<compile_context>
chip_gen: v5e
topology: v5e:2x2
jax: 0.10.0
libtpu: 0.0.40
codegen_flags: <defaults>
</compile_context>

<pallas_src>
import functools

import numpy as np
import jax
import jax.numpy as jnp
from jax.experimental import pallas as pl
from jax.experimental.pallas import tpu as pltpu

GAMMA_RELU = 1.7128585504496627
WS_EPS = 1e-4
LANE = 128
VMEM_LIMIT = 48 * 1024 * 1024


def _round_up(x, m):
    return ((x + m - 1) // m) * m


# ----------------------------------------------------------------------------
# In-kernel helpers
# ----------------------------------------------------------------------------
def _store_rows_padded(pad_ref, val2d, H, W, pad):
    """Scatter an (H*W, C) value into the interior of the zeroed padded scratch,
    one image row per store (avoids sublane-splitting reshapes)."""
    for i in range(H):
        pad_ref[pad + i, pad:pad + W, :] = val2d[i * W:(i + 1) * W, :]


def _taps_matmul(pad_ref, w_ref, b_row, H, W, K):
    """pad_ref: (H+K-1, W+K-1, C) f32 VMEM scratch, zero halo, conv input interior.

    Builds the K*K shifted taps as static slices (cast per-tap to the matmul
    dtype so the concat stays narrow), concatenates them along the lane axis and
    issues ONE MXU matmul with contraction depth K*K*C.  Returns f32 (H*W, Cout).
    """
    C = pad_ref.shape[-1]
    cdt = w_ref.dtype
    cols = []
    for kh in range(K):
        for kw in range(K):
            tap = pad_ref[kh:kh + H, kw:kw + W, :].reshape(H * W, C)
            cols.append(tap.astype(cdt))
    taps = jnp.concatenate(cols, axis=-1) if K > 1 else cols[0]
    return jnp.dot(taps, w_ref[...], preferred_element_type=jnp.float32) + b_row


def _block_core(x2d, w1_ref, b1_ref, w2_ref, b2_ref,
                w1fc_ref, b1fc_ref, w2fc_ref, b2fc_ref, scale_ref,
                apad_ref, hpad_ref, *, H, W, K, beta):
    """Residual-branch of nfConvResBlock on the VMEM-resident x tile.

    Returns f32 (H*W, Cout_p): alpha*tau * SE(conv2(nonlin2(conv1(nonlin1(beta*x))))).
    """
    pad = (K - 1) // 2

    # Zero the halo every step (megacore/parallel-grid safe: no reliance on
    # scratch state from other grid iterations).  Cost is trivial.
    apad_ref[...] = jnp.zeros_like(apad_ref)

    # Pre-nonlinearity applied ONCE per activation, in f32 (v5e VPU has no bf16).
    _store_rows_padded(apad_ref, GAMMA_RELU * jnp.maximum(x2d * beta, 0.0), H, W, pad)
    y1 = _taps_matmul(apad_ref, w1_ref, b1_ref[...], H, W, K)        # (HW, C) f32

    # nonlin2 fused into the conv1 epilogue; conv2 is then a pure matmul.
    hpad_ref[...] = jnp.zeros_like(hpad_ref)
    _store_rows_padded(hpad_ref, GAMMA_RELU * jnp.maximum(y1, 0.0), H, W, pad)
    y2 = _taps_matmul(hpad_ref, w2_ref, b2_ref[...], H, W, K)        # (HW, C) f32

    # SE unit on the VMEM-resident conv2 output (never leaves VMEM).
    pooled = jnp.sum(y2, axis=0, keepdims=True) * (1.0 / (H * W))    # (1, C)
    se = jnp.dot(pooled, w1fc_ref[...], preferred_element_type=jnp.float32) + b1fc_ref[...]
    se = GAMMA_RELU * jnp.maximum(se, 0.0)                           # scaledReLU
    se = jnp.dot(se, w2fc_ref[...], preferred_element_type=jnp.float32) + b2fc_ref[...]
    gate = 2.0 * jax.nn.sigmoid(se) * scale_ref[...]                 # includes alpha*tau
    return y2 * gate


# ----------------------------------------------------------------------------
# Pallas kernels (one per block flavor)
# ----------------------------------------------------------------------------
def nf_block_id_kernel(x_ref, w1_ref, b1_ref, w2_ref, b2_ref,
                       w1fc_ref, b1fc_ref, w2fc_ref, b2fc_ref, scale_ref,
                       o_ref, apad_ref, hpad_ref, *, H, W, K, beta):
    """Identity-skip nfConvResBlock, one batch element per grid step."""
    x2d = x_ref[0]                                                   # (HW, C) f32
    y = _block_core(x2d, w1_ref, b1_ref, w2_ref, b2_ref,
                    w1fc_ref, b1fc_ref, w2fc_ref, b2fc_ref, scale_ref,
                    apad_ref, hpad_ref, H=H, W=W, K=K, beta=beta)
    o_ref[0] = y + x2d                                               # residual (f32)


def nf_block_proj_kernel(x_ref, w1_ref, b1_ref, w2_ref, b2_ref,
                         w1fc_ref, b1fc_ref, w2fc_ref, b2fc_ref, scale_ref,
                         ws_ref, bs_ref,
                         o_ref, apad_ref, hpad_ref, *, H, W, K, beta):
    """nfConvResBlock with fused 1x1 WSConv skip (Cin != Cout)."""
    x2d = x_ref[0]                                                   # (HW, Cin_p) f32
    y = _block_core(x2d, w1_ref, b1_ref, w2_ref, b2_ref,
                    w1fc_ref, b1fc_ref, w2fc_ref, b2fc_ref, scale_ref,
                    apad_ref, hpad_ref, H=H, W=W, K=K, beta=beta)
    skip = jnp.dot(x2d.astype(ws_ref.dtype), ws_ref[...],
                   preferred_element_type=jnp.float32) + bs_ref[...]
    o_ref[0] = y + skip


# ----------------------------------------------------------------------------
# Pallas wrapper (one pallas_call per block)
# ----------------------------------------------------------------------------
def pallas_nf_block(x, prm, *, H, W, K, beta, has_skip_conv):
    N, HW, cin_p = x.shape
    cout_p = prm["w1"].shape[-1]
    crp = prm["w1fc"].shape[-1]
    pad = (K - 1) // 2
    Hp, Wp = H + 2 * pad, W + 2 * pad

    in_specs = [
        pl.BlockSpec((1, HW, cin_p), lambda n: (n, 0, 0)),
        pl.BlockSpec((K * K * cin_p, cout_p), lambda n: (0, 0)),
        pl.BlockSpec((1, cout_p), lambda n: (0, 0)),
        pl.BlockSpec((K * K * cout_p, cout_p), lambda n: (0, 0)),
        pl.BlockSpec((1, cout_p), lambda n: (0, 0)),
        pl.BlockSpec((cout_p, crp), lambda n: (0, 0)),
        pl.BlockSpec((1, crp), lambda n: (0, 0)),
        pl.BlockSpec((crp, cout_p), lambda n: (0, 0)),
        pl.BlockSpec((1, cout_p), lambda n: (0, 0)),
        pl.BlockSpec((1, 1), lambda n: (0, 0)),
    ]
    args = [x, prm["w1"], prm["b1"], prm["w2"], prm["b2"],
            prm["w1fc"], prm["b1fc"], prm["w2fc"], prm["b2fc"], prm["scale"]]

    if has_skip_conv:
        kern = functools.partial(nf_block_proj_kernel, H=H, W=W, K=K, beta=beta)
        in_specs += [pl.BlockSpec((cin_p, cout_p), lambda n: (0, 0)),
                     pl.BlockSpec((1, cout_p), lambda n: (0, 0))]
        args += [prm["ws"], prm["bs"]]
    else:
        kern = functools.partial(nf_block_id_kernel, H=H, W=W, K=K, beta=beta)

    # Block output overwrites the input HBM buffer whenever shapes/dtypes match
    # (identity skip always qualifies; projection also qualifies after padding).
    aliases = {0: 0} if (cin_p == cout_p and x.dtype == jnp.float32) else {}

    return pl.pallas_call(
        kern,
        out_shape=jax.ShapeDtypeStruct((N, HW, cout_p), jnp.float32),
        grid_spec=pltpu.PrefetchScalarGridSpec(
            num_scalar_prefetch=0,
            grid=(N,),
            in_specs=in_specs,
            out_specs=pl.BlockSpec((1, HW, cout_p), lambda n: (n, 0, 0)),
            scratch_shapes=[pltpu.VMEM((Hp, Wp, cin_p), jnp.float32),
                            pltpu.VMEM((Hp, Wp, cout_p), jnp.float32)],
        ),
        input_output_aliases=aliases,
        compiler_params=pltpu.CompilerParams(
            dimension_semantics=("parallel",),
            vmem_limit_bytes=VMEM_LIMIT),
    )(*args)


# ----------------------------------------------------------------------------
# Glue: weight standardization, channel padding, block / stage composition
# ----------------------------------------------------------------------------
def standardize_weights(w, unbiased):
    """WSConv2d.standardized_weights on the ORIGINAL (unpadded) (Cout,Cin,K,K)."""
    mean = jnp.mean(w, axis=(1, 2, 3), keepdims=True)
    var = jnp.var(w, axis=(1, 2, 3), keepdims=True, ddof=1 if unbiased else 0)
    fan_in = float(np.prod(w.shape[1:]))
    scale = jax.lax.rsqrt(jnp.maximum(var * fan_in, WS_EPS))
    return (w - mean) * scale


def prep_conv_weight(w, cin_p, cout_p, unbiased, compute_dtype):
    """Standardize, zero-pad channels, reshape to the (K*K*Cin_p, Cout_p) operand."""
    cout, cin, K, _ = w.shape
    w_std = standardize_weights(w, unbiased)
    w_std = jnp.pad(w_std, ((0, cout_p - cout), (0, cin_p - cin), (0, 0), (0, 0)))
    wk = jnp.transpose(w_std, (2, 3, 1, 0)).reshape(K * K * cin_p, cout_p)
    return wk.astype(compute_dtype)


def pad_vec(v, target):
    return jnp.pad(v, (0, target - v.shape[0])).reshape(1, target).astype(jnp.float32)


def pallas_nf_conv_res_block(x_flat, p, beta, alpha, H, W, compute_dtype):
    """x_flat: (N, H*W, Cin_p) f32 channel-padded -> (N, H*W, Cout_p) f32."""
    cin_p = x_flat.shape[-1]
    cout, cin, K, _ = p["conv1_w"].shape
    cout_p = _round_up(cout, LANE)

    prm = {
        "w1": prep_conv_weight(p["conv1_w"], cin_p, cout_p, True, compute_dtype),
        "b1": pad_vec(p["conv1_b"], cout_p),
        "w2": prep_conv_weight(p["conv2_w"], cout_p, cout_p, True, compute_dtype),
        "b2": pad_vec(p["conv2_b"], cout_p),
    }
    cr = p["fc1_w"].shape[0]
    crp = _round_up(cr, LANE)
    prm["w1fc"] = jnp.pad(p["fc1_w"].T, ((0, cout_p - cout), (0, crp - cr))).astype(jnp.float32)
    prm["b1fc"] = pad_vec(p["fc1_b"], crp)
    prm["w2fc"] = jnp.pad(p["fc2_w"].T, ((0, crp - cr), (0, cout_p - cout))).astype(jnp.float32)
    prm["b2fc"] = pad_vec(p["fc2_b"], cout_p)
    prm["scale"] = jnp.reshape(jnp.asarray(alpha * p["tau"], jnp.float32), (1, 1))

    has_skip = "skip_w" in p
    if has_skip:                               # Cin != Cout: fused 1x1 WSConv skip
        prm["ws"] = prep_conv_weight(p["skip_w"], cin_p, cout_p, False, compute_dtype)
        prm["bs"] = pad_vec(p["skip_b"], cout_p)

    # StochDepth: stochdepth_rate=0 / eval mode -> identity (skipped).
    return pallas_nf_block(x_flat, prm, H=H, W=W, K=K, beta=beta,
                           has_skip_conv=has_skip)


def nf_conv_res_stage_pallas(x_nchw, params_list, alpha,
                             compute_dtype=jnp.bfloat16):
    N, C, H, W = x_nchw.shape
    cin_p = _round_up(C, LANE)
    x = jnp.transpose(x_nchw, (0, 2, 3, 1)).astype(jnp.float32)
    x = jnp.pad(x, ((0, 0), (0, 0), (0, 0), (0, cin_p - C)))
    x_flat = x.reshape(N, H * W, cin_p)

    expected_std = 1.0
    for p in params_list:
        beta = 1.0 / expected_std
        x_flat = pallas_nf_conv_res_block(x_flat, p, beta, alpha, H, W,
                                          compute_dtype)
        expected_std = (expected_std ** 2 + alpha ** 2) ** 0.5

    cout = params_list[-1]["conv1_w"].shape[0]
    cout_p = x_flat.shape[-1]
    out = x_flat.reshape(N, H, W, cout_p)[..., :cout]
    return jnp.transpose(out, (0, 3, 1, 2))


# ----------------------------------------------------------------------------
# Pure-JAX reference (mirrors the PyTorch forward), for correctness checking
# ----------------------------------------------------------------------------
def _ref_conv(x, w_std, b, pad):
    y = jax.lax.conv_general_dilated(
        x, w_std, window_strides=(1, 1),
        padding=[(pad, pad), (pad, pad)],
        dimension_numbers=("NCHW", "OIHW", "NCHW"))
    return y + b[None, :, None, None]


def _ref_block(x, p, beta, alpha):
    cin = x.shape[1]
    cout = p["conv1_w"].shape[0]
    if cin == cout:
        skip = x
    else:
        skip = _ref_conv(x, standardize_weights(p["skip_w"], False), p["skip_b"], 0)
    h = GAMMA_RELU * jnp.maximum(x * beta, 0.0)
    h = _ref_conv(h, standardize_weights(p["conv1_w"], True), p["conv1_b"], 1)
    h = GAMMA_RELU * jnp.maximum(h, 0.0)
    h = _ref_conv(h, standardize_weights(p["conv2_w"], True), p["conv2_b"], 1)
    pooled = jnp.mean(h, axis=(2, 3))
    se = GAMMA_RELU * jnp.maximum(pooled @ p["fc1_w"].T + p["fc1_b"], 0.0)
    se = 2.0 * jax.nn.sigmoid(se @ p["fc2_w"].T + p["fc2_b"])
    h = h * se[:, :, None, None]
    h = h * (alpha * p["tau"])
    return h + skip


def nf_conv_res_stage_ref(x, params_list, alpha):
    expected_std = 1.0
    for p in params_list:
        beta = 1.0 / expected_std
        x = _ref_block(x, p, beta, alpha)
        expected_std = (expected_std ** 2 + alpha ** 2) ** 0.5
    return x


# ----------------------------------------------------------------------------
# Deterministic parameter init (shapes per module __init__)
# ----------------------------------------------------------------------------
def init_params(key, in_ch, out_ch, n_blocks, se_reduction=4, ksize=3):
    params = []
    in_list = [in_ch] + [out_ch] * (n_blocks - 1)
    for cin in in_list:
        key, k0, k1, k2, k3, k4 = jax.random.split(key, 6)
        p = {}
        p["conv1_w"] = jax.random.normal(k0, (out_ch, cin, ksize, ksize),
                                         jnp.float32) * np.sqrt(2.0 / (cin * ksize * ksize))
        p["conv1_b"] = jnp.zeros((out_ch,), jnp.float32)
        p["conv2_w"] = jax.random.normal(k1, (out_ch, out_ch, ksize, ksize),
                                         jnp.float32) * np.sqrt(2.0 / (out_ch * ksize * ksize))
        p["conv2_b"] = jnp.zeros((out_ch,), jnp.float32)
        if cin != out_ch:
            p["skip_w"] = jax.random.normal(k2, (out_ch, cin, 1, 1),
                                            jnp.float32) * np.sqrt(2.0 / cin)
            p["skip_b"] = jnp.zeros((out_ch,), jnp.float32)
        cr = out_ch // se_reduction
        p["fc1_w"] = jax.random.normal(k3, (cr, out_ch), jnp.float32) / np.sqrt(out_ch)
        p["fc1_b"] = jnp.zeros((cr,), jnp.float32)
        p["fc2_w"] = jax.random.normal(k4, (out_ch, cr), jnp.float32) / np.sqrt(cr)
        p["fc2_b"] = jnp.zeros((out_ch,), jnp.float32)
        # PyTorch init sets tau = 0 (which would zero the residual branch);
        # use a deterministic nonzero value so the conv/SE path is exercised.
        p["tau"] = jnp.float32(0.5)
        params.append(p)
    return params


# ----------------------------------------------------------------------------
if __name__ == "__main__":
    key = jax.random.PRNGKey(0)
    kx, kp = jax.random.split(key)

    N, Cin, H, W = 2, 4, 16, 16
    Cout, n_blocks, alpha = 8, 2, 0.2

    x = jax.random.normal(kx, (N, Cin, H, W), jnp.float32)     # NCHW, like PyTorch
    params = init_params(kp, Cin, Cout, n_blocks)

    ref = nf_conv_res_stage_ref(x, params, alpha)

    # Exact-arithmetic path: tight check of the kernel math against the reference.
    run_f32 = jax.jit(lambda xb: nf_conv_res_stage_pallas(
        xb, params, alpha, compute_dtype=jnp.float32))
    out_f32 = jax.block_until_ready(run_f32(x))
    assert out_f32.shape == (N, Cout, H, W), out_f32.shape
    np.testing.assert_allclose(np.asarray(out_f32), np.asarray(ref),
                               rtol=1e-3, atol=1e-3)

    # Default fast path: bf16 conv operands, f32 accumulation / f32 residual.
    run_bf16 = jax.jit(lambda xb: nf_conv_res_stage_pallas(
        xb, params, alpha, compute_dtype=jnp.bfloat16))
    out_bf16 = jax.block_until_ready(run_bf16(x))
    assert out_bf16.shape == (N, Cout, H, W), out_bf16.shape
    np.testing.assert_allclose(np.asarray(out_bf16), np.asarray(ref),
                               rtol=3e-2, atol=3e-2)

    print("KERNEL_OK")
</pallas_src>

<mosaic_0001>
module attributes {stable_mosaic.version = 11 : i64} {
  func.func @nf_block_proj_kernel(%arg0: i32, %arg1: memref<1x256x128xf32, #tpu.memory_space<vmem>>, %arg2: memref<1152x128xf32, #tpu.memory_space<vmem>>, %arg3: memref<1x128xf32, #tpu.memory_space<vmem>>, %arg4: memref<1152x128xf32, #tpu.memory_space<vmem>>, %arg5: memref<1x128xf32, #tpu.memory_space<vmem>>, %arg6: memref<128x128xf32, #tpu.memory_space<vmem>>, %arg7: memref<1x128xf32, #tpu.memory_space<vmem>>, %arg8: memref<128x128xf32, #tpu.memory_space<vmem>>, %arg9: memref<1x128xf32, #tpu.memory_space<vmem>>, %arg10: memref<1x1xf32, #tpu.memory_space<vmem>>, %arg11: memref<128x128xf32, #tpu.memory_space<vmem>>, %arg12: memref<1x128xf32, #tpu.memory_space<vmem>>, %arg13: memref<1x256x128xf32, #tpu.memory_space<vmem>>, %arg14: memref<18x18x128xf32, #tpu.memory_space<vmem>>, %arg15: memref<18x18x128xf32, #tpu.memory_space<vmem>>) attributes {dimension_semantics = [#tpu.dimension_semantics<parallel>], iteration_bounds = array<i64: 2>, scalar_prefetch = 0 : i64, scratch_operands = 2 : i64, tpu.core_type = #tpu.core_type<tc>, window_params = [{transform_indices = @transform_0, window_bounds = array<i64: 1, 256, 128>}, {pipeline_mode = #tpu.pipeline_mode<synchronous>, transform_indices = @transform_1, window_bounds = array<i64: 1152, 128>}, {pipeline_mode = #tpu.pipeline_mode<synchronous>, transform_indices = @transform_2, window_bounds = array<i64: 1, 128>}, {pipeline_mode = #tpu.pipeline_mode<synchronous>, transform_indices = @transform_3, window_bounds = array<i64: 1152, 128>}, {pipeline_mode = #tpu.pipeline_mode<synchronous>, transform_indices = @transform_4, window_bounds = array<i64: 1, 128>}, {pipeline_mode = #tpu.pipeline_mode<synchronous>, transform_indices = @transform_5, window_bounds = array<i64: 128, 128>}, {pipeline_mode = #tpu.pipeline_mode<synchronous>, transform_indices = @transform_6, window_bounds = array<i64: 1, 128>}, {pipeline_mode = #tpu.pipeline_mode<synchronous>, transform_indices = @transform_7, window_bounds = array<i64: 128, 128>}, {pipeline_mode = #tpu.pipeline_mode<synchronous>, transform_indices = @transform_8, window_bounds = array<i64: 1, 128>}, {pipeline_mode = #tpu.pipeline_mode<synchronous>, transform_indices = @transform_9, window_bounds = array<i64: 1, 1>}, {pipeline_mode = #tpu.pipeline_mode<synchronous>, transform_indices = @transform_10, window_bounds = array<i64: 128, 128>}, {pipeline_mode = #tpu.pipeline_mode<synchronous>, transform_indices = @transform_11, window_bounds = array<i64: 1, 128>}, {transform_indices = @transform_12, window_bounds = array<i64: 1, 256, 128>}]} {
    %c0 = arith.constant 0 : index
    %c0_0 = arith.constant 0 : index
    %c0_1 = arith.constant 0 : index
    %0 = vector.load %arg1[%c0, %c0_0, %c0_1] : memref<1x256x128xf32, #tpu.memory_space<vmem>>, vector<1x256x128xf32>
    %1 = vector.shape_cast %0 : vector<1x256x128xf32> to vector<256x128xf32>
    %cst = arith.constant 0.000000e+00 : f32
    %2 = vector.broadcast %cst : f32 to vector<18x18x128xf32>
    %c0_2 = arith.constant 0 : index
    %c0_3 = arith.constant 0 : index
    %c0_4 = arith.constant 0 : index
    %3 = vector.load %arg14[%c0_2, %c0_3, %c0_4] : memref<18x18x128xf32, #tpu.memory_space<vmem>>, vector<18x18x128xf32>
    tpu.vector_store %arg14[%c0_2, %c0_3, %c0_4], %2 {strides = array<i32>} : memref<18x18x128xf32, #tpu.memory_space<vmem>>, vector<18x18x128xf32>,
    %cst_5 = arith.constant 1.000000e+00 : f32
    %4 = vector.broadcast %cst_5 : f32 to vector<256x128xf32>
    %5 = arith.mulf %1, %4 : vector<256x128xf32>
    %cst_6 = arith.constant 0.000000e+00 : f32
    %6 = vector.broadcast %cst_6 : f32 to vector<256x128xf32>
    %7 = arith.maximumf %5, %6 : vector<256x128xf32>
    %cst_7 = arith.constant 1.71285856 : f32
    %8 = vector.broadcast %cst_7 : f32 to vector<256x128xf32>
    %9 = arith.mulf %8, %7 : vector<256x128xf32>
    %10 = vector.extract_strided_slice %9 {offsets = [0, 0], sizes = [16, 128], strides = [1, 1]} : vector<256x128xf32> to vector<16x128xf32>
    %c1 = arith.constant 1 : index
    %c1_8 = arith.constant 1 : index
    %c0_9 = arith.constant 0 : index
    %11 = vector.load %arg14[%c1, %c1_8, %c0_9] : memref<18x18x128xf32, #tpu.memory_space<vmem>>, vector<1x16x128xf32>
    %12 = vector.shape_cast %11 : vector<1x16x128xf32> to vector<16x128xf32>
    %13 = vector.shape_cast %10 : vector<16x128xf32> to vector<1x16x128xf32>
    tpu.vector_store %arg14[%c1, %c1_8, %c0_9], %13 {strides = array<i32>} : memref<18x18x128xf32, #tpu.memory_space<vmem>>, vector<1x16x128xf32>,
    %14 = vector.extract_strided_slice %9 {offsets = [16, 0], sizes = [16, 128], strides = [1, 1]} : vector<256x128xf32> to vector<16x128xf32>
    %c2 = arith.constant 2 : index
    %c1_10 = arith.constant 1 : index
    %c0_11 = arith.constant 0 : index
    %15 = vector.load %arg14[%c2, %c1_10, %c0_11] : memref<18x18x128xf32, #tpu.memory_space<vmem>>, vector<1x16x128xf32>
    %16 = vector.shape_cast %15 : vector<1x16x128xf32> to vector<16x128xf32>
    %17 = vector.shape_cast %14 : vector<16x128xf32> to vector<1x16x128xf32>
    tpu.vector_store %arg14[%c2, %c1_10, %c0_11], %17 {strides = array<i32>} : memref<18x18x128xf32, #tpu.memory_space<vmem>>, vector<1x16x128xf32>,
    %18 = vector.extract_strided_slice %9 {offsets = [32, 0], sizes = [16, 128], strides = [1, 1]} : vector<256x128xf32> to vector<16x128xf32>
    %c3 = arith.constant 3 : index
    %c1_12 = arith.constant 1 : index
    %c0_13 = arith.constant 0 : index
    %19 = vector.load %arg14[%c3, %c1_12, %c0_13] : memref<18x18x128xf32, #tpu.memory_space<vmem>>, vector<1x16x128xf32>
    %20 = vector.shape_cast %19 : vector<1x16x128xf32> to vector<16x128xf32>
    %21 = vector.shape_cast %18 : vector<16x128xf32> to vector<1x16x128xf32>
    tpu.vector_store %arg14[%c3, %c1_12, %c0_13], %21 {strides = array<i32>} : memref<18x18x128xf32, #tpu.memory_space<vmem>>, vector<1x16x128xf32>,
    %22 = vector.extract_strided_slice %9 {offsets = [48, 0], sizes = [16, 128], strides = [1, 1]} : vector<256x128xf32> to vector<16x128xf32>
    %c4 = arith.constant 4 : index
    %c1_14 = arith.constant 1 : index
    %c0_15 = arith.constant 0 : index
    %23 = vector.load %arg14[%c4, %c1_14, %c0_15] : memref<18x18x128xf32, #tpu.memory_space<vmem>>, vector<1x16x128xf32>
    %24 = vector.shape_cast %23 : vector<1x16x128xf32> to vector<16x128xf32>
    %25 = vector.shape_cast %22 : vector<16x128xf32> to vector<1x16x128xf32>
    tpu.vector_store %arg14[%c4, %c1_14, %c0_15], %25 {strides = array<i32>} : memref<18x18x128xf32, #tpu.memory_space<vmem>>, vector<1x16x128xf32>,
    %26 = vector.extract_strided_slice %9 {offsets = [64, 0], sizes = [16, 128], strides = [1, 1]} : vector<256x128xf32> to vector<16x128xf32>
    %c5 = arith.constant 5 : index
    %c1_16 = arith.constant 1 : index
    %c0_17 = arith.constant 0 : index
    %27 = vector.load %arg14[%c5, %c1_16, %c0_17] : memref<18x18x128xf32, #tpu.memory_space<vmem>>, vector<1x16x128xf32>
    %28 = vector.shape_cast %27 : vector<1x16x128xf32> to vector<16x128xf32>
    %29 = vector.shape_cast %26 : vector<16x128xf32> to vector<1x16x128xf32>
    tpu.vector_store %arg14[%c5, %c1_16, %c0_17], %29 {strides = array<i32>} : memref<18x18x128xf32, #tpu.memory_space<vmem>>, vector<1x16x128xf32>,
    %30 = vector.extract_strided_slice %9 {offsets = [80, 0], sizes = [16, 128], strides = [1, 1]} : vector<256x128xf32> to vector<16x128xf32>
    %c6 = arith.constant 6 : index
    %c1_18 = arith.constant 1 : index
    %c0_19 = arith.constant 0 : index
    %31 = vector.load %arg14[%c6, %c1_18, %c0_19] : memref<18x18x128xf32, #tpu.memory_space<vmem>>, vector<1x16x128xf32>
    %32 = vector.shape_cast %31 : vector<1x16x128xf32> to vector<16x128xf32>
    %33 = vector.shape_cast %30 : vector<16x128xf32> to vector<1x16x128xf32>
    tpu.vector_store %arg14[%c6, %c1_18, %c0_19], %33 {strides = array<i32>} : memref<18x18x128xf32, #tpu.memory_space<vmem>>, vector<1x16x128xf32>,
    %34 = vector.extract_strided_slice %9 {offsets = [96, 0], sizes = [16, 128], strides = [1, 1]} : vector<256x128xf32> to vector<16x128xf32>
    %c7 = arith.constant 7 : index
    %c1_20 = arith.constant 1 : index
    %c0_21 = arith.constant 0 : index
    %35 = vector.load %arg14[%c7, %c1_20, %c0_21] : memref<18x18x128xf32, #tpu.memory_space<vmem>>, vector<1x16x128xf32>
    %36 = vector.shape_cast %35 : vector<1x16x128xf32> to vector<16x128xf32>
    %37 = vector.shape_cast %34 : vector<16x128xf32> to vector<1x16x128xf32>
    tpu.vector_store %arg14[%c7, %c1_20, %c0_21], %37 {strides = array<i32>} : memref<18x18x128xf32, #tpu.memory_space<vmem>>, vector<1x16x128xf32>,
    %38 = vector.extract_strided_slice %9 {offsets = [112, 0], sizes = [16, 128], strides = [1, 1]} : vector<256x128xf32> to vector<16x128xf32>
    %c8 = arith.constant 8 : index
    %c1_22 = arith.constant 1 : index
    %c0_23 = arith.constant 0 : index
    %39 = vector.load %arg14[%c8, %c1_22, %c0_23] : memref<18x18x128xf32, #tpu.memory_space<vmem>>, vector<1x16x128xf32>
    %40 = vector.shape_cast %39 : vector<1x16x128xf32> to vector<16x128xf32>
    %41 = vector.shape_cast %38 : vector<16x128xf32> to vector<1x16x128xf32>
    tpu.vector_store %arg14[%c8, %c1_22, %c0_23], %41 {strides = array<i32>} : memref<18x18x128xf32, #tpu.memory_space<vmem>>, vector<1x16x128xf32>,
    %42 = vector.extract_strided_slice %9 {offsets = [128, 0], sizes = [16, 128], strides = [1, 1]} : vector<256x128xf32> to vector<16x128xf32>
    %c9 = arith.constant 9 : index
    %c1_24 = arith.constant 1 : index
    %c0_25 = arith.constant 0 : index
    %43 = vector.load %arg14[%c9, %c1_24, %c0_25] : memref<18x18x128xf32, #tpu.memory_space<vmem>>, vector<1x16x128xf32>
    %44 = vector.shape_cast %43 : vector<1x16x128xf32> to vector<16x128xf32>
    %45 = vector.shape_cast %42 : vector<16x128xf32> to vector<1x16x128xf32>
    tpu.vector_store %arg14[%c9, %c1_24, %c0_25], %45 {strides = array<i32>} : memref<18x18x128xf32, #tpu.memory_space<vmem>>, vector<1x16x128xf32>,
    %46 = vector.extract_strided_slice %9 {offsets = [144, 0], sizes = [16, 128], strides = [1, 1]} : vector<256x128xf32> to vector<16x128xf32>
    %c10 = arith.constant 10 : index
    %c1_26 = arith.constant 1 : index
    %c0_27 = arith.constant 0 : index
    %47 = vector.load %arg14[%c10, %c1_26, %c0_27] : memref<18x18x128xf32, #tpu.memory_space<vmem>>, vector<1x16x128xf32>
    %48 = vector.shape_cast %47 : vector<1x16x128xf32> to vector<16x128xf32>
    %49 = vector.shape_cast %46 : vector<16x128xf32> to vector<1x16x128xf32>
    tpu.vector_store %arg14[%c10, %c1_26, %c0_27], %49 {strides = array<i32>} : memref<18x18x128xf32, #tpu.memory_space<vmem>>, vector<1x16x128xf32>,
    %50 = vector.extract_strided_slice %9 {offsets = [160, 0], sizes = [16, 128], strides = [1, 1]} : vector<256x128xf32> to vector<16x128xf32>
    %c11 = arith.constant 11 : index
    %c1_28 = arith.constant 1 : index
    %c0_29 = arith.constant 0 : index
    %51 = vector.load %arg14[%c11, %c1_28, %c0_29] : memref<18x18x128xf32, #tpu.memory_space<vmem>>, vector<1x16x128xf32>
    %52 = vector.shape_cast %51 : vector<1x16x128xf32> to vector<16x128xf32>
    %53 = vector.shape_cast %50 : vector<16x128xf32> to vector<1x16x128xf32>
    tpu.vector_store %arg14[%c11, %c1_28, %c0_29], %53 {strides = array<i32>} : memref<18x18x128xf32, #tpu.memory_space<vmem>>, vector<1x16x128xf32>,
    %54 = vector.extract_strided_slice %9 {offsets = [176, 0], sizes = [16, 128], strides = [1, 1]} : vector<256x128xf32> to vector<16x128xf32>
    %c12 = arith.constant 12 : index
    %c1_30 = arith.constant 1 : index
    %c0_31 = arith.constant 0 : index
    %55 = vector.load %arg14[%c12, %c1_30, %c0_31] : memref<18x18x128xf32, #tpu.memory_space<vmem>>, vector<1x16x128xf32>
    %56 = vector.shape_cast %55 : vector<1x16x128xf32> to vector<16x128xf32>
    %57 = vector.shape_cast %54 : vector<16x128xf32> to vector<1x16x128xf32>
    tpu.vector_store %arg14[%c12, %c1_30, %c0_31], %57 {strides = array<i32>} : memref<18x18x128xf32, #tpu.memory_space<vmem>>, vector<1x16x128xf32>,
    %58 = vector.extract_strided_slice %9 {offsets = [192, 0], sizes = [16, 128], strides = [1, 1]} : vector<256x128xf32> to vector<16x128xf32>
    %c13 = arith.constant 13 : index
    %c1_32 = arith.constant 1 : index
    %c0_33 = arith.constant 0 : index
    %59 = vector.load %arg14[%c13, %c1_32, %c0_33] : memref<18x18x128xf32, #tpu.memory_space<vmem>>, vector<1x16x128xf32>
    %60 = vector.shape_cast %59 : vector<1x16x128xf32> to vector<16x128xf32>
    %61 = vector.shape_cast %58 : vector<16x128xf32> to vector<1x16x128xf32>
    tpu.vector_store %arg14[%c13, %c1_32, %c0_33], %61 {strides = array<i32>} : memref<18x18x128xf32, #tpu.memory_space<vmem>>, vector<1x16x128xf32>,
    %62 = vector.extract_strided_slice %9 {offsets = [208, 0], sizes = [16, 128], strides = [1, 1]} : vector<256x128xf32> to vector<16x128xf32>
    %c14 = arith.constant 14 : index
    %c1_34 = arith.constant 1 : index
    %c0_35 = arith.constant 0 : index
    %63 = vector.load %arg14[%c14, %c1_34, %c0_35] : memref<18x18x128xf32, #tpu.memory_space<vmem>>, vector<1x16x128xf32>
    %64 = vector.shape_cast %63 : vector<1x16x128xf32> to vector<16x128xf32>
    %65 = vector.shape_cast %62 : vector<16x128xf32> to vector<1x16x128xf32>
    tpu.vector_store %arg14[%c14, %c1_34, %c0_35], %65 {strides = array<i32>} : memref<18x18x128xf32, #tpu.memory_space<vmem>>, vector<1x16x128xf32>,
    %66 = vector.extract_strided_slice %9 {offsets = [224, 0], sizes = [16, 128], strides = [1, 1]} : vector<256x128xf32> to vector<16x128xf32>
    %c15 = arith.constant 15 : index
    %c1_36 = arith.constant 1 : index
    %c0_37 = arith.constant 0 : index
    %67 = vector.load %arg14[%c15, %c1_36, %c0_37] : memref<18x18x128xf32, #tpu.memory_space<vmem>>, vector<1x16x128xf32>
    %68 = vector.shape_cast %67 : vector<1x16x128xf32> to vector<16x128xf32>
    %69 = vector.shape_cast %66 : vector<16x128xf32> to vector<1x16x128xf32>
    tpu.vector_store %arg14[%c15, %c1_36, %c0_37], %69 {strides = array<i32>} : memref<18x18x128xf32, #tpu.memory_space<vmem>>, vector<1x16x128xf32>,
    %70 = vector.extract_strided_slice %9 {offsets = [240, 0], sizes = [16, 128], strides = [1, 1]} : vector<256x128xf32> to vector<16x128xf32>
    %c16 = arith.constant 16 : index
    %c1_38 = arith.constant 1 : index
    %c0_39 = arith.constant 0 : index
    %71 = vector.load %arg14[%c16, %c1_38, %c0_39] : memref<18x18x128xf32, #tpu.memory_space<vmem>>, vector<1x16x128xf32>
    %72 = vector.shape_cast %71 : vector<1x16x128xf32> to vector<16x128xf32>
    %73 = vector.shape_cast %70 : vector<16x128xf32> to vector<1x16x128xf32>
    tpu.vector_store %arg14[%c16, %c1_38, %c0_39], %73 {strides = array<i32>} : memref<18x18x128xf32, #tpu.memory_space<vmem>>, vector<1x16x128xf32>,
    %c0_40 = arith.constant 0 : index
    %c0_41 = arith.constant 0 : index
    %74 = vector.load %arg3[%c0_40, %c0_41] : memref<1x128xf32, #tpu.memory_space<vmem>>, vector<1x128xf32>
    %c0_42 = arith.constant 0 : index
    %c0_43 = arith.constant 0 : index
    %c0_44 = arith.constant 0 : index
    %75 = vector.load %arg14[%c0_42, %c0_43, %c0_44] : memref<18x18x128xf32, #tpu.memory_space<vmem>>, vector<16x16x128xf32>
    %76 = vector.shape_cast %75 : vector<16x16x128xf32> to vector<256x128xf32>
    %c0_45 = arith.constant 0 : index
    %c1_46 = arith.constant 1 : index
    %c0_47 = arith.constant 0 : index
    %77 = vector.load %arg14[%c0_45, %c1_46, %c0_47] : memref<18x18x128xf32, #tpu.memory_space<vmem>>, vector<16x16x128xf32>
    %78 = vector.shape_cast %77 : vector<16x16x128xf32> to vector<256x128xf32>
    %c0_48 = arith.constant 0 : index
    %c2_49 = arith.constant 2 : index
    %c0_50 = arith.constant 0 : index
    %79 = vector.load %arg14[%c0_48, %c2_49, %c0_50] : memref<18x18x128xf32, #tpu.memory_space<vmem>>, vector<16x16x128xf32>
    %80 = vector.shape_cast %79 : vector<16x16x128xf32> to vector<256x128xf32>
    %c1_51 = arith.constant 1 : index
    %c0_52 = arith.constant 0 : index
    %c0_53 = arith.constant 0 : index
    %81 = vector.load %arg14[%c1_51, %c0_52, %c0_53] : memref<18x18x128xf32, #tpu.memory_space<vmem>>, vector<16x16x128xf32>
    %82 = vector.shape_cast %81 : vector<16x16x128xf32> to vector<256x128xf32>
    %c1_54 = arith.constant 1 : index
    %c1_55 = arith.constant 1 : index
    %c0_56 = arith.constant 0 : index
    %83 = vector.load %arg14[%c1_54, %c1_55, %c0_56] : memref<18x18x128xf32, #tpu.memory_space<vmem>>, vector<16x16x128xf32>
    %84 = vector.shape_cast %83 : vector<16x16x128xf32> to vector<256x128xf32>
    %c1_57 = arith.constant 1 : index
    %c2_58 = arith.constant 2 : index
    %c0_59 = arith.constant 0 : index
    %85 = vector.load %arg14[%c1_57, %c2_58, %c0_59] : memref<18x18x128xf32, #tpu.memory_space<vmem>>, vector<16x16x128xf32>
    %86 = vector.shape_cast %85 : vector<16x16x128xf32> to vector<256x128xf32>
    %c2_60 = arith.constant 2 : index
    %c0_61 = arith.constant 0 : index
    %c0_62 = arith.constant 0 : index
    %87 = vector.load %arg14[%c2_60, %c0_61, %c0_62] : memref<18x18x128xf32, #tpu.memory_space<vmem>>, vector<16x16x128xf32>
    %88 = vector.shape_cast %87 : vector<16x16x128xf32> to vector<256x128xf32>
    %c2_63 = arith.constant 2 : index
    %c1_64 = arith.constant 1 : index
    %c0_65 = arith.constant 0 : index
    %89 = vector.load %arg14[%c2_63, %c1_64, %c0_65] : memref<18x18x128xf32, #tpu.memory_space<vmem>>, vector<16x16x128xf32>
    %90 = vector.shape_cast %89 : vector<16x16x128xf32> to vector<256x128xf32>
    %c2_66 = arith.constant 2 : index
    %c2_67 = arith.constant 2 : index
    %c0_68 = arith.constant 0 : index
    %91 = vector.load %arg14[%c2_66, %c2_67, %c0_68] : memref<18x18x128xf32, #tpu.memory_space<vmem>>, vector<16x16x128xf32>
    %92 = vector.shape_cast %91 : vector<16x16x128xf32> to vector<256x128xf32>
    %93 = tpu.concatenate %76, %78, %80, %82, %84, %86, %88, %90, %92 in 1 : vector<256x128xf32>, vector<256x128xf32>, vector<256x128xf32>, vector<256x128xf32>, vector<256x128xf32>, vector<256x128xf32>, vector<256x128xf32>, vector<256x128xf32>, vector<256x128xf32> -> vector<256x1152xf32>
    %c0_69 = arith.constant 0 : index
    %c0_70 = arith.constant 0 : index
    %94 = vector.load %arg2[%c0_69, %c0_70] : memref<1152x128xf32, #tpu.memory_space<vmem>>, vector<1152x128xf32>
    %cst_71 = arith.constant dense<0.000000e+00> : vector<256x128xf32>
    %95 = tpu.matmul %93, %94, %cst_71 {dimension_numbers = #tpu.dot_dimension_numbers<[1], [0], [0], [1], [0, 0, 1, 1], [], []>} : vector<256x1152xf32>, vector<1152x128xf32>, vector<256x128xf32> -> vector<256x128xf32>
    %96 = vector.broadcast %74 : vector<1x128xf32> to vector<256x128xf32>
    %97 = arith.addf %95, %96 : vector<256x128xf32>
    %cst_72 = arith.constant 0.000000e+00 : f32
    %98 = vector.broadcast %cst_72 : f32 to vector<18x18x128xf32>
    %c0_73 = arith.constant 0 : index
    %c0_74 = arith.constant 0 : index
    %c0_75 = arith.constant 0 : index
    %99 = vector.load %arg15[%c0_73, %c0_74, %c0_75] : memref<18x18x128xf32, #tpu.memory_space<vmem>>, vector<18x18x128xf32>
    tpu.vector_store %arg15[%c0_73, %c0_74, %c0_75], %98 {strides = array<i32>} : memref<18x18x128xf32, #tpu.memory_space<vmem>>, vector<18x18x128xf32>,
    %cst_76 = arith.constant 0.000000e+00 : f32
    %100 = vector.broadcast %cst_76 : f32 to vector<256x128xf32>
    %101 = arith.maximumf %97, %100 : vector<256x128xf32>
    %cst_77 = arith.constant 1.71285856 : f32
    %102 = vector.broadcast %cst_77 : f32 to vector<256x128xf32>
    %103 = arith.mulf %102, %101 : vector<256x128xf32>
    %104 = vector.extract_strided_slice %103 {offsets = [0, 0], sizes = [16, 128], strides = [1, 1]} : vector<256x128xf32> to vector<16x128xf32>
    %c1_78 = arith.constant 1 : index
    %c1_79 = arith.constant 1 : index
    %c0_80 = arith.constant 0 : index
    %105 = vector.load %arg15[%c1_78, %c1_79, %c0_80] : memref<18x18x128xf32, #tpu.memory_space<vmem>>, vector<1x16x128xf32>
    %106 = vector.shape_cast %105 : vector<1x16x128xf32> to vector<16x128xf32>
    %107 = vector.shape_cast %104 : vector<16x128xf32> to vector<1x16x128xf32>
    tpu.vector_store %arg15[%c1_78, %c1_79, %c0_80], %107 {strides = array<i32>} : memref<18x18x128xf32, #tpu.memory_space<vmem>>, vector<1x16x128xf32>,
    %108 = vector.extract_strided_slice %103 {offsets = [16, 0], sizes = [16, 128], strides = [1, 1]} : vector<256x128xf32> to vector<16x128xf32>
    %c2_81 = arith.constant 2 : index
    %c1_82 = arith.constant 1 : index
    %c0_83 = arith.constant 0 : index
    %109 = vector.load %arg15[%c2_81, %c1_82, %c0_83] : memref<18x18x128xf32, #tpu.memory_space<vmem>>, vector<1x16x128xf32>
    %110 = vector.shape_cast %109 : vector<1x16x128xf32> to vector<16x128xf32>
    %111 = vector.shape_cast %108 : vector<16x128xf32> to vector<1x16x128xf32>
    tpu.vector_store %arg15[%c2_81, %c1_82, %c0_83], %111 {strides = array<i32>} : memref<18x18x128xf32, #tpu.memory_space<vmem>>, vector<1x16x128xf32>,
    %112 = vector.extract_strided_slice %103 {offsets = [32, 0], sizes = [16, 128], strides = [1, 1]} : vector<256x128xf32> to vector<16x128xf32>
    %c3_84 = arith.constant 3 : index
    %c1_85 = arith.constant 1 : index
    %c0_86 = arith.constant 0 : index
    %113 = vector.load %arg15[%c3_84, %c1_85, %c0_86] : memref<18x18x128xf32, #tpu.memory_space<vmem>>, vector<1x16x128xf32>
    %114 = vector.shape_cast %113 : vector<1x16x128xf32> to vector<16x128xf32>
    %115 = vector.shape_cast %112 : vector<16x128xf32> to vector<1x16x128xf32>
    tpu.vector_store %arg15[%c3_84, %c1_85, %c0_86], %115 {strides = array<i32>} : memref<18x18x128xf32, #tpu.memory_space<vmem>>, vector<1x16x128xf32>,
    %116 = vector.extract_strided_slice %103 {offsets = [48, 0], sizes = [16, 128], strides = [1, 1]} : vector<256x128xf32> to vector<16x128xf32>
    %c4_87 = arith.constant 4 : index
    %c1_88 = arith.constant 1 : index
    %c0_89 = arith.constant 0 : index
    %117 = vector.load %arg15[%c4_87, %c1_88, %c0_89] : memref<18x18x128xf32, #tpu.memory_space<vmem>>, vector<1x16x128xf32>
    %118 = vector.shape_cast %117 : vector<1x16x128xf32> to vector<16x128xf32>
    %119 = vector.shape_cast %116 : vector<16x128xf32> to vector<1x16x128xf32>
    tpu.vector_store %arg15[%c4_87, %c1_88, %c0_89], %119 {strides = array<i32>} : memref<18x18x128xf32, #tpu.memory_space<vmem>>, vector<1x16x128xf32>,
    %120 = vector.extract_strided_slice %103 {offsets = [64, 0], sizes = [16, 128], strides = [1, 1]} : vector<256x128xf32> to vector<16x128xf32>
    %c5_90 = arith.constant 5 : index
    %c1_91 = arith.constant 1 : index
    %c0_92 = arith.constant 0 : index
    %121 = vector.load %arg15[%c5_90, %c1_91, %c0_92] : memref<18x18x128xf32, #tpu.memory_space<vmem>>, vector<1x16x128xf32>
    %122 = vector.shape_cast %121 : vector<1x16x128xf32> to vector<16x128xf32>
    %123 = vector.shape_cast %120 : vector<16x128xf32> to vector<1x16x128xf32>
    tpu.vector_store %arg15[%c5_90, %c1_91, %c0_92], %123 {strides = array<i32>} : memref<18x18x128xf32, #tpu.memory_space<vmem>>, vector<1x16x128xf32>,
    %124 = vector.extract_strided_slice %103 {offsets = [80, 0], sizes = [16, 128], strides = [1, 1]} : vector<256x128xf32> to vector<16x128xf32>
    %c6_93 = arith.constant 6 : index
    %c1_94 = arith.constant 1 : index
    %c0_95 = arith.constant 0 : index
    %125 = vector.load %arg15[%c6_93, %c1_94, %c0_95] : memref<18x18x128xf32, #tpu.memory_space<vmem>>, vector<1x16x128xf32>
    %126 = vector.shape_cast %125 : vector<1x16x128xf32> to vector<16x128xf32>
    %127 = vector.shape_cast %124 : vector<16x128xf32> to vector<1x16x128xf32>
    tpu.vector_store %arg15[%c6_93, %c1_94, %c0_95], %127 {strides = array<i32>} : memref<18x18x128xf32, #tpu.memory_space<vmem>>, vector<1x16x128xf32>,
    %128 = vector.extract_strided_slice %103 {offsets = [96, 0], sizes = [16, 128], strides = [1, 1]} : vector<256x128xf32> to vector<16x128xf32>
    %c7_96 = arith.constant 7 : index
    %c1_97 = arith.constant 1 : index
    %c0_98 = arith.constant 0 : index
    %129 = vector.load %arg15[%c7_96, %c1_97, %c0_98] : memref<18x18x128xf32, #tpu.memory_space<vmem>>, vector<1x16x128xf32>
    %130 = vector.shape_cast %129 : vector<1x16x128xf32> to vector<16x128xf32>
    %131 = vector.shape_cast %128 : vector<16x128xf32> to vector<1x16x128xf32>
    tpu.vector_store %arg15[%c7_96, %c1_97, %c0_98], %131 {strides = array<i32>} : memref<18x18x128xf32, #tpu.memory_space<vmem>>, vector<1x16x128xf32>,
    %132 = vector.extract_strided_slice %103 {offsets = [112, 0], sizes = [16, 128], strides = [1, 1]} : vector<256x128xf32> to vector<16x128xf32>
    %c8_99 = arith.constant 8 : index
    %c1_100 = arith.constant 1 : index
    %c0_101 = arith.constant 0 : index
    %133 = vector.load %arg15[%c8_99, %c1_100, %c0_101] : memref<18x18x128xf32, #tpu.memory_space<vmem>>, vector<1x16x128xf32>
    %134 = vector.shape_cast %133 : vector<1x16x128xf32> to vector<16x128xf32>
    %135 = vector.shape_cast %132 : vector<16x128xf32> to vector<1x16x128xf32>
    tpu.vector_store %arg15[%c8_99, %c1_100, %c0_101], %135 {strides = array<i32>} : memref<18x18x128xf32, #tpu.memory_space<vmem>>, vector<1x16x128xf32>,
    %136 = vector.extract_strided_slice %103 {offsets = [128, 0], sizes = [16, 128], strides = [1, 1]} : vector<256x128xf32> to vector<16x128xf32>
    %c9_102 = arith.constant 9 : index
    %c1_103 = arith.constant 1 : index
    %c0_104 = arith.constant 0 : index
    %137 = vector.load %arg15[%c9_102, %c1_103, %c0_104] : memref<18x18x128xf32, #tpu.memory_space<vmem>>, vector<1x16x128xf32>
    %138 = vector.shape_cast %137 : vector<1x16x128xf32> to vector<16x128xf32>
    %139 = vector.shape_cast %136 : vector<16x128xf32> to vector<1x16x128xf32>
    tpu.vector_store %arg15[%c9_102, %c1_103, %c0_104], %139 {strides = array<i32>} : memref<18x18x128xf32, #tpu.memory_space<vmem>>, vector<1x16x128xf32>,
    %140 = vector.extract_strided_slice %103 {offsets = [144, 0], sizes = [16, 128], strides = [1, 1]} : vector<256x128xf32> to vector<16x128xf32>
    %c10_105 = arith.constant 10 : index
    %c1_106 = arith.constant 1 : index
    %c0_107 = arith.constant 0 : index
    %141 = vector.load %arg15[%c10_105, %c1_106, %c0_107] : memref<18x18x128xf32, #tpu.memory_space<vmem>>, vector<1x16x128xf32>
    %142 = vector.shape_cast %141 : vector<1x16x128xf32> to vector<16x128xf32>
    %143 = vector.shape_cast %140 : vector<16x128xf32> to vector<1x16x128xf32>
    tpu.vector_store %arg15[%c10_105, %c1_106, %c0_107], %143 {strides = array<i32>} : memref<18x18x128xf32, #tpu.memory_space<vmem>>, vector<1x16x128xf32>,
    %144 = vector.extract_strided_slice %103 {offsets = [160, 0], sizes = [16, 128], strides = [1, 1]} : vector<256x128xf32> to vector<16x128xf32>
    %c11_108 = arith.constant 11 : index
    %c1_109 = arith.constant 1 : index
    %c0_110 = arith.constant 0 : index
    %145 = vector.load %arg15[%c11_108, %c1_109, %c0_110] : memref<18x18x128xf32, #tpu.memory_space<vmem>>, vector<1x16x128xf32>
    %146 = vector.shape_cast %145 : vector<1x16x128xf32> to vector<16x128xf32>
    %147 = vector.shape_cast %144 : vector<16x128xf32> to vector<1x16x128xf32>
    tpu.vector_store %arg15[%c11_108, %c1_109, %c0_110], %147 {strides = array<i32>} : memref<18x18x128xf32, #tpu.memory_space<vmem>>, vector<1x16x128xf32>,
    %148 = vector.extract_strided_slice %103 {offsets = [176, 0], sizes = [16, 128], strides = [1, 1]} : vector<256x128xf32> to vector<16x128xf32>
    %c12_111 = arith.constant 12 : index
    %c1_112 = arith.constant 1 : index
    %c0_113 = arith.constant 0 : index
    %149 = vector.load %arg15[%c12_111, %c1_112, %c0_113] : memref<18x18x128xf32, #tpu.memory_space<vmem>>, vector<1x16x128xf32>
    %150 = vector.shape_cast %149 : vector<1x16x128xf32> to vector<16x128xf32>
    %151 = vector.shape_cast %148 : vector<16x128xf32> to vector<1x16x128xf32>
    tpu.vector_store %arg15[%c12_111, %c1_112, %c0_113], %151 {strides = array<i32>} : memref<18x18x128xf32, #tpu.memory_space<vmem>>, vector<1x16x128xf32>,
    %152 = vector.extract_strided_slice %103 {offsets = [192, 0], sizes = [16, 128], strides = [1, 1]} : vector<256x128xf32> to vector<16x128xf32>
    %c13_114 = arith.constant 13 : index
    %c1_115 = arith.constant 1 : index
    %c0_116 = arith.constant 0 : index
    %153 = vector.load %arg15[%c13_114, %c1_115, %c0_116] : memref<18x18x128xf32, #tpu.memory_space<vmem>>, vector<1x16x128xf32>
    %154 = vector.shape_cast %153 : vector<1x16x128xf32> to vector<16x128xf32>
    %155 = vector.shape_cast %152 : vector<16x128xf32> to vector<1x16x128xf32>
    tpu.vector_store %arg15[%c13_114, %c1_115, %c0_116], %155 {strides = array<i32>} : memref<18x18x128xf32, #tpu.memory_space<vmem>>, vector<1x16x128xf32>,
    %156 = vector.extract_strided_slice %103 {offsets = [208, 0], sizes = [16, 128], strides = [1, 1]} : vector<256x128xf32> to vector<16x128xf32>
    %c14_117 = arith.constant 14 : index
    %c1_118 = arith.constant 1 : index
    %c0_119 = arith.constant 0 : index
    %157 = vector.load %arg15[%c14_117, %c1_118, %c0_119] : memref<18x18x128xf32, #tpu.memory_space<vmem>>, vector<1x16x128xf32>
    %158 = vector.shape_cast %157 : vector<1x16x128xf32> to vector<16x128xf32>
    %159 = vector.shape_cast %156 : vector<16x128xf32> to vector<1x16x128xf32>
    tpu.vector_store %arg15[%c14_117, %c1_118, %c0_119], %159 {strides = array<i32>} : memref<18x18x128xf32, #tpu.memory_space<vmem>>, vector<1x16x128xf32>,
    %160 = vector.extract_strided_slice %103 {offsets = [224, 0], sizes = [16, 128], strides = [1, 1]} : vector<256x128xf32> to vector<16x128xf32>
    %c15_120 = arith.constant 15 : index
    %c1_121 = arith.constant 1 : index
    %c0_122 = arith.constant 0 : index
    %161 = vector.load %arg15[%c15_120, %c1_121, %c0_122] : memref<18x18x128xf32, #tpu.memory_space<vmem>>, vector<1x16x128xf32>
    %162 = vector.shape_cast %161 : vector<1x16x128xf32> to vector<16x128xf32>
    %163 = vector.shape_cast %160 : vector<16x128xf32> to vector<1x16x128xf32>
    tpu.vector_store %arg15[%c15_120, %c1_121, %c0_122], %163 {strides = array<i32>} : memref<18x18x128xf32, #tpu.memory_space<vmem>>, vector<1x16x128xf32>,
    %164 = vector.extract_strided_slice %103 {offsets = [240, 0], sizes = [16, 128], strides = [1, 1]} : vector<256x128xf32> to vector<16x128xf32>
    %c16_123 = arith.constant 16 : index
    %c1_124 = arith.constant 1 : index
    %c0_125 = arith.constant 0 : index
    %165 = vector.load %arg15[%c16_123, %c1_124, %c0_125] : memref<18x18x128xf32, #tpu.memory_space<vmem>>, vector<1x16x128xf32>
    %166 = vector.shape_cast %165 : vector<1x16x128xf32> to vector<16x128xf32>
    %167 = vector.shape_cast %164 : vector<16x128xf32> to vector<1x16x128xf32>
    tpu.vector_store %arg15[%c16_123, %c1_124, %c0_125], %167 {strides = array<i32>} : memref<18x18x128xf32, #tpu.memory_space<vmem>>, vector<1x16x128xf32>,
    %c0_126 = arith.constant 0 : index
    %c0_127 = arith.constant 0 : index
    %168 = vector.load %arg5[%c0_126, %c0_127] : memref<1x128xf32, #tpu.memory_space<vmem>>, vector<1x128xf32>
    %c0_128 = arith.constant 0 : index
    %c0_129 = arith.constant 0 : index
    %c0_130 = arith.constant 0 : index
    %169 = vector.load %arg15[%c0_128, %c0_129, %c0_130] : memref<18x18x128xf32, #tpu.memory_space<vmem>>, vector<16x16x128xf32>
    %170 = vector.shape_cast %169 : vector<16x16x128xf32> to vector<256x128xf32>
    %c0_131 = arith.constant 0 : index
    %c1_132 = arith.constant 1 : index
    %c0_133 = arith.constant 0 : index
    %171 = vector.load %arg15[%c0_131, %c1_132, %c0_133] : memref<18x18x128xf32, #tpu.memory_space<vmem>>, vector<16x16x128xf32>
    %172 = vector.shape_cast %171 : vector<16x16x128xf32> to vector<256x128xf32>
    %c0_134 = arith.constant 0 : index
    %c2_135 = arith.constant 2 : index
    %c0_136 = arith.constant 0 : index
    %173 = vector.load %arg15[%c0_134, %c2_135, %c0_136] : memref<18x18x128xf32, #tpu.memory_space<vmem>>, vector<16x16x128xf32>
    %174 = vector.shape_cast %173 : vector<16x16x128xf32> to vector<256x128xf32>
    %c1_137 = arith.constant 1 : index
    %c0_138 = arith.constant 0 : index
    %c0_139 = arith.constant 0 : index
    %175 = vector.load %arg15[%c1_137, %c0_138, %c0_139] : memref<18x18x128xf32, #tpu.memory_space<vmem>>, vector<16x16x128xf32>
    %176 = vector.shape_cast %175 : vector<16x16x128xf32> to vector<256x128xf32>
    %c1_140 = arith.constant 1 : index
    %c1_141 = arith.constant 1 : index
    %c0_142 = arith.constant 0 : index
    %177 = vector.load %arg15[%c1_140, %c1_141, %c0_142] : memref<18x18x128xf32, #tpu.memory_space<vmem>>, vector<16x16x128xf32>
    %178 = vector.shape_cast %177 : vector<16x16x128xf32> to vector<256x128xf32>
    %c1_143 = arith.constant 1 : index
    %c2_144 = arith.constant 2 : index
    %c0_145 = arith.constant 0 : index
    %179 = vector.load %arg15[%c1_143, %c2_144, %c0_145] : memref<18x18x128xf32, #tpu.memory_space<vmem>>, vector<16x16x128xf32>
    %180 = vector.shape_cast %179 : vector<16x16x128xf32> to vector<256x128xf32>
    %c2_146 = arith.constant 2 : index
    %c0_147 = arith.constant 0 : index
    %c0_148 = arith.constant 0 : index
    %181 = vector.load %arg15[%c2_146, %c0_147, %c0_148] : memref<18x18x128xf32, #tpu.memory_space<vmem>>, vector<16x16x128xf32>
    %182 = vector.shape_cast %181 : vector<16x16x128xf32> to vector<256x128xf32>
    %c2_149 = arith.constant 2 : index
    %c1_150 = arith.constant 1 : index
    %c0_151 = arith.constant 0 : index
    %183 = vector.load %arg15[%c2_149, %c1_150, %c0_151] : memref<18x18x128xf32, #tpu.memory_space<vmem>>, vector<16x16x128xf32>
    %184 = vector.shape_cast %183 : vector<16x16x128xf32> to vector<256x128xf32>
    %c2_152 = arith.constant 2 : index
    %c2_153 = arith.constant 2 : index
    %c0_154 = arith.constant 0 : index
    %185 = vector.load %arg15[%c2_152, %c2_153, %c0_154] : memref<18x18x128xf32, #tpu.memory_space<vmem>>, vector<16x16x128xf32>
    %186 = vector.shape_cast %185 : vector<16x16x128xf32> to vector<256x128xf32>
    %187 = tpu.concatenate %170, %172, %174, %176, %178, %180, %182, %184, %186 in 1 : vector<256x128xf32>, vector<256x128xf32>, vector<256x128xf32>, vector<256x128xf32>, vector<256x128xf32>, vector<256x128xf32>, vector<256x128xf32>, vector<256x128xf32>, vector<256x128xf32> -> vector<256x1152xf32>
    %c0_155 = arith.constant 0 : index
    %c0_156 = arith.constant 0 : index
    %188 = vector.load %arg4[%c0_155, %c0_156] : memref<1152x128xf32, #tpu.memory_space<vmem>>, vector<1152x128xf32>
    %cst_157 = arith.constant dense<0.000000e+00> : vector<256x128xf32>
    %189 = tpu.matmul %187, %188, %cst_157 {dimension_numbers = #tpu.dot_dimension_numbers<[1], [0], [0], [1], [0, 0, 1, 1], [], []>} : vector<256x1152xf32>, vector<1152x128xf32>, vector<256x128xf32> -> vector<256x128xf32>
    %190 = vector.broadcast %168 : vector<1x128xf32> to vector<256x128xf32>
    %191 = arith.addf %189, %190 : vector<256x128xf32>
    %cst_158 = arith.constant dense<0.000000e+00> : vector<128xf32>
    %192 = vector.multi_reduction <add>, %191, %cst_158 [0] : vector<256x128xf32> to vector<128xf32>
    %193 = vector.shape_cast %192 : vector<128xf32> to vector<1x128xf32>
    %cst_159 = arith.constant 3.906250e-03 : f32
    %194 = vector.broadcast %cst_159 : f32 to vector<1x128xf32>
    %195 = arith.mulf %193, %194 : vector<1x128xf32>
    %c0_160 = arith.constant 0 : index
    %c0_161 = arith.constant 0 : index
    %196 = vector.load %arg6[%c0_160, %c0_161] : memref<128x128xf32, #tpu.memory_space<vmem>>, vector<128x128xf32>
    %cst_162 = arith.constant dense<0.000000e+00> : vector<1x128xf32>
    %197 = tpu.matmul %195, %196, %cst_162 {dimension_numbers = #tpu.dot_dimension_numbers<[1], [0], [0], [1], [0, 0, 1, 1], [], []>} : vector<1x128xf32>, vector<128x128xf32>, vector<1x128xf32> -> vector<1x128xf32>
    %c0_163 = arith.constant 0 : index
    %c0_164 = arith.constant 0 : index
    %198 = vector.load %arg7[%c0_163, %c0_164] : memref<1x128xf32, #tpu.memory_space<vmem>>, vector<1x128xf32>
    %199 = arith.addf %197, %198 : vector<1x128xf32>
    %cst_165 = arith.constant 0.000000e+00 : f32
    %200 = vector.broadcast %cst_165 : f32 to vector<1x128xf32>
    %201 = arith.maximumf %199, %200 : vector<1x128xf32>
    %cst_166 = arith.constant 1.71285856 : f32
    %202 = vector.broadcast %cst_166 : f32 to vector<1x128xf32>
    %203 = arith.mulf %202, %201 : vector<1x128xf32>
    %c0_167 = arith.constant 0 : index
    %c0_168 = arith.constant 0 : index
    %204 = vector.load %arg8[%c0_167, %c0_168] : memref<128x128xf32, #tpu.memory_space<vmem>>, vector<128x128xf32>
    %cst_169 = arith.constant dense<0.000000e+00> : vector<1x128xf32>
    %205 = tpu.matmul %203, %204, %cst_169 {dimension_numbers = #tpu.dot_dimension_numbers<[1], [0], [0], [1], [0, 0, 1, 1], [], []>} : vector<1x128xf32>, vector<128x128xf32>, vector<1x128xf32> -> vector<1x128xf32>
    %c0_170 = arith.constant 0 : index
    %c0_171 = arith.constant 0 : index
    %206 = vector.load %arg9[%c0_170, %c0_171] : memref<1x128xf32, #tpu.memory_space<vmem>>, vector<1x128xf32>
    %207 = arith.addf %205, %206 : vector<1x128xf32>
    %208 = arith.negf %207 : vector<1x128xf32>
    %209 = math.exp %208 : vector<1x128xf32>
    %cst_172 = arith.constant 1.000000e+00 : f32
    %210 = vector.broadcast %cst_172 : f32 to vector<1x128xf32>
    %211 = arith.addf %210, %209 : vector<1x128xf32>
    %212 = arith.divf %210, %211 : vector<1x128xf32>
    %cst_173 = arith.constant 2.000000e+00 : f32
    %213 = vector.broadcast %cst_173 : f32 to vector<1x128xf32>
    %214 = arith.mulf %213, %212 : vector<1x128xf32>
    %c0_174 = arith.constant 0 : index
    %c0_175 = arith.constant 0 : index
    %215 = vector.load %arg10[%c0_174, %c0_175] : memref<1x1xf32, #tpu.memory_space<vmem>>, vector<1x1xf32>
    %216 = vector.broadcast %215 : vector<1x1xf32> to vector<1x128xf32>
    %217 = arith.mulf %214, %216 : vector<1x128xf32>
    %218 = vector.broadcast %217 : vector<1x128xf32> to vector<256x128xf32>
    %219 = arith.mulf %191, %218 : vector<256x128xf32>
    %c0_176 = arith.constant 0 : index
    %c0_177 = arith.constant 0 : index
    %220 = vector.load %arg11[%c0_176, %c0_177] : memref<128x128xf32, #tpu.memory_space<vmem>>, vector<128x128xf32>
    %cst_178 = arith.constant dense<0.000000e+00> : vector<256x128xf32>
    %221 = tpu.matmul %1, %220, %cst_178 {dimension_numbers = #tpu.dot_dimension_numbers<[1], [0], [0], [1], [0, 0, 1, 1], [], []>} : vector<256x128xf32>, vector<128x128xf32>, vector<256x128xf32> -> vector<256x128xf32>
    %c0_179 = arith.constant 0 : index
    %c0_180 = arith.constant 0 : index
    %222 = vector.load %arg12[%c0_179, %c0_180] : memref<1x128xf32, #tpu.memory_space<vmem>>, vector<1x128xf32>
    %223 = vector.broadcast %222 : vector<1x128xf32> to vector<256x128xf32>
    %224 = arith.addf %221, %223 : vector<256x128xf32>
    %225 = arith.addf %219, %224 : vector<256x128xf32>
    %c0_181 = arith.constant 0 : index
    %c0_182 = arith.constant 0 : index
    %c0_183 = arith.constant 0 : index
    %226 = vector.load %arg13[%c0_181, %c0_182, %c0_183] : memref<1x256x128xf32, #tpu.memory_space<vmem>>, vector<1x256x128xf32>
    %227 = vector.shape_cast %226 : vector<1x256x128xf32> to vector<256x128xf32>
    %228 = vector.shape_cast %225 : vector<256x128xf32> to vector<1x256x128xf32>
    tpu.vector_store %arg13[%c0_181, %c0_182, %c0_183], %228 {strides = array<i32>} : memref<1x256x128xf32, #tpu.memory_space<vmem>>, vector<1x256x128xf32>,
    return
  }
  func.func @transform_0(%arg0: i32) -> (i32, i32, i32) {
    %c0_i32 = arith.constant 0 : i32
    %c0_i32_0 = arith.constant 0 : i32
    %c0_i32_1 = arith.constant 0 : i32
    return %arg0, %c0_i32, %c0_i32_0 : i32, i32, i32
  }
  func.func @transform_1(%arg0: i32) -> (i32, i32) {
    %c0_i32 = arith.constant 0 : i32
    %c0_i32_0 = arith.constant 0 : i32
    %c0_i32_1 = arith.constant 0 : i32
    return %c0_i32, %c0_i32_0 : i32, i32
  }
  func.func @transform_2(%arg0: i32) -> (i32, i32) {
    %c0_i32 = arith.constant 0 : i32
    %c0_i32_0 = arith.constant 0 : i32
    %c0_i32_1 = arith.constant 0 : i32
    return %c0_i32, %c0_i32_0 : i32, i32
  }
  func.func @transform_3(%arg0: i32) -> (i32, i32) {
    %c0_i32 = arith.constant 0 : i32
    %c0_i32_0 = arith.constant 0 : i32
    %c0_i32_1 = arith.constant 0 : i32
    return %c0_i32, %c0_i32_0 : i32, i32
  }
  func.func @transform_4(%arg0: i32) -> (i32, i32) {
    %c0_i32 = arith.constant 0 : i32
    %c0_i32_0 = arith.constant 0 : i32
    %c0_i32_1 = arith.constant 0 : i32
    return %c0_i32, %c0_i32_0 : i32, i32
  }
  func.func @transform_5(%arg0: i32) -> (i32, i32) {
    %c0_i32 = arith.constant 0 : i32
    %c0_i32_0 = arith.constant 0 : i32
    %c0_i32_1 = arith.constant 0 : i32
    return %c0_i32, %c0_i32_0 : i32, i32
  }
  func.func @transform_6(%arg0: i32) -> (i32, i32) {
    %c0_i32 = arith.constant 0 : i32
    %c0_i32_0 = arith.constant 0 : i32
    %c0_i32_1 = arith.constant 0 : i32
    return %c0_i32, %c0_i32_0 : i32, i32
  }
  func.func @transform_7(%arg0: i32) -> (i32, i32) {
    %c0_i32 = arith.constant 0 : i32
    %c0_i32_0 = arith.constant 0 : i32
    %c0_i32_1 = arith.constant 0 : i32
    return %c0_i32, %c0_i32_0 : i32, i32
  }
  func.func @transform_8(%arg0: i32) -> (i32, i32) {
    %c0_i32 = arith.constant 0 : i32
    %c0_i32_0 = arith.constant 0 : i32
    %c0_i32_1 = arith.constant 0 : i32
    return %c0_i32, %c0_i32_0 : i32, i32
  }
  func.func @transform_9(%arg0: i32) -> (i32, i32) {
    %c0_i32 = arith.constant 0 : i32
    %c0_i32_0 = arith.constant 0 : i32
    %c0_i32_1 = arith.constant 0 : i32
    return %c0_i32, %c0_i32_0 : i32, i32
  }
  func.func @transform_10(%arg0: i32) -> (i32, i32) {
    %c0_i32 = arith.constant 0 : i32
    %c0_i32_0 = arith.constant 0 : i32
    %c0_i32_1 = arith.constant 0 : i32
    return %c0_i32, %c0_i32_0 : i32, i32
  }
  func.func @transform_11(%arg0: i32) -> (i32, i32) {
    %c0_i32 = arith.constant 0 : i32
    %c0_i32_0 = arith.constant 0 : i32
    %c0_i32_1 = arith.constant 0 : i32
    return %c0_i32, %c0_i32_0 : i32, i32
  }
  func.func @transform_12(%arg0: i32) -> (i32, i32, i32) {
    %c0_i32 = arith.constant 0 : i32
    %c0_i32_0 = arith.constant 0 : i32
    %c0_i32_1 = arith.constant 0 : i32
    return %arg0, %c0_i32, %c0_i32_0 : i32, i32, i32
  }
}

module attributes {stable_mosaic.version = 11 : i64} {
  func.func @nf_block_id_kernel(%arg0: i32, %arg1: memref<1x256x128xf32, #tpu.memory_space<vmem>>, %arg2: memref<1152x128xf32, #tpu.memory_space<vmem>>, %arg3: memref<1x128xf32, #tpu.memory_space<vmem>>, %arg4: memref<1152x128xf32, #tpu.memory_space<vmem>>, %arg5: memref<1x128xf32, #tpu.memory_space<vmem>>, %arg6: memref<128x128xf32, #tpu.memory_space<vmem>>, %arg7: memref<1x128xf32, #tpu.memory_space<vmem>>, %arg8: memref<128x128xf32, #tpu.memory_space<vmem>>, %arg9: memref<1x128xf32, #tpu.memory_space<vmem>>, %arg10: memref<1x1xf32, #tpu.memory_space<vmem>>, %arg11: memref<1x256x128xf32, #tpu.memory_space<vmem>>, %arg12: memref<18x18x128xf32, #tpu.memory_space<vmem>>, %arg13: memref<18x18x128xf32, #tpu.memory_space<vmem>>) attributes {dimension_semantics = [#tpu.dimension_semantics<parallel>], iteration_bounds = array<i64: 2>, scalar_prefetch = 0 : i64, scratch_operands = 2 : i64, tpu.core_type = #tpu.core_type<tc>, window_params = [{transform_indices = @transform_0, window_bounds = array<i64: 1, 256, 128>}, {pipeline_mode = #tpu.pipeline_mode<synchronous>, transform_indices = @transform_1, window_bounds = array<i64: 1152, 128>}, {pipeline_mode = #tpu.pipeline_mode<synchronous>, transform_indices = @transform_2, window_bounds = array<i64: 1, 128>}, {pipeline_mode = #tpu.pipeline_mode<synchronous>, transform_indices = @transform_3, window_bounds = array<i64: 1152, 128>}, {pipeline_mode = #tpu.pipeline_mode<synchronous>, transform_indices = @transform_4, window_bounds = array<i64: 1, 128>}, {pipeline_mode = #tpu.pipeline_mode<synchronous>, transform_indices = @transform_5, window_bounds = array<i64: 128, 128>}, {pipeline_mode = #tpu.pipeline_mode<synchronous>, transform_indices = @transform_6, window_bounds = array<i64: 1, 128>}, {pipeline_mode = #tpu.pipeline_mode<synchronous>, transform_indices = @transform_7, window_bounds = array<i64: 128, 128>}, {pipeline_mode = #tpu.pipeline_mode<synchronous>, transform_indices = @transform_8, window_bounds = array<i64: 1, 128>}, {pipeline_mode = #tpu.pipeline_mode<synchronous>, transform_indices = @transform_9, window_bounds = array<i64: 1, 1>}, {transform_indices = @transform_10, window_bounds = array<i64: 1, 256, 128>}]} {
    %c0 = arith.constant 0 : index
    %c0_0 = arith.constant 0 : index
    %c0_1 = arith.constant 0 : index
    %0 = vector.load %arg1[%c0, %c0_0, %c0_1] : memref<1x256x128xf32, #tpu.memory_space<vmem>>, vector<1x256x128xf32>
    %1 = vector.shape_cast %0 : vector<1x256x128xf32> to vector<256x128xf32>
    %cst = arith.constant 0.000000e+00 : f32
    %2 = vector.broadcast %cst : f32 to vector<18x18x128xf32>
    %c0_2 = arith.constant 0 : index
    %c0_3 = arith.constant 0 : index
    %c0_4 = arith.constant 0 : index
    %3 = vector.load %arg12[%c0_2, %c0_3, %c0_4] : memref<18x18x128xf32, #tpu.memory_space<vmem>>, vector<18x18x128xf32>
    tpu.vector_store %arg12[%c0_2, %c0_3, %c0_4], %2 {strides = array<i32>} : memref<18x18x128xf32, #tpu.memory_space<vmem>>, vector<18x18x128xf32>,
    %cst_5 = arith.constant 0.980580687 : f32
    %4 = vector.broadcast %cst_5 : f32 to vector<256x128xf32>
    %5 = arith.mulf %1, %4 : vector<256x128xf32>
    %cst_6 = arith.constant 0.000000e+00 : f32
    %6 = vector.broadcast %cst_6 : f32 to vector<256x128xf32>
    %7 = arith.maximumf %5, %6 : vector<256x128xf32>
    %cst_7 = arith.constant 1.71285856 : f32
    %8 = vector.broadcast %cst_7 : f32 to vector<256x128xf32>
    %9 = arith.mulf %8, %7 : vector<256x128xf32>
    %10 = vector.extract_strided_slice %9 {offsets = [0, 0], sizes = [16, 128], strides = [1, 1]} : vector<256x128xf32> to vector<16x128xf32>
    %c1 = arith.constant 1 : index
    %c1_8 = arith.constant 1 : index
    %c0_9 = arith.constant 0 : index
    %11 = vector.load %arg12[%c1, %c1_8, %c0_9] : memref<18x18x128xf32, #tpu.memory_space<vmem>>, vector<1x16x128xf32>
    %12 = vector.shape_cast %11 : vector<1x16x128xf32> to vector<16x128xf32>
    %13 = vector.shape_cast %10 : vector<16x128xf32> to vector<1x16x128xf32>
    tpu.vector_store %arg12[%c1, %c1_8, %c0_9], %13 {strides = array<i32>} : memref<18x18x128xf32, #tpu.memory_space<vmem>>, vector<1x16x128xf32>,
    %14 = vector.extract_strided_slice %9 {offsets = [16, 0], sizes = [16, 128], strides = [1, 1]} : vector<256x128xf32> to vector<16x128xf32>
    %c2 = arith.constant 2 : index
    %c1_10 = arith.constant 1 : index
    %c0_11 = arith.constant 0 : index
    %15 = vector.load %arg12[%c2, %c1_10, %c0_11] : memref<18x18x128xf32, #tpu.memory_space<vmem>>, vector<1x16x128xf32>
    %16 = vector.shape_cast %15 : vector<1x16x128xf32> to vector<16x128xf32>
    %17 = vector.shape_cast %14 : vector<16x128xf32> to vector<1x16x128xf32>
    tpu.vector_store %arg12[%c2, %c1_10, %c0_11], %17 {strides = array<i32>} : memref<18x18x128xf32, #tpu.memory_space<vmem>>, vector<1x16x128xf32>,
    %18 = vector.extract_strided_slice %9 {offsets = [32, 0], sizes = [16, 128], strides = [1, 1]} : vector<256x128xf32> to vector<16x128xf32>
    %c3 = arith.constant 3 : index
    %c1_12 = arith.constant 1 : index
    %c0_13 = arith.constant 0 : index
    %19 = vector.load %arg12[%c3, %c1_12, %c0_13] : memref<18x18x128xf32, #tpu.memory_space<vmem>>, vector<1x16x128xf32>
    %20 = vector.shape_cast %19 : vector<1x16x128xf32> to vector<16x128xf32>
    %21 = vector.shape_cast %18 : vector<16x128xf32> to vector<1x16x128xf32>
    tpu.vector_store %arg12[%c3, %c1_12, %c0_13], %21 {strides = array<i32>} : memref<18x18x128xf32, #tpu.memory_space<vmem>>, vector<1x16x128xf32>,
    %22 = vector.extract_strided_slice %9 {offsets = [48, 0], sizes = [16, 128], strides = [1, 1]} : vector<256x128xf32> to vector<16x128xf32>
    %c4 = arith.constant 4 : index
    %c1_14 = arith.constant 1 : index
    %c0_15 = arith.constant 0 : index
    %23 = vector.load %arg12[%c4, %c1_14, %c0_15] : memref<18x18x128xf32, #tpu.memory_space<vmem>>, vector<1x16x128xf32>
    %24 = vector.shape_cast %23 : vector<1x16x128xf32> to vector<16x128xf32>
    %25 = vector.shape_cast %22 : vector<16x128xf32> to vector<1x16x128xf32>
    tpu.vector_store %arg12[%c4, %c1_14, %c0_15], %25 {strides = array<i32>} : memref<18x18x128xf32, #tpu.memory_space<vmem>>, vector<1x16x128xf32>,
    %26 = vector.extract_strided_slice %9 {offsets = [64, 0], sizes = [16, 128], strides = [1, 1]} : vector<256x128xf32> to vector<16x128xf32>
    %c5 = arith.constant 5 : index
    %c1_16 = arith.constant 1 : index
    %c0_17 = arith.constant 0 : index
    %27 = vector.load %arg12[%c5, %c1_16, %c0_17] : memref<18x18x128xf32, #tpu.memory_space<vmem>>, vector<1x16x128xf32>
    %28 = vector.shape_cast %27 : vector<1x16x128xf32> to vector<16x128xf32>
    %29 = vector.shape_cast %26 : vector<16x128xf32> to vector<1x16x128xf32>
    tpu.vector_store %arg12[%c5, %c1_16, %c0_17], %29 {strides = array<i32>} : memref<18x18x128xf32, #tpu.memory_space<vmem>>, vector<1x16x128xf32>,
    %30 = vector.extract_strided_slice %9 {offsets = [80, 0], sizes = [16, 128], strides = [1, 1]} : vector<256x128xf32> to vector<16x128xf32>
    %c6 = arith.constant 6 : index
    %c1_18 = arith.constant 1 : index
    %c0_19 = arith.constant 0 : index
    %31 = vector.load %arg12[%c6, %c1_18, %c0_19] : memref<18x18x128xf32, #tpu.memory_space<vmem>>, vector<1x16x128xf32>
    %32 = vector.shape_cast %31 : vector<1x16x128xf32> to vector<16x128xf32>
    %33 = vector.shape_cast %30 : vector<16x128xf32> to vector<1x16x128xf32>
    tpu.vector_store %arg12[%c6, %c1_18, %c0_19], %33 {strides = array<i32>} : memref<18x18x128xf32, #tpu.memory_space<vmem>>, vector<1x16x128xf32>,
    %34 = vector.extract_strided_slice %9 {offsets = [96, 0], sizes = [16, 128], strides = [1, 1]} : vector<256x128xf32> to vector<16x128xf32>
    %c7 = arith.constant 7 : index
    %c1_20 = arith.constant 1 : index
    %c0_21 = arith.constant 0 : index
    %35 = vector.load %arg12[%c7, %c1_20, %c0_21] : memref<18x18x128xf32, #tpu.memory_space<vmem>>, vector<1x16x128xf32>
    %36 = vector.shape_cast %35 : vector<1x16x128xf32> to vector<16x128xf32>
    %37 = vector.shape_cast %34 : vector<16x128xf32> to vector<1x16x128xf32>
    tpu.vector_store %arg12[%c7, %c1_20, %c0_21], %37 {strides = array<i32>} : memref<18x18x128xf32, #tpu.memory_space<vmem>>, vector<1x16x128xf32>,
    %38 = vector.extract_strided_slice %9 {offsets = [112, 0], sizes = [16, 128], strides = [1, 1]} : vector<256x128xf32> to vector<16x128xf32>
    %c8 = arith.constant 8 : index
    %c1_22 = arith.constant 1 : index
    %c0_23 = arith.constant 0 : index
    %39 = vector.load %arg12[%c8, %c1_22, %c0_23] : memref<18x18x128xf32, #tpu.memory_space<vmem>>, vector<1x16x128xf32>
    %40 = vector.shape_cast %39 : vector<1x16x128xf32> to vector<16x128xf32>
    %41 = vector.shape_cast %38 : vector<16x128xf32> to vector<1x16x128xf32>
    tpu.vector_store %arg12[%c8, %c1_22, %c0_23], %41 {strides = array<i32>} : memref<18x18x128xf32, #tpu.memory_space<vmem>>, vector<1x16x128xf32>,
    %42 = vector.extract_strided_slice %9 {offsets = [128, 0], sizes = [16, 128], strides = [1, 1]} : vector<256x128xf32> to vector<16x128xf32>
    %c9 = arith.constant 9 : index
    %c1_24 = arith.constant 1 : index
    %c0_25 = arith.constant 0 : index
    %43 = vector.load %arg12[%c9, %c1_24, %c0_25] : memref<18x18x128xf32, #tpu.memory_space<vmem>>, vector<1x16x128xf32>
    %44 = vector.shape_cast %43 : vector<1x16x128xf32> to vector<16x128xf32>
    %45 = vector.shape_cast %42 : vector<16x128xf32> to vector<1x16x128xf32>
    tpu.vector_store %arg12[%c9, %c1_24, %c0_25], %45 {strides = array<i32>} : memref<18x18x128xf32, #tpu.memory_space<vmem>>, vector<1x16x128xf32>,
    %46 = vector.extract_strided_slice %9 {offsets = [144, 0], sizes = [16, 128], strides = [1, 1]} : vector<256x128xf32> to vector<16x128xf32>
    %c10 = arith.constant 10 : index
    %c1_26 = arith.constant 1 : index
    %c0_27 = arith.constant 0 : index
    %47 = vector.load %arg12[%c10, %c1_26, %c0_27] : memref<18x18x128xf32, #tpu.memory_space<vmem>>, vector<1x16x128xf32>
    %48 = vector.shape_cast %47 : vector<1x16x128xf32> to vector<16x128xf32>
    %49 = vector.shape_cast %46 : vector<16x128xf32> to vector<1x16x128xf32>
    tpu.vector_store %arg12[%c10, %c1_26, %c0_27], %49 {strides = array<i32>} : memref<18x18x128xf32, #tpu.memory_space<vmem>>, vector<1x16x128xf32>,
    %50 = vector.extract_strided_slice %9 {offsets = [160, 0], sizes = [16, 128], strides = [1, 1]} : vector<256x128xf32> to vector<16x128xf32>
    %c11 = arith.constant 11 : index
    %c1_28 = arith.constant 1 : index
    %c0_29 = arith.constant 0 : index
    %51 = vector.load %arg12[%c11, %c1_28, %c0_29] : memref<18x18x128xf32, #tpu.memory_space<vmem>>, vector<1x16x128xf32>
    %52 = vector.shape_cast %51 : vector<1x16x128xf32> to vector<16x128xf32>
    %53 = vector.shape_cast %50 : vector<16x128xf32> to vector<1x16x128xf32>
    tpu.vector_store %arg12[%c11, %c1_28, %c0_29], %53 {strides = array<i32>} : memref<18x18x128xf32, #tpu.memory_space<vmem>>, vector<1x16x128xf32>,
    %54 = vector.extract_strided_slice %9 {offsets = [176, 0], sizes = [16, 128], strides = [1, 1]} : vector<256x128xf32> to vector<16x128xf32>
    %c12 = arith.constant 12 : index
    %c1_30 = arith.constant 1 : index
    %c0_31 = arith.constant 0 : index
    %55 = vector.load %arg12[%c12, %c1_30, %c0_31] : memref<18x18x128xf32, #tpu.memory_space<vmem>>, vector<1x16x128xf32>
    %56 = vector.shape_cast %55 : vector<1x16x128xf32> to vector<16x128xf32>
    %57 = vector.shape_cast %54 : vector<16x128xf32> to vector<1x16x128xf32>
    tpu.vector_store %arg12[%c12, %c1_30, %c0_31], %57 {strides = array<i32>} : memref<18x18x128xf32, #tpu.memory_space<vmem>>, vector<1x16x128xf32>,
    %58 = vector.extract_strided_slice %9 {offsets = [192, 0], sizes = [16, 128], strides = [1, 1]} : vector<256x128xf32> to vector<16x128xf32>
    %c13 = arith.constant 13 : index
    %c1_32 = arith.constant 1 : index
    %c0_33 = arith.constant 0 : index
    %59 = vector.load %arg12[%c13, %c1_32, %c0_33] : memref<18x18x128xf32, #tpu.memory_space<vmem>>, vector<1x16x128xf32>
    %60 = vector.shape_cast %59 : vector<1x16x128xf32> to vector<16x128xf32>
    %61 = vector.shape_cast %58 : vector<16x128xf32> to vector<1x16x128xf32>
    tpu.vector_store %arg12[%c13, %c1_32, %c0_33], %61 {strides = array<i32>} : memref<18x18x128xf32, #tpu.memory_space<vmem>>, vector<1x16x128xf32>,
    %62 = vector.extract_strided_slice %9 {offsets = [208, 0], sizes = [16, 128], strides = [1, 1]} : vector<256x128xf32> to vector<16x128xf32>
    %c14 = arith.constant 14 : index
    %c1_34 = arith.constant 1 : index
    %c0_35 = arith.constant 0 : index
    %63 = vector.load %arg12[%c14, %c1_34, %c0_35] : memref<18x18x128xf32, #tpu.memory_space<vmem>>, vector<1x16x128xf32>
    %64 = vector.shape_cast %63 : vector<1x16x128xf32> to vector<16x128xf32>
    %65 = vector.shape_cast %62 : vector<16x128xf32> to vector<1x16x128xf32>
    tpu.vector_store %arg12[%c14, %c1_34, %c0_35], %65 {strides = array<i32>} : memref<18x18x128xf32, #tpu.memory_space<vmem>>, vector<1x16x128xf32>,
    %66 = vector.extract_strided_slice %9 {offsets = [224, 0], sizes = [16, 128], strides = [1, 1]} : vector<256x128xf32> to vector<16x128xf32>
    %c15 = arith.constant 15 : index
    %c1_36 = arith.constant 1 : index
    %c0_37 = arith.constant 0 : index
    %67 = vector.load %arg12[%c15, %c1_36, %c0_37] : memref<18x18x128xf32, #tpu.memory_space<vmem>>, vector<1x16x128xf32>
    %68 = vector.shape_cast %67 : vector<1x16x128xf32> to vector<16x128xf32>
    %69 = vector.shape_cast %66 : vector<16x128xf32> to vector<1x16x128xf32>
    tpu.vector_store %arg12[%c15, %c1_36, %c0_37], %69 {strides = array<i32>} : memref<18x18x128xf32, #tpu.memory_space<vmem>>, vector<1x16x128xf32>,
    %70 = vector.extract_strided_slice %9 {offsets = [240, 0], sizes = [16, 128], strides = [1, 1]} : vector<256x128xf32> to vector<16x128xf32>
    %c16 = arith.constant 16 : index
    %c1_38 = arith.constant 1 : index
    %c0_39 = arith.constant 0 : index
    %71 = vector.load %arg12[%c16, %c1_38, %c0_39] : memref<18x18x128xf32, #tpu.memory_space<vmem>>, vector<1x16x128xf32>
    %72 = vector.shape_cast %71 : vector<1x16x128xf32> to vector<16x128xf32>
    %73 = vector.shape_cast %70 : vector<16x128xf32> to vector<1x16x128xf32>
    tpu.vector_store %arg12[%c16, %c1_38, %c0_39], %73 {strides = array<i32>} : memref<18x18x128xf32, #tpu.memory_space<vmem>>, vector<1x16x128xf32>,
    %c0_40 = arith.constant 0 : index
    %c0_41 = arith.constant 0 : index
    %74 = vector.load %arg3[%c0_40, %c0_41] : memref<1x128xf32, #tpu.memory_space<vmem>>, vector<1x128xf32>
    %c0_42 = arith.constant 0 : index
    %c0_43 = arith.constant 0 : index
    %c0_44 = arith.constant 0 : index
    %75 = vector.load %arg12[%c0_42, %c0_43, %c0_44] : memref<18x18x128xf32, #tpu.memory_space<vmem>>, vector<16x16x128xf32>
    %76 = vector.shape_cast %75 : vector<16x16x128xf32> to vector<256x128xf32>
    %c0_45 = arith.constant 0 : index
    %c1_46 = arith.constant 1 : index
    %c0_47 = arith.constant 0 : index
    %77 = vector.load %arg12[%c0_45, %c1_46, %c0_47] : memref<18x18x128xf32, #tpu.memory_space<vmem>>, vector<16x16x128xf32>
    %78 = vector.shape_cast %77 : vector<16x16x128xf32> to vector<256x128xf32>
    %c0_48 = arith.constant 0 : index
    %c2_49 = arith.constant 2 : index
    %c0_50 = arith.constant 0 : index
    %79 = vector.load %arg12[%c0_48, %c2_49, %c0_50] : memref<18x18x128xf32, #tpu.memory_space<vmem>>, vector<16x16x128xf32>
    %80 = vector.shape_cast %79 : vector<16x16x128xf32> to vector<256x128xf32>
    %c1_51 = arith.constant 1 : index
    %c0_52 = arith.constant 0 : index
    %c0_53 = arith.constant 0 : index
    %81 = vector.load %arg12[%c1_51, %c0_52, %c0_53] : memref<18x18x128xf32, #tpu.memory_space<vmem>>, vector<16x16x128xf32>
    %82 = vector.shape_cast %81 : vector<16x16x128xf32> to vector<256x128xf32>
    %c1_54 = arith.constant 1 : index
    %c1_55 = arith.constant 1 : index
    %c0_56 = arith.constant 0 : index
    %83 = vector.load %arg12[%c1_54, %c1_55, %c0_56] : memref<18x18x128xf32, #tpu.memory_space<vmem>>, vector<16x16x128xf32>
    %84 = vector.shape_cast %83 : vector<16x16x128xf32> to vector<256x128xf32>
    %c1_57 = arith.constant 1 : index
    %c2_58 = arith.constant 2 : index
    %c0_59 = arith.constant 0 : index
    %85 = vector.load %arg12[%c1_57, %c2_58, %c0_59] : memref<18x18x128xf32, #tpu.memory_space<vmem>>, vector<16x16x128xf32>
    %86 = vector.shape_cast %85 : vector<16x16x128xf32> to vector<256x128xf32>
    %c2_60 = arith.constant 2 : index
    %c0_61 = arith.constant 0 : index
    %c0_62 = arith.constant 0 : index
    %87 = vector.load %arg12[%c2_60, %c0_61, %c0_62] : memref<18x18x128xf32, #tpu.memory_space<vmem>>, vector<16x16x128xf32>
    %88 = vector.shape_cast %87 : vector<16x16x128xf32> to vector<256x128xf32>
    %c2_63 = arith.constant 2 : index
    %c1_64 = arith.constant 1 : index
    %c0_65 = arith.constant 0 : index
    %89 = vector.load %arg12[%c2_63, %c1_64, %c0_65] : memref<18x18x128xf32, #tpu.memory_space<vmem>>, vector<16x16x128xf32>
    %90 = vector.shape_cast %89 : vector<16x16x128xf32> to vector<256x128xf32>
    %c2_66 = arith.constant 2 : index
    %c2_67 = arith.constant 2 : index
    %c0_68 = arith.constant 0 : index
    %91 = vector.load %arg12[%c2_66, %c2_67, %c0_68] : memref<18x18x128xf32, #tpu.memory_space<vmem>>, vector<16x16x128xf32>
    %92 = vector.shape_cast %91 : vector<16x16x128xf32> to vector<256x128xf32>
    %93 = tpu.concatenate %76, %78, %80, %82, %84, %86, %88, %90, %92 in 1 : vector<256x128xf32>, vector<256x128xf32>, vector<256x128xf32>, vector<256x128xf32>, vector<256x128xf32>, vector<256x128xf32>, vector<256x128xf32>, vector<256x128xf32>, vector<256x128xf32> -> vector<256x1152xf32>
    %c0_69 = arith.constant 0 : index
    %c0_70 = arith.constant 0 : index
    %94 = vector.load %arg2[%c0_69, %c0_70] : memref<1152x128xf32, #tpu.memory_space<vmem>>, vector<1152x128xf32>
    %cst_71 = arith.constant dense<0.000000e+00> : vector<256x128xf32>
    %95 = tpu.matmul %93, %94, %cst_71 {dimension_numbers = #tpu.dot_dimension_numbers<[1], [0], [0], [1], [0, 0, 1, 1], [], []>} : vector<256x1152xf32>, vector<1152x128xf32>, vector<256x128xf32> -> vector<256x128xf32>
    %96 = vector.broadcast %74 : vector<1x128xf32> to vector<256x128xf32>
    %97 = arith.addf %95, %96 : vector<256x128xf32>
    %cst_72 = arith.constant 0.000000e+00 : f32
    %98 = vector.broadcast %cst_72 : f32 to vector<18x18x128xf32>
    %c0_73 = arith.constant 0 : index
    %c0_74 = arith.constant 0 : index
    %c0_75 = arith.constant 0 : index
    %99 = vector.load %arg13[%c0_73, %c0_74, %c0_75] : memref<18x18x128xf32, #tpu.memory_space<vmem>>, vector<18x18x128xf32>
    tpu.vector_store %arg13[%c0_73, %c0_74, %c0_75], %98 {strides = array<i32>} : memref<18x18x128xf32, #tpu.memory_space<vmem>>, vector<18x18x128xf32>,
    %cst_76 = arith.constant 0.000000e+00 : f32
    %100 = vector.broadcast %cst_76 : f32 to vector<256x128xf32>
    %101 = arith.maximumf %97, %100 : vector<256x128xf32>
    %cst_77 = arith.constant 1.71285856 : f32
    %102 = vector.broadcast %cst_77 : f32 to vector<256x128xf32>
    %103 = arith.mulf %102, %101 : vector<256x128xf32>
    %104 = vector.extract_strided_slice %103 {offsets = [0, 0], sizes = [16, 128], strides = [1, 1]} : vector<256x128xf32> to vector<16x128xf32>
    %c1_78 = arith.constant 1 : index
    %c1_79 = arith.constant 1 : index
    %c0_80 = arith.constant 0 : index
    %105 = vector.load %arg13[%c1_78, %c1_79, %c0_80] : memref<18x18x128xf32, #tpu.memory_space<vmem>>, vector<1x16x128xf32>
    %106 = vector.shape_cast %105 : vector<1x16x128xf32> to vector<16x128xf32>
    %107 = vector.shape_cast %104 : vector<16x128xf32> to vector<1x16x128xf32>
    tpu.vector_store %arg13[%c1_78, %c1_79, %c0_80], %107 {strides = array<i32>} : memref<18x18x128xf32, #tpu.memory_space<vmem>>, vector<1x16x128xf32>,
    %108 = vector.extract_strided_slice %103 {offsets = [16, 0], sizes = [16, 128], strides = [1, 1]} : vector<256x128xf32> to vector<16x128xf32>
    %c2_81 = arith.constant 2 : index
    %c1_82 = arith.constant 1 : index
    %c0_83 = arith.constant 0 : index
    %109 = vector.load %arg13[%c2_81, %c1_82, %c0_83] : memref<18x18x128xf32, #tpu.memory_space<vmem>>, vector<1x16x128xf32>
    %110 = vector.shape_cast %109 : vector<1x16x128xf32> to vector<16x128xf32>
    %111 = vector.shape_cast %108 : vector<16x128xf32> to vector<1x16x128xf32>
    tpu.vector_store %arg13[%c2_81, %c1_82, %c0_83], %111 {strides = array<i32>} : memref<18x18x128xf32, #tpu.memory_space<vmem>>, vector<1x16x128xf32>,
    %112 = vector.extract_strided_slice %103 {offsets = [32, 0], sizes = [16, 128], strides = [1, 1]} : vector<256x128xf32> to vector<16x128xf32>
    %c3_84 = arith.constant 3 : index
    %c1_85 = arith.constant 1 : index
    %c0_86 = arith.constant 0 : index
    %113 = vector.load %arg13[%c3_84, %c1_85, %c0_86] : memref<18x18x128xf32, #tpu.memory_space<vmem>>, vector<1x16x128xf32>
    %114 = vector.shape_cast %113 : vector<1x16x128xf32> to vector<16x128xf32>
    %115 = vector.shape_cast %112 : vector<16x128xf32> to vector<1x16x128xf32>
    tpu.vector_store %arg13[%c3_84, %c1_85, %c0_86], %115 {strides = array<i32>} : memref<18x18x128xf32, #tpu.memory_space<vmem>>, vector<1x16x128xf32>,
    %116 = vector.extract_strided_slice %103 {offsets = [48, 0], sizes = [16, 128], strides = [1, 1]} : vector<256x128xf32> to vector<16x128xf32>
    %c4_87 = arith.constant 4 : index
    %c1_88 = arith.constant 1 : index
    %c0_89 = arith.constant 0 : index
    %117 = vector.load %arg13[%c4_87, %c1_88, %c0_89] : memref<18x18x128xf32, #tpu.memory_space<vmem>>, vector<1x16x128xf32>
    %118 = vector.shape_cast %117 : vector<1x16x128xf32> to vector<16x128xf32>
    %119 = vector.shape_cast %116 : vector<16x128xf32> to vector<1x16x128xf32>
    tpu.vector_store %arg13[%c4_87, %c1_88, %c0_89], %119 {strides = array<i32>} : memref<18x18x128xf32, #tpu.memory_space<vmem>>, vector<1x16x128xf32>,
    %120 = vector.extract_strided_slice %103 {offsets = [64, 0], sizes = [16, 128], strides = [1, 1]} : vector<256x128xf32> to vector<16x128xf32>
    %c5_90 = arith.constant 5 : index
    %c1_91 = arith.constant 1 : index
    %c0_92 = arith.constant 0 : index
    %121 = vector.load %arg13[%c5_90, %c1_91, %c0_92] : memref<18x18x128xf32, #tpu.memory_space<vmem>>, vector<1x16x128xf32>
    %122 = vector.shape_cast %121 : vector<1x16x128xf32> to vector<16x128xf32>
    %123 = vector.shape_cast %120 : vector<16x128xf32> to vector<1x16x128xf32>
    tpu.vector_store %arg13[%c5_90, %c1_91, %c0_92], %123 {strides = array<i32>} : memref<18x18x128xf32, #tpu.memory_space<vmem>>, vector<1x16x128xf32>,
    %124 = vector.extract_strided_slice %103 {offsets = [80, 0], sizes = [16, 128], strides = [1, 1]} : vector<256x128xf32> to vector<16x128xf32>
    %c6_93 = arith.constant 6 : index
    %c1_94 = arith.constant 1 : index
    %c0_95 = arith.constant 0 : index
    %125 = vector.load %arg13[%c6_93, %c1_94, %c0_95] : memref<18x18x128xf32, #tpu.memory_space<vmem>>, vector<1x16x128xf32>
    %126 = vector.shape_cast %125 : vector<1x16x128xf32> to vector<16x128xf32>
    %127 = vector.shape_cast %124 : vector<16x128xf32> to vector<1x16x128xf32>
    tpu.vector_store %arg13[%c6_93, %c1_94, %c0_95], %127 {strides = array<i32>} : memref<18x18x128xf32, #tpu.memory_space<vmem>>, vector<1x16x128xf32>,
    %128 = vector.extract_strided_slice %103 {offsets = [96, 0], sizes = [16, 128], strides = [1, 1]} : vector<256x128xf32> to vector<16x128xf32>
    %c7_96 = arith.constant 7 : index
    %c1_97 = arith.constant 1 : index
    %c0_98 = arith.constant 0 : index
    %129 = vector.load %arg13[%c7_96, %c1_97, %c0_98] : memref<18x18x128xf32, #tpu.memory_space<vmem>>, vector<1x16x128xf32>
    %130 = vector.shape_cast %129 : vector<1x16x128xf32> to vector<16x128xf32>
    %131 = vector.shape_cast %128 : vector<16x128xf32> to vector<1x16x128xf32>
    tpu.vector_store %arg13[%c7_96, %c1_97, %c0_98], %131 {strides = array<i32>} : memref<18x18x128xf32, #tpu.memory_space<vmem>>, vector<1x16x128xf32>,
    %132 = vector.extract_strided_slice %103 {offsets = [112, 0], sizes = [16, 128], strides = [1, 1]} : vector<256x128xf32> to vector<16x128xf32>
    %c8_99 = arith.constant 8 : index
    %c1_100 = arith.constant 1 : index
    %c0_101 = arith.constant 0 : index
    %133 = vector.load %arg13[%c8_99, %c1_100, %c0_101] : memref<18x18x128xf32, #tpu.memory_space<vmem>>, vector<1x16x128xf32>
    %134 = vector.shape_cast %133 : vector<1x16x128xf32> to vector<16x128xf32>
    %135 = vector.shape_cast %132 : vector<16x128xf32> to vector<1x16x128xf32>
    tpu.vector_store %arg13[%c8_99, %c1_100, %c0_101], %135 {strides = array<i32>} : memref<18x18x128xf32, #tpu.memory_space<vmem>>, vector<1x16x128xf32>,
    %136 = vector.extract_strided_slice %103 {offsets = [128, 0], sizes = [16, 128], strides = [1, 1]} : vector<256x128xf32> to vector<16x128xf32>
    %c9_102 = arith.constant 9 : index
    %c1_103 = arith.constant 1 : index
    %c0_104 = arith.constant 0 : index
    %137 = vector.load %arg13[%c9_102, %c1_103, %c0_104] : memref<18x18x128xf32, #tpu.memory_space<vmem>>, vector<1x16x128xf32>
    %138 = vector.shape_cast %137 : vector<1x16x128xf32> to vector<16x128xf32>
    %139 = vector.shape_cast %136 : vector<16x128xf32> to vector<1x16x128xf32>
    tpu.vector_store %arg13[%c9_102, %c1_103, %c0_104], %139 {strides = array<i32>} : memref<18x18x128xf32, #tpu.memory_space<vmem>>, vector<1x16x128xf32>,
    %140 = vector.extract_strided_slice %103 {offsets = [144, 0], sizes = [16, 128], strides = [1, 1]} : vector<256x128xf32> to vector<16x128xf32>
    %c10_105 = arith.constant 10 : index
    %c1_106 = arith.constant 1 : index
    %c0_107 = arith.constant 0 : index
    %141 = vector.load %arg13[%c10_105, %c1_106, %c0_107] : memref<18x18x128xf32, #tpu.memory_space<vmem>>, vector<1x16x128xf32>
    %142 = vector.shape_cast %141 : vector<1x16x128xf32> to vector<16x128xf32>
    %143 = vector.shape_cast %140 : vector<16x128xf32> to vector<1x16x128xf32>
    tpu.vector_store %arg13[%c10_105, %c1_106, %c0_107], %143 {strides = array<i32>} : memref<18x18x128xf32, #tpu.memory_space<vmem>>, vector<1x16x128xf32>,
    %144 = vector.extract_strided_slice %103 {offsets = [160, 0], sizes = [16, 128], strides = [1, 1]} : vector<256x128xf32> to vector<16x128xf32>
    %c11_108 = arith.constant 11 : index
    %c1_109 = arith.constant 1 : index
    %c0_110 = arith.constant 0 : index
    %145 = vector.load %arg13[%c11_108, %c1_109, %c0_110] : memref<18x18x128xf32, #tpu.memory_space<vmem>>, vector<1x16x128xf32>
    %146 = vector.shape_cast %145 : vector<1x16x128xf32> to vector<16x128xf32>
    %147 = vector.shape_cast %144 : vector<16x128xf32> to vector<1x16x128xf32>
    tpu.vector_store %arg13[%c11_108, %c1_109, %c0_110], %147 {strides = array<i32>} : memref<18x18x128xf32, #tpu.memory_space<vmem>>, vector<1x16x128xf32>,
    %148 = vector.extract_strided_slice %103 {offsets = [176, 0], sizes = [16, 128], strides = [1, 1]} : vector<256x128xf32> to vector<16x128xf32>
    %c12_111 = arith.constant 12 : index
    %c1_112 = arith.constant 1 : index
    %c0_113 = arith.constant 0 : index
    %149 = vector.load %arg13[%c12_111, %c1_112, %c0_113] : memref<18x18x128xf32, #tpu.memory_space<vmem>>, vector<1x16x128xf32>
    %150 = vector.shape_cast %149 : vector<1x16x128xf32> to vector<16x128xf32>
    %151 = vector.shape_cast %148 : vector<16x128xf32> to vector<1x16x128xf32>
    tpu.vector_store %arg13[%c12_111, %c1_112, %c0_113], %151 {strides = array<i32>} : memref<18x18x128xf32, #tpu.memory_space<vmem>>, vector<1x16x128xf32>,
    %152 = vector.extract_strided_slice %103 {offsets = [192, 0], sizes = [16, 128], strides = [1, 1]} : vector<256x128xf32> to vector<16x128xf32>
    %c13_114 = arith.constant 13 : index
    %c1_115 = arith.constant 1 : index
    %c0_116 = arith.constant 0 : index
    %153 = vector.load %arg13[%c13_114, %c1_115, %c0_116] : memref<18x18x128xf32, #tpu.memory_space<vmem>>, vector<1x16x128xf32>
    %154 = vector.shape_cast %153 : vector<1x16x128xf32> to vector<16x128xf32>
    %155 = vector.shape_cast %152 : vector<16x128xf32> to vector<1x16x128xf32>
    tpu.vector_store %arg13[%c13_114, %c1_115, %c0_116], %155 {strides = array<i32>} : memref<18x18x128xf32, #tpu.memory_space<vmem>>, vector<1x16x128xf32>,
    %156 = vector.extract_strided_slice %103 {offsets = [208, 0], sizes = [16, 128], strides = [1, 1]} : vector<256x128xf32> to vector<16x128xf32>
    %c14_117 = arith.constant 14 : index
    %c1_118 = arith.constant 1 : index
    %c0_119 = arith.constant 0 : index
    %157 = vector.load %arg13[%c14_117, %c1_118, %c0_119] : memref<18x18x128xf32, #tpu.memory_space<vmem>>, vector<1x16x128xf32>
    %158 = vector.shape_cast %157 : vector<1x16x128xf32> to vector<16x128xf32>
    %159 = vector.shape_cast %156 : vector<16x128xf32> to vector<1x16x128xf32>
    tpu.vector_store %arg13[%c14_117, %c1_118, %c0_119], %159 {strides = array<i32>} : memref<18x18x128xf32, #tpu.memory_space<vmem>>, vector<1x16x128xf32>,
    %160 = vector.extract_strided_slice %103 {offsets = [224, 0], sizes = [16, 128], strides = [1, 1]} : vector<256x128xf32> to vector<16x128xf32>
    %c15_120 = arith.constant 15 : index
    %c1_121 = arith.constant 1 : index
    %c0_122 = arith.constant 0 : index
    %161 = vector.load %arg13[%c15_120, %c1_121, %c0_122] : memref<18x18x128xf32, #tpu.memory_space<vmem>>, vector<1x16x128xf32>
    %162 = vector.shape_cast %161 : vector<1x16x128xf32> to vector<16x128xf32>
    %163 = vector.shape_cast %160 : vector<16x128xf32> to vector<1x16x128xf32>
    tpu.vector_store %arg13[%c15_120, %c1_121, %c0_122], %163 {strides = array<i32>} : memref<18x18x128xf32, #tpu.memory_space<vmem>>, vector<1x16x128xf32>,
    %164 = vector.extract_strided_slice %103 {offsets = [240, 0], sizes = [16, 128], strides = [1, 1]} : vector<256x128xf32> to vector<16x128xf32>
    %c16_123 = arith.constant 16 : index
    %c1_124 = arith.constant 1 : index
    %c0_125 = arith.constant 0 : index
    %165 = vector.load %arg13[%c16_123, %c1_124, %c0_125] : memref<18x18x128xf32, #tpu.memory_space<vmem>>, vector<1x16x128xf32>
    %166 = vector.shape_cast %165 : vector<1x16x128xf32> to vector<16x128xf32>
    %167 = vector.shape_cast %164 : vector<16x128xf32> to vector<1x16x128xf32>
    tpu.vector_store %arg13[%c16_123, %c1_124, %c0_125], %167 {strides = array<i32>} : memref<18x18x128xf32, #tpu.memory_space<vmem>>, vector<1x16x128xf32>,
    %c0_126 = arith.constant 0 : index
    %c0_127 = arith.constant 0 : index
    %168 = vector.load %arg5[%c0_126, %c0_127] : memref<1x128xf32, #tpu.memory_space<vmem>>, vector<1x128xf32>
    %c0_128 = arith.constant 0 : index
    %c0_129 = arith.constant 0 : index
    %c0_130 = arith.constant 0 : index
    %169 = vector.load %arg13[%c0_128, %c0_129, %c0_130] : memref<18x18x128xf32, #tpu.memory_space<vmem>>, vector<16x16x128xf32>
    %170 = vector.shape_cast %169 : vector<16x16x128xf32> to vector<256x128xf32>
    %c0_131 = arith.constant 0 : index
    %c1_132 = arith.constant 1 : index
    %c0_133 = arith.constant 0 : index
    %171 = vector.load %arg13[%c0_131, %c1_132, %c0_133] : memref<18x18x128xf32, #tpu.memory_space<vmem>>, vector<16x16x128xf32>
    %172 = vector.shape_cast %171 : vector<16x16x128xf32> to vector<256x128xf32>
    %c0_134 = arith.constant 0 : index
    %c2_135 = arith.constant 2 : index
    %c0_136 = arith.constant 0 : index
    %173 = vector.load %arg13[%c0_134, %c2_135, %c0_136] : memref<18x18x128xf32, #tpu.memory_space<vmem>>, vector<16x16x128xf32>
    %174 = vector.shape_cast %173 : vector<16x16x128xf32> to vector<256x128xf32>
    %c1_137 = arith.constant 1 : index
    %c0_138 = arith.constant 0 : index
    %c0_139 = arith.constant 0 : index
    %175 = vector.load %arg13[%c1_137, %c0_138, %c0_139] : memref<18x18x128xf32, #tpu.memory_space<vmem>>, vector<16x16x128xf32>
    %176 = vector.shape_cast %175 : vector<16x16x128xf32> to vector<256x128xf32>
    %c1_140 = arith.constant 1 : index
    %c1_141 = arith.constant 1 : index
    %c0_142 = arith.constant 0 : index
    %177 = vector.load %arg13[%c1_140, %c1_141, %c0_142] : memref<18x18x128xf32, #tpu.memory_space<vmem>>, vector<16x16x128xf32>
    %178 = vector.shape_cast %177 : vector<16x16x128xf32> to vector<256x128xf32>
    %c1_143 = arith.constant 1 : index
    %c2_144 = arith.constant 2 : index
    %c0_145 = arith.constant 0 : index
    %179 = vector.load %arg13[%c1_143, %c2_144, %c0_145] : memref<18x18x128xf32, #tpu.memory_space<vmem>>, vector<16x16x128xf32>
    %180 = vector.shape_cast %179 : vector<16x16x128xf32> to vector<256x128xf32>
    %c2_146 = arith.constant 2 : index
    %c0_147 = arith.constant 0 : index
    %c0_148 = arith.constant 0 : index
    %181 = vector.load %arg13[%c2_146, %c0_147, %c0_148] : memref<18x18x128xf32, #tpu.memory_space<vmem>>, vector<16x16x128xf32>
    %182 = vector.shape_cast %181 : vector<16x16x128xf32> to vector<256x128xf32>
    %c2_149 = arith.constant 2 : index
    %c1_150 = arith.constant 1 : index
    %c0_151 = arith.constant 0 : index
    %183 = vector.load %arg13[%c2_149, %c1_150, %c0_151] : memref<18x18x128xf32, #tpu.memory_space<vmem>>, vector<16x16x128xf32>
    %184 = vector.shape_cast %183 : vector<16x16x128xf32> to vector<256x128xf32>
    %c2_152 = arith.constant 2 : index
    %c2_153 = arith.constant 2 : index
    %c0_154 = arith.constant 0 : index
    %185 = vector.load %arg13[%c2_152, %c2_153, %c0_154] : memref<18x18x128xf32, #tpu.memory_space<vmem>>, vector<16x16x128xf32>
    %186 = vector.shape_cast %185 : vector<16x16x128xf32> to vector<256x128xf32>
    %187 = tpu.concatenate %170, %172, %174, %176, %178, %180, %182, %184, %186 in 1 : vector<256x128xf32>, vector<256x128xf32>, vector<256x128xf32>, vector<256x128xf32>, vector<256x128xf32>, vector<256x128xf32>, vector<256x128xf32>, vector<256x128xf32>, vector<256x128xf32> -> vector<256x1152xf32>
    %c0_155 = arith.constant 0 : index
    %c0_156 = arith.constant 0 : index
    %188 = vector.load %arg4[%c0_155, %c0_156] : memref<1152x128xf32, #tpu.memory_space<vmem>>, vector<1152x128xf32>
    %cst_157 = arith.constant dense<0.000000e+00> : vector<256x128xf32>
    %189 = tpu.matmul %187, %188, %cst_157 {dimension_numbers = #tpu.dot_dimension_numbers<[1], [0], [0], [1], [0, 0, 1, 1], [], []>} : vector<256x1152xf32>, vector<1152x128xf32>, vector<256x128xf32> -> vector<256x128xf32>
    %190 = vector.broadcast %168 : vector<1x128xf32> to vector<256x128xf32>
    %191 = arith.addf %189, %190 : vector<256x128xf32>
    %cst_158 = arith.constant dense<0.000000e+00> : vector<128xf32>
    %192 = vector.multi_reduction <add>, %191, %cst_158 [0] : vector<256x128xf32> to vector<128xf32>
    %193 = vector.shape_cast %192 : vector<128xf32> to vector<1x128xf32>
    %cst_159 = arith.constant 3.906250e-03 : f32
    %194 = vector.broadcast %cst_159 : f32 to vector<1x128xf32>
    %195 = arith.mulf %193, %194 : vector<1x128xf32>
    %c0_160 = arith.constant 0 : index
    %c0_161 = arith.constant 0 : index
    %196 = vector.load %arg6[%c0_160, %c0_161] : memref<128x128xf32, #tpu.memory_space<vmem>>, vector<128x128xf32>
    %cst_162 = arith.constant dense<0.000000e+00> : vector<1x128xf32>
    %197 = tpu.matmul %195, %196, %cst_162 {dimension_numbers = #tpu.dot_dimension_numbers<[1], [0], [0], [1], [0, 0, 1, 1], [], []>} : vector<1x128xf32>, vector<128x128xf32>, vector<1x128xf32> -> vector<1x128xf32>
    %c0_163 = arith.constant 0 : index
    %c0_164 = arith.constant 0 : index
    %198 = vector.load %arg7[%c0_163, %c0_164] : memref<1x128xf32, #tpu.memory_space<vmem>>, vector<1x128xf32>
    %199 = arith.addf %197, %198 : vector<1x128xf32>
    %cst_165 = arith.constant 0.000000e+00 : f32
    %200 = vector.broadcast %cst_165 : f32 to vector<1x128xf32>
    %201 = arith.maximumf %199, %200 : vector<1x128xf32>
    %cst_166 = arith.constant 1.71285856 : f32
    %202 = vector.broadcast %cst_166 : f32 to vector<1x128xf32>
    %203 = arith.mulf %202, %201 : vector<1x128xf32>
    %c0_167 = arith.constant 0 : index
    %c0_168 = arith.constant 0 : index
    %204 = vector.load %arg8[%c0_167, %c0_168] : memref<128x128xf32, #tpu.memory_space<vmem>>, vector<128x128xf32>
    %cst_169 = arith.constant dense<0.000000e+00> : vector<1x128xf32>
    %205 = tpu.matmul %203, %204, %cst_169 {dimension_numbers = #tpu.dot_dimension_numbers<[1], [0], [0], [1], [0, 0, 1, 1], [], []>} : vector<1x128xf32>, vector<128x128xf32>, vector<1x128xf32> -> vector<1x128xf32>
    %c0_170 = arith.constant 0 : index
    %c0_171 = arith.constant 0 : index
    %206 = vector.load %arg9[%c0_170, %c0_171] : memref<1x128xf32, #tpu.memory_space<vmem>>, vector<1x128xf32>
    %207 = arith.addf %205, %206 : vector<1x128xf32>
    %208 = arith.negf %207 : vector<1x128xf32>
    %209 = math.exp %208 : vector<1x128xf32>
    %cst_172 = arith.constant 1.000000e+00 : f32
    %210 = vector.broadcast %cst_172 : f32 to vector<1x128xf32>
    %211 = arith.addf %210, %209 : vector<1x128xf32>
    %212 = arith.divf %210, %211 : vector<1x128xf32>
    %cst_173 = arith.constant 2.000000e+00 : f32
    %213 = vector.broadcast %cst_173 : f32 to vector<1x128xf32>
    %214 = arith.mulf %213, %212 : vector<1x128xf32>
    %c0_174 = arith.constant 0 : index
    %c0_175 = arith.constant 0 : index
    %215 = vector.load %arg10[%c0_174, %c0_175] : memref<1x1xf32, #tpu.memory_space<vmem>>, vector<1x1xf32>
    %216 = vector.broadcast %215 : vector<1x1xf32> to vector<1x128xf32>
    %217 = arith.mulf %214, %216 : vector<1x128xf32>
    %218 = vector.broadcast %217 : vector<1x128xf32> to vector<256x128xf32>
    %219 = arith.mulf %191, %218 : vector<256x128xf32>
    %220 = arith.addf %219, %1 : vector<256x128xf32>
    %c0_176 = arith.constant 0 : index
    %c0_177 = arith.constant 0 : index
    %c0_178 = arith.constant 0 : index
    %221 = vector.load %arg11[%c0_176, %c0_177, %c0_178] : memref<1x256x128xf32, #tpu.memory_space<vmem>>, vector<1x256x128xf32>
    %222 = vector.shape_cast %221 : vector<1x256x128xf32> to vector<256x128xf32>
    %223 = vector.shape_cast %220 : vector<256x128xf32> to vector<1x256x128xf32>
    tpu.vector_store %arg11[%c0_176, %c0_177, %c0_178], %223 {strides = array<i32>} : memref<1x256x128xf32, #tpu.memory_space<vmem>>, vector<1x256x128xf32>,
    return
  }
  func.func @transform_0(%arg0: i32) -> (i32, i32, i32) {
    %c0_i32 = arith.constant 0 : i32
    %c0_i32_0 = arith.constant 0 : i32
    %c0_i32_1 = arith.constant 0 : i32
    return %arg0, %c0_i32, %c0_i32_0 : i32, i32, i32
  }
  func.func @transform_1(%arg0: i32) -> (i32, i32) {
    %c0_i32 = arith.constant 0 : i32
    %c0_i32_0 = arith.constant 0 : i32
    %c0_i32_1 = arith.constant 0 : i32
    return %c0_i32, %c0_i32_0 : i32, i32
  }
  func.func @transform_2(%arg0: i32) -> (i32, i32) {
    %c0_i32 = arith.constant 0 : i32
    %c0_i32_0 = arith.constant 0 : i32
    %c0_i32_1 = arith.constant 0 : i32
    return %c0_i32, %c0_i32_0 : i32, i32
  }
  func.func @transform_3(%arg0: i32) -> (i32, i32) {
    %c0_i32 = arith.constant 0 : i32
    %c0_i32_0 = arith.constant 0 : i32
    %c0_i32_1 = arith.constant 0 : i32
    return %c0_i32, %c0_i32_0 : i32, i32
  }
  func.func @transform_4(%arg0: i32) -> (i32, i32) {
    %c0_i32 = arith.constant 0 : i32
    %c0_i32_0 = arith.constant 0 : i32
    %c0_i32_1 = arith.constant 0 : i32
    return %c0_i32, %c0_i32_0 : i32, i32
  }
  func.func @transform_5(%arg0: i32) -> (i32, i32) {
    %c0_i32 = arith.constant 0 : i32
    %c0_i32_0 = arith.constant 0 : i32
    %c0_i32_1 = arith.constant 0 : i32
    return %c0_i32, %c0_i32_0 : i32, i32
  }
  func.func @transform_6(%arg0: i32) -> (i32, i32) {
    %c0_i32 = arith.constant 0 : i32
    %c0_i32_0 = arith.constant 0 : i32
    %c0_i32_1 = arith.constant 0 : i32
    return %c0_i32, %c0_i32_0 : i32, i32
  }
  func.func @transform_7(%arg0: i32) -> (i32, i32) {
    %c0_i32 = arith.constant 0 : i32
    %c0_i32_0 = arith.constant 0 : i32
    %c0_i32_1 = arith.constant 0 : i32
    return %c0_i32, %c0_i32_0 : i32, i32
  }
  func.func @transform_8(%arg0: i32) -> (i32, i32) {
    %c0_i32 = arith.constant 0 : i32
    %c0_i32_0 = arith.constant 0 : i32
    %c0_i32_1 = arith.constant 0 : i32
    return %c0_i32, %c0_i32_0 : i32, i32
  }
  func.func @transform_9(%arg0: i32) -> (i32, i32) {
    %c0_i32 = arith.constant 0 : i32
    %c0_i32_0 = arith.constant 0 : i32
    %c0_i32_1 = arith.constant 0 : i32
    return %c0_i32, %c0_i32_0 : i32, i32
  }
  func.func @transform_10(%arg0: i32) -> (i32, i32, i32) {
    %c0_i32 = arith.constant 0 : i32
    %c0_i32_0 = arith.constant 0 : i32
    %c0_i32_1 = arith.constant 0 : i32
    return %arg0, %c0_i32, %c0_i32_0 : i32, i32, i32
  }
}

</mosaic_0001>

<llo_original>
// kernel: _lambda_.3
$region0: #{_lambda_.3}
  #allocation0 [shape = 'u32[]', space=smem, size = 0x4, offset = 0x4, fixed_abs, tag = 'smem constant byte address 0x4 - core index']
  #allocation1 [shape = 'u32[72,128]{1,0:T(1,128)}', space=vmem, size = 0x9000, scoped, tag = 'internal scratch']
  #allocation2 [shape = 'f32[18,18,128]{2,1,0:T(8,128)}', space=vmem, size = 0x36000, scoped, tag = 'scratch operand']
  #allocation3 [shape = 'f32[18,18,128]{2,1,0:T(8,128)}', space=vmem, size = 0x36000, scoped, tag = 'scratch operand']
  #allocation4 [shape = 'f32[1,1]{1,0:T(1,128)S(1)}', space=vmem, size = 0x200, scoped, tag = 'scoped memory for _lambda_.3']
  %s0 = inlined_call_operand.vmem [shape: f32[2,256,128], index: 0, kind: input, shape index: {}, may-alias: {0,10}]
  %s1 = inlined_call_operand.vmem [shape: f32[1152,128], index: 1, kind: input, shape index: {}]
  %s2 = inlined_call_operand.vmem [shape: f32[1,128], index: 2, kind: input, shape index: {}, may-alias: {2,4,8}]
  %s3 = inlined_call_operand.vmem [shape: f32[1152,128], index: 3, kind: input, shape index: {}]
  %s4 = inlined_call_operand.vmem [shape: f32[1,128], index: 4, kind: input, shape index: {}, may-alias: {2,4,8}]
  %s5 = inlined_call_operand.vmem [shape: f32[128,128], index: 5, kind: input, shape index: {}]
  %s6 = inlined_call_operand.vmem [shape: f32[1,128], index: 6, kind: input, shape index: {}]
  %s7 = inlined_call_operand.vmem [shape: f32[128,128], index: 7, kind: input, shape index: {}]
  %s8 = inlined_call_operand.vmem [shape: f32[1,128], index: 8, kind: input, shape index: {}, may-alias: {2,4,8}]
  %s9 = inlined_call_operand.<no memory space> [shape: f32[1,1], index: 9, kind: input, shape index: {}]
  %s10 = inlined_call_operand.vmem [shape: f32[2,256,128], index: 10, kind: output, shape index: {}, may-alias: {0,10}]
  %s11 = sld [smem:[#allocation0]]
  $region73: #{_lambda_.3} parent=0
    _
  %s13 = ssub.s32 1, %s11
  %s14 = scalar_select 0, %s13, %s11
  %v15 = vstv %s9
  %16 = vst [vmem:[#allocation4] sm:$0x1] %v15
  loop: start=0, step=1, limit=4
  $region2: #{_lambda_.3} parent=0 // loop_pre_header
    _
  $region3: #{_lambda_.3} parent=0 // loop_header
    %s18 = sphi 0, %s22
    %p19 = scmp.ge.s32.totalorder %s18, 4
    %s28 = sphi 0, %s30
    %s31 = sphi 0, %s28
    %s32 = sphi 0, %s31
    %s48 = sphi 0, %s32
    %s52 = sphi 0, %s52
    %s54 = sphi 0, %s52
    %s55 = sphi 0, %s54
    %s69 = sphi 0, %s55
    %s73 = sphi 0, %s73
    %s75 = sphi 0, %s73
    %s76 = sphi 0, %s75
    %s90 = sphi 0, %s76
    %s94 = sphi 0, %s94
    %s96 = sphi 0, %s94
    %s97 = sphi 0, %s96
    %s111 = sphi 0, %s97
    %s115 = sphi 0, %s115
    %s117 = sphi 0, %s115
    %s118 = sphi 0, %s117
    %s132 = sphi 0, %s118
    %s136 = sphi 0, %s136
    %s138 = sphi 0, %s136
    %s139 = sphi 0, %s138
    %s153 = sphi 0, %s139
    %s157 = sphi 0, %s157
    %s159 = sphi 0, %s157
    %s160 = sphi 0, %s159
    %s174 = sphi 0, %s160
    %s178 = sphi 0, %s178
    %s180 = sphi 0, %s178
    %s181 = sphi 0, %s180
    %s195 = sphi 0, %s181
    %s199 = sphi 0, %s199
    %s201 = sphi 0, %s199
    %s202 = sphi 0, %s201
    %s216 = sphi 0, %s202
    %s220 = sphi 0, %s220
    %s222 = sphi 0, %s220
    %s223 = sphi 0, %s222
    %s237 = sphi 0, %s223
    %s243 = sphi 0, %s245
    %s246 = sphi 0, %s243
    %s247 = sphi 0, %s246
    %s263 = sphi 0, %s247
  $region4: #{_lambda_.3} parent=0 // loop_header_branch
    %21 = sbr.rel (%p19) target = $region8
  $region5: #{_lambda_.3} parent=0 // loop_body
    %s23 = ssub.s32 %s18, 1
    %s24 = ssub.s32 %s18, 2
    %s25 = sadd.s32 %s18, 1
    %s26 = ssub.s32 %s18, %s25
    %p27 = scmp.eq.s32.totalorder %s26, 0
    %s29 = sadd.s32 %s28, 1
    %s30 = scalar_select %p27, %s28, %s29
    %p33 = pneg %p27
    %p34 = scmp.eq.s32.totalorder %s18, 1
    %p35 = por %p33, %p34
    %p36 = scmp.ne.s32.totalorder %s28, %s31
    %p37 = scmp.eq.s32.totalorder %s18, 0
    %p38 = por %p36, %p37
    %p39 = scmp.ne.s32.totalorder %s28, %s31
    %p40 = scmp.eq.s32.totalorder %s23, 1
    %p41 = por %p39, %p40
    %p42 = scmp.ne.s32.totalorder %s31, %s32
    %p43 = scmp.eq.s32.totalorder %s23, 0
    %p44 = por %p42, %p43
    %p45 = scmp.ne.s32.totalorder %s31, %s32
    %p46 = scmp.eq.s32.totalorder %s24, 1
    %p47 = por %p45, %p46
    %p49 = scmp.ne.s32.totalorder %s32, %s48
    %p50 = scmp.eq.s32.totalorder %s24, 0
    %p51 = por %p49, %p50
    %s53 = sadd.s32 %s52, 1
    %p56 = scmp.eq.s32.totalorder %s18, 1
    %p57 = scmp.ne.s32.totalorder %s52, %s54
    %p58 = scmp.eq.s32.totalorder %s18, 0
    %p59 = por %p57, %p58
    %p60 = scmp.ne.s32.totalorder %s52, %s54
    %p61 = scmp.eq.s32.totalorder %s23, 1
    %p62 = por %p60, %p61
    %p63 = scmp.ne.s32.totalorder %s54, %s55
    %p64 = scmp.eq.s32.totalorder %s23, 0
    %p65 = por %p63, %p64
    %p66 = scmp.ne.s32.totalorder %s54, %s55
    %p67 = scmp.eq.s32.totalorder %s24, 1
    %p68 = por %p66, %p67
    %p70 = scmp.ne.s32.totalorder %s55, %s69
    %p71 = scmp.eq.s32.totalorder %s24, 0
    %p72 = por %p70, %p71
    %s74 = sadd.s32 %s73, 1
    %p77 = scmp.eq.s32.totalorder %s18, 1
    %p78 = scmp.ne.s32.totalorder %s73, %s75
    %p79 = scmp.eq.s32.totalorder %s18, 0
    %p80 = por %p78, %p79
    %p81 = scmp.ne.s32.totalorder %s73, %s75
    %p82 = scmp.eq.s32.totalorder %s23, 1
    %p83 = por %p81, %p82
    %p84 = scmp.ne.s32.totalorder %s75, %s76
    %p85 = scmp.eq.s32.totalorder %s23, 0
    %p86 = por %p84, %p85
    %p87 = scmp.ne.s32.totalorder %s75, %s76
    %p88 = scmp.eq.s32.totalorder %s24, 1
    %p89 = por %p87, %p88
    %p91 = scmp.ne.s32.totalorder %s76, %s90
    %p92 = scmp.eq.s32.totalorder %s24, 0
    %p93 = por %p91, %p92
    %s95 = sadd.s32 %s94, 1
    %p98 = scmp.eq.s32.totalorder %s18, 1
    %p99 = scmp.ne.s32.totalorder %s94, %s96
    %p100 = scmp.eq.s32.totalorder %s18, 0
    %p101 = por %p99, %p100
    %p102 = scmp.ne.s32.totalorder %s94, %s96
    %p103 = scmp.eq.s32.totalorder %s23, 1
    %p104 = por %p102, %p103
    %p105 = scmp.ne.s32.totalorder %s96, %s97
    %p106 = scmp.eq.s32.totalorder %s23, 0
    %p107 = por %p105, %p106
    %p108 = scmp.ne.s32.totalorder %s96, %s97
    %p109 = scmp.eq.s32.totalorder %s24, 1
    %p110 = por %p108, %p109
    %p112 = scmp.ne.s32.totalorder %s97, %s111
    %p113 = scmp.eq.s32.totalorder %s24, 0
    %p114 = por %p112, %p113
    %s116 = sadd.s32 %s115, 1
    %p119 = scmp.eq.s32.totalorder %s18, 1
    %p120 = scmp.ne.s32.totalorder %s115, %s117
    %p121 = scmp.eq.s32.totalorder %s18, 0
    %p122 = por %p120, %p121
    %p123 = scmp.ne.s32.totalorder %s115, %s117
    %p124 = scmp.eq.s32.totalorder %s23, 1
    %p125 = por %p123, %p124
    %p126 = scmp.ne.s32.totalorder %s117, %s118
    %p127 = scmp.eq.s32.totalorder %s23, 0
    %p128 = por %p126, %p127
    %p129 = scmp.ne.s32.totalorder %s117, %s118
    %p130 = scmp.eq.s32.totalorder %s24, 1
    %p131 = por %p129, %p130
    %p133 = scmp.ne.s32.totalorder %s118, %s132
    %p134 = scmp.eq.s32.totalorder %s24, 0
    %p135 = por %p133, %p134
    %s137 = sadd.s32 %s136, 1
    %p140 = scmp.eq.s32.totalorder %s18, 1
    %p141 = scmp.ne.s32.totalorder %s136, %s138
    %p142 = scmp.eq.s32.totalorder %s18, 0
    %p143 = por %p141, %p142
    %p144 = scmp.ne.s32.totalorder %s136, %s138
    %p145 = scmp.eq.s32.totalorder %s23, 1
    %p146 = por %p144, %p145
    %p147 = scmp.ne.s32.totalorder %s138, %s139
    %p148 = scmp.eq.s32.totalorder %s23, 0
    %p149 = por %p147, %p148
    %p150 = scmp.ne.s32.totalorder %s138, %s139
    %p151 = scmp.eq.s32.totalorder %s24, 1
    %p152 = por %p150, %p151
    %p154 = scmp.ne.s32.totalorder %s139, %s153
    %p155 = scmp.eq.s32.totalorder %s24, 0
    %p156 = por %p154, %p155
    %s158 = sadd.s32 %s157, 1
    %p161 = scmp.eq.s32.totalorder %s18, 1
    %p162 = scmp.ne.s32.totalorder %s157, %s159
    %p163 = scmp.eq.s32.totalorder %s18, 0
    %p164 = por %p162, %p163
    %p165 = scmp.ne.s32.totalorder %s157, %s159
    %p166 = scmp.eq.s32.totalorder %s23, 1
    %p167 = por %p165, %p166
    %p168 = scmp.ne.s32.totalorder %s159, %s160
    %p169 = scmp.eq.s32.totalorder %s23, 0
    %p170 = por %p168, %p169
    %p171 = scmp.ne.s32.totalorder %s159, %s160
    %p172 = scmp.eq.s32.totalorder %s24, 1
    %p173 = por %p171, %p172
    %p175 = scmp.ne.s32.totalorder %s160, %s174
    %p176 = scmp.eq.s32.totalorder %s24, 0
    %p177 = por %p175, %p176
    %s179 = sadd.s32 %s178, 1
    %p182 = scmp.eq.s32.totalorder %s18, 1
    %p183 = scmp.ne.s32.totalorder %s178, %s180
    %p184 = scmp.eq.s32.totalorder %s18, 0
    %p185 = por %p183, %p184
    %p186 = scmp.ne.s32.totalorder %s178, %s180
    %p187 = scmp.eq.s32.totalorder %s23, 1
    %p188 = por %p186, %p187
    %p189 = scmp.ne.s32.totalorder %s180, %s181
    %p190 = scmp.eq.s32.totalorder %s23, 0
    %p191 = por %p189, %p190
    %p192 = scmp.ne.s32.totalorder %s180, %s181
    %p193 = scmp.eq.s32.totalorder %s24, 1
    %p194 = por %p192, %p193
    %p196 = scmp.ne.s32.totalorder %s181, %s195
    %p197 = scmp.eq.s32.totalorder %s24, 0
    %p198 = por %p196, %p197
    %s200 = sadd.s32 %s199, 1
    %p203 = scmp.eq.s32.totalorder %s18, 1
    %p204 = scmp.ne.s32.totalorder %s199, %s201
    %p205 = scmp.eq.s32.totalorder %s18, 0
    %p206 = por %p204, %p205
    %p207 = scmp.ne.s32.totalorder %s199, %s201
    %p208 = scmp.eq.s32.totalorder %s23, 1
    %p209 = por %p207, %p208
    %p210 = scmp.ne.s32.totalorder %s201, %s202
    %p211 = scmp.eq.s32.totalorder %s23, 0
    %p212 = por %p210, %p211
    %p213 = scmp.ne.s32.totalorder %s201, %s202
    %p214 = scmp.eq.s32.totalorder %s24, 1
    %p215 = por %p213, %p214
    %p217 = scmp.ne.s32.totalorder %s202, %s216
    %p218 = scmp.eq.s32.totalorder %s24, 0
    %p219 = por %p217, %p218
    %s221 = sadd.s32 %s220, 1
    %p224 = scmp.eq.s32.totalorder %s18, 1
    %p225 = scmp.ne.s32.totalorder %s220, %s222
    %p226 = scmp.eq.s32.totalorder %s18, 0
    %p227 = por %p225, %p226
    %p228 = scmp.ne.s32.totalorder %s220, %s222
    %p229 = scmp.eq.s32.totalorder %s23, 1
    %p230 = por %p228, %p229
    %p231 = scmp.ne.s32.totalorder %s222, %s223
    %p232 = scmp.eq.s32.totalorder %s23, 0
    %p233 = por %p231, %p232
    %p234 = scmp.ne.s32.totalorder %s222, %s223
    %p235 = scmp.eq.s32.totalorder %s24, 1
    %p236 = por %p234, %p235
    %p238 = scmp.ne.s32.totalorder %s223, %s237
    %p239 = scmp.eq.s32.totalorder %s24, 0
    %p240 = por %p238, %p239
    %s241 = ssub.s32 %s18, %s25
    %p242 = scmp.eq.s32.totalorder %s241, 0
    %s244 = sadd.s32 %s243, 1
    %s245 = scalar_select %p242, %s243, %s244
    %p248 = pneg %p242
    %p249 = scmp.eq.s32.totalorder %s18, 1
    %p250 = por %p248, %p249
    %p251 = scmp.ne.s32.totalorder %s243, %s246
    %p252 = scmp.eq.s32.totalorder %s18, 0
    %p253 = por %p251, %p252
    %p254 = scmp.ne.s32.totalorder %s243, %s246
    %p255 = scmp.eq.s32.totalorder %s23, 1
    %p256 = por %p254, %p255
    %p257 = scmp.ne.s32.totalorder %s246, %s247
    %p258 = scmp.eq.s32.totalorder %s23, 0
    %p259 = por %p257, %p258
    %p260 = scmp.ne.s32.totalorder %s246, %s247
    %p261 = scmp.eq.s32.totalorder %s24, 1
    %p262 = por %p260, %p261
    %p264 = scmp.ne.s32.totalorder %s247, %s263
    %p265 = scmp.eq.s32.totalorder %s24, 0
    %p266 = por %p264, %p265
    %p267 = scmp.le.s32.totalorder 1, %s18
    %p268 = scmp.lt.s32.totalorder %s18, 3
    %p269 = pnand %p267, %p268
    %p270 = pneg %p269
    // Predicated region
    $region9: #{_lambda_.3} parent=5 // pred_check
      _
    $region10: #{_lambda_.3} parent=5 // pred_check_branch
      %272 = sbr.rel (%p269) target = $region12
    $region11: #{_lambda_.3} parent=5 // pred_region
      %s273 = ssub.s32 %s18, 1
      // Predicated region
      $region13: #{_lambda_.3} parent=11 // pred_check
        %p274 = pneg %p65
      $region14: #{_lambda_.3} parent=11 // pred_check_branch
        %276 = sbr.rel (%p274) target = $region16
      $region15: #{_lambda_.3} parent=11 // pred_region
        _
      $region16: #{_lambda_.3} parent=11 // pred_fallthru
        _
      // Predicated region
      $region17: #{_lambda_.3} parent=11 // pred_check
        %p277 = pneg %p86
      $region18: #{_lambda_.3} parent=11 // pred_check_branch
        %279 = sbr.rel (%p277) target = $region20
      $region19: #{_lambda_.3} parent=11 // pred_region
        _
      $region20: #{_lambda_.3} parent=11 // pred_fallthru
        _
      // Predicated region
      $region21: #{_lambda_.3} parent=11 // pred_check
        %p280 = pneg %p107
      $region22: #{_lambda_.3} parent=11 // pred_check_branch
        %282 = sbr.rel (%p280) target = $region24
      $region23: #{_lambda_.3} parent=11 // pred_region
        _
      $region24: #{_lambda_.3} parent=11 // pred_fallthru
        _
      // Predicated region
      $region25: #{_lambda_.3} parent=11 // pred_check
        %p283 = pneg %p128
      $region26: #{_lambda_.3} parent=11 // pred_check_branch
        %285 = sbr.rel (%p283) target = $region28
      $region27: #{_lambda_.3} parent=11 // pred_region
        _
      $region28: #{_lambda_.3} parent=11 // pred_fallthru
        _
      // Predicated region
      $region29: #{_lambda_.3} parent=11 // pred_check
        %p286 = pneg %p149
      $region30: #{_lambda_.3} parent=11 // pred_check_branch
        %288 = sbr.rel (%p286) target = $region32
      $region31: #{_lambda_.3} parent=11 // pred_region
        _
      $region32: #{_lambda_.3} parent=11 // pred_fallthru
        _
      // Predicated region
      $region33: #{_lambda_.3} parent=11 // pred_check
        %p289 = pneg %p170
      $region34: #{_lambda_.3} parent=11 // pred_check_branch
        %291 = sbr.rel (%p289) target = $region36
      $region35: #{_lambda_.3} parent=11 // pred_region
        _
      $region36: #{_lambda_.3} parent=11 // pred_fallthru
        _
      // Predicated region
      $region37: #{_lambda_.3} parent=11 // pred_check
        %p292 = pneg %p191
      $region38: #{_lambda_.3} parent=11 // pred_check_branch
        %294 = sbr.rel (%p292) target = $region40
      $region39: #{_lambda_.3} parent=11 // pred_region
        _
      $region40: #{_lambda_.3} parent=11 // pred_fallthru
        _
      // Predicated region
      $region41: #{_lambda_.3} parent=11 // pred_check
        %p295 = pneg %p212
      $region42: #{_lambda_.3} parent=11 // pred_check_branch
        %297 = sbr.rel (%p295) target = $region44
      $region43: #{_lambda_.3} parent=11 // pred_region
        _
      $region44: #{_lambda_.3} parent=11 // pred_fallthru
        _
      // Predicated region
      $region45: #{_lambda_.3} parent=11 // pred_check
        %p298 = pneg %p233
      $region46: #{_lambda_.3} parent=11 // pred_check_branch
        %300 = sbr.rel (%p298) target = $region48
      $region47: #{_lambda_.3} parent=11 // pred_region
        _
      $region48: #{_lambda_.3} parent=11 // pred_fallthru
        _
    $region12: #{_lambda_.3} parent=5 // pred_fallthru
      _
    %p301 = scmp.lt.s32.totalorder %s18, 2
    // Predicated region
    $region49: #{_lambda_.3} parent=5 // pred_check
      %p302 = pneg %p301
    $region50: #{_lambda_.3} parent=5 // pred_check_branch
      %304 = sbr.rel (%p302) target = $region52
    $region51: #{_lambda_.3} parent=5 // pred_region
      // Predicated region
      $region53: #{_lambda_.3} parent=51 // pred_check
        %p305 = pneg %p38
      $region54: #{_lambda_.3} parent=51 // pred_check_branch
        %307 = sbr.rel (%p305) target = $region56
      $region55: #{_lambda_.3} parent=51 // pred_region
        %p308 = scmp.lt.s32.totalorder %s18, 1
        %s309 = scalar_select %p308, %s18, 1
        %s310 = smul.addr %s309, 32
        %s311 = smul.addr %s310, 8
        %s312 = scalar_lea.vmem %s0, %s311
      $region56: #{_lambda_.3} parent=51 // pred_fallthru
        _
    $region52: #{_lambda_.3} parent=5 // pred_fallthru
      _
    %p313 = scmp.le.s32.totalorder 1, %s18
    %p314 = scmp.lt.s32.totalorder %s18, 3
    %p315 = pnand %p313, %p314
    %p316 = pneg %p315
    // Predicated region
    $region57: #{_lambda_.3} parent=5 // pred_check
      _
    $region58: #{_lambda_.3} parent=5 // pred_check_branch
      %318 = sbr.rel (%p315) target = $region60
    $region59: #{_lambda_.3} parent=5 // pred_region
      %s319 = ssub.s32 %s18, 1
      %p320 = scmp.lt.s32.totalorder %s23, 1
      %s321 = scalar_select %p320, %s23, 1
      %s322 = smul.addr %s321, 32
      %s323 = smul.addr %s322, 8
      %s324 = scalar_lea.vmem %s0, %s323
      %p325 = pneg %p44
      %p326 = pneg %p41
      %p327 = pneg %p65
      %p328 = pneg %p62
      %p329 = pneg %p86
      %p330 = pneg %p83
      %p331 = pneg %p107
      %p332 = pneg %p104
      %p333 = pneg %p128
      %p334 = pneg %p125
      %p335 = pneg %p149
      %p336 = pneg %p146
      %p337 = pneg %p170
      %p338 = pneg %p167
      %p339 = pneg %p191
      %p340 = pneg %p188
      %p341 = pneg %p212
      %p342 = pneg %p209
      %p343 = pneg %p233
      %p344 = pneg %p230
      %p345 = pneg %p259
      %p346 = pneg %p256
      %p347 = scmp.lt.s32.totalorder %s23, 1
      %s348 = scalar_select %p347, %s23, 1
      %s349 = smul.addr %s348, 32
      %s350 = smul.addr %s349, 8
      %s351 = scalar_lea.vmem %s10, %s350
      %p352 = scmp.lt.s32.totalorder %s23, 1
      %s353 = scalar_select %p352, %s23, 1
      %s354 = smul.addr %s353, 32
      %s355 = smul.addr %s354, 8
      %s356 = scalar_lea.vmem %s0, %s355
      %p357 = scmp.lt.s32.totalorder %s23, 1
      %s358 = scalar_select %p357, %s23, 1
      %s359 = smul.addr %s358, 32
      %s360 = smul.addr %s359, 8
      %s361 = scalar_lea.vmem %s10, %s360
      %v362 = vld [vmem:[%s356] sm:$0xff]
      %v363 = vld [vmem:[%s356 + $0x8] sm:$0xff]
      %v364 = vld [vmem:[%s356 + $0x10] sm:$0xff]
      %v365 = vld [vmem:[%s356 + $0x18] sm:$0xff]
      %v366 = vld [vmem:[%s356 + $0x20] sm:$0xff]
      %v367 = vld [vmem:[%s356 + $0x28] sm:$0xff]
      %v368 = vld [vmem:[%s356 + $0x30] sm:$0xff]
      %v369 = vld [vmem:[%s356 + $0x38] sm:$0xff]
      %v370 = vld [vmem:[%s356 + $0x40] sm:$0xff]
      %v371 = vld [vmem:[%s356 + $0x48] sm:$0xff]
      %v372 = vld [vmem:[%s356 + $0x50] sm:$0xff]
      %v373 = vld [vmem:[%s356 + $0x58] sm:$0xff]
      %v374 = vld [vmem:[%s356 + $0x60] sm:$0xff]
      %v375 = vld [vmem:[%s356 + $0x68] sm:$0xff]
      %v376 = vld [vmem:[%s356 + $0x70] sm:$0xff]
      %v377 = vld [vmem:[%s356 + $0x78] sm:$0xff]
      %v378 = vld [vmem:[%s356 + $0x80] sm:$0xff]
      %v379 = vld [vmem:[%s356 + $0x88] sm:$0xff]
      %v380 = vld [vmem:[%s356 + $0x90] sm:$0xff]
      %v381 = vld [vmem:[%s356 + $0x98] sm:$0xff]
      %v382 = vld [vmem:[%s356 + $0xa0] sm:$0xff]
      %v383 = vld [vmem:[%s356 + $0xa8] sm:$0xff]
      %v384 = vld [vmem:[%s356 + $0xb0] sm:$0xff]
      %v385 = vld [vmem:[%s356 + $0xb8] sm:$0xff]
      %v386 = vld [vmem:[%s356 + $0xc0] sm:$0xff]
      %v387 = vld [vmem:[%s356 + $0xc8] sm:$0xff]
      %v388 = vld [vmem:[%s356 + $0xd0] sm:$0xff]
      %v389 = vld [vmem:[%s356 + $0xd8] sm:$0xff]
      %v390 = vld [vmem:[%s356 + $0xe0] sm:$0xff]
      %v391 = vld [vmem:[%s356 + $0xe8] sm:$0xff]
      %v392 = vld [vmem:[%s356 + $0xf0] sm:$0xff]
      %v393 = vld [vmem:[%s356 + $0xf8] sm:$0xff]
      %394 = vst [vmem:[#allocation2] sm:$0xff] 0.0
      %395 = vst [vmem:[#allocation2 + $0x8] sm:$0xff] 0.0
      %396 = vst [vmem:[#allocation2 + $0x10] sm:$0x3] 0.0
      %397 = vst [vmem:[#allocation2 + $0x18] sm:$0xff] 0.0
      %398 = vst [vmem:[#allocation2 + $0x20] sm:$0xff] 0.0
      %399 = vst [vmem:[#allocation2 + $0x28] sm:$0x3] 0.0
      %400 = vst [vmem:[#allocation2 + $0x30] sm:$0xff] 0.0
      %401 = vst [vmem:[#allocation2 + $0x38] sm:$0xff] 0.0
      %402 = vst [vmem:[#allocation2 + $0x40] sm:$0x3] 0.0
      %403 = vst [vmem:[#allocation2 + $0x48] sm:$0xff] 0.0
      %404 = vst [vmem:[#allocation2 + $0x50] sm:$0xff] 0.0
      %405 = vst [vmem:[#allocation2 + $0x58] sm:$0x3] 0.0
      %406 = vst [vmem:[#allocation2 + $0x60] sm:$0xff] 0.0
      %407 = vst [vmem:[#allocation2 + $0x68] sm:$0xff] 0.0
      %408 = vst [vmem:[#allocation2 + $0x70] sm:$0x3] 0.0
      %409 = vst [vmem:[#allocation2 + $0x78] sm:$0xff] 0.0
      %410 = vst [vmem:[#allocation2 + $0x80] sm:$0xff] 0.0
      %411 = vst [vmem:[#allocation2 + $0x88] sm:$0x3] 0.0
      %412 = vst [vmem:[#allocation2 + $0x90] sm:$0xff] 0.0
      %413 = vst [vmem:[#allocation2 + $0x98] sm:$0xff] 0.0
      %414 = vst [vmem:[#allocation2 + $0xa0] sm:$0x3] 0.0
      %415 = vst [vmem:[#allocation2 + $0xa8] sm:$0xff] 0.0
      %416 = vst [vmem:[#allocation2 + $0xb0] sm:$0xff] 0.0
      %417 = vst [vmem:[#allocation2 + $0xb8] sm:$0x3] 0.0
      %418 = vst [vmem:[#allocation2 + $0xc0] sm:$0xff] 0.0
      %419 = vst [vmem:[#allocation2 + $0xc8] sm:$0xff] 0.0
      %420 = vst [vmem:[#allocation2 + $0xd0] sm:$0x3] 0.0
      %421 = vst [vmem:[#allocation2 + $0xd8] sm:$0xff] 0.0
      %422 = vst [vmem:[#allocation2 + $0xe0] sm:$0xff] 0.0
      %423 = vst [vmem:[#allocation2 + $0xe8] sm:$0x3] 0.0
      %424 = vst [vmem:[#allocation2 + $0xf0] sm:$0xff] 0.0
      %425 = vst [vmem:[#allocation2 + $0xf8] sm:$0xff] 0.0
      %426 = vst [vmem:[#allocation2 + $0x100] sm:$0x3] 0.0
      %427 = vst [vmem:[#allocation2 + $0x108] sm:$0xff] 0.0
      %428 = vst [vmem:[#allocation2 + $0x110] sm:$0xff] 0.0
      %429 = vst [vmem:[#allocation2 + $0x118] sm:$0x3] 0.0
      %430 = vst [vmem:[#allocation2 + $0x120] sm:$0xff] 0.0
      %431 = vst [vmem:[#allocation2 + $0x128] sm:$0xff] 0.0
      %432 = vst [vmem:[#allocation2 + $0x130] sm:$0x3] 0.0
      %433 = vst [vmem:[#allocation2 + $0x138] sm:$0xff] 0.0
      %434 = vst [vmem:[#allocation2 + $0x140] sm:$0xff] 0.0
      %435 = vst [vmem:[#allocation2 + $0x148] sm:$0x3] 0.0
      %436 = vst [vmem:[#allocation2 + $0x150] sm:$0xff] 0.0
      %437 = vst [vmem:[#allocation2 + $0x158] sm:$0xff] 0.0
      %438 = vst [vmem:[#allocation2 + $0x160] sm:$0x3] 0.0
      %439 = vst [vmem:[#allocation2 + $0x168] sm:$0xff] 0.0
      %440 = vst [vmem:[#allocation2 + $0x170] sm:$0xff] 0.0
      %441 = vst [vmem:[#allocation2 + $0x178] sm:$0x3] 0.0
      %442 = vst [vmem:[#allocation2 + $0x180] sm:$0xff] 0.0
      %443 = vst [vmem:[#allocation2 + $0x188] sm:$0xff] 0.0
      %444 = vst [vmem:[#allocation2 + $0x190] sm:$0x3] 0.0
      %445 = vst [vmem:[#allocation2 + $0x198] sm:$0xff] 0.0
      %446 = vst [vmem:[#allocation2 + $0x1a0] sm:$0xff] 0.0
      %447 = vst [vmem:[#allocation2 + $0x1a8] sm:$0x3] 0.0
      %v448 = vmul.f32 %v362, 0.9805807
      %v449 = vmul.f32 %v363, 0.9805807
      %v450 = vmul.f32 %v364, 0.9805807
      %v451 = vmul.f32 %v365, 0.9805807
      %v452 = vmul.f32 %v366, 0.9805807
      %v453 = vmul.f32 %v367, 0.9805807
      %v454 = vmul.f32 %v368, 0.9805807
      %v455 = vmul.f32 %v369, 0.9805807
      %v456 = vmul.f32 %v370, 0.9805807
      %v457 = vmul.f32 %v371, 0.9805807
      %v458 = vmul.f32 %v372, 0.9805807
      %v459 = vmul.f32 %v373, 0.9805807
      %v460 = vmul.f32 %v374, 0.9805807
      %v461 = vmul.f32 %v375, 0.9805807
      %v462 = vmul.f32 %v376, 0.9805807
      %v463 = vmul.f32 %v377, 0.9805807
      %v464 = vmul.f32 %v378, 0.9805807
      %v465 = vmul.f32 %v379, 0.9805807
      %v466 = vmul.f32 %v380, 0.9805807
      %v467 = vmul.f32 %v381, 0.9805807
      %v468 = vmul.f32 %v382, 0.9805807
      %v469 = vmul.f32 %v383, 0.9805807
      %v470 = vmul.f32 %v384, 0.9805807
      %v471 = vmul.f32 %v385, 0.9805807
      %v472 = vmul.f32 %v386, 0.9805807
      %v473 = vmul.f32 %v387, 0.9805807
      %v474 = vmul.f32 %v388, 0.9805807
      %v475 = vmul.f32 %v389, 0.9805807
      %v476 = vmul.f32 %v390, 0.9805807
      %v477 = vmul.f32 %v391, 0.9805807
      %v478 = vmul.f32 %v392, 0.9805807
      %v479 = vmul.f32 %v393, 0.9805807
      %v480 = vmax.f32 %v448, 0.0
      %v481 = vmax.f32 %v449, 0.0
      %v482 = vmax.f32 %v450, 0.0
      %v483 = vmax.f32 %v451, 0.0
      %v484 = vmax.f32 %v452, 0.0
      %v485 = vmax.f32 %v453, 0.0
      %v486 = vmax.f32 %v454, 0.0
      %v487 = vmax.f32 %v455, 0.0
      %v488 = vmax.f32 %v456, 0.0
      %v489 = vmax.f32 %v457, 0.0
      %v490 = vmax.f32 %v458, 0.0
      %v491 = vmax.f32 %v459, 0.0
      %v492 = vmax.f32 %v460, 0.0
      %v493 = vmax.f32 %v461, 0.0
      %v494 = vmax.f32 %v462, 0.0
      %v495 = vmax.f32 %v463, 0.0
      %v496 = vmax.f32 %v464, 0.0
      %v497 = vmax.f32 %v465, 0.0
      %v498 = vmax.f32 %v466, 0.0
      %v499 = vmax.f32 %v467, 0.0
      %v500 = vmax.f32 %v468, 0.0
      %v501 = vmax.f32 %v469, 0.0
      %v502 = vmax.f32 %v470, 0.0
      %v503 = vmax.f32 %v471, 0.0
      %v504 = vmax.f32 %v472, 0.0
      %v505 = vmax.f32 %v473, 0.0
      %v506 = vmax.f32 %v474, 0.0
      %v507 = vmax.f32 %v475, 0.0
      %v508 = vmax.f32 %v476, 0.0
      %v509 = vmax.f32 %v477, 0.0
      %v510 = vmax.f32 %v478, 0.0
      %v511 = vmax.f32 %v479, 0.0
      %v512 = vmul.f32 %v480, 1.7128586
      %v513 = vmul.f32 %v481, 1.7128586
      %v514 = vmul.f32 %v482, 1.7128586
      %v515 = vmul.f32 %v483, 1.7128586
      %v516 = vmul.f32 %v484, 1.7128586
      %v517 = vmul.f32 %v485, 1.7128586
      %v518 = vmul.f32 %v486, 1.7128586
      %v519 = vmul.f32 %v487, 1.7128586
      %v520 = vmul.f32 %v488, 1.7128586
      %v521 = vmul.f32 %v489, 1.7128586
      %v522 = vmul.f32 %v490, 1.7128586
      %v523 = vmul.f32 %v491, 1.7128586
      %v524 = vmul.f32 %v492, 1.7128586
      %v525 = vmul.f32 %v493, 1.7128586
      %v526 = vmul.f32 %v494, 1.7128586
      %v527 = vmul.f32 %v495, 1.7128586
      %v528 = vmul.f32 %v496, 1.7128586
      %v529 = vmul.f32 %v497, 1.7128586
      %v530 = vmul.f32 %v498, 1.7128586
      %v531 = vmul.f32 %v499, 1.7128586
      %v532 = vmul.f32 %v500, 1.7128586
      %v533 = vmul.f32 %v501, 1.7128586
      %v534 = vmul.f32 %v502, 1.7128586
      %v535 = vmul.f32 %v503, 1.7128586
      %v536 = vmul.f32 %v504, 1.7128586
      %v537 = vmul.f32 %v505, 1.7128586
      %v538 = vmul.f32 %v506, 1.7128586
      %v539 = vmul.f32 %v507, 1.7128586
      %v540 = vmul.f32 %v508, 1.7128586
      %v541 = vmul.f32 %v509, 1.7128586
      %v542 = vmul.f32 %v510, 1.7128586
      %v543 = vmul.f32 %v511, 1.7128586
      %s544 = scalar_lea.vmem [#allocation2], 24
      %545 = vst [vmem:[%s544 + $0x1] sm:$0xff] %v512
      %546 = vst [vmem:[%s544 + $0x9] sm:$0xff] %v513
      %s547 = scalar_lea.vmem [#allocation2], 48
      %548 = vst [vmem:[%s547 + $0x1] sm:$0xff] %v514
      %549 = vst [vmem:[%s547 + $0x9] sm:$0xff] %v515
      %s550 = scalar_lea.vmem [#allocation2], 72
      %551 = vst [vmem:[%s550 + $0x1] sm:$0xff] %v516
      %552 = vst [vmem:[%s550 + $0x9] sm:$0xff] %v517
      %s553 = scalar_lea.vmem [#allocation2], 96
      %554 = vst [vmem:[%s553 + $0x1] sm:$0xff] %v518
      %555 = vst [vmem:[%s553 + $0x9] sm:$0xff] %v519
      %s556 = scalar_lea.vmem [#allocation2], 120
      %557 = vst [vmem:[%s556 + $0x1] sm:$0xff] %v520
      %558 = vst [vmem:[%s556 + $0x9] sm:$0xff] %v521
      %s559 = scalar_lea.vmem [#allocation2], 144
      %560 = vst [vmem:[%s559 + $0x1] sm:$0xff] %v522
      %561 = vst [vmem:[%s559 + $0x9] sm:$0xff] %v523
      %s562 = scalar_lea.vmem [#allocation2], 168
      %563 = vst [vmem:[%s562 + $0x1] sm:$0xff] %v524
      %564 = vst [vmem:[%s562 + $0x9] sm:$0xff] %v525
      %s565 = scalar_lea.vmem [#allocation2], 192
      %566 = vst [vmem:[%s565 + $0x1] sm:$0xff] %v526
      %567 = vst [vmem:[%s565 + $0x9] sm:$0xff] %v527
      %s568 = scalar_lea.vmem [#allocation2], 216
      %569 = vst [vmem:[%s568 + $0x1] sm:$0xff] %v528
      %570 = vst [vmem:[%s568 + $0x9] sm:$0xff] %v529
      %s571 = scalar_lea.vmem [#allocation2], 240
      %572 = vst [vmem:[%s571 + $0x1] sm:$0xff] %v530
      %573 = vst [vmem:[%s571 + $0x9] sm:$0xff] %v531
      %s574 = scalar_lea.vmem [#allocation2], 264
      %575 = vst [vmem:[%s574 + $0x1] sm:$0xff] %v532
      %576 = vst [vmem:[%s574 + $0x9] sm:$0xff] %v533
      %s577 = scalar_lea.vmem [#allocation2], 288
      %578 = vst [vmem:[%s577 + $0x1] sm:$0xff] %v534
      %579 = vst [vmem:[%s577 + $0x9] sm:$0xff] %v535
      %s580 = scalar_lea.vmem [#allocation2], 312
      %581 = vst [vmem:[%s580 + $0x1] sm:$0xff] %v536
      %582 = vst [vmem:[%s580 + $0x9] sm:$0xff] %v537
      %s583 = scalar_lea.vmem [#allocation2], 336
      %584 = vst [vmem:[%s583 + $0x1] sm:$0xff] %v538
      %585 = vst [vmem:[%s583 + $0x9] sm:$0xff] %v539
      %s586 = scalar_lea.vmem [#allocation2], 360
      %587 = vst [vmem:[%s586 + $0x1] sm:$0xff] %v540
      %588 = vst [vmem:[%s586 + $0x9] sm:$0xff] %v541
      %s589 = scalar_lea.vmem [#allocation2], 384
      %590 = vst [vmem:[%s589 + $0x1] sm:$0xff] %v542
      %591 = vst [vmem:[%s589 + $0x9] sm:$0xff] %v543
      %v592 = vld [vmem:[%s2] sm:$0x1]
      %v593 = vld [vmem:[#allocation2] sm:$0xff]
      %v594 = vld [vmem:[#allocation2 + $0x8] sm:$0xff]
      %v595 = vld [vmem:[#allocation2 + $0x18] sm:$0xff]
      %v596 = vld [vmem:[#allocation2 + $0x20] sm:$0xff]
      %v597 = vld [vmem:[#allocation2 + $0x30] sm:$0xff]
      %v598 = vld [vmem:[#allocation2 + $0x38] sm:$0xff]
      %v599 = vld [vmem:[#allocation2 + $0x48] sm:$0xff]
      %v600 = vld [vmem:[#allocation2 + $0x50] sm:$0xff]
      %v601 = vld [vmem:[#allocation2 + $0x60] sm:$0xff]
      %v602 = vld [vmem:[#allocation2 + $0x68] sm:$0xff]
      %v603 = vld [vmem:[#allocation2 + $0x78] sm:$0xff]
      %v604 = vld [vmem:[#allocation2 + $0x80] sm:$0xff]
      %v605 = vld [vmem:[#allocation2 + $0x90] sm:$0xff]
      %v606 = vld [vmem:[#allocation2 + $0x98] sm:$0xff]
      %v607 = vld [vmem:[#allocation2 + $0xa8] sm:$0xff]
      %v608 = vld [vmem:[#allocation2 + $0xb0] sm:$0xff]
      %v609 = vld [vmem:[#allocation2 + $0xc0] sm:$0xff]
      %v610 = vld [vmem:[#allocation2 + $0xc8] sm:$0xff]
      %v611 = vld [vmem:[#allocation2 + $0xd8] sm:$0xff]
      %v612 = vld [vmem:[#allocation2 + $0xe0] sm:$0xff]
      %v613 = vld [vmem:[#allocation2 + $0xf0] sm:$0xff]
      %v614 = vld [vmem:[#allocation2 + $0xf8] sm:$0xff]
      %v615 = vld [vmem:[#allocation2 + $0x108] sm:$0xff]
      %v616 = vld [vmem:[#allocation2 + $0x110] sm:$0xff]
      %v617 = vld [vmem:[#allocation2 + $0x120] sm:$0xff]
      %v618 = vld [vmem:[#allocation2 + $0x128] sm:$0xff]
      %v619 = vld [vmem:[#allocation2 + $0x138] sm:$0xff]
      %v620 = vld [vmem:[#allocation2 + $0x140] sm:$0xff]
      %v621 = vld [vmem:[#allocation2 + $0x150] sm:$0xff]
      %v622 = vld [vmem:[#allocation2 + $0x158] sm:$0xff]
      %v623 = vld [vmem:[#allocation2 + $0x168] sm:$0xff]
      %v624 = vld [vmem:[#allocation2 + $0x170] sm:$0xff]
      %v625 = vld [vmem:[#allocation2 + $0x1] sm:$0xff]
      %v626 = vld [vmem:[#allocation2 + $0x9] sm:$0xff]
      %v627 = vld [vmem:[#allocation2 + $0x19] sm:$0xff]
      %v628 = vld [vmem:[#allocation2 + $0x21] sm:$0xff]
      %v629 = vld [vmem:[#allocation2 + $0x31] sm:$0xff]
      %v630 = vld [vmem:[#allocation2 + $0x39] sm:$0xff]
      %v631 = vld [vmem:[#allocation2 + $0x49] sm:$0xff]
      %v632 = vld [vmem:[#allocation2 + $0x51] sm:$0xff]
      %v633 = vld [vmem:[#allocation2 + $0x61] sm:$0xff]
      %v634 = vld [vmem:[#allocation2 + $0x69] sm:$0xff]
      %v635 = vld [vmem:[#allocation2 + $0x79] sm:$0xff]
      %v636 = vld [vmem:[#allocation2 + $0x81] sm:$0xff]
      %v637 = vld [vmem:[#allocation2 + $0x91] sm:$0xff]
      %v638 = vld [vmem:[#allocation2 + $0x99] sm:$0xff]
      %v639 = vld [vmem:[#allocation2 + $0xa9] sm:$0xff]
      %v640 = vld [vmem:[#allocation2 + $0xb1] sm:$0xff]
      %v641 = vld [vmem:[#allocation2 + $0xc1] sm:$0xff]
      %v642 = vld [vmem:[#allocation2 + $0xc9] sm:$0xff]
      %v643 = vld [vmem:[#allocation2 + $0xd9] sm:$0xff]
      %v644 = vld [vmem:[#allocation2 + $0xe1] sm:$0xff]
      %v645 = vld [vmem:[#allocation2 + $0xf1] sm:$0xff]
      %v646 = vld [vmem:[#allocation2 + $0xf9] sm:$0xff]
      %v647 = vld [vmem:[#allocation2 + $0x109] sm:$0xff]
      %v648 = vld [vmem:[#allocation2 + $0x111] sm:$0xff]
      %v649 = vld [vmem:[#allocation2 + $0x121] sm:$0xff]
      %v650 = vld [vmem:[#allocation2 + $0x129] sm:$0xff]
      %v651 = vld [vmem:[#allocation2 + $0x139] sm:$0xff]
      %v652 = vld [vmem:[#allocation2 + $0x141] sm:$0xff]
      %v653 = vld [vmem:[#allocation2 + $0x151] sm:$0xff]
      %v654 = vld [vmem:[#allocation2 + $0x159] sm:$0xff]
      %v655 = vld [vmem:[#allocation2 + $0x169] sm:$0xff]
      %v656 = vld [vmem:[#allocation2 + $0x171] sm:$0xff]
      %v657 = vld [vmem:[#allocation2 + $0x2] sm:$0xff]
      %v658 = vld [vmem:[#allocation2 + $0xa] sm:$0xff]
      %v659 = vld [vmem:[#allocation2 + $0x1a] sm:$0xff]
      %v660 = vld [vmem:[#allocation2 + $0x22] sm:$0xff]
      %v661 = vld [vmem:[#allocation2 + $0x32] sm:$0xff]
      %v662 = vld [vmem:[#allocation2 + $0x3a] sm:$0xff]
      %v663 = vld [vmem:[#allocation2 + $0x4a] sm:$0xff]
      %v664 = vld [vmem:[#allocation2 + $0x52] sm:$0xff]
      %v665 = vld [vmem:[#allocation2 + $0x62] sm:$0xff]
      %v666 = vld [vmem:[#allocation2 + $0x6a] sm:$0xff]
      %v667 = vld [vmem:[#allocation2 + $0x7a] sm:$0xff]
      %v668 = vld [vmem:[#allocation2 + $0x82] sm:$0xff]
      %v669 = vld [vmem:[#allocation2 + $0x92] sm:$0xff]
      %v670 = vld [vmem:[#allocation2 + $0x9a] sm:$0xff]
      %v671 = vld [vmem:[#allocation2 + $0xaa] sm:$0xff]
      %v672 = vld [vmem:[#allocation2 + $0xb2] sm:$0xff]
      %v673 = vld [vmem:[#allocation2 + $0xc2] sm:$0xff]
      %v674 = vld [vmem:[#allocation2 + $0xca] sm:$0xff]
      %v675 = vld [vmem:[#allocation2 + $0xda] sm:$0xff]
      %v676 = vld [vmem:[#allocation2 + $0xe2] sm:$0xff]
      %v677 = vld [vmem:[#allocation2 + $0xf2] sm:$0xff]
      %v678 = vld [vmem:[#allocation2 + $0xfa] sm:$0xff]
      %v679 = vld [vmem:[#allocation2 + $0x10a] sm:$0xff]
      %v680 = vld [vmem:[#allocation2 + $0x112] sm:$0xff]
      %v681 = vld [vmem:[#allocation2 + $0x122] sm:$0xff]
      %v682 = vld [vmem:[#allocation2 + $0x12a] sm:$0xff]
      %v683 = vld [vmem:[#allocation2 + $0x13a] sm:$0xff]
      %v684 = vld [vmem:[#allocation2 + $0x142] sm:$0xff]
      %v685 = vld [vmem:[#allocation2 + $0x152] sm:$0xff]
      %v686 = vld [vmem:[#allocation2 + $0x15a] sm:$0xff]
      %v687 = vld [vmem:[#allocation2 + $0x16a] sm:$0xff]
      %v688 = vld [vmem:[#allocation2 + $0x172] sm:$0xff]
      %v689 = vld [vmem:[%s544] sm:$0xff]
      %v690 = vld [vmem:[%s544 + $0x8] sm:$0xff]
      %v691 = vld [vmem:[%s544 + $0x18] sm:$0xff]
      %v692 = vld [vmem:[%s544 + $0x20] sm:$0xff]
      %v693 = vld [vmem:[%s544 + $0x30] sm:$0xff]
      %v694 = vld [vmem:[%s544 + $0x38] sm:$0xff]
      %v695 = vld [vmem:[%s544 + $0x48] sm:$0xff]
      %v696 = vld [vmem:[%s544 + $0x50] sm:$0xff]
      %v697 = vld [vmem:[%s544 + $0x60] sm:$0xff]
      %v698 = vld [vmem:[%s544 + $0x68] sm:$0xff]
      %v699 = vld [vmem:[%s544 + $0x78] sm:$0xff]
      %v700 = vld [vmem:[%s544 + $0x80] sm:$0xff]
      %v701 = vld [vmem:[%s544 + $0x90] sm:$0xff]
      %v702 = vld [vmem:[%s544 + $0x98] sm:$0xff]
      %v703 = vld [vmem:[%s544 + $0xa8] sm:$0xff]
      %v704 = vld [vmem:[%s544 + $0xb0] sm:$0xff]
      %v705 = vld [vmem:[%s544 + $0xc0] sm:$0xff]
      %v706 = vld [vmem:[%s544 + $0xc8] sm:$0xff]
      %v707 = vld [vmem:[%s544 + $0xd8] sm:$0xff]
      %v708 = vld [vmem:[%s544 + $0xe0] sm:$0xff]
      %v709 = vld [vmem:[%s544 + $0xf0] sm:$0xff]
      %v710 = vld [vmem:[%s544 + $0xf8] sm:$0xff]
      %v711 = vld [vmem:[%s544 + $0x108] sm:$0xff]
      %v712 = vld [vmem:[%s544 + $0x110] sm:$0xff]
      %v713 = vld [vmem:[%s544 + $0x120] sm:$0xff]
      %v714 = vld [vmem:[%s544 + $0x128] sm:$0xff]
      %v715 = vld [vmem:[%s544 + $0x138] sm:$0xff]
      %v716 = vld [vmem:[%s544 + $0x140] sm:$0xff]
      %v717 = vld [vmem:[%s544 + $0x150] sm:$0xff]
      %v718 = vld [vmem:[%s544 + $0x158] sm:$0xff]
      %v719 = vld [vmem:[%s544 + $0x168] sm:$0xff]
      %v720 = vld [vmem:[%s544 + $0x170] sm:$0xff]
      %v721 = vld [vmem:[%s544 + $0x1] sm:$0xff]
      %v722 = vld [vmem:[%s544 + $0x9] sm:$0xff]
      %v723 = vld [vmem:[%s544 + $0x19] sm:$0xff]
      %v724 = vld [vmem:[%s544 + $0x21] sm:$0xff]
      %v725 = vld [vmem:[%s544 + $0x31] sm:$0xff]
      %v726 = vld [vmem:[%s544 + $0x39] sm:$0xff]
      %v727 = vld [vmem:[%s544 + $0x49] sm:$0xff]
      %v728 = vld [vmem:[%s544 + $0x51] sm:$0xff]
      %v729 = vld [vmem:[%s544 + $0x61] sm:$0xff]
      %v730 = vld [vmem:[%s544 + $0x69] sm:$0xff]
      %v731 = vld [vmem:[%s544 + $0x79] sm:$0xff]
      %v732 = vld [vmem:[%s544 + $0x81] sm:$0xff]
      %v733 = vld [vmem:[%s544 + $0x91] sm:$0xff]
      %v734 = vld [vmem:[%s544 + $0x99] sm:$0xff]
      %v735 = vld [vmem:[%s544 + $0xa9] sm:$0xff]
      %v736 = vld [vmem:[%s544 + $0xb1] sm:$0xff]
      %v737 = vld [vmem:[%s544 + $0xc1] sm:$0xff]
      %v738 = vld [vmem:[%s544 + $0xc9] sm:$0xff]
      %v739 = vld [vmem:[%s544 + $0xd9] sm:$0xff]
      %v740 = vld [vmem:[%s544 + $0xe1] sm:$0xff]
      %v741 = vld [vmem:[%s544 + $0xf1] sm:$0xff]
      %v742 = vld [vmem:[%s544 + $0xf9] sm:$0xff]
      %v743 = vld [vmem:[%s544 + $0x109] sm:$0xff]
      %v744 = vld [vmem:[%s544 + $0x111] sm:$0xff]
      %v745 = vld [vmem:[%s544 + $0x121] sm:$0xff]
      %v746 = vld [vmem:[%s544 + $0x129] sm:$0xff]
      %v747 = vld [vmem:[%s544 + $0x139] sm:$0xff]
      %v748 = vld [vmem:[%s544 + $0x141] sm:$0xff]
      %v749 = vld [vmem:[%s544 + $0x151] sm:$0xff]
      %v750 = vld [vmem:[%s544 + $0x159] sm:$0xff]
      %v751 = vld [vmem:[%s544 + $0x169] sm:$0xff]
      %v752 = vld [vmem:[%s544 + $0x171] sm:$0xff]
      %v753 = vld [vmem:[%s544 + $0x2] sm:$0xff]
      %v754 = vld [vmem:[%s544 + $0xa] sm:$0xff]
      %v755 = vld [vmem:[%s544 + $0x1a] sm:$0xff]
      %v756 = vld [vmem:[%s544 + $0x22] sm:$0xff]
      %v757 = vld [vmem:[%s544 + $0x32] sm:$0xff]
      %v758 = vld [vmem:[%s544 + $0x3a] sm:$0xff]
      %v759 = vld [vmem:[%s544 + $0x4a] sm:$0xff]
      %v760 = vld [vmem:[%s544 + $0x52] sm:$0xff]
      %v761 = vld [vmem:[%s544 + $0x62] sm:$0xff]
      %v762 = vld [vmem:[%s544 + $0x6a] sm:$0xff]
      %v763 = vld [vmem:[%s544 + $0x7a] sm:$0xff]
      %v764 = vld [vmem:[%s544 + $0x82] sm:$0xff]
      %v765 = vld [vmem:[%s544 + $0x92] sm:$0xff]
      %v766 = vld [vmem:[%s544 + $0x9a] sm:$0xff]
      %v767 = vld [vmem:[%s544 + $0xaa] sm:$0xff]
      %v768 = vld [vmem:[%s544 + $0xb2] sm:$0xff]
      %v769 = vld [vmem:[%s544 + $0xc2] sm:$0xff]
      %v770 = vld [vmem:[%s544 + $0xca] sm:$0xff]
      %v771 = vld [vmem:[%s544 + $0xda] sm:$0xff]
      %v772 = vld [vmem:[%s544 + $0xe2] sm:$0xff]
      %v773 = vld [vmem:[%s544 + $0xf2] sm:$0xff]
      %v774 = vld [vmem:[%s544 + $0xfa] sm:$0xff]
      %v775 = vld [vmem:[%s544 + $0x10a] sm:$0xff]
      %v776 = vld [vmem:[%s544 + $0x112] sm:$0xff]
      %v777 = vld [vmem:[%s544 + $0x122] sm:$0xff]
      %v778 = vld [vmem:[%s544 + $0x12a] sm:$0xff]
      %v779 = vld [vmem:[%s544 + $0x13a] sm:$0xff]
      %v780 = vld [vmem:[%s544 + $0x142] sm:$0xff]
      %v781 = vld [vmem:[%s544 + $0x152] sm:$0xff]
      %v782 = vld [vmem:[%s544 + $0x15a] sm:$0xff]
      %v783 = vld [vmem:[%s544 + $0x16a] sm:$0xff]
      %v784 = vld [vmem:[%s544 + $0x172] sm:$0xff]
      %v785 = vld [vmem:[%s547] sm:$0xff]
      %v786 = vld [vmem:[%s547 + $0x8] sm:$0xff]
      %v787 = vld [vmem:[%s547 + $0x18] sm:$0xff]
      %v788 = vld [vmem:[%s547 + $0x20] sm:$0xff]
      %v789 = vld [vmem:[%s547 + $0x30] sm:$0xff]
      %v790 = vld [vmem:[%s547 + $0x38] sm:$0xff]
      %v791 = vld [vmem:[%s547 + $0x48] sm:$0xff]
      %v792 = vld [vmem:[%s547 + $0x50] sm:$0xff]
      %v793 = vld [vmem:[%s547 + $0x60] sm:$0xff]
      %v794 = vld [vmem:[%s547 + $0x68] sm:$0xff]
      %v795 = vld [vmem:[%s547 + $0x78] sm:$0xff]
      %v796 = vld [vmem:[%s547 + $0x80] sm:$0xff]
      %v797 = vld [vmem:[%s547 + $0x90] sm:$0xff]
      %v798 = vld [vmem:[%s547 + $0x98] sm:$0xff]
      %v799 = vld [vmem:[%s547 + $0xa8] sm:$0xff]
      %v800 = vld [vmem:[%s547 + $0xb0] sm:$0xff]
      %v801 = vld [vmem:[%s547 + $0xc0] sm:$0xff]
      %v802 = vld [vmem:[%s547 + $0xc8] sm:$0xff]
      %v803 = vld [vmem:[%s547 + $0xd8] sm:$0xff]
      %v804 = vld [vmem:[%s547 + $0xe0] sm:$0xff]
      %v805 = vld [vmem:[%s547 + $0xf0] sm:$0xff]
      %v806 = vld [vmem:[%s547 + $0xf8] sm:$0xff]
      %v807 = vld [vmem:[%s547 + $0x108] sm:$0xff]
      %v808 = vld [vmem:[%s547 + $0x110] sm:$0xff]
      %v809 = vld [vmem:[%s547 + $0x120] sm:$0xff]
      %v810 = vld [vmem:[%s547 + $0x128] sm:$0xff]
      %v811 = vld [vmem:[%s547 + $0x138] sm:$0xff]
      %v812 = vld [vmem:[%s547 + $0x140] sm:$0xff]
      %v813 = vld [vmem:[%s547 + $0x150] sm:$0xff]
      %v814 = vld [vmem:[%s547 + $0x158] sm:$0xff]
      %v815 = vld [vmem:[%s547 + $0x168] sm:$0xff]
      %v816 = vld [vmem:[%s547 + $0x170] sm:$0xff]
      %v817 = vld [vmem:[%s547 + $0x1] sm:$0xff]
      %v818 = vld [vmem:[%s547 + $0x9] sm:$0xff]
      %v819 = vld [vmem:[%s547 + $0x19] sm:$0xff]
      %v820 = vld [vmem:[%s547 + $0x21] sm:$0xff]
      %v821 = vld [vmem:[%s547 + $0x31] sm:$0xff]
      %v822 = vld [vmem:[%s547 + $0x39] sm:$0xff]
      %v823 = vld [vmem:[%s547 + $0x49] sm:$0xff]
      %v824 = vld [vmem:[%s547 + $0x51] sm:$0xff]
      %v825 = vld [vmem:[%s547 + $0x61] sm:$0xff]
      %v826 = vld [vmem:[%s547 + $0x69] sm:$0xff]
      %v827 = vld [vmem:[%s547 + $0x79] sm:$0xff]
      %v828 = vld [vmem:[%s547 + $0x81] sm:$0xff]
      %v829 = vld [vmem:[%s547 + $0x91] sm:$0xff]
      %v830 = vld [vmem:[%s547 + $0x99] sm:$0xff]
      %v831 = vld [vmem:[%s547 + $0xa9] sm:$0xff]
      %v832 = vld [vmem:[%s547 + $0xb1] sm:$0xff]
      %v833 = vld [vmem:[%s547 + $0xc1] sm:$0xff]
      %v834 = vld [vmem:[%s547 + $0xc9] sm:$0xff]
      %v835 = vld [vmem:[%s547 + $0xd9] sm:$0xff]
      %v836 = vld [vmem:[%s547 + $0xe1] sm:$0xff]
      %v837 = vld [vmem:[%s547 + $0xf1] sm:$0xff]
      %v838 = vld [vmem:[%s547 + $0xf9] sm:$0xff]
      %v839 = vld [vmem:[%s547 + $0x109] sm:$0xff]
      %v840 = vld [vmem:[%s547 + $0x111] sm:$0xff]
      %v841 = vld [vmem:[%s547 + $0x121] sm:$0xff]
      %v842 = vld [vmem:[%s547 + $0x129] sm:$0xff]
      %v843 = vld [vmem:[%s547 + $0x139] sm:$0xff]
      %v844 = vld [vmem:[%s547 + $0x141] sm:$0xff]
      %v845 = vld [vmem:[%s547 + $0x151] sm:$0xff]
      %v846 = vld [vmem:[%s547 + $0x159] sm:$0xff]
      %v847 = vld [vmem:[%s547 + $0x169] sm:$0xff]
      %v848 = vld [vmem:[%s547 + $0x171] sm:$0xff]
      %v849 = vld [vmem:[%s547 + $0x2] sm:$0xff]
      %v850 = vld [vmem:[%s547 + $0xa] sm:$0xff]
      %v851 = vld [vmem:[%s547 + $0x1a] sm:$0xff]
      %v852 = vld [vmem:[%s547 + $0x22] sm:$0xff]
      %v853 = vld [vmem:[%s547 + $0x32] sm:$0xff]
      %v854 = vld [vmem:[%s547 + $0x3a] sm:$0xff]
      %v855 = vld [vmem:[%s547 + $0x4a] sm:$0xff]
      %v856 = vld [vmem:[%s547 + $0x52] sm:$0xff]
      %v857 = vld [vmem:[%s547 + $0x62] sm:$0xff]
      %v858 = vld [vmem:[%s547 + $0x6a] sm:$0xff]
      %v859 = vld [vmem:[%s547 + $0x7a] sm:$0xff]
      %v860 = vld [vmem:[%s547 + $0x82] sm:$0xff]
      %v861 = vld [vmem:[%s547 + $0x92] sm:$0xff]
      %v862 = vld [vmem:[%s547 + $0x9a] sm:$0xff]
      %v863 = vld [vmem:[%s547 + $0xaa] sm:$0xff]
      %v864 = vld [vmem:[%s547 + $0xb2] sm:$0xff]
      %v865 = vld [vmem:[%s547 + $0xc2] sm:$0xff]
      %v866 = vld [vmem:[%s547 + $0xca] sm:$0xff]
      %v867 = vld [vmem:[%s547 + $0xda] sm:$0xff]
      %v868 = vld [vmem:[%s547 + $0xe2] sm:$0xff]
      %v869 = vld [vmem:[%s547 + $0xf2] sm:$0xff]
      %v870 = vld [vmem:[%s547 + $0xfa] sm:$0xff]
      %v871 = vld [vmem:[%s547 + $0x10a] sm:$0xff]
      %v872 = vld [vmem:[%s547 + $0x112] sm:$0xff]
      %v873 = vld [vmem:[%s547 + $0x122] sm:$0xff]
      %v874 = vld [vmem:[%s547 + $0x12a] sm:$0xff]
      %v875 = vld [vmem:[%s547 + $0x13a] sm:$0xff]
      %v876 = vld [vmem:[%s547 + $0x142] sm:$0xff]
      %v877 = vld [vmem:[%s547 + $0x152] sm:$0xff]
      %v878 = vld [vmem:[%s547 + $0x15a] sm:$0xff]
      %v879 = vld [vmem:[%s547 + $0x16a] sm:$0xff]
      %v880 = vld [vmem:[%s547 + $0x172] sm:$0xff]
      %v881 = vld [vmem:[%s1] sm:$0xff]
      %v882 = vld [vmem:[%s1 + $0x8] sm:$0xff]
      %v883 = vld [vmem:[%s1 + $0x10] sm:$0xff]
      %v884 = vld [vmem:[%s1 + $0x18] sm:$0xff]
      %v885 = vld [vmem:[%s1 + $0x20] sm:$0xff]
      %v886 = vld [vmem:[%s1 + $0x28] sm:$0xff]
      %v887 = vld [vmem:[%s1 + $0x30] sm:$0xff]
      %v888 = vld [vmem:[%s1 + $0x38] sm:$0xff]
      %v889 = vld [vmem:[%s1 + $0x40] sm:$0xff]
      %v890 = vld [vmem:[%s1 + $0x48] sm:$0xff]
      %v891 = vld [vmem:[%s1 + $0x50] sm:$0xff]
      %v892 = vld [vmem:[%s1 + $0x58] sm:$0xff]
      %v893 = vld [vmem:[%s1 + $0x60] sm:$0xff]
      %v894 = vld [vmem:[%s1 + $0x68] sm:$0xff]
      %v895 = vld [vmem:[%s1 + $0x70] sm:$0xff]
      %v896 = vld [vmem:[%s1 + $0x78] sm:$0xff]
      %v897 = vld [vmem:[%s1 + $0x80] sm:$0xff]
      %v898 = vld [vmem:[%s1 + $0x88] sm:$0xff]
      %v899 = vld [vmem:[%s1 + $0x90] sm:$0xff]
      %v900 = vld [vmem:[%s1 + $0x98] sm:$0xff]
      %v901 = vld [vmem:[%s1 + $0xa0] sm:$0xff]
      %v902 = vld [vmem:[%s1 + $0xa8] sm:$0xff]
      %v903 = vld [vmem:[%s1 + $0xb0] sm:$0xff]
      %v904 = vld [vmem:[%s1 + $0xb8] sm:$0xff]
      %v905 = vld [vmem:[%s1 + $0xc0] sm:$0xff]
      %v906 = vld [vmem:[%s1 + $0xc8] sm:$0xff]
      %v907 = vld [vmem:[%s1 + $0xd0] sm:$0xff]
      %v908 = vld [vmem:[%s1 + $0xd8] sm:$0xff]
      %v909 = vld [vmem:[%s1 + $0xe0] sm:$0xff]
      %v910 = vld [vmem:[%s1 + $0xe8] sm:$0xff]
      %v911 = vld [vmem:[%s1 + $0xf0] sm:$0xff]
      %v912 = vld [vmem:[%s1 + $0xf8] sm:$0xff]
      %v913 = vld [vmem:[%s1 + $0x100] sm:$0xff]
      %v914 = vld [vmem:[%s1 + $0x108] sm:$0xff]
      %v915 = vld [vmem:[%s1 + $0x110] sm:$0xff]
      %v916 = vld [vmem:[%s1 + $0x118] sm:$0xff]
      %v917 = vld [vmem:[%s1 + $0x120] sm:$0xff]
      %v918 = vld [vmem:[%s1 + $0x128] sm:$0xff]
      %v919 = vld [vmem:[%s1 + $0x130] sm:$0xff]
      %v920 = vld [vmem:[%s1 + $0x138] sm:$0xff]
      %v921 = vld [vmem:[%s1 + $0x140] sm:$0xff]
      %v922 = vld [vmem:[%s1 + $0x148] sm:$0xff]
      %v923 = vld [vmem:[%s1 + $0x150] sm:$0xff]
      %v924 = vld [vmem:[%s1 + $0x158] sm:$0xff]
      %v925 = vld [vmem:[%s1 + $0x160] sm:$0xff]
      %v926 = vld [vmem:[%s1 + $0x168] sm:$0xff]
      %v927 = vld [vmem:[%s1 + $0x170] sm:$0xff]
      %v928 = vld [vmem:[%s1 + $0x178] sm:$0xff]
      %v929 = vld [vmem:[%s1 + $0x180] sm:$0xff]
      %v930 = vld [vmem:[%s1 + $0x188] sm:$0xff]
      %v931 = vld [vmem:[%s1 + $0x190] sm:$0xff]
      %v932 = vld [vmem:[%s1 + $0x198] sm:$0xff]
      %v933 = vld [vmem:[%s1 + $0x1a0] sm:$0xff]
      %v934 = vld [vmem:[%s1 + $0x1a8] sm:$0xff]
      %v935 = vld [vmem:[%s1 + $0x1b0] sm:$0xff]
      %v936 = vld [vmem:[%s1 + $0x1b8] sm:$0xff]
      %v937 = vld [vmem:[%s1 + $0x1c0] sm:$0xff]
      %v938 = vld [vmem:[%s1 + $0x1c8] sm:$0xff]
      %v939 = vld [vmem:[%s1 + $0x1d0] sm:$0xff]
      %v940 = vld [vmem:[%s1 + $0x1d8] sm:$0xff]
      %v941 = vld [vmem:[%s1 + $0x1e0] sm:$0xff]
      %v942 = vld [vmem:[%s1 + $0x1e8] sm:$0xff]
      %v943 = vld [vmem:[%s1 + $0x1f0] sm:$0xff]
      %v944 = vld [vmem:[%s1 + $0x1f8] sm:$0xff]
      %v945 = vld [vmem:[%s1 + $0x200] sm:$0xff]
      %v946 = vld [vmem:[%s1 + $0x208] sm:$0xff]
      %v947 = vld [vmem:[%s1 + $0x210] sm:$0xff]
      %v948 = vld [vmem:[%s1 + $0x218] sm:$0xff]
      %v949 = vld [vmem:[%s1 + $0x220] sm:$0xff]
      %v950 = vld [vmem:[%s1 + $0x228] sm:$0xff]
      %v951 = vld [vmem:[%s1 + $0x230] sm:$0xff]
      %v952 = vld [vmem:[%s1 + $0x238] sm:$0xff]
      %v953 = vld [vmem:[%s1 + $0x240] sm:$0xff]
      %v954 = vld [vmem:[%s1 + $0x248] sm:$0xff]
      %v955 = vld [vmem:[%s1 + $0x250] sm:$0xff]
      %v956 = vld [vmem:[%s1 + $0x258] sm:$0xff]
      %v957 = vld [vmem:[%s1 + $0x260] sm:$0xff]
      %v958 = vld [vmem:[%s1 + $0x268] sm:$0xff]
      %v959 = vld [vmem:[%s1 + $0x270] sm:$0xff]
      %v960 = vld [vmem:[%s1 + $0x278] sm:$0xff]
      %v961 = vld [vmem:[%s1 + $0x280] sm:$0xff]
      %v962 = vld [vmem:[%s1 + $0x288] sm:$0xff]
      %v963 = vld [vmem:[%s1 + $0x290] sm:$0xff]
      %v964 = vld [vmem:[%s1 + $0x298] sm:$0xff]
      %v965 = vld [vmem:[%s1 + $0x2a0] sm:$0xff]
      %v966 = vld [vmem:[%s1 + $0x2a8] sm:$0xff]
      %v967 = vld [vmem:[%s1 + $0x2b0] sm:$0xff]
      %v968 = vld [vmem:[%s1 + $0x2b8] sm:$0xff]
      %v969 = vld [vmem:[%s1 + $0x2c0] sm:$0xff]
      %v970 = vld [vmem:[%s1 + $0x2c8] sm:$0xff]
      %v971 = vld [vmem:[%s1 + $0x2d0] sm:$0xff]
      %v972 = vld [vmem:[%s1 + $0x2d8] sm:$0xff]
      %v973 = vld [vmem:[%s1 + $0x2e0] sm:$0xff]
      %v974 = vld [vmem:[%s1 + $0x2e8] sm:$0xff]
      %v975 = vld [vmem:[%s1 + $0x2f0] sm:$0xff]
      %v976 = vld [vmem:[%s1 + $0x2f8] sm:$0xff]
      %v977 = vld [vmem:[%s1 + $0x300] sm:$0xff]
      %v978 = vld [vmem:[%s1 + $0x308] sm:$0xff]
      %v979 = vld [vmem:[%s1 + $0x310] sm:$0xff]
      %v980 = vld [vmem:[%s1 + $0x318] sm:$0xff]
      %v981 = vld [vmem:[%s1 + $0x320] sm:$0xff]
      %v982 = vld [vmem:[%s1 + $0x328] sm:$0xff]
      %v983 = vld [vmem:[%s1 + $0x330] sm:$0xff]
      %v984 = vld [vmem:[%s1 + $0x338] sm:$0xff]
      %v985 = vld [vmem:[%s1 + $0x340] sm:$0xff]
      %v986 = vld [vmem:[%s1 + $0x348] sm:$0xff]
      %v987 = vld [vmem:[%s1 + $0x350] sm:$0xff]
      %v988 = vld [vmem:[%s1 + $0x358] sm:$0xff]
      %v989 = vld [vmem:[%s1 + $0x360] sm:$0xff]
      %v990 = vld [vmem:[%s1 + $0x368] sm:$0xff]
      %v991 = vld [vmem:[%s1 + $0x370] sm:$0xff]
      %v992 = vld [vmem:[%s1 + $0x378] sm:$0xff]
      %v993 = vld [vmem:[%s1 + $0x380] sm:$0xff]
      %v994 = vld [vmem:[%s1 + $0x388] sm:$0xff]
      %v995 = vld [vmem:[%s1 + $0x390] sm:$0xff]
      %v996 = vld [vmem:[%s1 + $0x398] sm:$0xff]
      %v997 = vld [vmem:[%s1 + $0x3a0] sm:$0xff]
      %v998 = vld [vmem:[%s1 + $0x3a8] sm:$0xff]
      %v999 = vld [vmem:[%s1 + $0x3b0] sm:$0xff]
      %v1000 = vld [vmem:[%s1 + $0x3b8] sm:$0xff]
      %v1001 = vld [vmem:[%s1 + $0x3c0] sm:$0xff]
      %v1002 = vld [vmem:[%s1 + $0x3c8] sm:$0xff]
      %v1003 = vld [vmem:[%s1 + $0x3d0] sm:$0xff]
      %v1004 = vld [vmem:[%s1 + $0x3d8] sm:$0xff]
      %v1005 = vld [vmem:[%s1 + $0x3e0] sm:$0xff]
      %v1006 = vld [vmem:[%s1 + $0x3e8] sm:$0xff]
      %v1007 = vld [vmem:[%s1 + $0x3f0] sm:$0xff]
      %v1008 = vld [vmem:[%s1 + $0x3f8] sm:$0xff]
      %v1009 = vld [vmem:[%s1 + $0x400] sm:$0xff]
      %v1010 = vld [vmem:[%s1 + $0x408] sm:$0xff]
      %v1011 = vld [vmem:[%s1 + $0x410] sm:$0xff]
      %v1012 = vld [vmem:[%s1 + $0x418] sm:$0xff]
      %v1013 = vld [vmem:[%s1 + $0x420] sm:$0xff]
      %v1014 = vld [vmem:[%s1 + $0x428] sm:$0xff]
      %v1015 = vld [vmem:[%s1 + $0x430] sm:$0xff]
      %v1016 = vld [vmem:[%s1 + $0x438] sm:$0xff]
      %v1017 = vld [vmem:[%s1 + $0x440] sm:$0xff]
      %v1018 = vld [vmem:[%s1 + $0x448] sm:$0xff]
      %v1019 = vld [vmem:[%s1 + $0x450] sm:$0xff]
      %v1020 = vld [vmem:[%s1 + $0x458] sm:$0xff]
      %v1021 = vld [vmem:[%s1 + $0x460] sm:$0xff]
      %v1022 = vld [vmem:[%s1 + $0x468] sm:$0xff]
      %v1023 = vld [vmem:[%s1 + $0x470] sm:$0xff]
      %v1024 = vld [vmem:[%s1 + $0x478] sm:$0xff]
      %v1026 = vperm.slane %v592, 0
      %1028 = vmatpush.msra.mxu0 %v896
      %1029 = vmatpush.msra.mxu0 %v895
      %1030 = vmatpush.msra.mxu0 %v894
      %1031 = vmatpush.msra.mxu0 %v893
      %1032 = vmatpush.msra.mxu0 %v892
      %1033 = vmatpush.msra.mxu0 %v891
      %1034 = vmatpush.msra.mxu0 %v890
      %1035 = vmatpush.msra.mxu0 %v889
      %1036 = vmatpush.msra.mxu0 %v888
      %1037 = vmatpush.msra.mxu0 %v887
      %1038 = vmatpush.msra.mxu0 %v886
      %1039 = vmatpush.msra.mxu0 %v885
      %1040 = vmatpush.msra.mxu0 %v884
      %1041 = vmatpush.msra.mxu0 %v883
      %1042 = vmatpush.msra.mxu0 %v882
      %1043 = vmatpush.msra.mxu0 %v881
      %1044 = vmatmul.f32.gmra.mxu0 %v593
      %v1045 = vpop.f32.mrf.mxu0
      %v1046 = vadd.f32 %v1026, %v1045
      %1047 = vmatmul.f32.gmra.mxu0 %v594
      %v1048 = vpop.f32.mrf.mxu0
      %v1049 = vadd.f32 %v1026, %v1048
      %1050 = vmatmul.f32.gmra.mxu0 %v595
      %v1051 = vpop.f32.mrf.mxu0
      %v1052 = vadd.f32 %v1026, %v1051
      %1053 = vmatmul.f32.gmra.mxu0 %v596
      %v1054 = vpop.f32.mrf.mxu0
      %v1055 = vadd.f32 %v1026, %v1054
      %1056 = vmatmul.f32.gmra.mxu0 %v597
      %v1057 = vpop.f32.mrf.mxu0
      %v1058 = vadd.f32 %v1026, %v1057
      %1059 = vmatmul.f32.gmra.mxu0 %v598
      %v1060 = vpop.f32.mrf.mxu0
      %v1061 = vadd.f32 %v1026, %v1060
      %1062 = vmatmul.f32.gmra.mxu0 %v599
      %v1063 = vpop.f32.mrf.mxu0
      %v1064 = vadd.f32 %v1026, %v1063
      %1065 = vmatmul.f32.gmra.mxu0 %v600
      %v1066 = vpop.f32.mrf.mxu0
      %v1067 = vadd.f32 %v1026, %v1066
      %1068 = vmatmul.f32.gmra.mxu0 %v601
      %v1069 = vpop.f32.mrf.mxu0
      %v1070 = vadd.f32 %v1026, %v1069
      %1071 = vmatmul.f32.gmra.mxu0 %v602
      %v1072 = vpop.f32.mrf.mxu0
      %v1073 = vadd.f32 %v1026, %v1072
      %1074 = vmatmul.f32.gmra.mxu0 %v603
      %v1075 = vpop.f32.mrf.mxu0
      %v1076 = vadd.f32 %v1026, %v1075
      %1077 = vmatmul.f32.gmra.mxu0 %v604
      %v1078 = vpop.f32.mrf.mxu0
      %v1079 = vadd.f32 %v1026, %v1078
      %1080 = vmatmul.f32.gmra.mxu0 %v605
      %v1081 = vpop.f32.mrf.mxu0
      %v1082 = vadd.f32 %v1026, %v1081
      %1083 = vmatmul.f32.gmra.mxu0 %v606
      %v1084 = vpop.f32.mrf.mxu0
      %v1085 = vadd.f32 %v1026, %v1084
      %1086 = vmatmul.f32.gmra.mxu0 %v607
      %v1087 = vpop.f32.mrf.mxu0
      %v1088 = vadd.f32 %v1026, %v1087
      %1089 = vmatmul.f32.gmra.mxu0 %v608
      %v1090 = vpop.f32.mrf.mxu0
      %v1091 = vadd.f32 %v1026, %v1090
      %1092 = vmatmul.f32.gmra.mxu0 %v609
      %v1093 = vpop.f32.mrf.mxu0
      %v1094 = vadd.f32 %v1026, %v1093
      %1095 = vmatmul.f32.gmra.mxu0 %v610
      %v1096 = vpop.f32.mrf.mxu0
      %v1097 = vadd.f32 %v1026, %v1096
      %1098 = vmatmul.f32.gmra.mxu0 %v611
      %v1099 = vpop.f32.mrf.mxu0
      %v1100 = vadd.f32 %v1026, %v1099
      %1101 = vmatmul.f32.gmra.mxu0 %v612
      %v1102 = vpop.f32.mrf.mxu0
      %v1103 = vadd.f32 %v1026, %v1102
      %1104 = vmatmul.f32.gmra.mxu0 %v613
      %v1105 = vpop.f32.mrf.mxu0
      %v1106 = vadd.f32 %v1026, %v1105
      %1107 = vmatmul.f32.gmra.mxu0 %v614
      %v1108 = vpop.f32.mrf.mxu0
      %v1109 = vadd.f32 %v1026, %v1108
      %1110 = vmatmul.f32.gmra.mxu0 %v615
      %v1111 = vpop.f32.mrf.mxu0
      %v1112 = vadd.f32 %v1026, %v1111
      %1113 = vmatmul.f32.gmra.mxu0 %v616
      %v1114 = vpop.f32.mrf.mxu0
      %v1115 = vadd.f32 %v1026, %v1114
      %1116 = vmatmul.f32.gmra.mxu0 %v617
      %v1117 = vpop.f32.mrf.mxu0
      %v1118 = vadd.f32 %v1026, %v1117
      %1119 = vmatmul.f32.gmra.mxu0 %v618
      %v1120 = vpop.f32.mrf.mxu0
      %v1121 = vadd.f32 %v1026, %v1120
      %1122 = vmatmul.f32.gmra.mxu0 %v619
      %v1123 = vpop.f32.mrf.mxu0
      %v1124 = vadd.f32 %v1026, %v1123
      %1125 = vmatmul.f32.gmra.mxu0 %v620
      %v1126 = vpop.f32.mrf.mxu0
      %v1127 = vadd.f32 %v1026, %v1126
      %1128 = vmatmul.f32.gmra.mxu0 %v621
      %v1129 = vpop.f32.mrf.mxu0
      %v1130 = vadd.f32 %v1026, %v1129
      %1131 = vmatmul.f32.gmra.mxu0 %v622
      %v1132 = vpop.f32.mrf.mxu0
      %v1133 = vadd.f32 %v1026, %v1132
      %1134 = vmatmul.f32.gmra.mxu0 %v623
      %v1135 = vpop.f32.mrf.mxu0
      %v1136 = vadd.f32 %v1026, %v1135
      %1137 = vmatmul.f32.gmra.mxu0 %v624
      %v1138 = vpop.f32.mrf.mxu0
      %v1139 = vadd.f32 %v1026, %v1138
      %1140 = vdwg.mxu0
      %1141 = vmatpush.msra.mxu0 %v912
      %1142 = vmatpush.msra.mxu0 %v911
      %1143 = vmatpush.msra.mxu0 %v910
      %1144 = vmatpush.msra.mxu0 %v909
      %1145 = vmatpush.msra.mxu0 %v908
      %1146 = vmatpush.msra.mxu0 %v907
      %1147 = vmatpush.msra.mxu0 %v906
      %1148 = vmatpush.msra.mxu0 %v905
      %1149 = vmatpush.msra.mxu0 %v904
      %1150 = vmatpush.msra.mxu0 %v903
      %1151 = vmatpush.msra.mxu0 %v902
      %1152 = vmatpush.msra.mxu0 %v901
      %1153 = vmatpush.msra.mxu0 %v900
      %1154 = vmatpush.msra.mxu0 %v899
      %1155 = vmatpush.msra.mxu0 %v898
      %1156 = vmatpush.msra.mxu0 %v897
      %1157 = vmatmul.f32.gmra.mxu0 %v625
      %v1158 = vpop.f32.mrf.mxu0
      %v1159 = vadd.f32 %v1046, %v1158
      %1160 = vmatmul.f32.gmra.mxu0 %v626
      %v1161 = vpop.f32.mrf.mxu0
      %v1162 = vadd.f32 %v1049, %v1161
      %1163 = vmatmul.f32.gmra.mxu0 %v627
      %v1164 = vpop.f32.mrf.mxu0
      %v1165 = vadd.f32 %v1052, %v1164
      %1166 = vmatmul.f32.gmra.mxu0 %v628
      %v1167 = vpop.f32.mrf.mxu0
      %v1168 = vadd.f32 %v1055, %v1167
      %1169 = vmatmul.f32.gmra.mxu0 %v629
      %v1170 = vpop.f32.mrf.mxu0
      %v1171 = vadd.f32 %v1058, %v1170
      %1172 = vmatmul.f32.gmra.mxu0 %v630
      %v1173 = vpop.f32.mrf.mxu0
      %v1174 = vadd.f32 %v1061, %v1173
      %1175 = vmatmul.f32.gmra.mxu0 %v631
      %v1176 = vpop.f32.mrf.mxu0
      %v1177 = vadd.f32 %v1064, %v1176
      %1178 = vmatmul.f32.gmra.mxu0 %v632
      %v1179 = vpop.f32.mrf.mxu0
      %v1180 = vadd.f32 %v1067, %v1179
      %1181 = vmatmul.f32.gmra.mxu0 %v633
      %v1182 = vpop.f32.mrf.mxu0
      %v1183 = vadd.f32 %v1070, %v1182
      %1184 = vmatmul.f32.gmra.mxu0 %v634
      %v1185 = vpop.f32.mrf.mxu0
      %v1186 = vadd.f32 %v1073, %v1185
      %1187 = vmatmul.f32.gmra.mxu0 %v635
      %v1188 = vpop.f32.mrf.mxu0
      %v1189 = vadd.f32 %v1076, %v1188
      %1190 = vmatmul.f32.gmra.mxu0 %v636
      %v1191 = vpop.f32.mrf.mxu0
      %v1192 = vadd.f32 %v1079, %v1191
      %1193 = vmatmul.f32.gmra.mxu0 %v637
      %v1194 = vpop.f32.mrf.mxu0
      %v1195 = vadd.f32 %v1082, %v1194
      %1196 = vmatmul.f32.gmra.mxu0 %v638
      %v1197 = vpop.f32.mrf.mxu0
      %v1198 = vadd.f32 %v1085, %v1197
      %1199 = vmatmul.f32.gmra.mxu0 %v639
      %v1200 = vpop.f32.mrf.mxu0
      %v1201 = vadd.f32 %v1088, %v1200
      %1202 = vmatmul.f32.gmra.mxu0 %v640
      %v1203 = vpop.f32.mrf.mxu0
      %v1204 = vadd.f32 %v1091, %v1203
      %1205 = vmatmul.f32.gmra.mxu0 %v641
      %v1206 = vpop.f32.mrf.mxu0
      %v1207 = vadd.f32 %v1094, %v1206
      %1208 = vmatmul.f32.gmra.mxu0 %v642
      %v1209 = vpop.f32.mrf.mxu0
      %v1210 = vadd.f32 %v1097, %v1209
      %1211 = vmatmul.f32.gmra.mxu0 %v643
      %v1212 = vpop.f32.mrf.mxu0
      %v1213 = vadd.f32 %v1100, %v1212
      %1214 = vmatmul.f32.gmra.mxu0 %v644
      %v1215 = vpop.f32.mrf.mxu0
      %v1216 = vadd.f32 %v1103, %v1215
      %1217 = vmatmul.f32.gmra.mxu0 %v645
      %v1218 = vpop.f32.mrf.mxu0
      %v1219 = vadd.f32 %v1106, %v1218
      %1220 = vmatmul.f32.gmra.mxu0 %v646
      %v1221 = vpop.f32.mrf.mxu0
      %v1222 = vadd.f32 %v1109, %v1221
      %1223 = vmatmul.f32.gmra.mxu0 %v647
      %v1224 = vpop.f32.mrf.mxu0
      %v1225 = vadd.f32 %v1112, %v1224
      %1226 = vmatmul.f32.gmra.mxu0 %v648
      %v1227 = vpop.f32.mrf.mxu0
      %v1228 = vadd.f32 %v1115, %v1227
      %1229 = vmatmul.f32.gmra.mxu0 %v649
      %v1230 = vpop.f32.mrf.mxu0
      %v1231 = vadd.f32 %v1118, %v1230
      %1232 = vmatmul.f32.gmra.mxu0 %v650
      %v1233 = vpop.f32.mrf.mxu0
      %v1234 = vadd.f32 %v1121, %v1233
      %1235 = vmatmul.f32.gmra.mxu0 %v651
      %v1236 = vpop.f32.mrf.mxu0
      %v1237 = vadd.f32 %v1124, %v1236
      %1238 = vmatmul.f32.gmra.mxu0 %v652
      %v1239 = vpop.f32.mrf.mxu0
      %v1240 = vadd.f32 %v1127, %v1239
      %1241 = vmatmul.f32.gmra.mxu0 %v653
      %v1242 = vpop.f32.mrf.mxu0
      %v1243 = vadd.f32 %v1130, %v1242
      %1244 = vmatmul.f32.gmra.mxu0 %v654
      %v1245 = vpop.f32.mrf.mxu0
      %v1246 = vadd.f32 %v1133, %v1245
      %1247 = vmatmul.f32.gmra.mxu0 %v655
      %v1248 = vpop.f32.mrf.mxu0
      %v1249 = vadd.f32 %v1136, %v1248
      %1250 = vmatmul.f32.gmra.mxu0 %v656
      %v1251 = vpop.f32.mrf.mxu0
      %v1252 = vadd.f32 %v1139, %v1251
      %1253 = vdwg.mxu0
      %1254 = vmatpush.msra.mxu0 %v928
      %1255 = vmatpush.msra.mxu0 %v927
      %1256 = vmatpush.msra.mxu0 %v926
      %1257 = vmatpush.msra.mxu0 %v925
      %1258 = vmatpush.msra.mxu0 %v924
      %1259 = vmatpush.msra.mxu0 %v923
      %1260 = vmatpush.msra.mxu0 %v922
      %1261 = vmatpush.msra.mxu0 %v921
      %1262 = vmatpush.msra.mxu0 %v920
      %1263 = vmatpush.msra.mxu0 %v919
      %1264 = vmatpush.msra.mxu0 %v918
      %1265 = vmatpush.msra.mxu0 %v917
      %1266 = vmatpush.msra.mxu0 %v916
      %1267 = vmatpush.msra.mxu0 %v915
      %1268 = vmatpush.msra.mxu0 %v914
      %1269 = vmatpush.msra.mxu0 %v913
      %1270 = vmatmul.f32.gmra.mxu0 %v657
      %v1271 = vpop.f32.mrf.mxu0
      %v1272 = vadd.f32 %v1159, %v1271
      %1273 = vmatmul.f32.gmra.mxu0 %v658
      %v1274 = vpop.f32.mrf.mxu0
      %v1275 = vadd.f32 %v1162, %v1274
      %1276 = vmatmul.f32.gmra.mxu0 %v659
      %v1277 = vpop.f32.mrf.mxu0
      %v1278 = vadd.f32 %v1165, %v1277
      %1279 = vmatmul.f32.gmra.mxu0 %v660
      %v1280 = vpop.f32.mrf.mxu0
      %v1281 = vadd.f32 %v1168, %v1280
      %1282 = vmatmul.f32.gmra.mxu0 %v661
      %v1283 = vpop.f32.mrf.mxu0
      %v1284 = vadd.f32 %v1171, %v1283
      %1285 = vmatmul.f32.gmra.mxu0 %v662
      %v1286 = vpop.f32.mrf.mxu0
      %v1287 = vadd.f32 %v1174, %v1286
      %1288 = vmatmul.f32.gmra.mxu0 %v663
      %v1289 = vpop.f32.mrf.mxu0
      %v1290 = vadd.f32 %v1177, %v1289
      %1291 = vmatmul.f32.gmra.mxu0 %v664
      %v1292 = vpop.f32.mrf.mxu0
      %v1293 = vadd.f32 %v1180, %v1292
      %1294 = vmatmul.f32.gmra.mxu0 %v665
      %v1295 = vpop.f32.mrf.mxu0
      %v1296 = vadd.f32 %v1183, %v1295
      %1297 = vmatmul.f32.gmra.mxu0 %v666
      %v1298 = vpop.f32.mrf.mxu0
      %v1299 = vadd.f32 %v1186, %v1298
      %1300 = vmatmul.f32.gmra.mxu0 %v667
      %v1301 = vpop.f32.mrf.mxu0
      %v1302 = vadd.f32 %v1189, %v1301
      %1303 = vmatmul.f32.gmra.mxu0 %v668
      %v1304 = vpop.f32.mrf.mxu0
      %v1305 = vadd.f32 %v1192, %v1304
      %1306 = vmatmul.f32.gmra.mxu0 %v669
      %v1307 = vpop.f32.mrf.mxu0
      %v1308 = vadd.f32 %v1195, %v1307
      %1309 = vmatmul.f32.gmra.mxu0 %v670
      %v1310 = vpop.f32.mrf.mxu0
      %v1311 = vadd.f32 %v1198, %v1310
      %1312 = vmatmul.f32.gmra.mxu0 %v671
      %v1313 = vpop.f32.mrf.mxu0
      %v1314 = vadd.f32 %v1201, %v1313
      %1315 = vmatmul.f32.gmra.mxu0 %v672
      %v1316 = vpop.f32.mrf.mxu0
      %v1317 = vadd.f32 %v1204, %v1316
      %1318 = vmatmul.f32.gmra.mxu0 %v673
      %v1319 = vpop.f32.mrf.mxu0
      %v1320 = vadd.f32 %v1207, %v1319
      %1321 = vmatmul.f32.gmra.mxu0 %v674
      %v1322 = vpop.f32.mrf.mxu0
      %v1323 = vadd.f32 %v1210, %v1322
      %1324 = vmatmul.f32.gmra.mxu0 %v675
      %v1325 = vpop.f32.mrf.mxu0
      %v1326 = vadd.f32 %v1213, %v1325
      %1327 = vmatmul.f32.gmra.mxu0 %v676
      %v1328 = vpop.f32.mrf.mxu0
      %v1329 = vadd.f32 %v1216, %v1328
      %1330 = vmatmul.f32.gmra.mxu0 %v677
      %v1331 = vpop.f32.mrf.mxu0
      %v1332 = vadd.f32 %v1219, %v1331
      %1333 = vmatmul.f32.gmra.mxu0 %v678
      %v1334 = vpop.f32.mrf.mxu0
      %v1335 = vadd.f32 %v1222, %v1334
      %1336 = vmatmul.f32.gmra.mxu0 %v679
      %v1337 = vpop.f32.mrf.mxu0
      %v1338 = vadd.f32 %v1225, %v1337
      %1339 = vmatmul.f32.gmra.mxu0 %v680
      %v1340 = vpop.f32.mrf.mxu0
      %v1341 = vadd.f32 %v1228, %v1340
      %1342 = vmatmul.f32.gmra.mxu0 %v681
      %v1343 = vpop.f32.mrf.mxu0
      %v1344 = vadd.f32 %v1231, %v1343
      %1345 = vmatmul.f32.gmra.mxu0 %v682
      %v1346 = vpop.f32.mrf.mxu0
      %v1347 = vadd.f32 %v1234, %v1346
      %1348 = vmatmul.f32.gmra.mxu0 %v683
      %v1349 = vpop.f32.mrf.mxu0
      %v1350 = vadd.f32 %v1237, %v1349
      %1351 = vmatmul.f32.gmra.mxu0 %v684
      %v1352 = vpop.f32.mrf.mxu0
      %v1353 = vadd.f32 %v1240, %v1352
      %1354 = vmatmul.f32.gmra.mxu0 %v685
      %v1355 = vpop.f32.mrf.mxu0
      %v1356 = vadd.f32 %v1243, %v1355
      %1357 = vmatmul.f32.gmra.mxu0 %v686
      %v1358 = vpop.f32.mrf.mxu0
      %v1359 = vadd.f32 %v1246, %v1358
      %1360 = vmatmul.f32.gmra.mxu0 %v687
      %v1361 = vpop.f32.mrf.mxu0
      %v1362 = vadd.f32 %v1249, %v1361
      %1363 = vmatmul.f32.gmra.mxu0 %v688
      %v1364 = vpop.f32.mrf.mxu0
      %v1365 = vadd.f32 %v1252, %v1364
      %1366 = vdwg.mxu0
      %1367 = vmatpush.msra.mxu0 %v944
      %1368 = vmatpush.msra.mxu0 %v943
      %1369 = vmatpush.msra.mxu0 %v942
      %1370 = vmatpush.msra.mxu0 %v941
      %1371 = vmatpush.msra.mxu0 %v940
      %1372 = vmatpush.msra.mxu0 %v939
      %1373 = vmatpush.msra.mxu0 %v938
      %1374 = vmatpush.msra.mxu0 %v937
      %1375 = vmatpush.msra.mxu0 %v936
      %1376 = vmatpush.msra.mxu0 %v935
      %1377 = vmatpush.msra.mxu0 %v934
      %1378 = vmatpush.msra.mxu0 %v933
      %1379 = vmatpush.msra.mxu0 %v932
      %1380 = vmatpush.msra.mxu0 %v931
      %1381 = vmatpush.msra.mxu0 %v930
      %1382 = vmatpush.msra.mxu0 %v929
      %1383 = vmatmul.f32.gmra.mxu0 %v689
      %v1384 = vpop.f32.mrf.mxu0
      %v1385 = vadd.f32 %v1272, %v1384
      %1386 = vmatmul.f32.gmra.mxu0 %v690
      %v1387 = vpop.f32.mrf.mxu0
      %v1388 = vadd.f32 %v1275, %v1387
      %1389 = vmatmul.f32.gmra.mxu0 %v691
      %v1390 = vpop.f32.mrf.mxu0
      %v1391 = vadd.f32 %v1278, %v1390
      %1392 = vmatmul.f32.gmra.mxu0 %v692
      %v1393 = vpop.f32.mrf.mxu0
      %v1394 = vadd.f32 %v1281, %v1393
      %1395 = vmatmul.f32.gmra.mxu0 %v693
      %v1396 = vpop.f32.mrf.mxu0
      %v1397 = vadd.f32 %v1284, %v1396
      %1398 = vmatmul.f32.gmra.mxu0 %v694
      %v1399 = vpop.f32.mrf.mxu0
      %v1400 = vadd.f32 %v1287, %v1399
      %1401 = vmatmul.f32.gmra.mxu0 %v695
      %v1402 = vpop.f32.mrf.mxu0
      %v1403 = vadd.f32 %v1290, %v1402
      %1404 = vmatmul.f32.gmra.mxu0 %v696
      %v1405 = vpop.f32.mrf.mxu0
      %v1406 = vadd.f32 %v1293, %v1405
      %1407 = vmatmul.f32.gmra.mxu0 %v697
      %v1408 = vpop.f32.mrf.mxu0
      %v1409 = vadd.f32 %v1296, %v1408
      %1410 = vmatmul.f32.gmra.mxu0 %v698
      %v1411 = vpop.f32.mrf.mxu0
      %v1412 = vadd.f32 %v1299, %v1411
      %1413 = vmatmul.f32.gmra.mxu0 %v699
      %v1414 = vpop.f32.mrf.mxu0
      %v1415 = vadd.f32 %v1302, %v1414
      %1416 = vmatmul.f32.gmra.mxu0 %v700
      %v1417 = vpop.f32.mrf.mxu0
      %v1418 = vadd.f32 %v1305, %v1417
      %1419 = vmatmul.f32.gmra.mxu0 %v701
      %v1420 = vpop.f32.mrf.mxu0
      %v1421 = vadd.f32 %v1308, %v1420
      %1422 = vmatmul.f32.gmra.mxu0 %v702
      %v1423 = vpop.f32.mrf.mxu0
      %v1424 = vadd.f32 %v1311, %v1423
      %1425 = vmatmul.f32.gmra.mxu0 %v703
      %v1426 = vpop.f32.mrf.mxu0
      %v1427 = vadd.f32 %v1314, %v1426
      %1428 = vmatmul.f32.gmra.mxu0 %v704
      %v1429 = vpop.f32.mrf.mxu0
      %v1430 = vadd.f32 %v1317, %v1429
      %1431 = vmatmul.f32.gmra.mxu0 %v705
      %v1432 = vpop.f32.mrf.mxu0
      %v1433 = vadd.f32 %v1320, %v1432
      %1434 = vmatmul.f32.gmra.mxu0 %v706
      %v1435 = vpop.f32.mrf.mxu0
      %v1436 = vadd.f32 %v1323, %v1435
      %1437 = vmatmul.f32.gmra.mxu0 %v707
      %v1438 = vpop.f32.mrf.mxu0
      %v1439 = vadd.f32 %v1326, %v1438
      %1440 = vmatmul.f32.gmra.mxu0 %v708
      %v1441 = vpop.f32.mrf.mxu0
      %v1442 = vadd.f32 %v1329, %v1441
      %1443 = vmatmul.f32.gmra.mxu0 %v709
      %v1444 = vpop.f32.mrf.mxu0
      %v1445 = vadd.f32 %v1332, %v1444
      %1446 = vmatmul.f32.gmra.mxu0 %v710
      %v1447 = vpop.f32.mrf.mxu0
      %v1448 = vadd.f32 %v1335, %v1447
      %1449 = vmatmul.f32.gmra.mxu0 %v711
      %v1450 = vpop.f32.mrf.mxu0
      %v1451 = vadd.f32 %v1338, %v1450
      %1452 = vmatmul.f32.gmra.mxu0 %v712
      %v1453 = vpop.f32.mrf.mxu0
      %v1454 = vadd.f32 %v1341, %v1453
      %1455 = vmatmul.f32.gmra.mxu0 %v713
      %v1456 = vpop.f32.mrf.mxu0
      %v1457 = vadd.f32 %v1344, %v1456
      %1458 = vmatmul.f32.gmra.mxu0 %v714
      %v1459 = vpop.f32.mrf.mxu0
      %v1460 = vadd.f32 %v1347, %v1459
      %1461 = vmatmul.f32.gmra.mxu0 %v715
      %v1462 = vpop.f32.mrf.mxu0
      %v1463 = vadd.f32 %v1350, %v1462
      %1464 = vmatmul.f32.gmra.mxu0 %v716
      %v1465 = vpop.f32.mrf.mxu0
      %v1466 = vadd.f32 %v1353, %v1465
      %1467 = vmatmul.f32.gmra.mxu0 %v717
      %v1468 = vpop.f32.mrf.mxu0
      %v1469 = vadd.f32 %v1356, %v1468
      %1470 = vmatmul.f32.gmra.mxu0 %v718
      %v1471 = vpop.f32.mrf.mxu0
      %v1472 = vadd.f32 %v1359, %v1471
      %1473 = vmatmul.f32.gmra.mxu0 %v719
      %v1474 = vpop.f32.mrf.mxu0
      %v1475 = vadd.f32 %v1362, %v1474
      %1476 = vmatmul.f32.gmra.mxu0 %v720
      %v1477 = vpop.f32.mrf.mxu0
      %v1478 = vadd.f32 %v1365, %v1477
      %1479 = vdwg.mxu0
      %1480 = vmatpush.msra.mxu0 %v960
      %1481 = vmatpush.msra.mxu0 %v959
      %1482 = vmatpush.msra.mxu0 %v958
      %1483 = vmatpush.msra.mxu0 %v957
      %1484 = vmatpush.msra.mxu0 %v956
      %1485 = vmatpush.msra.mxu0 %v955
      %1486 = vmatpush.msra.mxu0 %v954
      %1487 = vmatpush.msra.mxu0 %v953
      %1488 = vmatpush.msra.mxu0 %v952
      %1489 = vmatpush.msra.mxu0 %v951
      %1490 = vmatpush.msra.mxu0 %v950
      %1491 = vmatpush.msra.mxu0 %v949
      %1492 = vmatpush.msra.mxu0 %v948
      %1493 = vmatpush.msra.mxu0 %v947
      %1494 = vmatpush.msra.mxu0 %v946
      %1495 = vmatpush.msra.mxu0 %v945
      %1496 = vmatmul.f32.gmra.mxu0 %v721
      %v1497 = vpop.f32.mrf.mxu0
      %v1498 = vadd.f32 %v1385, %v1497
      %1499 = vmatmul.f32.gmra.mxu0 %v722
      %v1500 = vpop.f32.mrf.mxu0
      %v1501 = vadd.f32 %v1388, %v1500
      %1502 = vmatmul.f32.gmra.mxu0 %v723
      %v1503 = vpop.f32.mrf.mxu0
      %v1504 = vadd.f32 %v1391, %v1503
      %1505 = vmatmul.f32.gmra.mxu0 %v724
      %v1506 = vpop.f32.mrf.mxu0
      %v1507 = vadd.f32 %v1394, %v1506
      %1508 = vmatmul.f32.gmra.mxu0 %v725
      %v1509 = vpop.f32.mrf.mxu0
      %v1510 = vadd.f32 %v1397, %v1509
      %1511 = vmatmul.f32.gmra.mxu0 %v726
      %v1512 = vpop.f32.mrf.mxu0
      %v1513 = vadd.f32 %v1400, %v1512
      %1514 = vmatmul.f32.gmra.mxu0 %v727
      %v1515 = vpop.f32.mrf.mxu0
      %v1516 = vadd.f32 %v1403, %v1515
      %1517 = vmatmul.f32.gmra.mxu0 %v728
      %v1518 = vpop.f32.mrf.mxu0
      %v1519 = vadd.f32 %v1406, %v1518
      %1520 = vmatmul.f32.gmra.mxu0 %v729
      %v1521 = vpop.f32.mrf.mxu0
      %v1522 = vadd.f32 %v1409, %v1521
      %1523 = vmatmul.f32.gmra.mxu0 %v730
      %v1524 = vpop.f32.mrf.mxu0
      %v1525 = vadd.f32 %v1412, %v1524
      %1526 = vmatmul.f32.gmra.mxu0 %v731
      %v1527 = vpop.f32.mrf.mxu0
      %v1528 = vadd.f32 %v1415, %v1527
      %1529 = vmatmul.f32.gmra.mxu0 %v732
      %v1530 = vpop.f32.mrf.mxu0
      %v1531 = vadd.f32 %v1418, %v1530
      %1532 = vmatmul.f32.gmra.mxu0 %v733
      %v1533 = vpop.f32.mrf.mxu0
      %v1534 = vadd.f32 %v1421, %v1533
      %1535 = vmatmul.f32.gmra.mxu0 %v734
      %v1536 = vpop.f32.mrf.mxu0
      %v1537 = vadd.f32 %v1424, %v1536
      %1538 = vmatmul.f32.gmra.mxu0 %v735
      %v1539 = vpop.f32.mrf.mxu0
      %v1540 = vadd.f32 %v1427, %v1539
      %1541 = vmatmul.f32.gmra.mxu0 %v736
      %v1542 = vpop.f32.mrf.mxu0
      %v1543 = vadd.f32 %v1430, %v1542
      %1544 = vmatmul.f32.gmra.mxu0 %v737
      %v1545 = vpop.f32.mrf.mxu0
      %v1546 = vadd.f32 %v1433, %v1545
      %1547 = vmatmul.f32.gmra.mxu0 %v738
      %v1548 = vpop.f32.mrf.mxu0
      %v1549 = vadd.f32 %v1436, %v1548
      %1550 = vmatmul.f32.gmra.mxu0 %v739
      %v1551 = vpop.f32.mrf.mxu0
      %v1552 = vadd.f32 %v1439, %v1551
      %1553 = vmatmul.f32.gmra.mxu0 %v740
      %v1554 = vpop.f32.mrf.mxu0
      %v1555 = vadd.f32 %v1442, %v1554
      %1556 = vmatmul.f32.gmra.mxu0 %v741
      %v1557 = vpop.f32.mrf.mxu0
      %v1558 = vadd.f32 %v1445, %v1557
      %1559 = vmatmul.f32.gmra.mxu0 %v742
      %v1560 = vpop.f32.mrf.mxu0
      %v1561 = vadd.f32 %v1448, %v1560
      %1562 = vmatmul.f32.gmra.mxu0 %v743
      %v1563 = vpop.f32.mrf.mxu0
      %v1564 = vadd.f32 %v1451, %v1563
      %1565 = vmatmul.f32.gmra.mxu0 %v744
      %v1566 = vpop.f32.mrf.mxu0
      %v1567 = vadd.f32 %v1454, %v1566
      %1568 = vmatmul.f32.gmra.mxu0 %v745
      %v1569 = vpop.f32.mrf.mxu0
      %v1570 = vadd.f32 %v1457, %v1569
      %1571 = vmatmul.f32.gmra.mxu0 %v746
      %v1572 = vpop.f32.mrf.mxu0
      %v1573 = vadd.f32 %v1460, %v1572
      %1574 = vmatmul.f32.gmra.mxu0 %v747
      %v1575 = vpop.f32.mrf.mxu0
      %v1576 = vadd.f32 %v1463, %v1575
      %1577 = vmatmul.f32.gmra.mxu0 %v748
      %v1578 = vpop.f32.mrf.mxu0
      %v1579 = vadd.f32 %v1466, %v1578
      %1580 = vmatmul.f32.gmra.mxu0 %v749
      %v1581 = vpop.f32.mrf.mxu0
      %v1582 = vadd.f32 %v1469, %v1581
      %1583 = vmatmul.f32.gmra.mxu0 %v750
      %v1584 = vpop.f32.mrf.mxu0
      %v1585 = vadd.f32 %v1472, %v1584
      %1586 = vmatmul.f32.gmra.mxu0 %v751
      %v1587 = vpop.f32.mrf.mxu0
      %v1588 = vadd.f32 %v1475, %v1587
      %1589 = vmatmul.f32.gmra.mxu0 %v752
      %v1590 = vpop.f32.mrf.mxu0
      %v1591 = vadd.f32 %v1478, %v1590
      %1592 = vdwg.mxu0
      %1593 = vmatpush.msra.mxu0 %v976
      %1594 = vmatpush.msra.mxu0 %v975
      %1595 = vmatpush.msra.mxu0 %v974
      %1596 = vmatpush.msra.mxu0 %v973
      %1597 = vmatpush.msra.mxu0 %v972
      %1598 = vmatpush.msra.mxu0 %v971
      %1599 = vmatpush.msra.mxu0 %v970
      %1600 = vmatpush.msra.mxu0 %v969
      %1601 = vmatpush.msra.mxu0 %v968
      %1602 = vmatpush.msra.mxu0 %v967
      %1603 = vmatpush.msra.mxu0 %v966
      %1604 = vmatpush.msra.mxu0 %v965
      %1605 = vmatpush.msra.mxu0 %v964
      %1606 = vmatpush.msra.mxu0 %v963
      %1607 = vmatpush.msra.mxu0 %v962
      %1608 = vmatpush.msra.mxu0 %v961
      %1609 = vmatmul.f32.gmra.mxu0 %v753
      %v1610 = vpop.f32.mrf.mxu0
      %v1611 = vadd.f32 %v1498, %v1610
      %1612 = vmatmul.f32.gmra.mxu0 %v754
      %v1613 = vpop.f32.mrf.mxu0
      %v1614 = vadd.f32 %v1501, %v1613
      %1615 = vmatmul.f32.gmra.mxu0 %v755
      %v1616 = vpop.f32.mrf.mxu0
      %v1617 = vadd.f32 %v1504, %v1616
      %1618 = vmatmul.f32.gmra.mxu0 %v756
      %v1619 = vpop.f32.mrf.mxu0
      %v1620 = vadd.f32 %v1507, %v1619
      %1621 = vmatmul.f32.gmra.mxu0 %v757
      %v1622 = vpop.f32.mrf.mxu0
      %v1623 = vadd.f32 %v1510, %v1622
      %1624 = vmatmul.f32.gmra.mxu0 %v758
      %v1625 = vpop.f32.mrf.mxu0
      %v1626 = vadd.f32 %v1513, %v1625
      %1627 = vmatmul.f32.gmra.mxu0 %v759
      %v1628 = vpop.f32.mrf.mxu0
      %v1629 = vadd.f32 %v1516, %v1628
      %1630 = vmatmul.f32.gmra.mxu0 %v760
      %v1631 = vpop.f32.mrf.mxu0
      %v1632 = vadd.f32 %v1519, %v1631
      %1633 = vmatmul.f32.gmra.mxu0 %v761
      %v1634 = vpop.f32.mrf.mxu0
      %v1635 = vadd.f32 %v1522, %v1634
      %1636 = vmatmul.f32.gmra.mxu0 %v762
      %v1637 = vpop.f32.mrf.mxu0
      %v1638 = vadd.f32 %v1525, %v1637
      %1639 = vmatmul.f32.gmra.mxu0 %v763
      %v1640 = vpop.f32.mrf.mxu0
      %v1641 = vadd.f32 %v1528, %v1640
      %1642 = vmatmul.f32.gmra.mxu0 %v764
      %v1643 = vpop.f32.mrf.mxu0
      %v1644 = vadd.f32 %v1531, %v1643
      %1645 = vmatmul.f32.gmra.mxu0 %v765
      %v1646 = vpop.f32.mrf.mxu0
      %v1647 = vadd.f32 %v1534, %v1646
      %1648 = vmatmul.f32.gmra.mxu0 %v766
      %v1649 = vpop.f32.mrf.mxu0
      %v1650 = vadd.f32 %v1537, %v1649
      %1651 = vmatmul.f32.gmra.mxu0 %v767
      %v1652 = vpop.f32.mrf.mxu0
      %v1653 = vadd.f32 %v1540, %v1652
      %1654 = vmatmul.f32.gmra.mxu0 %v768
      %v1655 = vpop.f32.mrf.mxu0
      %v1656 = vadd.f32 %v1543, %v1655
      %1657 = vmatmul.f32.gmra.mxu0 %v769
      %v1658 = vpop.f32.mrf.mxu0
      %v1659 = vadd.f32 %v1546, %v1658
      %1660 = vmatmul.f32.gmra.mxu0 %v770
      %v1661 = vpop.f32.mrf.mxu0
      %v1662 = vadd.f32 %v1549, %v1661
      %1663 = vmatmul.f32.gmra.mxu0 %v771
      %v1664 = vpop.f32.mrf.mxu0
      %v1665 = vadd.f32 %v1552, %v1664
      %1666 = vmatmul.f32.gmra.mxu0 %v772
      %v1667 = vpop.f32.mrf.mxu0
      %v1668 = vadd.f32 %v1555, %v1667
      %1669 = vmatmul.f32.gmra.mxu0 %v773
      %v1670 = vpop.f32.mrf.mxu0
      %v1671 = vadd.f32 %v1558, %v1670
      %1672 = vmatmul.f32.gmra.mxu0 %v774
      %v1673 = vpop.f32.mrf.mxu0
      %v1674 = vadd.f32 %v1561, %v1673
      %1675 = vmatmul.f32.gmra.mxu0 %v775
      %v1676 = vpop.f32.mrf.mxu0
      %v1677 = vadd.f32 %v1564, %v1676
      %1678 = vmatmul.f32.gmra.mxu0 %v776
      %v1679 = vpop.f32.mrf.mxu0
      %v1680 = vadd.f32 %v1567, %v1679
      %1681 = vmatmul.f32.gmra.mxu0 %v777
      %v1682 = vpop.f32.mrf.mxu0
      %v1683 = vadd.f32 %v1570, %v1682
      %1684 = vmatmul.f32.gmra.mxu0 %v778
      %v1685 = vpop.f32.mrf.mxu0
      %v1686 = vadd.f32 %v1573, %v1685
      %1687 = vmatmul.f32.gmra.mxu0 %v779
      %v1688 = vpop.f32.mrf.mxu0
      %v1689 = vadd.f32 %v1576, %v1688
      %1690 = vmatmul.f32.gmra.mxu0 %v780
      %v1691 = vpop.f32.mrf.mxu0
      %v1692 = vadd.f32 %v1579, %v1691
      %1693 = vmatmul.f32.gmra.mxu0 %v781
      %v1694 = vpop.f32.mrf.mxu0
      %v1695 = vadd.f32 %v1582, %v1694
      %1696 = vmatmul.f32.gmra.mxu0 %v782
      %v1697 = vpop.f32.mrf.mxu0
      %v1698 = vadd.f32 %v1585, %v1697
      %1699 = vmatmul.f32.gmra.mxu0 %v783
      %v1700 = vpop.f32.mrf.mxu0
      %v1701 = vadd.f32 %v1588, %v1700
      %1702 = vmatmul.f32.gmra.mxu0 %v784
      %v1703 = vpop.f32.mrf.mxu0
      %v1704 = vadd.f32 %v1591, %v1703
      %1705 = vdwg.mxu0
      %1706 = vmatpush.msra.mxu0 %v992
      %1707 = vmatpush.msra.mxu0 %v991
      %1708 = vmatpush.msra.mxu0 %v990
      %1709 = vmatpush.msra.mxu0 %v989
      %1710 = vmatpush.msra.mxu0 %v988
      %1711 = vmatpush.msra.mxu0 %v987
      %1712 = vmatpush.msra.mxu0 %v986
      %1713 = vmatpush.msra.mxu0 %v985
      %1714 = vmatpush.msra.mxu0 %v984
      %1715 = vmatpush.msra.mxu0 %v983
      %1716 = vmatpush.msra.mxu0 %v982
      %1717 = vmatpush.msra.mxu0 %v981
      %1718 = vmatpush.msra.mxu0 %v980
      %1719 = vmatpush.msra.mxu0 %v979
      %1720 = vmatpush.msra.mxu0 %v978
      %1721 = vmatpush.msra.mxu0 %v977
      %1722 = vmatmul.f32.gmra.mxu0 %v785
      %v1723 = vpop.f32.mrf.mxu0
      %v1724 = vadd.f32 %v1611, %v1723
      %1725 = vmatmul.f32.gmra.mxu0 %v786
      %v1726 = vpop.f32.mrf.mxu0
      %v1727 = vadd.f32 %v1614, %v1726
      %1728 = vmatmul.f32.gmra.mxu0 %v787
      %v1729 = vpop.f32.mrf.mxu0
      %v1730 = vadd.f32 %v1617, %v1729
      %1731 = vmatmul.f32.gmra.mxu0 %v788
      %v1732 = vpop.f32.mrf.mxu0
      %v1733 = vadd.f32 %v1620, %v1732
      %1734 = vmatmul.f32.gmra.mxu0 %v789
      %v1735 = vpop.f32.mrf.mxu0
      %v1736 = vadd.f32 %v1623, %v1735
      %1737 = vmatmul.f32.gmra.mxu0 %v790
      %v1738 = vpop.f32.mrf.mxu0
      %v1739 = vadd.f32 %v1626, %v1738
      %1740 = vmatmul.f32.gmra.mxu0 %v791
      %v1741 = vpop.f32.mrf.mxu0
      %v1742 = vadd.f32 %v1629, %v1741
      %1743 = vmatmul.f32.gmra.mxu0 %v792
      %v1744 = vpop.f32.mrf.mxu0
      %v1745 = vadd.f32 %v1632, %v1744
      %1746 = vmatmul.f32.gmra.mxu0 %v793
      %v1747 = vpop.f32.mrf.mxu0
      %v1748 = vadd.f32 %v1635, %v1747
      %1749 = vmatmul.f32.gmra.mxu0 %v794
      %v1750 = vpop.f32.mrf.mxu0
      %v1751 = vadd.f32 %v1638, %v1750
      %1752 = vmatmul.f32.gmra.mxu0 %v795
      %v1753 = vpop.f32.mrf.mxu0
      %v1754 = vadd.f32 %v1641, %v1753
      %1755 = vmatmul.f32.gmra.mxu0 %v796
      %v1756 = vpop.f32.mrf.mxu0
      %v1757 = vadd.f32 %v1644, %v1756
      %1758 = vmatmul.f32.gmra.mxu0 %v797
      %v1759 = vpop.f32.mrf.mxu0
      %v1760 = vadd.f32 %v1647, %v1759
      %1761 = vmatmul.f32.gmra.mxu0 %v798
      %v1762 = vpop.f32.mrf.mxu0
      %v1763 = vadd.f32 %v1650, %v1762
      %1764 = vmatmul.f32.gmra.mxu0 %v799
      %v1765 = vpop.f32.mrf.mxu0
      %v1766 = vadd.f32 %v1653, %v1765
      %1767 = vmatmul.f32.gmra.mxu0 %v800
      %v1768 = vpop.f32.mrf.mxu0
      %v1769 = vadd.f32 %v1656, %v1768
      %1770 = vmatmul.f32.gmra.mxu0 %v801
      %v1771 = vpop.f32.mrf.mxu0
      %v1772 = vadd.f32 %v1659, %v1771
      %1773 = vmatmul.f32.gmra.mxu0 %v802
      %v1774 = vpop.f32.mrf.mxu0
      %v1775 = vadd.f32 %v1662, %v1774
      %1776 = vmatmul.f32.gmra.mxu0 %v803
      %v1777 = vpop.f32.mrf.mxu0
      %v1778 = vadd.f32 %v1665, %v1777
      %1779 = vmatmul.f32.gmra.mxu0 %v804
      %v1780 = vpop.f32.mrf.mxu0
      %v1781 = vadd.f32 %v1668, %v1780
      %1782 = vmatmul.f32.gmra.mxu0 %v805
      %v1783 = vpop.f32.mrf.mxu0
      %v1784 = vadd.f32 %v1671, %v1783
      %1785 = vmatmul.f32.gmra.mxu0 %v806
      %v1786 = vpop.f32.mrf.mxu0
      %v1787 = vadd.f32 %v1674, %v1786
      %1788 = vmatmul.f32.gmra.mxu0 %v807
      %v1789 = vpop.f32.mrf.mxu0
      %v1790 = vadd.f32 %v1677, %v1789
      %1791 = vmatmul.f32.gmra.mxu0 %v808
      %v1792 = vpop.f32.mrf.mxu0
      %v1793 = vadd.f32 %v1680, %v1792
      %1794 = vmatmul.f32.gmra.mxu0 %v809
      %v1795 = vpop.f32.mrf.mxu0
      %v1796 = vadd.f32 %v1683, %v1795
      %1797 = vmatmul.f32.gmra.mxu0 %v810
      %v1798 = vpop.f32.mrf.mxu0
      %v1799 = vadd.f32 %v1686, %v1798
      %1800 = vmatmul.f32.gmra.mxu0 %v811
      %v1801 = vpop.f32.mrf.mxu0
      %v1802 = vadd.f32 %v1689, %v1801
      %1803 = vmatmul.f32.gmra.mxu0 %v812
      %v1804 = vpop.f32.mrf.mxu0
      %v1805 = vadd.f32 %v1692, %v1804
      %1806 = vmatmul.f32.gmra.mxu0 %v813
      %v1807 = vpop.f32.mrf.mxu0
      %v1808 = vadd.f32 %v1695, %v1807
      %1809 = vmatmul.f32.gmra.mxu0 %v814
      %v1810 = vpop.f32.mrf.mxu0
      %v1811 = vadd.f32 %v1698, %v1810
      %1812 = vmatmul.f32.gmra.mxu0 %v815
      %v1813 = vpop.f32.mrf.mxu0
      %v1814 = vadd.f32 %v1701, %v1813
      %1815 = vmatmul.f32.gmra.mxu0 %v816
      %v1816 = vpop.f32.mrf.mxu0
      %v1817 = vadd.f32 %v1704, %v1816
      %1818 = vdwg.mxu0
      %1819 = vmatpush.msra.mxu0 %v1008
      %1820 = vmatpush.msra.mxu0 %v1007
      %1821 = vmatpush.msra.mxu0 %v1006
      %1822 = vmatpush.msra.mxu0 %v1005
      %1823 = vmatpush.msra.mxu0 %v1004
      %1824 = vmatpush.msra.mxu0 %v1003
      %1825 = vmatpush.msra.mxu0 %v1002
      %1826 = vmatpush.msra.mxu0 %v1001
      %1827 = vmatpush.msra.mxu0 %v1000
      %1828 = vmatpush.msra.mxu0 %v999
      %1829 = vmatpush.msra.mxu0 %v998
      %1830 = vmatpush.msra.mxu0 %v997
      %1831 = vmatpush.msra.mxu0 %v996
      %1832 = vmatpush.msra.mxu0 %v995
      %1833 = vmatpush.msra.mxu0 %v994
      %1834 = vmatpush.msra.mxu0 %v993
      %1835 = vmatmul.f32.gmra.mxu0 %v817
      %v1836 = vpop.f32.mrf.mxu0
      %v1837 = vadd.f32 %v1724, %v1836
      %1838 = vmatmul.f32.gmra.mxu0 %v818
      %v1839 = vpop.f32.mrf.mxu0
      %v1840 = vadd.f32 %v1727, %v1839
      %1841 = vmatmul.f32.gmra.mxu0 %v819
      %v1842 = vpop.f32.mrf.mxu0
      %v1843 = vadd.f32 %v1730, %v1842
      %1844 = vmatmul.f32.gmra.mxu0 %v820
      %v1845 = vpop.f32.mrf.mxu0
      %v1846 = vadd.f32 %v1733, %v1845
      %1847 = vmatmul.f32.gmra.mxu0 %v821
      %v1848 = vpop.f32.mrf.mxu0
      %v1849 = vadd.f32 %v1736, %v1848
      %1850 = vmatmul.f32.gmra.mxu0 %v822
      %v1851 = vpop.f32.mrf.mxu0
      %v1852 = vadd.f32 %v1739, %v1851
      %1853 = vmatmul.f32.gmra.mxu0 %v823
      %v1854 = vpop.f32.mrf.mxu0
      %v1855 = vadd.f32 %v1742, %v1854
      %1856 = vmatmul.f32.gmra.mxu0 %v824
      %v1857 = vpop.f32.mrf.mxu0
      %v1858 = vadd.f32 %v1745, %v1857
      %1859 = vmatmul.f32.gmra.mxu0 %v825
      %v1860 = vpop.f32.mrf.mxu0
      %v1861 = vadd.f32 %v1748, %v1860
      %1862 = vmatmul.f32.gmra.mxu0 %v826
      %v1863 = vpop.f32.mrf.mxu0
      %v1864 = vadd.f32 %v1751, %v1863
      %1865 = vmatmul.f32.gmra.mxu0 %v827
      %v1866 = vpop.f32.mrf.mxu0
      %v1867 = vadd.f32 %v1754, %v1866
      %1868 = vmatmul.f32.gmra.mxu0 %v828
      %v1869 = vpop.f32.mrf.mxu0
      %v1870 = vadd.f32 %v1757, %v1869
      %1871 = vmatmul.f32.gmra.mxu0 %v829
      %v1872 = vpop.f32.mrf.mxu0
      %v1873 = vadd.f32 %v1760, %v1872
      %1874 = vmatmul.f32.gmra.mxu0 %v830
      %v1875 = vpop.f32.mrf.mxu0
      %v1876 = vadd.f32 %v1763, %v1875
      %1877 = vmatmul.f32.gmra.mxu0 %v831
      %v1878 = vpop.f32.mrf.mxu0
      %v1879 = vadd.f32 %v1766, %v1878
      %1880 = vmatmul.f32.gmra.mxu0 %v832
      %v1881 = vpop.f32.mrf.mxu0
      %v1882 = vadd.f32 %v1769, %v1881
      %1883 = vmatmul.f32.gmra.mxu0 %v833
      %v1884 = vpop.f32.mrf.mxu0
      %v1885 = vadd.f32 %v1772, %v1884
      %1886 = vmatmul.f32.gmra.mxu0 %v834
      %v1887 = vpop.f32.mrf.mxu0
      %v1888 = vadd.f32 %v1775, %v1887
      %1889 = vmatmul.f32.gmra.mxu0 %v835
      %v1890 = vpop.f32.mrf.mxu0
      %v1891 = vadd.f32 %v1778, %v1890
      %1892 = vmatmul.f32.gmra.mxu0 %v836
      %v1893 = vpop.f32.mrf.mxu0
      %v1894 = vadd.f32 %v1781, %v1893
      %1895 = vmatmul.f32.gmra.mxu0 %v837
      %v1896 = vpop.f32.mrf.mxu0
      %v1897 = vadd.f32 %v1784, %v1896
      %1898 = vmatmul.f32.gmra.mxu0 %v838
      %v1899 = vpop.f32.mrf.mxu0
      %v1900 = vadd.f32 %v1787, %v1899
      %1901 = vmatmul.f32.gmra.mxu0 %v839
      %v1902 = vpop.f32.mrf.mxu0
      %v1903 = vadd.f32 %v1790, %v1902
      %1904 = vmatmul.f32.gmra.mxu0 %v840
      %v1905 = vpop.f32.mrf.mxu0
      %v1906 = vadd.f32 %v1793, %v1905
      %1907 = vmatmul.f32.gmra.mxu0 %v841
      %v1908 = vpop.f32.mrf.mxu0
      %v1909 = vadd.f32 %v1796, %v1908
      %1910 = vmatmul.f32.gmra.mxu0 %v842
      %v1911 = vpop.f32.mrf.mxu0
      %v1912 = vadd.f32 %v1799, %v1911
      %1913 = vmatmul.f32.gmra.mxu0 %v843
      %v1914 = vpop.f32.mrf.mxu0
      %v1915 = vadd.f32 %v1802, %v1914
      %1916 = vmatmul.f32.gmra.mxu0 %v844
      %v1917 = vpop.f32.mrf.mxu0
      %v1918 = vadd.f32 %v1805, %v1917
      %1919 = vmatmul.f32.gmra.mxu0 %v845
      %v1920 = vpop.f32.mrf.mxu0
      %v1921 = vadd.f32 %v1808, %v1920
      %1922 = vmatmul.f32.gmra.mxu0 %v846
      %v1923 = vpop.f32.mrf.mxu0
      %v1924 = vadd.f32 %v1811, %v1923
      %1925 = vmatmul.f32.gmra.mxu0 %v847
      %v1926 = vpop.f32.mrf.mxu0
      %v1927 = vadd.f32 %v1814, %v1926
      %1928 = vmatmul.f32.gmra.mxu0 %v848
      %v1929 = vpop.f32.mrf.mxu0
      %v1930 = vadd.f32 %v1817, %v1929
      %1931 = vdwg.mxu0
      %1932 = vmatpush.msra.mxu0 %v1024
      %1933 = vmatpush.msra.mxu0 %v1023
      %1934 = vmatpush.msra.mxu0 %v1022
      %1935 = vmatpush.msra.mxu0 %v1021
      %1936 = vmatpush.msra.mxu0 %v1020
      %1937 = vmatpush.msra.mxu0 %v1019
      %1938 = vmatpush.msra.mxu0 %v1018
      %1939 = vmatpush.msra.mxu0 %v1017
      %1940 = vmatpush.msra.mxu0 %v1016
      %1941 = vmatpush.msra.mxu0 %v1015
      %1942 = vmatpush.msra.mxu0 %v1014
      %1943 = vmatpush.msra.mxu0 %v1013
      %1944 = vmatpush.msra.mxu0 %v1012
      %1945 = vmatpush.msra.mxu0 %v1011
      %1946 = vmatpush.msra.mxu0 %v1010
      %1947 = vmatpush.msra.mxu0 %v1009
      %1948 = vmatmul.f32.gmra.mxu0 %v849
      %v1949 = vpop.f32.mrf.mxu0
      %v1950 = vadd.f32 %v1837, %v1949
      %1951 = vmatmul.f32.gmra.mxu0 %v850
      %v1952 = vpop.f32.mrf.mxu0
      %v1953 = vadd.f32 %v1840, %v1952
      %1954 = vmatmul.f32.gmra.mxu0 %v851
      %v1955 = vpop.f32.mrf.mxu0
      %v1956 = vadd.f32 %v1843, %v1955
      %1957 = vmatmul.f32.gmra.mxu0 %v852
      %v1958 = vpop.f32.mrf.mxu0
      %v1959 = vadd.f32 %v1846, %v1958
      %1960 = vmatmul.f32.gmra.mxu0 %v853
      %v1961 = vpop.f32.mrf.mxu0
      %v1962 = vadd.f32 %v1849, %v1961
      %1963 = vmatmul.f32.gmra.mxu0 %v854
      %v1964 = vpop.f32.mrf.mxu0
      %v1965 = vadd.f32 %v1852, %v1964
      %1966 = vmatmul.f32.gmra.mxu0 %v855
      %v1967 = vpop.f32.mrf.mxu0
      %v1968 = vadd.f32 %v1855, %v1967
      %1969 = vmatmul.f32.gmra.mxu0 %v856
      %v1970 = vpop.f32.mrf.mxu0
      %v1971 = vadd.f32 %v1858, %v1970
      %1972 = vmatmul.f32.gmra.mxu0 %v857
      %v1973 = vpop.f32.mrf.mxu0
      %v1974 = vadd.f32 %v1861, %v1973
      %1975 = vmatmul.f32.gmra.mxu0 %v858
      %v1976 = vpop.f32.mrf.mxu0
      %v1977 = vadd.f32 %v1864, %v1976
      %1978 = vmatmul.f32.gmra.mxu0 %v859
      %v1979 = vpop.f32.mrf.mxu0
      %v1980 = vadd.f32 %v1867, %v1979
      %1981 = vmatmul.f32.gmra.mxu0 %v860
      %v1982 = vpop.f32.mrf.mxu0
      %v1983 = vadd.f32 %v1870, %v1982
      %1984 = vmatmul.f32.gmra.mxu0 %v861
      %v1985 = vpop.f32.mrf.mxu0
      %v1986 = vadd.f32 %v1873, %v1985
      %1987 = vmatmul.f32.gmra.mxu0 %v862
      %v1988 = vpop.f32.mrf.mxu0
      %v1989 = vadd.f32 %v1876, %v1988
      %1990 = vmatmul.f32.gmra.mxu0 %v863
      %v1991 = vpop.f32.mrf.mxu0
      %v1992 = vadd.f32 %v1879, %v1991
      %1993 = vmatmul.f32.gmra.mxu0 %v864
      %v1994 = vpop.f32.mrf.mxu0
      %v1995 = vadd.f32 %v1882, %v1994
      %1996 = vmatmul.f32.gmra.mxu0 %v865
      %v1997 = vpop.f32.mrf.mxu0
      %v1998 = vadd.f32 %v1885, %v1997
      %1999 = vmatmul.f32.gmra.mxu0 %v866
      %v2000 = vpop.f32.mrf.mxu0
      %v2001 = vadd.f32 %v1888, %v2000
      %2002 = vmatmul.f32.gmra.mxu0 %v867
      %v2003 = vpop.f32.mrf.mxu0
      %v2004 = vadd.f32 %v1891, %v2003
      %2005 = vmatmul.f32.gmra.mxu0 %v868
      %v2006 = vpop.f32.mrf.mxu0
      %v2007 = vadd.f32 %v1894, %v2006
      %2008 = vmatmul.f32.gmra.mxu0 %v869
      %v2009 = vpop.f32.mrf.mxu0
      %v2010 = vadd.f32 %v1897, %v2009
      %2011 = vmatmul.f32.gmra.mxu0 %v870
      %v2012 = vpop.f32.mrf.mxu0
      %v2013 = vadd.f32 %v1900, %v2012
      %2014 = vmatmul.f32.gmra.mxu0 %v871
      %v2015 = vpop.f32.mrf.mxu0
      %v2016 = vadd.f32 %v1903, %v2015
      %2017 = vmatmul.f32.gmra.mxu0 %v872
      %v2018 = vpop.f32.mrf.mxu0
      %v2019 = vadd.f32 %v1906, %v2018
      %2020 = vmatmul.f32.gmra.mxu0 %v873
      %v2021 = vpop.f32.mrf.mxu0
      %v2022 = vadd.f32 %v1909, %v2021
      %2023 = vmatmul.f32.gmra.mxu0 %v874
      %v2024 = vpop.f32.mrf.mxu0
      %v2025 = vadd.f32 %v1912, %v2024
      %2026 = vmatmul.f32.gmra.mxu0 %v875
      %v2027 = vpop.f32.mrf.mxu0
      %v2028 = vadd.f32 %v1915, %v2027
      %2029 = vmatmul.f32.gmra.mxu0 %v876
      %v2030 = vpop.f32.mrf.mxu0
      %v2031 = vadd.f32 %v1918, %v2030
      %2032 = vmatmul.f32.gmra.mxu0 %v877
      %v2033 = vpop.f32.mrf.mxu0
      %v2034 = vadd.f32 %v1921, %v2033
      %2035 = vmatmul.f32.gmra.mxu0 %v878
      %v2036 = vpop.f32.mrf.mxu0
      %v2037 = vadd.f32 %v1924, %v2036
      %2038 = vmatmul.f32.gmra.mxu0 %v879
      %v2039 = vpop.f32.mrf.mxu0
      %v2040 = vadd.f32 %v1927, %v2039
      %2041 = vmatmul.f32.gmra.mxu0 %v880
      %v2042 = vpop.f32.mrf.mxu0
      %v2043 = vadd.f32 %v1930, %v2042
      %2044 = vdwg.mxu0
      %2045 = vst [vmem:[#allocation3] sm:$0xff] 0.0
      %2046 = vst [vmem:[#allocation3 + $0x8] sm:$0xff] 0.0
      %2047 = vst [vmem:[#allocation3 + $0x10] sm:$0x3] 0.0
      %2048 = vst [vmem:[#allocation3 + $0x18] sm:$0xff] 0.0
      %2049 = vst [vmem:[#allocation3 + $0x20] sm:$0xff] 0.0
      %2050 = vst [vmem:[#allocation3 + $0x28] sm:$0x3] 0.0
      %2051 = vst [vmem:[#allocation3 + $0x30] sm:$0xff] 0.0
      %2052 = vst [vmem:[#allocation3 + $0x38] sm:$0xff] 0.0
      %2053 = vst [vmem:[#allocation3 + $0x40] sm:$0x3] 0.0
      %2054 = vst [vmem:[#allocation3 + $0x48] sm:$0xff] 0.0
      %2055 = vst [vmem:[#allocation3 + $0x50] sm:$0xff] 0.0
      %2056 = vst [vmem:[#allocation3 + $0x58] sm:$0x3] 0.0
      %2057 = vst [vmem:[#allocation3 + $0x60] sm:$0xff] 0.0
      %2058 = vst [vmem:[#allocation3 + $0x68] sm:$0xff] 0.0
      %2059 = vst [vmem:[#allocation3 + $0x70] sm:$0x3] 0.0
      %2060 = vst [vmem:[#allocation3 + $0x78] sm:$0xff] 0.0
      %2061 = vst [vmem:[#allocation3 + $0x80] sm:$0xff] 0.0
      %2062 = vst [vmem:[#allocation3 + $0x88] sm:$0x3] 0.0
      %2063 = vst [vmem:[#allocation3 + $0x90] sm:$0xff] 0.0
      %2064 = vst [vmem:[#allocation3 + $0x98] sm:$0xff] 0.0
      %2065 = vst [vmem:[#allocation3 + $0xa0] sm:$0x3] 0.0
      %2066 = vst [vmem:[#allocation3 + $0xa8] sm:$0xff] 0.0
      %2067 = vst [vmem:[#allocation3 + $0xb0] sm:$0xff] 0.0
      %2068 = vst [vmem:[#allocation3 + $0xb8] sm:$0x3] 0.0
      %2069 = vst [vmem:[#allocation3 + $0xc0] sm:$0xff] 0.0
      %2070 = vst [vmem:[#allocation3 + $0xc8] sm:$0xff] 0.0
      %2071 = vst [vmem:[#allocation3 + $0xd0] sm:$0x3] 0.0
      %2072 = vst [vmem:[#allocation3 + $0xd8] sm:$0xff] 0.0
      %2073 = vst [vmem:[#allocation3 + $0xe0] sm:$0xff] 0.0
      %2074 = vst [vmem:[#allocation3 + $0xe8] sm:$0x3] 0.0
      %2075 = vst [vmem:[#allocation3 + $0xf0] sm:$0xff] 0.0
      %2076 = vst [vmem:[#allocation3 + $0xf8] sm:$0xff] 0.0
      %2077 = vst [vmem:[#allocation3 + $0x100] sm:$0x3] 0.0
      %2078 = vst [vmem:[#allocation3 + $0x108] sm:$0xff] 0.0
      %2079 = vst [vmem:[#allocation3 + $0x110] sm:$0xff] 0.0
      %2080 = vst [vmem:[#allocation3 + $0x118] sm:$0x3] 0.0
      %2081 = vst [vmem:[#allocation3 + $0x120] sm:$0xff] 0.0
      %2082 = vst [vmem:[#allocation3 + $0x128] sm:$0xff] 0.0
      %2083 = vst [vmem:[#allocation3 + $0x130] sm:$0x3] 0.0
      %2084 = vst [vmem:[#allocation3 + $0x138] sm:$0xff] 0.0
      %2085 = vst [vmem:[#allocation3 + $0x140] sm:$0xff] 0.0
      %2086 = vst [vmem:[#allocation3 + $0x148] sm:$0x3] 0.0
      %2087 = vst [vmem:[#allocation3 + $0x150] sm:$0xff] 0.0
      %2088 = vst [vmem:[#allocation3 + $0x158] sm:$0xff] 0.0
      %2089 = vst [vmem:[#allocation3 + $0x160] sm:$0x3] 0.0
      %2090 = vst [vmem:[#allocation3 + $0x168] sm:$0xff] 0.0
      %2091 = vst [vmem:[#allocation3 + $0x170] sm:$0xff] 0.0
      %2092 = vst [vmem:[#allocation3 + $0x178] sm:$0x3] 0.0
      %2093 = vst [vmem:[#allocation3 + $0x180] sm:$0xff] 0.0
      %2094 = vst [vmem:[#allocation3 + $0x188] sm:$0xff] 0.0
      %2095 = vst [vmem:[#allocation3 + $0x190] sm:$0x3] 0.0
      %2096 = vst [vmem:[#allocation3 + $0x198] sm:$0xff] 0.0
      %2097 = vst [vmem:[#allocation3 + $0x1a0] sm:$0xff] 0.0
      %2098 = vst [vmem:[#allocation3 + $0x1a8] sm:$0x3] 0.0
      %v2099 = vmax.f32 %v1950, 0.0
      %v2100 = vmax.f32 %v1953, 0.0
      %v2101 = vmax.f32 %v1956, 0.0
      %v2102 = vmax.f32 %v1959, 0.0
      %v2103 = vmax.f32 %v1962, 0.0
      %v2104 = vmax.f32 %v1965, 0.0
      %v2105 = vmax.f32 %v1968, 0.0
      %v2106 = vmax.f32 %v1971, 0.0
      %v2107 = vmax.f32 %v1974, 0.0
      %v2108 = vmax.f32 %v1977, 0.0
      %v2109 = vmax.f32 %v1980, 0.0
      %v2110 = vmax.f32 %v1983, 0.0
      %v2111 = vmax.f32 %v1986, 0.0
      %v2112 = vmax.f32 %v1989, 0.0
      %v2113 = vmax.f32 %v1992, 0.0
      %v2114 = vmax.f32 %v1995, 0.0
      %v2115 = vmax.f32 %v1998, 0.0
      %v2116 = vmax.f32 %v2001, 0.0
      %v2117 = vmax.f32 %v2004, 0.0
      %v2118 = vmax.f32 %v2007, 0.0
      %v2119 = vmax.f32 %v2010, 0.0
      %v2120 = vmax.f32 %v2013, 0.0
      %v2121 = vmax.f32 %v2016, 0.0
      %v2122 = vmax.f32 %v2019, 0.0
      %v2123 = vmax.f32 %v2022, 0.0
      %v2124 = vmax.f32 %v2025, 0.0
      %v2125 = vmax.f32 %v2028, 0.0
      %v2126 = vmax.f32 %v2031, 0.0
      %v2127 = vmax.f32 %v2034, 0.0
      %v2128 = vmax.f32 %v2037, 0.0
      %v2129 = vmax.f32 %v2040, 0.0
      %v2130 = vmax.f32 %v2043, 0.0
      %v2131 = vmul.f32 %v2099, 1.7128586
      %v2132 = vmul.f32 %v2100, 1.7128586
      %v2133 = vmul.f32 %v2101, 1.7128586
      %v2134 = vmul.f32 %v2102, 1.7128586
      %v2135 = vmul.f32 %v2103, 1.7128586
      %v2136 = vmul.f32 %v2104, 1.7128586
      %v2137 = vmul.f32 %v2105, 1.7128586
      %v2138 = vmul.f32 %v2106, 1.7128586
      %v2139 = vmul.f32 %v2107, 1.7128586
      %v2140 = vmul.f32 %v2108, 1.7128586
      %v2141 = vmul.f32 %v2109, 1.7128586
      %v2142 = vmul.f32 %v2110, 1.7128586
      %v2143 = vmul.f32 %v2111, 1.7128586
      %v2144 = vmul.f32 %v2112, 1.7128586
      %v2145 = vmul.f32 %v2113, 1.7128586
      %v2146 = vmul.f32 %v2114, 1.7128586
      %v2147 = vmul.f32 %v2115, 1.7128586
      %v2148 = vmul.f32 %v2116, 1.7128586
      %v2149 = vmul.f32 %v2117, 1.7128586
      %v2150 = vmul.f32 %v2118, 1.7128586
      %v2151 = vmul.f32 %v2119, 1.7128586
      %v2152 = vmul.f32 %v2120, 1.7128586
      %v2153 = vmul.f32 %v2121, 1.7128586
      %v2154 = vmul.f32 %v2122, 1.7128586
      %v2155 = vmul.f32 %v2123, 1.7128586
      %v2156 = vmul.f32 %v2124, 1.7128586
      %v2157 = vmul.f32 %v2125, 1.7128586
      %v2158 = vmul.f32 %v2126, 1.7128586
      %v2159 = vmul.f32 %v2127, 1.7128586
      %v2160 = vmul.f32 %v2128, 1.7128586
      %v2161 = vmul.f32 %v2129, 1.7128586
      %v2162 = vmul.f32 %v2130, 1.7128586
      %s2163 = scalar_lea.vmem [#allocation3], 24
      %2164 = vst [vmem:[%s2163 + $0x1] sm:$0xff] %v2131
      %2165 = vst [vmem:[%s2163 + $0x9] sm:$0xff] %v2132
      %s2166 = scalar_lea.vmem [#allocation3], 48
      %2167 = vst [vmem:[%s2166 + $0x1] sm:$0xff] %v2133
      %2168 = vst [vmem:[%s2166 + $0x9] sm:$0xff] %v2134
      %s2169 = scalar_lea.vmem [#allocation3], 72
      %2170 = vst [vmem:[%s2169 + $0x1] sm:$0xff] %v2135
      %2171 = vst [vmem:[%s2169 + $0x9] sm:$0xff] %v2136
      %s2172 = scalar_lea.vmem [#allocation3], 96
      %2173 = vst [vmem:[%s2172 + $0x1] sm:$0xff] %v2137
      %2174 = vst [vmem:[%s2172 + $0x9] sm:$0xff] %v2138
      %s2175 = scalar_lea.vmem [#allocation3], 120
      %2176 = vst [vmem:[%s2175 + $0x1] sm:$0xff] %v2139
      %2177 = vst [vmem:[%s2175 + $0x9] sm:$0xff] %v2140
      %s2178 = scalar_lea.vmem [#allocation3], 144
      %2179 = vst [vmem:[%s2178 + $0x1] sm:$0xff] %v2141
      %2180 = vst [vmem:[%s2178 + $0x9] sm:$0xff] %v2142
      %s2181 = scalar_lea.vmem [#allocation3], 168
      %2182 = vst [vmem:[%s2181 + $0x1] sm:$0xff] %v2143
      %2183 = vst [vmem:[%s2181 + $0x9] sm:$0xff] %v2144
      %s2184 = scalar_lea.vmem [#allocation3], 192
      %2185 = vst [vmem:[%s2184 + $0x1] sm:$0xff] %v2145
      %2186 = vst [vmem:[%s2184 + $0x9] sm:$0xff] %v2146
      %s2187 = scalar_lea.vmem [#allocation3], 216
      %2188 = vst [vmem:[%s2187 + $0x1] sm:$0xff] %v2147
      %2189 = vst [vmem:[%s2187 + $0x9] sm:$0xff] %v2148
      %s2190 = scalar_lea.vmem [#allocation3], 240
      %2191 = vst [vmem:[%s2190 + $0x1] sm:$0xff] %v2149
      %2192 = vst [vmem:[%s2190 + $0x9] sm:$0xff] %v2150
      %s2193 = scalar_lea.vmem [#allocation3], 264
      %2194 = vst [vmem:[%s2193 + $0x1] sm:$0xff] %v2151
      %2195 = vst [vmem:[%s2193 + $0x9] sm:$0xff] %v2152
      %s2196 = scalar_lea.vmem [#allocation3], 288
      %2197 = vst [vmem:[%s2196 + $0x1] sm:$0xff] %v2153
      %2198 = vst [vmem:[%s2196 + $0x9] sm:$0xff] %v2154
      %s2199 = scalar_lea.vmem [#allocation3], 312
      %2200 = vst [vmem:[%s2199 + $0x1] sm:$0xff] %v2155
      %2201 = vst [vmem:[%s2199 + $0x9] sm:$0xff] %v2156
      %s2202 = scalar_lea.vmem [#allocation3], 336
      %2203 = vst [vmem:[%s2202 + $0x1] sm:$0xff] %v2157
      %2204 = vst [vmem:[%s2202 + $0x9] sm:$0xff] %v2158
      %s2205 = scalar_lea.vmem [#allocation3], 360
      %2206 = vst [vmem:[%s2205 + $0x1] sm:$0xff] %v2159
      %2207 = vst [vmem:[%s2205 + $0x9] sm:$0xff] %v2160
      %s2208 = scalar_lea.vmem [#allocation3], 384
      %2209 = vst [vmem:[%s2208 + $0x1] sm:$0xff] %v2161
      %2210 = vst [vmem:[%s2208 + $0x9] sm:$0xff] %v2162
      %v2211 = vld [vmem:[%s4] sm:$0x1]
      %v2212 = vld [vmem:[#allocation3] sm:$0xff]
      %v2213 = vld [vmem:[#allocation3 + $0x8] sm:$0xff]
      %v2214 = vld [vmem:[#allocation3 + $0x18] sm:$0xff]
      %v2215 = vld [vmem:[#allocation3 + $0x20] sm:$0xff]
      %v2216 = vld [vmem:[#allocation3 + $0x30] sm:$0xff]
      %v2217 = vld [vmem:[#allocation3 + $0x38] sm:$0xff]
      %v2218 = vld [vmem:[#allocation3 + $0x48] sm:$0xff]
      %v2219 = vld [vmem:[#allocation3 + $0x50] sm:$0xff]
      %v2220 = vld [vmem:[#allocation3 + $0x60] sm:$0xff]
      %v2221 = vld [vmem:[#allocation3 + $0x68] sm:$0xff]
      %v2222 = vld [vmem:[#allocation3 + $0x78] sm:$0xff]
      %v2223 = vld [vmem:[#allocation3 + $0x80] sm:$0xff]
      %v2224 = vld [vmem:[#allocation3 + $0x90] sm:$0xff]
      %v2225 = vld [vmem:[#allocation3 + $0x98] sm:$0xff]
      %v2226 = vld [vmem:[#allocation3 + $0xa8] sm:$0xff]
      %v2227 = vld [vmem:[#allocation3 + $0xb0] sm:$0xff]
      %v2228 = vld [vmem:[#allocation3 + $0xc0] sm:$0xff]
      %v2229 = vld [vmem:[#allocation3 + $0xc8] sm:$0xff]
      %v2230 = vld [vmem:[#allocation3 + $0xd8] sm:$0xff]
      %v2231 = vld [vmem:[#allocation3 + $0xe0] sm:$0xff]
      %v2232 = vld [vmem:[#allocation3 + $0xf0] sm:$0xff]
      %v2233 = vld [vmem:[#allocation3 + $0xf8] sm:$0xff]
      %v2234 = vld [vmem:[#allocation3 + $0x108] sm:$0xff]
      %v2235 = vld [vmem:[#allocation3 + $0x110] sm:$0xff]
      %v2236 = vld [vmem:[#allocation3 + $0x120] sm:$0xff]
      %v2237 = vld [vmem:[#allocation3 + $0x128] sm:$0xff]
      %v2238 = vld [vmem:[#allocation3 + $0x138] sm:$0xff]
      %v2239 = vld [vmem:[#allocation3 + $0x140] sm:$0xff]
      %v2240 = vld [vmem:[#allocation3 + $0x150] sm:$0xff]
      %v2241 = vld [vmem:[#allocation3 + $0x158] sm:$0xff]
      %v2242 = vld [vmem:[#allocation3 + $0x168] sm:$0xff]
      %v2243 = vld [vmem:[#allocation3 + $0x170] sm:$0xff]
      %v2244 = vld [vmem:[#allocation3 + $0x1] sm:$0xff]
      %v2245 = vld [vmem:[#allocation3 + $0x9] sm:$0xff]
      %v2246 = vld [vmem:[#allocation3 + $0x19] sm:$0xff]
      %v2247 = vld [vmem:[#allocation3 + $0x21] sm:$0xff]
      %v2248 = vld [vmem:[#allocation3 + $0x31] sm:$0xff]
      %v2249 = vld [vmem:[#allocation3 + $0x39] sm:$0xff]
      %v2250 = vld [vmem:[#allocation3 + $0x49] sm:$0xff]
      %v2251 = vld [vmem:[#allocation3 + $0x51] sm:$0xff]
      %v2252 = vld [vmem:[#allocation3 + $0x61] sm:$0xff]
      %v2253 = vld [vmem:[#allocation3 + $0x69] sm:$0xff]
      %v2254 = vld [vmem:[#allocation3 + $0x79] sm:$0xff]
      %v2255 = vld [vmem:[#allocation3 + $0x81] sm:$0xff]
      %v2256 = vld [vmem:[#allocation3 + $0x91] sm:$0xff]
      %v2257 = vld [vmem:[#allocation3 + $0x99] sm:$0xff]
      %v2258 = vld [vmem:[#allocation3 + $0xa9] sm:$0xff]
      %v2259 = vld [vmem:[#allocation3 + $0xb1] sm:$0xff]
      %v2260 = vld [vmem:[#allocation3 + $0xc1] sm:$0xff]
      %v2261 = vld [vmem:[#allocation3 + $0xc9] sm:$0xff]
      %v2262 = vld [vmem:[#allocation3 + $0xd9] sm:$0xff]
      %v2263 = vld [vmem:[#allocation3 + $0xe1] sm:$0xff]
      %v2264 = vld [vmem:[#allocation3 + $0xf1] sm:$0xff]
      %v2265 = vld [vmem:[#allocation3 + $0xf9] sm:$0xff]
      %v2266 = vld [vmem:[#allocation3 + $0x109] sm:$0xff]
      %v2267 = vld [vmem:[#allocation3 + $0x111] sm:$0xff]
      %v2268 = vld [vmem:[#allocation3 + $0x121] sm:$0xff]
      %v2269 = vld [vmem:[#allocation3 + $0x129] sm:$0xff]
      %v2270 = vld [vmem:[#allocation3 + $0x139] sm:$0xff]
      %v2271 = vld [vmem:[#allocation3 + $0x141] sm:$0xff]
      %v2272 = vld [vmem:[#allocation3 + $0x151] sm:$0xff]
      %v2273 = vld [vmem:[#allocation3 + $0x159] sm:$0xff]
      %v2274 = vld [vmem:[#allocation3 + $0x169] sm:$0xff]
      %v2275 = vld [vmem:[#allocation3 + $0x171] sm:$0xff]
      %v2276 = vld [vmem:[#allocation3 + $0x2] sm:$0xff]
      %v2277 = vld [vmem:[#allocation3 + $0xa] sm:$0xff]
      %v2278 = vld [vmem:[#allocation3 + $0x1a] sm:$0xff]
      %v2279 = vld [vmem:[#allocation3 + $0x22] sm:$0xff]
      %v2280 = vld [vmem:[#allocation3 + $0x32] sm:$0xff]
      %v2281 = vld [vmem:[#allocation3 + $0x3a] sm:$0xff]
      %v2282 = vld [vmem:[#allocation3 + $0x4a] sm:$0xff]
      %v2283 = vld [vmem:[#allocation3 + $0x52] sm:$0xff]
      %v2284 = vld [vmem:[#allocation3 + $0x62] sm:$0xff]
      %v2285 = vld [vmem:[#allocation3 + $0x6a] sm:$0xff]
      %v2286 = vld [vmem:[#allocation3 + $0x7a] sm:$0xff]
      %v2287 = vld [vmem:[#allocation3 + $0x82] sm:$0xff]
      %v2288 = vld [vmem:[#allocation3 + $0x92] sm:$0xff]
      %v2289 = vld [vmem:[#allocation3 + $0x9a] sm:$0xff]
      %v2290 = vld [vmem:[#allocation3 + $0xaa] sm:$0xff]
      %v2291 = vld [vmem:[#allocation3 + $0xb2] sm:$0xff]
      %v2292 = vld [vmem:[#allocation3 + $0xc2] sm:$0xff]
      %v2293 = vld [vmem:[#allocation3 + $0xca] sm:$0xff]
      %v2294 = vld [vmem:[#allocation3 + $0xda] sm:$0xff]
      %v2295 = vld [vmem:[#allocation3 + $0xe2] sm:$0xff]
      %v2296 = vld [vmem:[#allocation3 + $0xf2] sm:$0xff]
      %v2297 = vld [vmem:[#allocation3 + $0xfa] sm:$0xff]
      %v2298 = vld [vmem:[#allocation3 + $0x10a] sm:$0xff]
      %v2299 = vld [vmem:[#allocation3 + $0x112] sm:$0xff]
      %v2300 = vld [vmem:[#allocation3 + $0x122] sm:$0xff]
      %v2301 = vld [vmem:[#allocation3 + $0x12a] sm:$0xff]
      %v2302 = vld [vmem:[#allocation3 + $0x13a] sm:$0xff]
      %v2303 = vld [vmem:[#allocation3 + $0x142] sm:$0xff]
      %v2304 = vld [vmem:[#allocation3 + $0x152] sm:$0xff]
      %v2305 = vld [vmem:[#allocation3 + $0x15a] sm:$0xff]
      %v2306 = vld [vmem:[#allocation3 + $0x16a] sm:$0xff]
      %v2307 = vld [vmem:[#allocation3 + $0x172] sm:$0xff]
      %v2308 = vld [vmem:[%s2163] sm:$0xff]
      %v2309 = vld [vmem:[%s2163 + $0x8] sm:$0xff]
      %v2310 = vld [vmem:[%s2163 + $0x18] sm:$0xff]
      %v2311 = vld [vmem:[%s2163 + $0x20] sm:$0xff]
      %v2312 = vld [vmem:[%s2163 + $0x30] sm:$0xff]
      %v2313 = vld [vmem:[%s2163 + $0x38] sm:$0xff]
      %v2314 = vld [vmem:[%s2163 + $0x48] sm:$0xff]
      %v2315 = vld [vmem:[%s2163 + $0x50] sm:$0xff]
      %v2316 = vld [vmem:[%s2163 + $0x60] sm:$0xff]
      %v2317 = vld [vmem:[%s2163 + $0x68] sm:$0xff]
      %v2318 = vld [vmem:[%s2163 + $0x78] sm:$0xff]
      %v2319 = vld [vmem:[%s2163 + $0x80] sm:$0xff]
      %v2320 = vld [vmem:[%s2163 + $0x90] sm:$0xff]
      %v2321 = vld [vmem:[%s2163 + $0x98] sm:$0xff]
      %v2322 = vld [vmem:[%s2163 + $0xa8] sm:$0xff]
      %v2323 = vld [vmem:[%s2163 + $0xb0] sm:$0xff]
      %v2324 = vld [vmem:[%s2163 + $0xc0] sm:$0xff]
      %v2325 = vld [vmem:[%s2163 + $0xc8] sm:$0xff]
      %v2326 = vld [vmem:[%s2163 + $0xd8] sm:$0xff]
      %v2327 = vld [vmem:[%s2163 + $0xe0] sm:$0xff]
      %v2328 = vld [vmem:[%s2163 + $0xf0] sm:$0xff]
      %v2329 = vld [vmem:[%s2163 + $0xf8] sm:$0xff]
      %v2330 = vld [vmem:[%s2163 + $0x108] sm:$0xff]
      %v2331 = vld [vmem:[%s2163 + $0x110] sm:$0xff]
      %v2332 = vld [vmem:[%s2163 + $0x120] sm:$0xff]
      %v2333 = vld [vmem:[%s2163 + $0x128] sm:$0xff]
      %v2334 = vld [vmem:[%s2163 + $0x138] sm:$0xff]
      %v2335 = vld [vmem:[%s2163 + $0x140] sm:$0xff]
      %v2336 = vld [vmem:[%s2163 + $0x150] sm:$0xff]
      %v2337 = vld [vmem:[%s2163 + $0x158] sm:$0xff]
      %v2338 = vld [vmem:[%s2163 + $0x168] sm:$0xff]
      %v2339 = vld [vmem:[%s2163 + $0x170] sm:$0xff]
      %v2340 = vld [vmem:[%s2163 + $0x1] sm:$0xff]
      %v2341 = vld [vmem:[%s2163 + $0x9] sm:$0xff]
      %v2342 = vld [vmem:[%s2163 + $0x19] sm:$0xff]
      %v2343 = vld [vmem:[%s2163 + $0x21] sm:$0xff]
      %v2344 = vld [vmem:[%s2163 + $0x31] sm:$0xff]
      %v2345 = vld [vmem:[%s2163 + $0x39] sm:$0xff]
      %v2346 = vld [vmem:[%s2163 + $0x49] sm:$0xff]
      %v2347 = vld [vmem:[%s2163 + $0x51] sm:$0xff]
      %v2348 = vld [vmem:[%s2163 + $0x61] sm:$0xff]
      %v2349 = vld [vmem:[%s2163 + $0x69] sm:$0xff]
      %v2350 = vld [vmem:[%s2163 + $0x79] sm:$0xff]
      %v2351 = vld [vmem:[%s2163 + $0x81] sm:$0xff]
      %v2352 = vld [vmem:[%s2163 + $0x91] sm:$0xff]
      %v2353 = vld [vmem:[%s2163 + $0x99] sm:$0xff]
      %v2354 = vld [vmem:[%s2163 + $0xa9] sm:$0xff]
      %v2355 = vld [vmem:[%s2163 + $0xb1] sm:$0xff]
      %v2356 = vld [vmem:[%s2163 + $0xc1] sm:$0xff]
      %v2357 = vld [vmem:[%s2163 + $0xc9] sm:$0xff]
      %v2358 = vld [vmem:[%s2163 + $0xd9] sm:$0xff]
      %v2359 = vld [vmem:[%s2163 + $0xe1] sm:$0xff]
      %v2360 = vld [vmem:[%s2163 + $0xf1] sm:$0xff]
      %v2361 = vld [vmem:[%s2163 + $0xf9] sm:$0xff]
      %v2362 = vld [vmem:[%s2163 + $0x109] sm:$0xff]
      %v2363 = vld [vmem:[%s2163 + $0x111] sm:$0xff]
      %v2364 = vld [vmem:[%s2163 + $0x121] sm:$0xff]
      %v2365 = vld [vmem:[%s2163 + $0x129] sm:$0xff]
      %v2366 = vld [vmem:[%s2163 + $0x139] sm:$0xff]
      %v2367 = vld [vmem:[%s2163 + $0x141] sm:$0xff]
      %v2368 = vld [vmem:[%s2163 + $0x151] sm:$0xff]
      %v2369 = vld [vmem:[%s2163 + $0x159] sm:$0xff]
      %v2370 = vld [vmem:[%s2163 + $0x169] sm:$0xff]
      %v2371 = vld [vmem:[%s2163 + $0x171] sm:$0xff]
      %v2372 = vld [vmem:[%s2163 + $0x2] sm:$0xff]
      %v2373 = vld [vmem:[%s2163 + $0xa] sm:$0xff]
      %v2374 = vld [vmem:[%s2163 + $0x1a] sm:$0xff]
      %v2375 = vld [vmem:[%s2163 + $0x22] sm:$0xff]
      %v2376 = vld [vmem:[%s2163 + $0x32] sm:$0xff]
      %v2377 = vld [vmem:[%s2163 + $0x3a] sm:$0xff]
      %v2378 = vld [vmem:[%s2163 + $0x4a] sm:$0xff]
      %v2379 = vld [vmem:[%s2163 + $0x52] sm:$0xff]
      %v2380 = vld [vmem:[%s2163 + $0x62] sm:$0xff]
      %v2381 = vld [vmem:[%s2163 + $0x6a] sm:$0xff]
      %v2382 = vld [vmem:[%s2163 + $0x7a] sm:$0xff]
      %v2383 = vld [vmem:[%s2163 + $0x82] sm:$0xff]
      %v2384 = vld [vmem:[%s2163 + $0x92] sm:$0xff]
      %v2385 = vld [vmem:[%s2163 + $0x9a] sm:$0xff]
      %v2386 = vld [vmem:[%s2163 + $0xaa] sm:$0xff]
      %v2387 = vld [vmem:[%s2163 + $0xb2] sm:$0xff]
      %v2388 = vld [vmem:[%s2163 + $0xc2] sm:$0xff]
      %v2389 = vld [vmem:[%s2163 + $0xca] sm:$0xff]
      %v2390 = vld [vmem:[%s2163 + $0xda] sm:$0xff]
      %v2391 = vld [vmem:[%s2163 + $0xe2] sm:$0xff]
      %v2392 = vld [vmem:[%s2163 + $0xf2] sm:$0xff]
      %v2393 = vld [vmem:[%s2163 + $0xfa] sm:$0xff]
      %v2394 = vld [vmem:[%s2163 + $0x10a] sm:$0xff]
      %v2395 = vld [vmem:[%s2163 + $0x112] sm:$0xff]
      %v2396 = vld [vmem:[%s2163 + $0x122] sm:$0xff]
      %v2397 = vld [vmem:[%s2163 + $0x12a] sm:$0xff]
      %v2398 = vld [vmem:[%s2163 + $0x13a] sm:$0xff]
      %v2399 = vld [vmem:[%s2163 + $0x142] sm:$0xff]
      %v2400 = vld [vmem:[%s2163 + $0x152] sm:$0xff]
      %v2401 = vld [vmem:[%s2163 + $0x15a] sm:$0xff]
      %v2402 = vld [vmem:[%s2163 + $0x16a] sm:$0xff]
      %v2403 = vld [vmem:[%s2163 + $0x172] sm:$0xff]
      %v2404 = vld [vmem:[%s2166] sm:$0xff]
      %v2405 = vld [vmem:[%s2166 + $0x8] sm:$0xff]
      %v2406 = vld [vmem:[%s2166 + $0x18] sm:$0xff]
      %v2407 = vld [vmem:[%s2166 + $0x20] sm:$0xff]
      %v2408 = vld [vmem:[%s2166 + $0x30] sm:$0xff]
      %v2409 = vld [vmem:[%s2166 + $0x38] sm:$0xff]
      %v2410 = vld [vmem:[%s2166 + $0x48] sm:$0xff]
      %v2411 = vld [vmem:[%s2166 + $0x50] sm:$0xff]
      %v2412 = vld [vmem:[%s2166 + $0x60] sm:$0xff]
      %v2413 = vld [vmem:[%s2166 + $0x68] sm:$0xff]
      %v2414 = vld [vmem:[%s2166 + $0x78] sm:$0xff]
      %v2415 = vld [vmem:[%s2166 + $0x80] sm:$0xff]
      %v2416 = vld [vmem:[%s2166 + $0x90] sm:$0xff]
      %v2417 = vld [vmem:[%s2166 + $0x98] sm:$0xff]
      %v2418 = vld [vmem:[%s2166 + $0xa8] sm:$0xff]
      %v2419 = vld [vmem:[%s2166 + $0xb0] sm:$0xff]
      %v2420 = vld [vmem:[%s2166 + $0xc0] sm:$0xff]
      %v2421 = vld [vmem:[%s2166 + $0xc8] sm:$0xff]
      %v2422 = vld [vmem:[%s2166 + $0xd8] sm:$0xff]
      %v2423 = vld [vmem:[%s2166 + $0xe0] sm:$0xff]
      %v2424 = vld [vmem:[%s2166 + $0xf0] sm:$0xff]
      %v2425 = vld [vmem:[%s2166 + $0xf8] sm:$0xff]
      %v2426 = vld [vmem:[%s2166 + $0x108] sm:$0xff]
      %v2427 = vld [vmem:[%s2166 + $0x110] sm:$0xff]
      %v2428 = vld [vmem:[%s2166 + $0x120] sm:$0xff]
      %v2429 = vld [vmem:[%s2166 + $0x128] sm:$0xff]
      %v2430 = vld [vmem:[%s2166 + $0x138] sm:$0xff]
      %v2431 = vld [vmem:[%s2166 + $0x140] sm:$0xff]
      %v2432 = vld [vmem:[%s2166 + $0x150] sm:$0xff]
      %v2433 = vld [vmem:[%s2166 + $0x158] sm:$0xff]
      %v2434 = vld [vmem:[%s2166 + $0x168] sm:$0xff]
      %v2435 = vld [vmem:[%s2166 + $0x170] sm:$0xff]
      %v2436 = vld [vmem:[%s2166 + $0x1] sm:$0xff]
      %v2437 = vld [vmem:[%s2166 + $0x9] sm:$0xff]
      %v2438 = vld [vmem:[%s2166 + $0x19] sm:$0xff]
      %v2439 = vld [vmem:[%s2166 + $0x21] sm:$0xff]
      %v2440 = vld [vmem:[%s2166 + $0x31] sm:$0xff]
      %v2441 = vld [vmem:[%s2166 + $0x39] sm:$0xff]
      %v2442 = vld [vmem:[%s2166 + $0x49] sm:$0xff]
      %v2443 = vld [vmem:[%s2166 + $0x51] sm:$0xff]
      %v2444 = vld [vmem:[%s2166 + $0x61] sm:$0xff]
      %v2445 = vld [vmem:[%s2166 + $0x69] sm:$0xff]
      %v2446 = vld [vmem:[%s2166 + $0x79] sm:$0xff]
      %v2447 = vld [vmem:[%s2166 + $0x81] sm:$0xff]
      %v2448 = vld [vmem:[%s2166 + $0x91] sm:$0xff]
      %v2449 = vld [vmem:[%s2166 + $0x99] sm:$0xff]
      %v2450 = vld [vmem:[%s2166 + $0xa9] sm:$0xff]
      %v2451 = vld [vmem:[%s2166 + $0xb1] sm:$0xff]
      %v2452 = vld [vmem:[%s2166 + $0xc1] sm:$0xff]
      %v2453 = vld [vmem:[%s2166 + $0xc9] sm:$0xff]
      %v2454 = vld [vmem:[%s2166 + $0xd9] sm:$0xff]
      %v2455 = vld [vmem:[%s2166 + $0xe1] sm:$0xff]
      %v2456 = vld [vmem:[%s2166 + $0xf1] sm:$0xff]
      %v2457 = vld [vmem:[%s2166 + $0xf9] sm:$0xff]
      %v2458 = vld [vmem:[%s2166 + $0x109] sm:$0xff]
      %v2459 = vld [vmem:[%s2166 + $0x111] sm:$0xff]
      %v2460 = vld [vmem:[%s2166 + $0x121] sm:$0xff]
      %v2461 = vld [vmem:[%s2166 + $0x129] sm:$0xff]
      %v2462 = vld [vmem:[%s2166 + $0x139] sm:$0xff]
      %v2463 = vld [vmem:[%s2166 + $0x141] sm:$0xff]
      %v2464 = vld [vmem:[%s2166 + $0x151] sm:$0xff]
      %v2465 = vld [vmem:[%s2166 + $0x159] sm:$0xff]
      %v2466 = vld [vmem:[%s2166 + $0x169] sm:$0xff]
      %v2467 = vld [vmem:[%s2166 + $0x171] sm:$0xff]
      %v2468 = vld [vmem:[%s2166 + $0x2] sm:$0xff]
      %v2469 = vld [vmem:[%s2166 + $0xa] sm:$0xff]
      %v2470 = vld [vmem:[%s2166 + $0x1a] sm:$0xff]
      %v2471 = vld [vmem:[%s2166 + $0x22] sm:$0xff]
      %v2472 = vld [vmem:[%s2166 + $0x32] sm:$0xff]
      %v2473 = vld [vmem:[%s2166 + $0x3a] sm:$0xff]
      %v2474 = vld [vmem:[%s2166 + $0x4a] sm:$0xff]
      %v2475 = vld [vmem:[%s2166 + $0x52] sm:$0xff]
      %v2476 = vld [vmem:[%s2166 + $0x62] sm:$0xff]
      %v2477 = vld [vmem:[%s2166 + $0x6a] sm:$0xff]
      %v2478 = vld [vmem:[%s2166 + $0x7a] sm:$0xff]
      %v2479 = vld [vmem:[%s2166 + $0x82] sm:$0xff]
      %v2480 = vld [vmem:[%s2166 + $0x92] sm:$0xff]
      %v2481 = vld [vmem:[%s2166 + $0x9a] sm:$0xff]
      %v2482 = vld [vmem:[%s2166 + $0xaa] sm:$0xff]
      %v2483 = vld [vmem:[%s2166 + $0xb2] sm:$0xff]
      %v2484 = vld [vmem:[%s2166 + $0xc2] sm:$0xff]
      %v2485 = vld [vmem:[%s2166 + $0xca] sm:$0xff]
      %v2486 = vld [vmem:[%s2166 + $0xda] sm:$0xff]
      %v2487 = vld [vmem:[%s2166 + $0xe2] sm:$0xff]
      %v2488 = vld [vmem:[%s2166 + $0xf2] sm:$0xff]
      %v2489 = vld [vmem:[%s2166 + $0xfa] sm:$0xff]
      %v2490 = vld [vmem:[%s2166 + $0x10a] sm:$0xff]
      %v2491 = vld [vmem:[%s2166 + $0x112] sm:$0xff]
      %v2492 = vld [vmem:[%s2166 + $0x122] sm:$0xff]
      %v2493 = vld [vmem:[%s2166 + $0x12a] sm:$0xff]
      %v2494 = vld [vmem:[%s2166 + $0x13a] sm:$0xff]
      %v2495 = vld [vmem:[%s2166 + $0x142] sm:$0xff]
      %v2496 = vld [vmem:[%s2166 + $0x152] sm:$0xff]
      %v2497 = vld [vmem:[%s2166 + $0x15a] sm:$0xff]
      %v2498 = vld [vmem:[%s2166 + $0x16a] sm:$0xff]
      %v2499 = vld [vmem:[%s2166 + $0x172] sm:$0xff]
      %v2500 = vld [vmem:[%s3] sm:$0xff]
      %v2501 = vld [vmem:[%s3 + $0x8] sm:$0xff]
      %v2502 = vld [vmem:[%s3 + $0x10] sm:$0xff]
      %v2503 = vld [vmem:[%s3 + $0x18] sm:$0xff]
      %v2504 = vld [vmem:[%s3 + $0x20] sm:$0xff]
      %v2505 = vld [vmem:[%s3 + $0x28] sm:$0xff]
      %v2506 = vld [vmem:[%s3 + $0x30] sm:$0xff]
      %v2507 = vld [vmem:[%s3 + $0x38] sm:$0xff]
      %v2508 = vld [vmem:[%s3 + $0x40] sm:$0xff]
      %v2509 = vld [vmem:[%s3 + $0x48] sm:$0xff]
      %v2510 = vld [vmem:[%s3 + $0x50] sm:$0xff]
      %v2511 = vld [vmem:[%s3 + $0x58] sm:$0xff]
      %v2512 = vld [vmem:[%s3 + $0x60] sm:$0xff]
      %v2513 = vld [vmem:[%s3 + $0x68] sm:$0xff]
      %v2514 = vld [vmem:[%s3 + $0x70] sm:$0xff]
      %v2515 = vld [vmem:[%s3 + $0x78] sm:$0xff]
      %v2516 = vld [vmem:[%s3 + $0x80] sm:$0xff]
      %v2517 = vld [vmem:[%s3 + $0x88] sm:$0xff]
      %v2518 = vld [vmem:[%s3 + $0x90] sm:$0xff]
      %v2519 = vld [vmem:[%s3 + $0x98] sm:$0xff]
      %v2520 = vld [vmem:[%s3 + $0xa0] sm:$0xff]
      %v2521 = vld [vmem:[%s3 + $0xa8] sm:$0xff]
      %v2522 = vld [vmem:[%s3 + $0xb0] sm:$0xff]
      %v2523 = vld [vmem:[%s3 + $0xb8] sm:$0xff]
      %v2524 = vld [vmem:[%s3 + $0xc0] sm:$0xff]
      %v2525 = vld [vmem:[%s3 + $0xc8] sm:$0xff]
      %v2526 = vld [vmem:[%s3 + $0xd0] sm:$0xff]
      %v2527 = vld [vmem:[%s3 + $0xd8] sm:$0xff]
      %v2528 = vld [vmem:[%s3 + $0xe0] sm:$0xff]
      %v2529 = vld [vmem:[%s3 + $0xe8] sm:$0xff]
      %v2530 = vld [vmem:[%s3 + $0xf0] sm:$0xff]
      %v2531 = vld [vmem:[%s3 + $0xf8] sm:$0xff]
      %v2532 = vld [vmem:[%s3 + $0x100] sm:$0xff]
      %v2533 = vld [vmem:[%s3 + $0x108] sm:$0xff]
      %v2534 = vld [vmem:[%s3 + $0x110] sm:$0xff]
      %v2535 = vld [vmem:[%s3 + $0x118] sm:$0xff]
      %v2536 = vld [vmem:[%s3 + $0x120] sm:$0xff]
      %v2537 = vld [vmem:[%s3 + $0x128] sm:$0xff]
      %v2538 = vld [vmem:[%s3 + $0x130] sm:$0xff]
      %v2539 = vld [vmem:[%s3 + $0x138] sm:$0xff]
      %v2540 = vld [vmem:[%s3 + $0x140] sm:$0xff]
      %v2541 = vld [vmem:[%s3 + $0x148] sm:$0xff]
      %v2542 = vld [vmem:[%s3 + $0x150] sm:$0xff]
      %v2543 = vld [vmem:[%s3 + $0x158] sm:$0xff]
      %v2544 = vld [vmem:[%s3 + $0x160] sm:$0xff]
      %v2545 = vld [vmem:[%s3 + $0x168] sm:$0xff]
      %v2546 = vld [vmem:[%s3 + $0x170] sm:$0xff]
      %v2547 = vld [vmem:[%s3 + $0x178] sm:$0xff]
      %v2548 = vld [vmem:[%s3 + $0x180] sm:$0xff]
      %v2549 = vld [vmem:[%s3 + $0x188] sm:$0xff]
      %v2550 = vld [vmem:[%s3 + $0x190] sm:$0xff]
      %v2551 = vld [vmem:[%s3 + $0x198] sm:$0xff]
      %v2552 = vld [vmem:[%s3 + $0x1a0] sm:$0xff]
      %v2553 = vld [vmem:[%s3 + $0x1a8] sm:$0xff]
      %v2554 = vld [vmem:[%s3 + $0x1b0] sm:$0xff]
      %v2555 = vld [vmem:[%s3 + $0x1b8] sm:$0xff]
      %v2556 = vld [vmem:[%s3 + $0x1c0] sm:$0xff]
      %v2557 = vld [vmem:[%s3 + $0x1c8] sm:$0xff]
      %v2558 = vld [vmem:[%s3 + $0x1d0] sm:$0xff]
      %v2559 = vld [vmem:[%s3 + $0x1d8] sm:$0xff]
      %v2560 = vld [vmem:[%s3 + $0x1e0] sm:$0xff]
      %v2561 = vld [vmem:[%s3 + $0x1e8] sm:$0xff]
      %v2562 = vld [vmem:[%s3 + $0x1f0] sm:$0xff]
      %v2563 = vld [vmem:[%s3 + $0x1f8] sm:$0xff]
      %v2564 = vld [vmem:[%s3 + $0x200] sm:$0xff]
      %v2565 = vld [vmem:[%s3 + $0x208] sm:$0xff]
      %v2566 = vld [vmem:[%s3 + $0x210] sm:$0xff]
      %v2567 = vld [vmem:[%s3 + $0x218] sm:$0xff]
      %v2568 = vld [vmem:[%s3 + $0x220] sm:$0xff]
      %v2569 = vld [vmem:[%s3 + $0x228] sm:$0xff]
      %v2570 = vld [vmem:[%s3 + $0x230] sm:$0xff]
      %v2571 = vld [vmem:[%s3 + $0x238] sm:$0xff]
      %v2572 = vld [vmem:[%s3 + $0x240] sm:$0xff]
      %v2573 = vld [vmem:[%s3 + $0x248] sm:$0xff]
      %v2574 = vld [vmem:[%s3 + $0x250] sm:$0xff]
      %v2575 = vld [vmem:[%s3 + $0x258] sm:$0xff]
      %v2576 = vld [vmem:[%s3 + $0x260] sm:$0xff]
      %v2577 = vld [vmem:[%s3 + $0x268] sm:$0xff]
      %v2578 = vld [vmem:[%s3 + $0x270] sm:$0xff]
      %v2579 = vld [vmem:[%s3 + $0x278] sm:$0xff]
      %v2580 = vld [vmem:[%s3 + $0x280] sm:$0xff]
      %v2581 = vld [vmem:[%s3 + $0x288] sm:$0xff]
      %v2582 = vld [vmem:[%s3 + $0x290] sm:$0xff]
      %v2583 = vld [vmem:[%s3 + $0x298] sm:$0xff]
      %v2584 = vld [vmem:[%s3 + $0x2a0] sm:$0xff]
      %v2585 = vld [vmem:[%s3 + $0x2a8] sm:$0xff]
      %v2586 = vld [vmem:[%s3 + $0x2b0] sm:$0xff]
      %v2587 = vld [vmem:[%s3 + $0x2b8] sm:$0xff]
      %v2588 = vld [vmem:[%s3 + $0x2c0] sm:$0xff]
      %v2589 = vld [vmem:[%s3 + $0x2c8] sm:$0xff]
      %v2590 = vld [vmem:[%s3 + $0x2d0] sm:$0xff]
      %v2591 = vld [vmem:[%s3 + $0x2d8] sm:$0xff]
      %v2592 = vld [vmem:[%s3 + $0x2e0] sm:$0xff]
      %v2593 = vld [vmem:[%s3 + $0x2e8] sm:$0xff]
      %v2594 = vld [vmem:[%s3 + $0x2f0] sm:$0xff]
      %v2595 = vld [vmem:[%s3 + $0x2f8] sm:$0xff]
      %v2596 = vld [vmem:[%s3 + $0x300] sm:$0xff]
      %v2597 = vld [vmem:[%s3 + $0x308] sm:$0xff]
      %v2598 = vld [vmem:[%s3 + $0x310] sm:$0xff]
      %v2599 = vld [vmem:[%s3 + $0x318] sm:$0xff]
      %v2600 = vld [vmem:[%s3 + $0x320] sm:$0xff]
      %v2601 = vld [vmem:[%s3 + $0x328] sm:$0xff]
      %v2602 = vld [vmem:[%s3 + $0x330] sm:$0xff]
      %v2603 = vld [vmem:[%s3 + $0x338] sm:$0xff]
      %v2604 = vld [vmem:[%s3 + $0x340] sm:$0xff]
      %v2605 = vld [vmem:[%s3 + $0x348] sm:$0xff]
      %v2606 = vld [vmem:[%s3 + $0x350] sm:$0xff]
      %v2607 = vld [vmem:[%s3 + $0x358] sm:$0xff]
      %v2608 = vld [vmem:[%s3 + $0x360] sm:$0xff]
      %v2609 = vld [vmem:[%s3 + $0x368] sm:$0xff]
      %v2610 = vld [vmem:[%s3 + $0x370] sm:$0xff]
      %v2611 = vld [vmem:[%s3 + $0x378] sm:$0xff]
      %v2612 = vld [vmem:[%s3 + $0x380] sm:$0xff]
      %v2613 = vld [vmem:[%s3 + $0x388] sm:$0xff]
      %v2614 = vld [vmem:[%s3 + $0x390] sm:$0xff]
      %v2615 = vld [vmem:[%s3 + $0x398] sm:$0xff]
      %v2616 = vld [vmem:[%s3 + $0x3a0] sm:$0xff]
      %v2617 = vld [vmem:[%s3 + $0x3a8] sm:$0xff]
      %v2618 = vld [vmem:[%s3 + $0x3b0] sm:$0xff]
      %v2619 = vld [vmem:[%s3 + $0x3b8] sm:$0xff]
      %v2620 = vld [vmem:[%s3 + $0x3c0] sm:$0xff]
      %v2621 = vld [vmem:[%s3 + $0x3c8] sm:$0xff]
      %v2622 = vld [vmem:[%s3 + $0x3d0] sm:$0xff]
      %v2623 = vld [vmem:[%s3 + $0x3d8] sm:$0xff]
      %v2624 = vld [vmem:[%s3 + $0x3e0] sm:$0xff]
      %v2625 = vld [vmem:[%s3 + $0x3e8] sm:$0xff]
      %v2626 = vld [vmem:[%s3 + $0x3f0] sm:$0xff]
      %v2627 = vld [vmem:[%s3 + $0x3f8] sm:$0xff]
      %v2628 = vld [vmem:[%s3 + $0x400] sm:$0xff]
      %v2629 = vld [vmem:[%s3 + $0x408] sm:$0xff]
      %v2630 = vld [vmem:[%s3 + $0x410] sm:$0xff]
      %v2631 = vld [vmem:[%s3 + $0x418] sm:$0xff]
      %v2632 = vld [vmem:[%s3 + $0x420] sm:$0xff]
      %v2633 = vld [vmem:[%s3 + $0x428] sm:$0xff]
      %v2634 = vld [vmem:[%s3 + $0x430] sm:$0xff]
      %v2635 = vld [vmem:[%s3 + $0x438] sm:$0xff]
      %v2636 = vld [vmem:[%s3 + $0x440] sm:$0xff]
      %v2637 = vld [vmem:[%s3 + $0x448] sm:$0xff]
      %v2638 = vld [vmem:[%s3 + $0x450] sm:$0xff]
      %v2639 = vld [vmem:[%s3 + $0x458] sm:$0xff]
      %v2640 = vld [vmem:[%s3 + $0x460] sm:$0xff]
      %v2641 = vld [vmem:[%s3 + $0x468] sm:$0xff]
      %v2642 = vld [vmem:[%s3 + $0x470] sm:$0xff]
      %v2643 = vld [vmem:[%s3 + $0x478] sm:$0xff]
      %v2645 = vperm.slane %v2211, 0
      %2647 = vmatpush.msra.mxu0 %v2515
      %2648 = vmatpush.msra.mxu0 %v2514
      %2649 = vmatpush.msra.mxu0 %v2513
      %2650 = vmatpush.msra.mxu0 %v2512
      %2651 = vmatpush.msra.mxu0 %v2511
      %2652 = vmatpush.msra.mxu0 %v2510
      %2653 = vmatpush.msra.mxu0 %v2509
      %2654 = vmatpush.msra.mxu0 %v2508
      %2655 = vmatpush.msra.mxu0 %v2507
      %2656 = vmatpush.msra.mxu0 %v2506
      %2657 = vmatpush.msra.mxu0 %v2505
      %2658 = vmatpush.msra.mxu0 %v2504
      %2659 = vmatpush.msra.mxu0 %v2503
      %2660 = vmatpush.msra.mxu0 %v2502
      %2661 = vmatpush.msra.mxu0 %v2501
      %2662 = vmatpush.msra.mxu0 %v2500
      %2663 = vmatmul.f32.gmra.mxu0 %v2212
      %v2664 = vpop.f32.mrf.mxu0
      %v2665 = vadd.f32 %v2645, %v2664
      %2666 = vmatmul.f32.gmra.mxu0 %v2213
      %v2667 = vpop.f32.mrf.mxu0
      %v2668 = vadd.f32 %v2645, %v2667
      %2669 = vmatmul.f32.gmra.mxu0 %v2214
      %v2670 = vpop.f32.mrf.mxu0
      %v2671 = vadd.f32 %v2645, %v2670
      %2672 = vmatmul.f32.gmra.mxu0 %v2215
      %v2673 = vpop.f32.mrf.mxu0
      %v2674 = vadd.f32 %v2645, %v2673
      %2675 = vmatmul.f32.gmra.mxu0 %v2216
      %v2676 = vpop.f32.mrf.mxu0
      %v2677 = vadd.f32 %v2645, %v2676
      %2678 = vmatmul.f32.gmra.mxu0 %v2217
      %v2679 = vpop.f32.mrf.mxu0
      %v2680 = vadd.f32 %v2645, %v2679
      %2681 = vmatmul.f32.gmra.mxu0 %v2218
      %v2682 = vpop.f32.mrf.mxu0
      %v2683 = vadd.f32 %v2645, %v2682
      %2684 = vmatmul.f32.gmra.mxu0 %v2219
      %v2685 = vpop.f32.mrf.mxu0
      %v2686 = vadd.f32 %v2645, %v2685
      %2687 = vmatmul.f32.gmra.mxu0 %v2220
      %v2688 = vpop.f32.mrf.mxu0
      %v2689 = vadd.f32 %v2645, %v2688
      %2690 = vmatmul.f32.gmra.mxu0 %v2221
      %v2691 = vpop.f32.mrf.mxu0
      %v2692 = vadd.f32 %v2645, %v2691
      %2693 = vmatmul.f32.gmra.mxu0 %v2222
      %v2694 = vpop.f32.mrf.mxu0
      %v2695 = vadd.f32 %v2645, %v2694
      %2696 = vmatmul.f32.gmra.mxu0 %v2223
      %v2697 = vpop.f32.mrf.mxu0
      %v2698 = vadd.f32 %v2645, %v2697
      %2699 = vmatmul.f32.gmra.mxu0 %v2224
      %v2700 = vpop.f32.mrf.mxu0
      %v2701 = vadd.f32 %v2645, %v2700
      %2702 = vmatmul.f32.gmra.mxu0 %v2225
      %v2703 = vpop.f32.mrf.mxu0
      %v2704 = vadd.f32 %v2645, %v2703
      %2705 = vmatmul.f32.gmra.mxu0 %v2226
      %v2706 = vpop.f32.mrf.mxu0
      %v2707 = vadd.f32 %v2645, %v2706
      %2708 = vmatmul.f32.gmra.mxu0 %v2227
      %v2709 = vpop.f32.mrf.mxu0
      %v2710 = vadd.f32 %v2645, %v2709
      %2711 = vmatmul.f32.gmra.mxu0 %v2228
      %v2712 = vpop.f32.mrf.mxu0
      %v2713 = vadd.f32 %v2645, %v2712
      %2714 = vmatmul.f32.gmra.mxu0 %v2229
      %v2715 = vpop.f32.mrf.mxu0
      %v2716 = vadd.f32 %v2645, %v2715
      %2717 = vmatmul.f32.gmra.mxu0 %v2230
      %v2718 = vpop.f32.mrf.mxu0
      %v2719 = vadd.f32 %v2645, %v2718
      %2720 = vmatmul.f32.gmra.mxu0 %v2231
      %v2721 = vpop.f32.mrf.mxu0
      %v2722 = vadd.f32 %v2645, %v2721
      %2723 = vmatmul.f32.gmra.mxu0 %v2232
      %v2724 = vpop.f32.mrf.mxu0
      %v2725 = vadd.f32 %v2645, %v2724
      %2726 = vmatmul.f32.gmra.mxu0 %v2233
      %v2727 = vpop.f32.mrf.mxu0
      %v2728 = vadd.f32 %v2645, %v2727
      %2729 = vmatmul.f32.gmra.mxu0 %v2234
      %v2730 = vpop.f32.mrf.mxu0
      %v2731 = vadd.f32 %v2645, %v2730
      %2732 = vmatmul.f32.gmra.mxu0 %v2235
      %v2733 = vpop.f32.mrf.mxu0
      %v2734 = vadd.f32 %v2645, %v2733
      %2735 = vmatmul.f32.gmra.mxu0 %v2236
      %v2736 = vpop.f32.mrf.mxu0
      %v2737 = vadd.f32 %v2645, %v2736
      %2738 = vmatmul.f32.gmra.mxu0 %v2237
      %v2739 = vpop.f32.mrf.mxu0
      %v2740 = vadd.f32 %v2645, %v2739
      %2741 = vmatmul.f32.gmra.mxu0 %v2238
      %v2742 = vpop.f32.mrf.mxu0
      %v2743 = vadd.f32 %v2645, %v2742
      %2744 = vmatmul.f32.gmra.mxu0 %v2239
      %v2745 = vpop.f32.mrf.mxu0
      %v2746 = vadd.f32 %v2645, %v2745
      %2747 = vmatmul.f32.gmra.mxu0 %v2240
      %v2748 = vpop.f32.mrf.mxu0
      %v2749 = vadd.f32 %v2645, %v2748
      %2750 = vmatmul.f32.gmra.mxu0 %v2241
      %v2751 = vpop.f32.mrf.mxu0
      %v2752 = vadd.f32 %v2645, %v2751
      %2753 = vmatmul.f32.gmra.mxu0 %v2242
      %v2754 = vpop.f32.mrf.mxu0
      %v2755 = vadd.f32 %v2645, %v2754
      %2756 = vmatmul.f32.gmra.mxu0 %v2243
      %v2757 = vpop.f32.mrf.mxu0
      %v2758 = vadd.f32 %v2645, %v2757
      %2759 = vdwg.mxu0
      %2760 = vmatpush.msra.mxu0 %v2531
      %2761 = vmatpush.msra.mxu0 %v2530
      %2762 = vmatpush.msra.mxu0 %v2529
      %2763 = vmatpush.msra.mxu0 %v2528
      %2764 = vmatpush.msra.mxu0 %v2527
      %2765 = vmatpush.msra.mxu0 %v2526
      %2766 = vmatpush.msra.mxu0 %v2525
      %2767 = vmatpush.msra.mxu0 %v2524
      %2768 = vmatpush.msra.mxu0 %v2523
      %2769 = vmatpush.msra.mxu0 %v2522
      %2770 = vmatpush.msra.mxu0 %v2521
      %2771 = vmatpush.msra.mxu0 %v2520
      %2772 = vmatpush.msra.mxu0 %v2519
      %2773 = vmatpush.msra.mxu0 %v2518
      %2774 = vmatpush.msra.mxu0 %v2517
      %2775 = vmatpush.msra.mxu0 %v2516
      %2776 = vmatmul.f32.gmra.mxu0 %v2244
      %v2777 = vpop.f32.mrf.mxu0
      %v2778 = vadd.f32 %v2665, %v2777
      %2779 = vmatmul.f32.gmra.mxu0 %v2245
      %v2780 = vpop.f32.mrf.mxu0
      %v2781 = vadd.f32 %v2668, %v2780
      %2782 = vmatmul.f32.gmra.mxu0 %v2246
      %v2783 = vpop.f32.mrf.mxu0
      %v2784 = vadd.f32 %v2671, %v2783
      %2785 = vmatmul.f32.gmra.mxu0 %v2247
      %v2786 = vpop.f32.mrf.mxu0
      %v2787 = vadd.f32 %v2674, %v2786
      %2788 = vmatmul.f32.gmra.mxu0 %v2248
      %v2789 = vpop.f32.mrf.mxu0
      %v2790 = vadd.f32 %v2677, %v2789
      %2791 = vmatmul.f32.gmra.mxu0 %v2249
      %v2792 = vpop.f32.mrf.mxu0
      %v2793 = vadd.f32 %v2680, %v2792
      %2794 = vmatmul.f32.gmra.mxu0 %v2250
      %v2795 = vpop.f32.mrf.mxu0
      %v2796 = vadd.f32 %v2683, %v2795
      %2797 = vmatmul.f32.gmra.mxu0 %v2251
      %v2798 = vpop.f32.mrf.mxu0
      %v2799 = vadd.f32 %v2686, %v2798
      %2800 = vmatmul.f32.gmra.mxu0 %v2252
      %v2801 = vpop.f32.mrf.mxu0
      %v2802 = vadd.f32 %v2689, %v2801
      %2803 = vmatmul.f32.gmra.mxu0 %v2253
      %v2804 = vpop.f32.mrf.mxu0
      %v2805 = vadd.f32 %v2692, %v2804
      %2806 = vmatmul.f32.gmra.mxu0 %v2254
      %v2807 = vpop.f32.mrf.mxu0
      %v2808 = vadd.f32 %v2695, %v2807
      %2809 = vmatmul.f32.gmra.mxu0 %v2255
      %v2810 = vpop.f32.mrf.mxu0
      %v2811 = vadd.f32 %v2698, %v2810
      %2812 = vmatmul.f32.gmra.mxu0 %v2256
      %v2813 = vpop.f32.mrf.mxu0
      %v2814 = vadd.f32 %v2701, %v2813
      %2815 = vmatmul.f32.gmra.mxu0 %v2257
      %v2816 = vpop.f32.mrf.mxu0
      %v2817 = vadd.f32 %v2704, %v2816
      %2818 = vmatmul.f32.gmra.mxu0 %v2258
      %v2819 = vpop.f32.mrf.mxu0
      %v2820 = vadd.f32 %v2707, %v2819
      %2821 = vmatmul.f32.gmra.mxu0 %v2259
      %v2822 = vpop.f32.mrf.mxu0
      %v2823 = vadd.f32 %v2710, %v2822
      %2824 = vmatmul.f32.gmra.mxu0 %v2260
      %v2825 = vpop.f32.mrf.mxu0
      %v2826 = vadd.f32 %v2713, %v2825
      %2827 = vmatmul.f32.gmra.mxu0 %v2261
      %v2828 = vpop.f32.mrf.mxu0
      %v2829 = vadd.f32 %v2716, %v2828
      %2830 = vmatmul.f32.gmra.mxu0 %v2262
      %v2831 = vpop.f32.mrf.mxu0
      %v2832 = vadd.f32 %v2719, %v2831
      %2833 = vmatmul.f32.gmra.mxu0 %v2263
      %v2834 = vpop.f32.mrf.mxu0
      %v2835 = vadd.f32 %v2722, %v2834
      %2836 = vmatmul.f32.gmra.mxu0 %v2264
      %v2837 = vpop.f32.mrf.mxu0
      %v2838 = vadd.f32 %v2725, %v2837
      %2839 = vmatmul.f32.gmra.mxu0 %v2265
      %v2840 = vpop.f32.mrf.mxu0
      %v2841 = vadd.f32 %v2728, %v2840
      %2842 = vmatmul.f32.gmra.mxu0 %v2266
      %v2843 = vpop.f32.mrf.mxu0
      %v2844 = vadd.f32 %v2731, %v2843
      %2845 = vmatmul.f32.gmra.mxu0 %v2267
      %v2846 = vpop.f32.mrf.mxu0
      %v2847 = vadd.f32 %v2734, %v2846
      %2848 = vmatmul.f32.gmra.mxu0 %v2268
      %v2849 = vpop.f32.mrf.mxu0
      %v2850 = vadd.f32 %v2737, %v2849
      %2851 = vmatmul.f32.gmra.mxu0 %v2269
      %v2852 = vpop.f32.mrf.mxu0
      %v2853 = vadd.f32 %v2740, %v2852
      %2854 = vmatmul.f32.gmra.mxu0 %v2270
      %v2855 = vpop.f32.mrf.mxu0
      %v2856 = vadd.f32 %v2743, %v2855
      %2857 = vmatmul.f32.gmra.mxu0 %v2271
      %v2858 = vpop.f32.mrf.mxu0
      %v2859 = vadd.f32 %v2746, %v2858
      %2860 = vmatmul.f32.gmra.mxu0 %v2272
      %v2861 = vpop.f32.mrf.mxu0
      %v2862 = vadd.f32 %v2749, %v2861
      %2863 = vmatmul.f32.gmra.mxu0 %v2273
      %v2864 = vpop.f32.mrf.mxu0
      %v2865 = vadd.f32 %v2752, %v2864
      %2866 = vmatmul.f32.gmra.mxu0 %v2274
      %v2867 = vpop.f32.mrf.mxu0
      %v2868 = vadd.f32 %v2755, %v2867
      %2869 = vmatmul.f32.gmra.mxu0 %v2275
      %v2870 = vpop.f32.mrf.mxu0
      %v2871 = vadd.f32 %v2758, %v2870
      %2872 = vdwg.mxu0
      %2873 = vmatpush.msra.mxu0 %v2547
      %2874 = vmatpush.msra.mxu0 %v2546
      %2875 = vmatpush.msra.mxu0 %v2545
      %2876 = vmatpush.msra.mxu0 %v2544
      %2877 = vmatpush.msra.mxu0 %v2543
      %2878 = vmatpush.msra.mxu0 %v2542
      %2879 = vmatpush.msra.mxu0 %v2541
      %2880 = vmatpush.msra.mxu0 %v2540
      %2881 = vmatpush.msra.mxu0 %v2539
      %2882 = vmatpush.msra.mxu0 %v2538
      %2883 = vmatpush.msra.mxu0 %v2537
      %2884 = vmatpush.msra.mxu0 %v2536
      %2885 = vmatpush.msra.mxu0 %v2535
      %2886 = vmatpush.msra.mxu0 %v2534
      %2887 = vmatpush.msra.mxu0 %v2533
      %2888 = vmatpush.msra.mxu0 %v2532
      %2889 = vmatmul.f32.gmra.mxu0 %v2276
      %v2890 = vpop.f32.mrf.mxu0
      %v2891 = vadd.f32 %v2778, %v2890
      %2892 = vmatmul.f32.gmra.mxu0 %v2277
      %v2893 = vpop.f32.mrf.mxu0
      %v2894 = vadd.f32 %v2781, %v2893
      %2895 = vmatmul.f32.gmra.mxu0 %v2278
      %v2896 = vpop.f32.mrf.mxu0
      %v2897 = vadd.f32 %v2784, %v2896
      %2898 = vmatmul.f32.gmra.mxu0 %v2279
      %v2899 = vpop.f32.mrf.mxu0
      %v2900 = vadd.f32 %v2787, %v2899
      %2901 = vmatmul.f32.gmra.mxu0 %v2280
      %v2902 = vpop.f32.mrf.mxu0
      %v2903 = vadd.f32 %v2790, %v2902
      %2904 = vmatmul.f32.gmra.mxu0 %v2281
      %v2905 = vpop.f32.mrf.mxu0
      %v2906 = vadd.f32 %v2793, %v2905
      %2907 = vmatmul.f32.gmra.mxu0 %v2282
      %v2908 = vpop.f32.mrf.mxu0
      %v2909 = vadd.f32 %v2796, %v2908
      %2910 = vmatmul.f32.gmra.mxu0 %v2283
      %v2911 = vpop.f32.mrf.mxu0
      %v2912 = vadd.f32 %v2799, %v2911
      %2913 = vmatmul.f32.gmra.mxu0 %v2284
      %v2914 = vpop.f32.mrf.mxu0
      %v2915 = vadd.f32 %v2802, %v2914
      %2916 = vmatmul.f32.gmra.mxu0 %v2285
      %v2917 = vpop.f32.mrf.mxu0
      %v2918 = vadd.f32 %v2805, %v2917
      %2919 = vmatmul.f32.gmra.mxu0 %v2286
      %v2920 = vpop.f32.mrf.mxu0
      %v2921 = vadd.f32 %v2808, %v2920
      %2922 = vmatmul.f32.gmra.mxu0 %v2287
      %v2923 = vpop.f32.mrf.mxu0
      %v2924 = vadd.f32 %v2811, %v2923
      %2925 = vmatmul.f32.gmra.mxu0 %v2288
      %v2926 = vpop.f32.mrf.mxu0
      %v2927 = vadd.f32 %v2814, %v2926
      %2928 = vmatmul.f32.gmra.mxu0 %v2289
      %v2929 = vpop.f32.mrf.mxu0
      %v2930 = vadd.f32 %v2817, %v2929
      %2931 = vmatmul.f32.gmra.mxu0 %v2290
      %v2932 = vpop.f32.mrf.mxu0
      %v2933 = vadd.f32 %v2820, %v2932
      %2934 = vmatmul.f32.gmra.mxu0 %v2291
      %v2935 = vpop.f32.mrf.mxu0
      %v2936 = vadd.f32 %v2823, %v2935
      %2937 = vmatmul.f32.gmra.mxu0 %v2292
      %v2938 = vpop.f32.mrf.mxu0
      %v2939 = vadd.f32 %v2826, %v2938
      %2940 = vmatmul.f32.gmra.mxu0 %v2293
      %v2941 = vpop.f32.mrf.mxu0
      %v2942 = vadd.f32 %v2829, %v2941
      %2943 = vmatmul.f32.gmra.mxu0 %v2294
      %v2944 = vpop.f32.mrf.mxu0
      %v2945 = vadd.f32 %v2832, %v2944
      %2946 = vmatmul.f32.gmra.mxu0 %v2295
      %v2947 = vpop.f32.mrf.mxu0
      %v2948 = vadd.f32 %v2835, %v2947
      %2949 = vmatmul.f32.gmra.mxu0 %v2296
      %v2950 = vpop.f32.mrf.mxu0
      %v2951 = vadd.f32 %v2838, %v2950
      %2952 = vmatmul.f32.gmra.mxu0 %v2297
      %v2953 = vpop.f32.mrf.mxu0
      %v2954 = vadd.f32 %v2841, %v2953
      %2955 = vmatmul.f32.gmra.mxu0 %v2298
      %v2956 = vpop.f32.mrf.mxu0
      %v2957 = vadd.f32 %v2844, %v2956
      %2958 = vmatmul.f32.gmra.mxu0 %v2299
      %v2959 = vpop.f32.mrf.mxu0
      %v2960 = vadd.f32 %v2847, %v2959
      %2961 = vmatmul.f32.gmra.mxu0 %v2300
      %v2962 = vpop.f32.mrf.mxu0
      %v2963 = vadd.f32 %v2850, %v2962
      %2964 = vmatmul.f32.gmra.mxu0 %v2301
      %v2965 = vpop.f32.mrf.mxu0
      %v2966 = vadd.f32 %v2853, %v2965
      %2967 = vmatmul.f32.gmra.mxu0 %v2302
      %v2968 = vpop.f32.mrf.mxu0
      %v2969 = vadd.f32 %v2856, %v2968
      %2970 = vmatmul.f32.gmra.mxu0 %v2303
      %v2971 = vpop.f32.mrf.mxu0
      %v2972 = vadd.f32 %v2859, %v2971
      %2973 = vmatmul.f32.gmra.mxu0 %v2304
      %v2974 = vpop.f32.mrf.mxu0
      %v2975 = vadd.f32 %v2862, %v2974
      %2976 = vmatmul.f32.gmra.mxu0 %v2305
      %v2977 = vpop.f32.mrf.mxu0
      %v2978 = vadd.f32 %v2865, %v2977
      %2979 = vmatmul.f32.gmra.mxu0 %v2306
      %v2980 = vpop.f32.mrf.mxu0
      %v2981 = vadd.f32 %v2868, %v2980
      %2982 = vmatmul.f32.gmra.mxu0 %v2307
      %v2983 = vpop.f32.mrf.mxu0
      %v2984 = vadd.f32 %v2871, %v2983
      %2985 = vdwg.mxu0
      %2986 = vmatpush.msra.mxu0 %v2563
      %2987 = vmatpush.msra.mxu0 %v2562
      %2988 = vmatpush.msra.mxu0 %v2561
      %2989 = vmatpush.msra.mxu0 %v2560
      %2990 = vmatpush.msra.mxu0 %v2559
      %2991 = vmatpush.msra.mxu0 %v2558
      %2992 = vmatpush.msra.mxu0 %v2557
      %2993 = vmatpush.msra.mxu0 %v2556
      %2994 = vmatpush.msra.mxu0 %v2555
      %2995 = vmatpush.msra.mxu0 %v2554
      %2996 = vmatpush.msra.mxu0 %v2553
      %2997 = vmatpush.msra.mxu0 %v2552
      %2998 = vmatpush.msra.mxu0 %v2551
      %2999 = vmatpush.msra.mxu0 %v2550
      %3000 = vmatpush.msra.mxu0 %v2549
      %3001 = vmatpush.msra.mxu0 %v2548
      %3002 = vmatmul.f32.gmra.mxu0 %v2308
      %v3003 = vpop.f32.mrf.mxu0
      %v3004 = vadd.f32 %v2891, %v3003
      %3005 = vmatmul.f32.gmra.mxu0 %v2309
      %v3006 = vpop.f32.mrf.mxu0
      %v3007 = vadd.f32 %v2894, %v3006
      %3008 = vmatmul.f32.gmra.mxu0 %v2310
      %v3009 = vpop.f32.mrf.mxu0
      %v3010 = vadd.f32 %v2897, %v3009
      %3011 = vmatmul.f32.gmra.mxu0 %v2311
      %v3012 = vpop.f32.mrf.mxu0
      %v3013 = vadd.f32 %v2900, %v3012
      %3014 = vmatmul.f32.gmra.mxu0 %v2312
      %v3015 = vpop.f32.mrf.mxu0
      %v3016 = vadd.f32 %v2903, %v3015
      %3017 = vmatmul.f32.gmra.mxu0 %v2313
      %v3018 = vpop.f32.mrf.mxu0
      %v3019 = vadd.f32 %v2906, %v3018
      %3020 = vmatmul.f32.gmra.mxu0 %v2314
      %v3021 = vpop.f32.mrf.mxu0
      %v3022 = vadd.f32 %v2909, %v3021
      %3023 = vmatmul.f32.gmra.mxu0 %v2315
      %v3024 = vpop.f32.mrf.mxu0
      %v3025 = vadd.f32 %v2912, %v3024
      %3026 = vmatmul.f32.gmra.mxu0 %v2316
      %v3027 = vpop.f32.mrf.mxu0
      %v3028 = vadd.f32 %v2915, %v3027
      %3029 = vmatmul.f32.gmra.mxu0 %v2317
      %v3030 = vpop.f32.mrf.mxu0
      %v3031 = vadd.f32 %v2918, %v3030
      %3032 = vmatmul.f32.gmra.mxu0 %v2318
      %v3033 = vpop.f32.mrf.mxu0
      %v3034 = vadd.f32 %v2921, %v3033
      %3035 = vmatmul.f32.gmra.mxu0 %v2319
      %v3036 = vpop.f32.mrf.mxu0
      %v3037 = vadd.f32 %v2924, %v3036
      %3038 = vmatmul.f32.gmra.mxu0 %v2320
      %v3039 = vpop.f32.mrf.mxu0
      %v3040 = vadd.f32 %v2927, %v3039
      %3041 = vmatmul.f32.gmra.mxu0 %v2321
      %v3042 = vpop.f32.mrf.mxu0
      %v3043 = vadd.f32 %v2930, %v3042
      %3044 = vmatmul.f32.gmra.mxu0 %v2322
      %v3045 = vpop.f32.mrf.mxu0
      %v3046 = vadd.f32 %v2933, %v3045
      %3047 = vmatmul.f32.gmra.mxu0 %v2323
      %v3048 = vpop.f32.mrf.mxu0
      %v3049 = vadd.f32 %v2936, %v3048
      %3050 = vmatmul.f32.gmra.mxu0 %v2324
      %v3051 = vpop.f32.mrf.mxu0
      %v3052 = vadd.f32 %v2939, %v3051
      %3053 = vmatmul.f32.gmra.mxu0 %v2325
      %v3054 = vpop.f32.mrf.mxu0
      %v3055 = vadd.f32 %v2942, %v3054
      %3056 = vmatmul.f32.gmra.mxu0 %v2326
      %v3057 = vpop.f32.mrf.mxu0
      %v3058 = vadd.f32 %v2945, %v3057
      %3059 = vmatmul.f32.gmra.mxu0 %v2327
      %v3060 = vpop.f32.mrf.mxu0
      %v3061 = vadd.f32 %v2948, %v3060
      %3062 = vmatmul.f32.gmra.mxu0 %v2328
      %v3063 = vpop.f32.mrf.mxu0
      %v3064 = vadd.f32 %v2951, %v3063
      %3065 = vmatmul.f32.gmra.mxu0 %v2329
      %v3066 = vpop.f32.mrf.mxu0
      %v3067 = vadd.f32 %v2954, %v3066
      %3068 = vmatmul.f32.gmra.mxu0 %v2330
      %v3069 = vpop.f32.mrf.mxu0
      %v3070 = vadd.f32 %v2957, %v3069
      %3071 = vmatmul.f32.gmra.mxu0 %v2331
      %v3072 = vpop.f32.mrf.mxu0
      %v3073 = vadd.f32 %v2960, %v3072
      %3074 = vmatmul.f32.gmra.mxu0 %v2332
      %v3075 = vpop.f32.mrf.mxu0
      %v3076 = vadd.f32 %v2963, %v3075
      %3077 = vmatmul.f32.gmra.mxu0 %v2333
      %v3078 = vpop.f32.mrf.mxu0
      %v3079 = vadd.f32 %v2966, %v3078
      %3080 = vmatmul.f32.gmra.mxu0 %v2334
      %v3081 = vpop.f32.mrf.mxu0
      %v3082 = vadd.f32 %v2969, %v3081
      %3083 = vmatmul.f32.gmra.mxu0 %v2335
      %v3084 = vpop.f32.mrf.mxu0
      %v3085 = vadd.f32 %v2972, %v3084
      %3086 = vmatmul.f32.gmra.mxu0 %v2336
      %v3087 = vpop.f32.mrf.mxu0
      %v3088 = vadd.f32 %v2975, %v3087
      %3089 = vmatmul.f32.gmra.mxu0 %v2337
      %v3090 = vpop.f32.mrf.mxu0
      %v3091 = vadd.f32 %v2978, %v3090
      %3092 = vmatmul.f32.gmra.mxu0 %v2338
      %v3093 = vpop.f32.mrf.mxu0
      %v3094 = vadd.f32 %v2981, %v3093
      %3095 = vmatmul.f32.gmra.mxu0 %v2339
      %v3096 = vpop.f32.mrf.mxu0
      %v3097 = vadd.f32 %v2984, %v3096
      %3098 = vdwg.mxu0
      %3099 = vmatpush.msra.mxu0 %v2579
      %3100 = vmatpush.msra.mxu0 %v2578
      %3101 = vmatpush.msra.mxu0 %v2577
      %3102 = vmatpush.msra.mxu0 %v2576
      %3103 = vmatpush.msra.mxu0 %v2575
      %3104 = vmatpush.msra.mxu0 %v2574
      %3105 = vmatpush.msra.mxu0 %v2573
      %3106 = vmatpush.msra.mxu0 %v2572
      %3107 = vmatpush.msra.mxu0 %v2571
      %3108 = vmatpush.msra.mxu0 %v2570
      %3109 = vmatpush.msra.mxu0 %v2569
      %3110 = vmatpush.msra.mxu0 %v2568
      %3111 = vmatpush.msra.mxu0 %v2567
      %3112 = vmatpush.msra.mxu0 %v2566
      %3113 = vmatpush.msra.mxu0 %v2565
      %3114 = vmatpush.msra.mxu0 %v2564
      %3115 = vmatmul.f32.gmra.mxu0 %v2340
      %v3116 = vpop.f32.mrf.mxu0
      %v3117 = vadd.f32 %v3004, %v3116
      %3118 = vmatmul.f32.gmra.mxu0 %v2341
      %v3119 = vpop.f32.mrf.mxu0
      %v3120 = vadd.f32 %v3007, %v3119
      %3121 = vmatmul.f32.gmra.mxu0 %v2342
      %v3122 = vpop.f32.mrf.mxu0
      %v3123 = vadd.f32 %v3010, %v3122
      %3124 = vmatmul.f32.gmra.mxu0 %v2343
      %v3125 = vpop.f32.mrf.mxu0
      %v3126 = vadd.f32 %v3013, %v3125
      %3127 = vmatmul.f32.gmra.mxu0 %v2344
      %v3128 = vpop.f32.mrf.mxu0
      %v3129 = vadd.f32 %v3016, %v3128
      %3130 = vmatmul.f32.gmra.mxu0 %v2345
      %v3131 = vpop.f32.mrf.mxu0
      %v3132 = vadd.f32 %v3019, %v3131
      %3133 = vmatmul.f32.gmra.mxu0 %v2346
      %v3134 = vpop.f32.mrf.mxu0
      %v3135 = vadd.f32 %v3022, %v3134
      %3136 = vmatmul.f32.gmra.mxu0 %v2347
      %v3137 = vpop.f32.mrf.mxu0
      %v3138 = vadd.f32 %v3025, %v3137
      %3139 = vmatmul.f32.gmra.mxu0 %v2348
      %v3140 = vpop.f32.mrf.mxu0
      %v3141 = vadd.f32 %v3028, %v3140
      %3142 = vmatmul.f32.gmra.mxu0 %v2349
      %v3143 = vpop.f32.mrf.mxu0
      %v3144 = vadd.f32 %v3031, %v3143
      %3145 = vmatmul.f32.gmra.mxu0 %v2350
      %v3146 = vpop.f32.mrf.mxu0
      %v3147 = vadd.f32 %v3034, %v3146
      %3148 = vmatmul.f32.gmra.mxu0 %v2351
      %v3149 = vpop.f32.mrf.mxu0
      %v3150 = vadd.f32 %v3037, %v3149
      %3151 = vmatmul.f32.gmra.mxu0 %v2352
      %v3152 = vpop.f32.mrf.mxu0
      %v3153 = vadd.f32 %v3040, %v3152
      %3154 = vmatmul.f32.gmra.mxu0 %v2353
      %v3155 = vpop.f32.mrf.mxu0
      %v3156 = vadd.f32 %v3043, %v3155
      %3157 = vmatmul.f32.gmra.mxu0 %v2354
      %v3158 = vpop.f32.mrf.mxu0
      %v3159 = vadd.f32 %v3046, %v3158
      %3160 = vmatmul.f32.gmra.mxu0 %v2355
      %v3161 = vpop.f32.mrf.mxu0
      %v3162 = vadd.f32 %v3049, %v3161
      %3163 = vmatmul.f32.gmra.mxu0 %v2356
      %v3164 = vpop.f32.mrf.mxu0
      %v3165 = vadd.f32 %v3052, %v3164
      %3166 = vmatmul.f32.gmra.mxu0 %v2357
      %v3167 = vpop.f32.mrf.mxu0
      %v3168 = vadd.f32 %v3055, %v3167
      %3169 = vmatmul.f32.gmra.mxu0 %v2358
      %v3170 = vpop.f32.mrf.mxu0
      %v3171 = vadd.f32 %v3058, %v3170
      %3172 = vmatmul.f32.gmra.mxu0 %v2359
      %v3173 = vpop.f32.mrf.mxu0
      %v3174 = vadd.f32 %v3061, %v3173
      %3175 = vmatmul.f32.gmra.mxu0 %v2360
      %v3176 = vpop.f32.mrf.mxu0
      %v3177 = vadd.f32 %v3064, %v3176
      %3178 = vmatmul.f32.gmra.mxu0 %v2361
      %v3179 = vpop.f32.mrf.mxu0
      %v3180 = vadd.f32 %v3067, %v3179
      %3181 = vmatmul.f32.gmra.mxu0 %v2362
      %v3182 = vpop.f32.mrf.mxu0
      %v3183 = vadd.f32 %v3070, %v3182
      %3184 = vmatmul.f32.gmra.mxu0 %v2363
      %v3185 = vpop.f32.mrf.mxu0
      %v3186 = vadd.f32 %v3073, %v3185
      %3187 = vmatmul.f32.gmra.mxu0 %v2364
      %v3188 = vpop.f32.mrf.mxu0
      %v3189 = vadd.f32 %v3076, %v3188
      %3190 = vmatmul.f32.gmra.mxu0 %v2365
      %v3191 = vpop.f32.mrf.mxu0
      %v3192 = vadd.f32 %v3079, %v3191
      %3193 = vmatmul.f32.gmra.mxu0 %v2366
      %v3194 = vpop.f32.mrf.mxu0
      %v3195 = vadd.f32 %v3082, %v3194
      %3196 = vmatmul.f32.gmra.mxu0 %v2367
      %v3197 = vpop.f32.mrf.mxu0
      %v3198 = vadd.f32 %v3085, %v3197
      %3199 = vmatmul.f32.gmra.mxu0 %v2368
      %v3200 = vpop.f32.mrf.mxu0
      %v3201 = vadd.f32 %v3088, %v3200
      %3202 = vmatmul.f32.gmra.mxu0 %v2369
      %v3203 = vpop.f32.mrf.mxu0
      %v3204 = vadd.f32 %v3091, %v3203
      %3205 = vmatmul.f32.gmra.mxu0 %v2370
      %v3206 = vpop.f32.mrf.mxu0
      %v3207 = vadd.f32 %v3094, %v3206
      %3208 = vmatmul.f32.gmra.mxu0 %v2371
      %v3209 = vpop.f32.mrf.mxu0
      %v3210 = vadd.f32 %v3097, %v3209
      %3211 = vdwg.mxu0
      %3212 = vmatpush.msra.mxu0 %v2595
      %3213 = vmatpush.msra.mxu0 %v2594
      %3214 = vmatpush.msra.mxu0 %v2593
      %3215 = vmatpush.msra.mxu0 %v2592
      %3216 = vmatpush.msra.mxu0 %v2591
      %3217 = vmatpush.msra.mxu0 %v2590
      %3218 = vmatpush.msra.mxu0 %v2589
      %3219 = vmatpush.msra.mxu0 %v2588
      %3220 = vmatpush.msra.mxu0 %v2587
      %3221 = vmatpush.msra.mxu0 %v2586
      %3222 = vmatpush.msra.mxu0 %v2585
      %3223 = vmatpush.msra.mxu0 %v2584
      %3224 = vmatpush.msra.mxu0 %v2583
      %3225 = vmatpush.msra.mxu0 %v2582
      %3226 = vmatpush.msra.mxu0 %v2581
      %3227 = vmatpush.msra.mxu0 %v2580
      %3228 = vmatmul.f32.gmra.mxu0 %v2372
      %v3229 = vpop.f32.mrf.mxu0
      %v3230 = vadd.f32 %v3117, %v3229
      %3231 = vmatmul.f32.gmra.mxu0 %v2373
      %v3232 = vpop.f32.mrf.mxu0
      %v3233 = vadd.f32 %v3120, %v3232
      %3234 = vmatmul.f32.gmra.mxu0 %v2374
      %v3235 = vpop.f32.mrf.mxu0
      %v3236 = vadd.f32 %v3123, %v3235
      %3237 = vmatmul.f32.gmra.mxu0 %v2375
      %v3238 = vpop.f32.mrf.mxu0
      %v3239 = vadd.f32 %v3126, %v3238
      %3240 = vmatmul.f32.gmra.mxu0 %v2376
      %v3241 = vpop.f32.mrf.mxu0
      %v3242 = vadd.f32 %v3129, %v3241
      %3243 = vmatmul.f32.gmra.mxu0 %v2377
      %v3244 = vpop.f32.mrf.mxu0
      %v3245 = vadd.f32 %v3132, %v3244
      %3246 = vmatmul.f32.gmra.mxu0 %v2378
      %v3247 = vpop.f32.mrf.mxu0
      %v3248 = vadd.f32 %v3135, %v3247
      %3249 = vmatmul.f32.gmra.mxu0 %v2379
      %v3250 = vpop.f32.mrf.mxu0
      %v3251 = vadd.f32 %v3138, %v3250
      %3252 = vmatmul.f32.gmra.mxu0 %v2380
      %v3253 = vpop.f32.mrf.mxu0
      %v3254 = vadd.f32 %v3141, %v3253
      %3255 = vmatmul.f32.gmra.mxu0 %v2381
      %v3256 = vpop.f32.mrf.mxu0
      %v3257 = vadd.f32 %v3144, %v3256
      %3258 = vmatmul.f32.gmra.mxu0 %v2382
      %v3259 = vpop.f32.mrf.mxu0
      %v3260 = vadd.f32 %v3147, %v3259
      %3261 = vmatmul.f32.gmra.mxu0 %v2383
      %v3262 = vpop.f32.mrf.mxu0
      %v3263 = vadd.f32 %v3150, %v3262
      %3264 = vmatmul.f32.gmra.mxu0 %v2384
      %v3265 = vpop.f32.mrf.mxu0
      %v3266 = vadd.f32 %v3153, %v3265
      %3267 = vmatmul.f32.gmra.mxu0 %v2385
      %v3268 = vpop.f32.mrf.mxu0
      %v3269 = vadd.f32 %v3156, %v3268
      %3270 = vmatmul.f32.gmra.mxu0 %v2386
      %v3271 = vpop.f32.mrf.mxu0
      %v3272 = vadd.f32 %v3159, %v3271
      %3273 = vmatmul.f32.gmra.mxu0 %v2387
      %v3274 = vpop.f32.mrf.mxu0
      %v3275 = vadd.f32 %v3162, %v3274
      %3276 = vmatmul.f32.gmra.mxu0 %v2388
      %v3277 = vpop.f32.mrf.mxu0
      %v3278 = vadd.f32 %v3165, %v3277
      %3279 = vmatmul.f32.gmra.mxu0 %v2389
      %v3280 = vpop.f32.mrf.mxu0
      %v3281 = vadd.f32 %v3168, %v3280
      %3282 = vmatmul.f32.gmra.mxu0 %v2390
      %v3283 = vpop.f32.mrf.mxu0
      %v3284 = vadd.f32 %v3171, %v3283
      %3285 = vmatmul.f32.gmra.mxu0 %v2391
      %v3286 = vpop.f32.mrf.mxu0
      %v3287 = vadd.f32 %v3174, %v3286
      %3288 = vmatmul.f32.gmra.mxu0 %v2392
      %v3289 = vpop.f32.mrf.mxu0
      %v3290 = vadd.f32 %v3177, %v3289
      %3291 = vmatmul.f32.gmra.mxu0 %v2393
      %v3292 = vpop.f32.mrf.mxu0
      %v3293 = vadd.f32 %v3180, %v3292
      %3294 = vmatmul.f32.gmra.mxu0 %v2394
      %v3295 = vpop.f32.mrf.mxu0
      %v3296 = vadd.f32 %v3183, %v3295
      %3297 = vmatmul.f32.gmra.mxu0 %v2395
      %v3298 = vpop.f32.mrf.mxu0
      %v3299 = vadd.f32 %v3186, %v3298
      %3300 = vmatmul.f32.gmra.mxu0 %v2396
      %v3301 = vpop.f32.mrf.mxu0
      %v3302 = vadd.f32 %v3189, %v3301
      %3303 = vmatmul.f32.gmra.mxu0 %v2397
      %v3304 = vpop.f32.mrf.mxu0
      %v3305 = vadd.f32 %v3192, %v3304
      %3306 = vmatmul.f32.gmra.mxu0 %v2398
      %v3307 = vpop.f32.mrf.mxu0
      %v3308 = vadd.f32 %v3195, %v3307
      %3309 = vmatmul.f32.gmra.mxu0 %v2399
      %v3310 = vpop.f32.mrf.mxu0
      %v3311 = vadd.f32 %v3198, %v3310
      %3312 = vmatmul.f32.gmra.mxu0 %v2400
      %v3313 = vpop.f32.mrf.mxu0
      %v3314 = vadd.f32 %v3201, %v3313
      %3315 = vmatmul.f32.gmra.mxu0 %v2401
      %v3316 = vpop.f32.mrf.mxu0
      %v3317 = vadd.f32 %v3204, %v3316
      %3318 = vmatmul.f32.gmra.mxu0 %v2402
      %v3319 = vpop.f32.mrf.mxu0
      %v3320 = vadd.f32 %v3207, %v3319
      %3321 = vmatmul.f32.gmra.mxu0 %v2403
      %v3322 = vpop.f32.mrf.mxu0
      %v3323 = vadd.f32 %v3210, %v3322
      %3324 = vdwg.mxu0
      %3325 = vmatpush.msra.mxu0 %v2611
      %3326 = vmatpush.msra.mxu0 %v2610
      %3327 = vmatpush.msra.mxu0 %v2609
      %3328 = vmatpush.msra.mxu0 %v2608
      %3329 = vmatpush.msra.mxu0 %v2607
      %3330 = vmatpush.msra.mxu0 %v2606
      %3331 = vmatpush.msra.mxu0 %v2605
      %3332 = vmatpush.msra.mxu0 %v2604
      %3333 = vmatpush.msra.mxu0 %v2603
      %3334 = vmatpush.msra.mxu0 %v2602
      %3335 = vmatpush.msra.mxu0 %v2601
      %3336 = vmatpush.msra.mxu0 %v2600
      %3337 = vmatpush.msra.mxu0 %v2599
      %3338 = vmatpush.msra.mxu0 %v2598
      %3339 = vmatpush.msra.mxu0 %v2597
      %3340 = vmatpush.msra.mxu0 %v2596
      %3341 = vmatmul.f32.gmra.mxu0 %v2404
      %v3342 = vpop.f32.mrf.mxu0
      %v3343 = vadd.f32 %v3230, %v3342
      %3344 = vmatmul.f32.gmra.mxu0 %v2405
      %v3345 = vpop.f32.mrf.mxu0
      %v3346 = vadd.f32 %v3233, %v3345
      %3347 = vmatmul.f32.gmra.mxu0 %v2406
      %v3348 = vpop.f32.mrf.mxu0
      %v3349 = vadd.f32 %v3236, %v3348
      %3350 = vmatmul.f32.gmra.mxu0 %v2407
      %v3351 = vpop.f32.mrf.mxu0
      %v3352 = vadd.f32 %v3239, %v3351
      %3353 = vmatmul.f32.gmra.mxu0 %v2408
      %v3354 = vpop.f32.mrf.mxu0
      %v3355 = vadd.f32 %v3242, %v3354
      %3356 = vmatmul.f32.gmra.mxu0 %v2409
      %v3357 = vpop.f32.mrf.mxu0
      %v3358 = vadd.f32 %v3245, %v3357
      %3359 = vmatmul.f32.gmra.mxu0 %v2410
      %v3360 = vpop.f32.mrf.mxu0
      %v3361 = vadd.f32 %v3248, %v3360
      %3362 = vmatmul.f32.gmra.mxu0 %v2411
      %v3363 = vpop.f32.mrf.mxu0
      %v3364 = vadd.f32 %v3251, %v3363
      %3365 = vmatmul.f32.gmra.mxu0 %v2412
      %v3366 = vpop.f32.mrf.mxu0
      %v3367 = vadd.f32 %v3254, %v3366
      %3368 = vmatmul.f32.gmra.mxu0 %v2413
      %v3369 = vpop.f32.mrf.mxu0
      %v3370 = vadd.f32 %v3257, %v3369
      %3371 = vmatmul.f32.gmra.mxu0 %v2414
      %v3372 = vpop.f32.mrf.mxu0
      %v3373 = vadd.f32 %v3260, %v3372
      %3374 = vmatmul.f32.gmra.mxu0 %v2415
      %v3375 = vpop.f32.mrf.mxu0
      %v3376 = vadd.f32 %v3263, %v3375
      %3377 = vmatmul.f32.gmra.mxu0 %v2416
      %v3378 = vpop.f32.mrf.mxu0
      %v3379 = vadd.f32 %v3266, %v3378
      %3380 = vmatmul.f32.gmra.mxu0 %v2417
      %v3381 = vpop.f32.mrf.mxu0
      %v3382 = vadd.f32 %v3269, %v3381
      %3383 = vmatmul.f32.gmra.mxu0 %v2418
      %v3384 = vpop.f32.mrf.mxu0
      %v3385 = vadd.f32 %v3272, %v3384
      %3386 = vmatmul.f32.gmra.mxu0 %v2419
      %v3387 = vpop.f32.mrf.mxu0
      %v3388 = vadd.f32 %v3275, %v3387
      %3389 = vmatmul.f32.gmra.mxu0 %v2420
      %v3390 = vpop.f32.mrf.mxu0
      %v3391 = vadd.f32 %v3278, %v3390
      %3392 = vmatmul.f32.gmra.mxu0 %v2421
      %v3393 = vpop.f32.mrf.mxu0
      %v3394 = vadd.f32 %v3281, %v3393
      %3395 = vmatmul.f32.gmra.mxu0 %v2422
      %v3396 = vpop.f32.mrf.mxu0
      %v3397 = vadd.f32 %v3284, %v3396
      %3398 = vmatmul.f32.gmra.mxu0 %v2423
      %v3399 = vpop.f32.mrf.mxu0
      %v3400 = vadd.f32 %v3287, %v3399
      %3401 = vmatmul.f32.gmra.mxu0 %v2424
      %v3402 = vpop.f32.mrf.mxu0
      %v3403 = vadd.f32 %v3290, %v3402
      %3404 = vmatmul.f32.gmra.mxu0 %v2425
      %v3405 = vpop.f32.mrf.mxu0
      %v3406 = vadd.f32 %v3293, %v3405
      %3407 = vmatmul.f32.gmra.mxu0 %v2426
      %v3408 = vpop.f32.mrf.mxu0
      %v3409 = vadd.f32 %v3296, %v3408
      %3410 = vmatmul.f32.gmra.mxu0 %v2427
      %v3411 = vpop.f32.mrf.mxu0
      %v3412 = vadd.f32 %v3299, %v3411
      %3413 = vmatmul.f32.gmra.mxu0 %v2428
      %v3414 = vpop.f32.mrf.mxu0
      %v3415 = vadd.f32 %v3302, %v3414
      %3416 = vmatmul.f32.gmra.mxu0 %v2429
      %v3417 = vpop.f32.mrf.mxu0
      %v3418 = vadd.f32 %v3305, %v3417
      %3419 = vmatmul.f32.gmra.mxu0 %v2430
      %v3420 = vpop.f32.mrf.mxu0
      %v3421 = vadd.f32 %v3308, %v3420
      %3422 = vmatmul.f32.gmra.mxu0 %v2431
      %v3423 = vpop.f32.mrf.mxu0
      %v3424 = vadd.f32 %v3311, %v3423
      %3425 = vmatmul.f32.gmra.mxu0 %v2432
      %v3426 = vpop.f32.mrf.mxu0
      %v3427 = vadd.f32 %v3314, %v3426
      %3428 = vmatmul.f32.gmra.mxu0 %v2433
      %v3429 = vpop.f32.mrf.mxu0
      %v3430 = vadd.f32 %v3317, %v3429
      %3431 = vmatmul.f32.gmra.mxu0 %v2434
      %v3432 = vpop.f32.mrf.mxu0
      %v3433 = vadd.f32 %v3320, %v3432
      %3434 = vmatmul.f32.gmra.mxu0 %v2435
      %v3435 = vpop.f32.mrf.mxu0
      %v3436 = vadd.f32 %v3323, %v3435
      %3437 = vdwg.mxu0
      %3438 = vmatpush.msra.mxu0 %v2627
      %3439 = vmatpush.msra.mxu0 %v2626
      %3440 = vmatpush.msra.mxu0 %v2625
      %3441 = vmatpush.msra.mxu0 %v2624
      %3442 = vmatpush.msra.mxu0 %v2623
      %3443 = vmatpush.msra.mxu0 %v2622
      %3444 = vmatpush.msra.mxu0 %v2621
      %3445 = vmatpush.msra.mxu0 %v2620
      %3446 = vmatpush.msra.mxu0 %v2619
      %3447 = vmatpush.msra.mxu0 %v2618
      %3448 = vmatpush.msra.mxu0 %v2617
      %3449 = vmatpush.msra.mxu0 %v2616
      %3450 = vmatpush.msra.mxu0 %v2615
      %3451 = vmatpush.msra.mxu0 %v2614
      %3452 = vmatpush.msra.mxu0 %v2613
      %3453 = vmatpush.msra.mxu0 %v2612
      %3454 = vmatmul.f32.gmra.mxu0 %v2436
      %v3455 = vpop.f32.mrf.mxu0
      %v3456 = vadd.f32 %v3343, %v3455
      %3457 = vmatmul.f32.gmra.mxu0 %v2437
      %v3458 = vpop.f32.mrf.mxu0
      %v3459 = vadd.f32 %v3346, %v3458
      %3460 = vmatmul.f32.gmra.mxu0 %v2438
      %v3461 = vpop.f32.mrf.mxu0
      %v3462 = vadd.f32 %v3349, %v3461
      %3463 = vmatmul.f32.gmra.mxu0 %v2439
      %v3464 = vpop.f32.mrf.mxu0
      %v3465 = vadd.f32 %v3352, %v3464
      %3466 = vmatmul.f32.gmra.mxu0 %v2440
      %v3467 = vpop.f32.mrf.mxu0
      %v3468 = vadd.f32 %v3355, %v3467
      %3469 = vmatmul.f32.gmra.mxu0 %v2441
      %v3470 = vpop.f32.mrf.mxu0
      %v3471 = vadd.f32 %v3358, %v3470
      %3472 = vmatmul.f32.gmra.mxu0 %v2442
      %v3473 = vpop.f32.mrf.mxu0
      %v3474 = vadd.f32 %v3361, %v3473
      %3475 = vmatmul.f32.gmra.mxu0 %v2443
      %v3476 = vpop.f32.mrf.mxu0
      %v3477 = vadd.f32 %v3364, %v3476
      %3478 = vmatmul.f32.gmra.mxu0 %v2444
      %v3479 = vpop.f32.mrf.mxu0
      %v3480 = vadd.f32 %v3367, %v3479
      %3481 = vmatmul.f32.gmra.mxu0 %v2445
      %v3482 = vpop.f32.mrf.mxu0
      %v3483 = vadd.f32 %v3370, %v3482
      %3484 = vmatmul.f32.gmra.mxu0 %v2446
      %v3485 = vpop.f32.mrf.mxu0
      %v3486 = vadd.f32 %v3373, %v3485
      %3487 = vmatmul.f32.gmra.mxu0 %v2447
      %v3488 = vpop.f32.mrf.mxu0
      %v3489 = vadd.f32 %v3376, %v3488
      %3490 = vmatmul.f32.gmra.mxu0 %v2448
      %v3491 = vpop.f32.mrf.mxu0
      %v3492 = vadd.f32 %v3379, %v3491
      %3493 = vmatmul.f32.gmra.mxu0 %v2449
      %v3494 = vpop.f32.mrf.mxu0
      %v3495 = vadd.f32 %v3382, %v3494
      %3496 = vmatmul.f32.gmra.mxu0 %v2450
      %v3497 = vpop.f32.mrf.mxu0
      %v3498 = vadd.f32 %v3385, %v3497
      %3499 = vmatmul.f32.gmra.mxu0 %v2451
      %v3500 = vpop.f32.mrf.mxu0
      %v3501 = vadd.f32 %v3388, %v3500
      %3502 = vmatmul.f32.gmra.mxu0 %v2452
      %v3503 = vpop.f32.mrf.mxu0
      %v3504 = vadd.f32 %v3391, %v3503
      %3505 = vmatmul.f32.gmra.mxu0 %v2453
      %v3506 = vpop.f32.mrf.mxu0
      %v3507 = vadd.f32 %v3394, %v3506
      %3508 = vmatmul.f32.gmra.mxu0 %v2454
      %v3509 = vpop.f32.mrf.mxu0
      %v3510 = vadd.f32 %v3397, %v3509
      %3511 = vmatmul.f32.gmra.mxu0 %v2455
      %v3512 = vpop.f32.mrf.mxu0
      %v3513 = vadd.f32 %v3400, %v3512
      %3514 = vmatmul.f32.gmra.mxu0 %v2456
      %v3515 = vpop.f32.mrf.mxu0
      %v3516 = vadd.f32 %v3403, %v3515
      %3517 = vmatmul.f32.gmra.mxu0 %v2457
      %v3518 = vpop.f32.mrf.mxu0
      %v3519 = vadd.f32 %v3406, %v3518
      %3520 = vmatmul.f32.gmra.mxu0 %v2458
      %v3521 = vpop.f32.mrf.mxu0
      %v3522 = vadd.f32 %v3409, %v3521
      %3523 = vmatmul.f32.gmra.mxu0 %v2459
      %v3524 = vpop.f32.mrf.mxu0
      %v3525 = vadd.f32 %v3412, %v3524
      %3526 = vmatmul.f32.gmra.mxu0 %v2460
      %v3527 = vpop.f32.mrf.mxu0
      %v3528 = vadd.f32 %v3415, %v3527
      %3529 = vmatmul.f32.gmra.mxu0 %v2461
      %v3530 = vpop.f32.mrf.mxu0
      %v3531 = vadd.f32 %v3418, %v3530
      %3532 = vmatmul.f32.gmra.mxu0 %v2462
      %v3533 = vpop.f32.mrf.mxu0
      %v3534 = vadd.f32 %v3421, %v3533
      %3535 = vmatmul.f32.gmra.mxu0 %v2463
      %v3536 = vpop.f32.mrf.mxu0
      %v3537 = vadd.f32 %v3424, %v3536
      %3538 = vmatmul.f32.gmra.mxu0 %v2464
      %v3539 = vpop.f32.mrf.mxu0
      %v3540 = vadd.f32 %v3427, %v3539
      %3541 = vmatmul.f32.gmra.mxu0 %v2465
      %v3542 = vpop.f32.mrf.mxu0
      %v3543 = vadd.f32 %v3430, %v3542
      %3544 = vmatmul.f32.gmra.mxu0 %v2466
      %v3545 = vpop.f32.mrf.mxu0
      %v3546 = vadd.f32 %v3433, %v3545
      %3547 = vmatmul.f32.gmra.mxu0 %v2467
      %v3548 = vpop.f32.mrf.mxu0
      %v3549 = vadd.f32 %v3436, %v3548
      %3550 = vdwg.mxu0
      %3551 = vmatpush.msra.mxu0 %v2643
      %3552 = vmatpush.msra.mxu0 %v2642
      %3553 = vmatpush.msra.mxu0 %v2641
      %3554 = vmatpush.msra.mxu0 %v2640
      %3555 = vmatpush.msra.mxu0 %v2639
      %3556 = vmatpush.msra.mxu0 %v2638
      %3557 = vmatpush.msra.mxu0 %v2637
      %3558 = vmatpush.msra.mxu0 %v2636
      %3559 = vmatpush.msra.mxu0 %v2635
      %3560 = vmatpush.msra.mxu0 %v2634
      %3561 = vmatpush.msra.mxu0 %v2633
      %3562 = vmatpush.msra.mxu0 %v2632
      %3563 = vmatpush.msra.mxu0 %v2631
      %3564 = vmatpush.msra.mxu0 %v2630
      %3565 = vmatpush.msra.mxu0 %v2629
      %3566 = vmatpush.msra.mxu0 %v2628
      %3567 = vmatmul.f32.gmra.mxu0 %v2468
      %v3568 = vpop.f32.mrf.mxu0
      %v3569 = vadd.f32 %v3456, %v3568
      %3570 = vmatmul.f32.gmra.mxu0 %v2469
      %v3571 = vpop.f32.mrf.mxu0
      %v3572 = vadd.f32 %v3459, %v3571
      %3573 = vmatmul.f32.gmra.mxu0 %v2470
      %v3574 = vpop.f32.mrf.mxu0
      %v3575 = vadd.f32 %v3462, %v3574
      %3576 = vmatmul.f32.gmra.mxu0 %v2471
      %v3577 = vpop.f32.mrf.mxu0
      %v3578 = vadd.f32 %v3465, %v3577
      %3579 = vmatmul.f32.gmra.mxu0 %v2472
      %v3580 = vpop.f32.mrf.mxu0
      %v3581 = vadd.f32 %v3468, %v3580
      %3582 = vmatmul.f32.gmra.mxu0 %v2473
      %v3583 = vpop.f32.mrf.mxu0
      %v3584 = vadd.f32 %v3471, %v3583
      %3585 = vmatmul.f32.gmra.mxu0 %v2474
      %v3586 = vpop.f32.mrf.mxu0
      %v3587 = vadd.f32 %v3474, %v3586
      %3588 = vmatmul.f32.gmra.mxu0 %v2475
      %v3589 = vpop.f32.mrf.mxu0
      %v3590 = vadd.f32 %v3477, %v3589
      %3591 = vmatmul.f32.gmra.mxu0 %v2476
      %v3592 = vpop.f32.mrf.mxu0
      %v3593 = vadd.f32 %v3480, %v3592
      %3594 = vmatmul.f32.gmra.mxu0 %v2477
      %v3595 = vpop.f32.mrf.mxu0
      %v3596 = vadd.f32 %v3483, %v3595
      %3597 = vmatmul.f32.gmra.mxu0 %v2478
      %v3598 = vpop.f32.mrf.mxu0
      %v3599 = vadd.f32 %v3486, %v3598
      %3600 = vmatmul.f32.gmra.mxu0 %v2479
      %v3601 = vpop.f32.mrf.mxu0
      %v3602 = vadd.f32 %v3489, %v3601
      %3603 = vmatmul.f32.gmra.mxu0 %v2480
      %v3604 = vpop.f32.mrf.mxu0
      %v3605 = vadd.f32 %v3492, %v3604
      %3606 = vmatmul.f32.gmra.mxu0 %v2481
      %v3607 = vpop.f32.mrf.mxu0
      %v3608 = vadd.f32 %v3495, %v3607
      %3609 = vmatmul.f32.gmra.mxu0 %v2482
      %v3610 = vpop.f32.mrf.mxu0
      %v3611 = vadd.f32 %v3498, %v3610
      %3612 = vmatmul.f32.gmra.mxu0 %v2483
      %v3613 = vpop.f32.mrf.mxu0
      %v3614 = vadd.f32 %v3501, %v3613
      %3615 = vmatmul.f32.gmra.mxu0 %v2484
      %v3616 = vpop.f32.mrf.mxu0
      %v3617 = vadd.f32 %v3504, %v3616
      %3618 = vmatmul.f32.gmra.mxu0 %v2485
      %v3619 = vpop.f32.mrf.mxu0
      %v3620 = vadd.f32 %v3507, %v3619
      %3621 = vmatmul.f32.gmra.mxu0 %v2486
      %v3622 = vpop.f32.mrf.mxu0
      %v3623 = vadd.f32 %v3510, %v3622
      %3624 = vmatmul.f32.gmra.mxu0 %v2487
      %v3625 = vpop.f32.mrf.mxu0
      %v3626 = vadd.f32 %v3513, %v3625
      %3627 = vmatmul.f32.gmra.mxu0 %v2488
      %v3628 = vpop.f32.mrf.mxu0
      %v3629 = vadd.f32 %v3516, %v3628
      %3630 = vmatmul.f32.gmra.mxu0 %v2489
      %v3631 = vpop.f32.mrf.mxu0
      %v3632 = vadd.f32 %v3519, %v3631
      %3633 = vmatmul.f32.gmra.mxu0 %v2490
      %v3634 = vpop.f32.mrf.mxu0
      %v3635 = vadd.f32 %v3522, %v3634
      %3636 = vmatmul.f32.gmra.mxu0 %v2491
      %v3637 = vpop.f32.mrf.mxu0
      %v3638 = vadd.f32 %v3525, %v3637
      %3639 = vmatmul.f32.gmra.mxu0 %v2492
      %v3640 = vpop.f32.mrf.mxu0
      %v3641 = vadd.f32 %v3528, %v3640
      %3642 = vmatmul.f32.gmra.mxu0 %v2493
      %v3643 = vpop.f32.mrf.mxu0
      %v3644 = vadd.f32 %v3531, %v3643
      %3645 = vmatmul.f32.gmra.mxu0 %v2494
      %v3646 = vpop.f32.mrf.mxu0
      %v3647 = vadd.f32 %v3534, %v3646
      %3648 = vmatmul.f32.gmra.mxu0 %v2495
      %v3649 = vpop.f32.mrf.mxu0
      %v3650 = vadd.f32 %v3537, %v3649
      %3651 = vmatmul.f32.gmra.mxu0 %v2496
      %v3652 = vpop.f32.mrf.mxu0
      %v3653 = vadd.f32 %v3540, %v3652
      %3654 = vmatmul.f32.gmra.mxu0 %v2497
      %v3655 = vpop.f32.mrf.mxu0
      %v3656 = vadd.f32 %v3543, %v3655
      %3657 = vmatmul.f32.gmra.mxu0 %v2498
      %v3658 = vpop.f32.mrf.mxu0
      %v3659 = vadd.f32 %v3546, %v3658
      %3660 = vmatmul.f32.gmra.mxu0 %v2499
      %v3661 = vpop.f32.mrf.mxu0
      %v3662 = vadd.f32 %v3549, %v3661
      %3663 = vdwg.mxu0
      %v3664 = vadd.f32 %v3569, %v3572
      %v3665 = vadd.f32 %v3664, %v3575
      %v3666 = vadd.f32 %v3665, %v3578
      %v3667 = vadd.f32 %v3666, %v3581
      %v3668 = vadd.f32 %v3667, %v3584
      %v3669 = vadd.f32 %v3668, %v3587
      %v3670 = vadd.f32 %v3669, %v3590
      %v3671 = vadd.f32 %v3670, %v3593
      %v3672 = vadd.f32 %v3671, %v3596
      %v3673 = vadd.f32 %v3672, %v3599
      %v3674 = vadd.f32 %v3673, %v3602
      %v3675 = vadd.f32 %v3674, %v3605
      %v3676 = vadd.f32 %v3675, %v3608
      %v3677 = vadd.f32 %v3676, %v3611
      %v3678 = vadd.f32 %v3677, %v3614
      %v3679 = vadd.f32 %v3678, %v3617
      %v3680 = vadd.f32 %v3679, %v3620
      %v3681 = vadd.f32 %v3680, %v3623
      %v3682 = vadd.f32 %v3681, %v3626
      %v3683 = vadd.f32 %v3682, %v3629
      %v3684 = vadd.f32 %v3683, %v3632
      %v3685 = vadd.f32 %v3684, %v3635
      %v3686 = vadd.f32 %v3685, %v3638
      %v3687 = vadd.f32 %v3686, %v3641
      %v3688 = vadd.f32 %v3687, %v3644
      %v3689 = vadd.f32 %v3688, %v3647
      %v3690 = vadd.f32 %v3689, %v3650
      %v3691 = vadd.f32 %v3690, %v3653
      %v3692 = vadd.f32 %v3691, %v3656
      %v3693 = vadd.f32 %v3692, %v3659
      %v3694 = vadd.f32 %v3693, %v3662
      %v3695 = vrot.slane %v3694, 4
      %v3696 = vadd.f32 %v3694, %v3695
      %v3697 = vrot.slane %v3696, 2
      %v3698 = vadd.f32 %v3696, %v3697
      %v3699 = vrot.slane %v3698, 1
      %v3700 = vadd.f32 %v3698, %v3699
      %v3701 = vmul.f32 %v3700, 0.00390625
      %v3702 = vld [vmem:[%s5] sm:$0xff]
      %v3703 = vld [vmem:[%s5 + $0x8] sm:$0xff]
      %v3704 = vld [vmem:[%s5 + $0x10] sm:$0xff]
      %v3705 = vld [vmem:[%s5 + $0x18] sm:$0xff]
      %v3706 = vld [vmem:[%s5 + $0x20] sm:$0xff]
      %v3707 = vld [vmem:[%s5 + $0x28] sm:$0xff]
      %v3708 = vld [vmem:[%s5 + $0x30] sm:$0xff]
      %v3709 = vld [vmem:[%s5 + $0x38] sm:$0xff]
      %v3710 = vld [vmem:[%s5 + $0x40] sm:$0xff]
      %v3711 = vld [vmem:[%s5 + $0x48] sm:$0xff]
      %v3712 = vld [vmem:[%s5 + $0x50] sm:$0xff]
      %v3713 = vld [vmem:[%s5 + $0x58] sm:$0xff]
      %v3714 = vld [vmem:[%s5 + $0x60] sm:$0xff]
      %v3715 = vld [vmem:[%s5 + $0x68] sm:$0xff]
      %v3716 = vld [vmem:[%s5 + $0x70] sm:$0xff]
      %v3717 = vld [vmem:[%s5 + $0x78] sm:$0xff]
      %v3718 = vld [vmem:[%s6] sm:$0x1]
      %3719 = vmatpush.msra.mxu0 %v3717
      %3720 = vmatpush.msra.mxu0 %v3716
      %3721 = vmatpush.msra.mxu0 %v3715
      %3722 = vmatpush.msra.mxu0 %v3714
      %3723 = vmatpush.msra.mxu0 %v3713
      %3724 = vmatpush.msra.mxu0 %v3712
      %3725 = vmatpush.msra.mxu0 %v3711
      %3726 = vmatpush.msra.mxu0 %v3710
      %3727 = vmatpush.msra.mxu0 %v3709
      %3728 = vmatpush.msra.mxu0 %v3708
      %3729 = vmatpush.msra.mxu0 %v3707
      %3730 = vmatpush.msra.mxu0 %v3706
      %3731 = vmatpush.msra.mxu0 %v3705
      %3732 = vmatpush.msra.mxu0 %v3704
      %3733 = vmatpush.msra.mxu0 %v3703
      %3734 = vmatpush.msra.mxu0 %v3702
      %3735 = vmatmul.f32.gmra.mxu0 %v3701
      %v3736 = vpop.f32.mrf.mxu0
      %v3737 = vadd.f32 %v3718, %v3736
      %3738 = vdwg.mxu0
      %v3739 = vmax.f32 %v3737, 0.0
      %v3740 = vmul.f32 %v3739, 1.7128586
      %v3741 = vld [vmem:[%s7] sm:$0xff]
      %v3742 = vld [vmem:[%s7 + $0x8] sm:$0xff]
      %v3743 = vld [vmem:[%s7 + $0x10] sm:$0xff]
      %v3744 = vld [vmem:[%s7 + $0x18] sm:$0xff]
      %v3745 = vld [vmem:[%s7 + $0x20] sm:$0xff]
      %v3746 = vld [vmem:[%s7 + $0x28] sm:$0xff]
      %v3747 = vld [vmem:[%s7 + $0x30] sm:$0xff]
      %v3748 = vld [vmem:[%s7 + $0x38] sm:$0xff]
      %v3749 = vld [vmem:[%s7 + $0x40] sm:$0xff]
      %v3750 = vld [vmem:[%s7 + $0x48] sm:$0xff]
      %v3751 = vld [vmem:[%s7 + $0x50] sm:$0xff]
      %v3752 = vld [vmem:[%s7 + $0x58] sm:$0xff]
      %v3753 = vld [vmem:[%s7 + $0x60] sm:$0xff]
      %v3754 = vld [vmem:[%s7 + $0x68] sm:$0xff]
      %v3755 = vld [vmem:[%s7 + $0x70] sm:$0xff]
      %v3756 = vld [vmem:[%s7 + $0x78] sm:$0xff]
      %v3757 = vld [vmem:[%s8] sm:$0x1]
      %3758 = vmatpush.msra.mxu0 %v3756
      %3759 = vmatpush.msra.mxu0 %v3755
      %3760 = vmatpush.msra.mxu0 %v3754
      %3761 = vmatpush.msra.mxu0 %v3753
      %3762 = vmatpush.msra.mxu0 %v3752
      %3763 = vmatpush.msra.mxu0 %v3751
      %3764 = vmatpush.msra.mxu0 %v3750
      %3765 = vmatpush.msra.mxu0 %v3749
      %3766 = vmatpush.msra.mxu0 %v3748
      %3767 = vmatpush.msra.mxu0 %v3747
      %3768 = vmatpush.msra.mxu0 %v3746
      %3769 = vmatpush.msra.mxu0 %v3745
      %3770 = vmatpush.msra.mxu0 %v3744
      %3771 = vmatpush.msra.mxu0 %v3743
      %3772 = vmatpush.msra.mxu0 %v3742
      %3773 = vmatpush.msra.mxu0 %v3741
      %3774 = vmatmul.f32.gmra.mxu0 %v3740
      %v3775 = vpop.f32.mrf.mxu0
      %v3776 = vadd.f32 %v3757, %v3775
      %3777 = vdwg.mxu0
      %v3778 = vxor.u32 %v3776, 2147483648
      %v3779 = vmul.f32 %v3778, 1.442695
      %v3780 = vpow.pop %v3779
      %v3781 = vadd.f32 %v3780, 1.0
      %v3782 = vrcp.pop %v3781
      %v3783 = vmul.f32 %v3781, %v3782
      %v3784 = vsub.f32 1.0, %v3783
      %v3785 = vmul.f32 %v3782, %v3784
      %v3786 = vadd.f32 %v3782, %v3785
      %vm3787 = vweird.f32 %v3781
      %vm3788 = vweird.f32 %v3782
      %vm3789 = vmor %vm3787, %vm3788
      %v3790 = vsel %vm3789, %v3782, %v3786
      %v3791 = vand.u32 2147483647, %v3781
      %vm3792 = vcmp.eq.f32.partialorder %v3791, 8.507059e+37
      %v3793 = vand.u32 %v3781, 2147483648
      %v3794 = vor.u32 1.1754944e-38, %v3793
      %v3795 = vsel %vm3792, %v3794, %v3790
      %v3796 = vmul.f32 1.0, %v3795
      %v3797 = vmul.f32 %v3796, 2.0
      %v3798 = vld [vmem:[#allocation4] sm:$0x1]
      %3800 = vset.pattern.permute.xlu0 0
      %3801 = vperm.xlu0 %3800, %v3798
      %v3802 = vpop.permute.xlu0 %3801
      %v3804 = vperm.slane %v3802, 0
      %v3805 = vmul.f32 %v3797, %v3804
      %v3806 = vperm.slane %v3805, 0
      %v3807 = vmul.f32 %v3569, %v3806
      %v3808 = vmul.f32 %v3572, %v3806
      %v3809 = vmul.f32 %v3575, %v3806
      %v3810 = vmul.f32 %v3578, %v3806
      %v3811 = vmul.f32 %v3581, %v3806
      %v3812 = vmul.f32 %v3584, %v3806
      %v3813 = vmul.f32 %v3587, %v3806
      %v3814 = vmul.f32 %v3590, %v3806
      %v3815 = vmul.f32 %v3593, %v3806
      %v3816 = vmul.f32 %v3596, %v3806
      %v3817 = vmul.f32 %v3599, %v3806
      %v3818 = vmul.f32 %v3602, %v3806
      %v3819 = vmul.f32 %v3605, %v3806
      %v3820 = vmul.f32 %v3608, %v3806
      %v3821 = vmul.f32 %v3611, %v3806
      %v3822 = vmul.f32 %v3614, %v3806
      %v3823 = vmul.f32 %v3617, %v3806
      %v3824 = vmul.f32 %v3620, %v3806
      %v3825 = vmul.f32 %v3623, %v3806
      %v3826 = vmul.f32 %v3626, %v3806
      %v3827 = vmul.f32 %v3629, %v3806
      %v3828 = vmul.f32 %v3632, %v3806
      %v3829 = vmul.f32 %v3635, %v3806
      %v3830 = vmul.f32 %v3638, %v3806
      %v3831 = vmul.f32 %v3641, %v3806
      %v3832 = vmul.f32 %v3644, %v3806
      %v3833 = vmul.f32 %v3647, %v3806
      %v3834 = vmul.f32 %v3650, %v3806
      %v3835 = vmul.f32 %v3653, %v3806
      %v3836 = vmul.f32 %v3656, %v3806
      %v3837 = vmul.f32 %v3659, %v3806
      %v3838 = vmul.f32 %v3662, %v3806
      %v3839 = vadd.f32 %v3807, %v362
      %v3840 = vadd.f32 %v3808, %v363
      %v3841 = vadd.f32 %v3809, %v364
      %v3842 = vadd.f32 %v3810, %v365
      %v3843 = vadd.f32 %v3811, %v366
      %v3844 = vadd.f32 %v3812, %v367
      %v3845 = vadd.f32 %v3813, %v368
      %v3846 = vadd.f32 %v3814, %v369
      %v3847 = vadd.f32 %v3815, %v370
      %v3848 = vadd.f32 %v3816, %v371
      %v3849 = vadd.f32 %v3817, %v372
      %v3850 = vadd.f32 %v3818, %v373
      %v3851 = vadd.f32 %v3819, %v374
      %v3852 = vadd.f32 %v3820, %v375
      %v3853 = vadd.f32 %v3821, %v376
      %v3854 = vadd.f32 %v3822, %v377
      %v3855 = vadd.f32 %v3823, %v378
      %v3856 = vadd.f32 %v3824, %v379
      %v3857 = vadd.f32 %v3825, %v380
      %v3858 = vadd.f32 %v3826, %v381
      %v3859 = vadd.f32 %v3827, %v382
      %v3860 = vadd.f32 %v3828, %v383
      %v3861 = vadd.f32 %v3829, %v384
      %v3862 = vadd.f32 %v3830, %v385
      %v3863 = vadd.f32 %v3831, %v386
      %v3864 = vadd.f32 %v3832, %v387
      %v3865 = vadd.f32 %v3833, %v388
      %v3866 = vadd.f32 %v3834, %v389
      %v3867 = vadd.f32 %v3835, %v390
      %v3868 = vadd.f32 %v3836, %v391
      %v3869 = vadd.f32 %v3837, %v392
      %v3870 = vadd.f32 %v3838, %v393
      %3871 = vst [vmem:[%s361] sm:$0xff] %v3839
      %3872 = vst [vmem:[%s361 + $0x8] sm:$0xff] %v3840
      %3873 = vst [vmem:[%s361 + $0x10] sm:$0xff] %v3841
      %3874 = vst [vmem:[%s361 + $0x18] sm:$0xff] %v3842
      %3875 = vst [vmem:[%s361 + $0x20] sm:$0xff] %v3843
      %3876 = vst [vmem:[%s361 + $0x28] sm:$0xff] %v3844
      %3877 = vst [vmem:[%s361 + $0x30] sm:$0xff] %v3845
      %3878 = vst [vmem:[%s361 + $0x38] sm:$0xff] %v3846
      %3879 = vst [vmem:[%s361 + $0x40] sm:$0xff] %v3847
      %3880 = vst [vmem:[%s361 + $0x48] sm:$0xff] %v3848
      %3881 = vst [vmem:[%s361 + $0x50] sm:$0xff] %v3849
      %3882 = vst [vmem:[%s361 + $0x58] sm:$0xff] %v3850
      %3883 = vst [vmem:[%s361 + $0x60] sm:$0xff] %v3851
      %3884 = vst [vmem:[%s361 + $0x68] sm:$0xff] %v3852
      %3885 = vst [vmem:[%s361 + $0x70] sm:$0xff] %v3853
      %3886 = vst [vmem:[%s361 + $0x78] sm:$0xff] %v3854
      %3887 = vst [vmem:[%s361 + $0x80] sm:$0xff] %v3855
      %3888 = vst [vmem:[%s361 + $0x88] sm:$0xff] %v3856
      %3889 = vst [vmem:[%s361 + $0x90] sm:$0xff] %v3857
      %3890 = vst [vmem:[%s361 + $0x98] sm:$0xff] %v3858
      %3891 = vst [vmem:[%s361 + $0xa0] sm:$0xff] %v3859
      %3892 = vst [vmem:[%s361 + $0xa8] sm:$0xff] %v3860
      %3893 = vst [vmem:[%s361 + $0xb0] sm:$0xff] %v3861
      %3894 = vst [vmem:[%s361 + $0xb8] sm:$0xff] %v3862
      %3895 = vst [vmem:[%s361 + $0xc0] sm:$0xff] %v3863
      %3896 = vst [vmem:[%s361 + $0xc8] sm:$0xff] %v3864
      %3897 = vst [vmem:[%s361 + $0xd0] sm:$0xff] %v3865
      %3898 = vst [vmem:[%s361 + $0xd8] sm:$0xff] %v3866
      %3899 = vst [vmem:[%s361 + $0xe0] sm:$0xff] %v3867
      %3900 = vst [vmem:[%s361 + $0xe8] sm:$0xff] %v3868
      %3901 = vst [vmem:[%s361 + $0xf0] sm:$0xff] %v3869
      %3902 = vst [vmem:[%s361 + $0xf8] sm:$0xff] %v3870
      %p3903 = scmp.lt.s32.totalorder %s23, 1
      %s3904 = scalar_select %p3903, %s23, 1
      %s3905 = smul.addr %s3904, 32
      %s3906 = smul.addr %s3905, 8
      %s3907 = scalar_lea.vmem %s10, %s3906
      // Predicated region
      $region61: #{_lambda_.3} parent=59 // pred_check
        %p3908 = pneg %p256
      $region62: #{_lambda_.3} parent=59 // pred_check_branch
        %3910 = sbr.rel (%p3908) target = $region64
      $region63: #{_lambda_.3} parent=59 // pred_region
        _
      $region64: #{_lambda_.3} parent=59 // pred_fallthru
        _
    $region60: #{_lambda_.3} parent=5 // pred_fallthru
      _
    %p3911 = scmp.le.s32.totalorder 2, %s18
    // Predicated region
    $region65: #{_lambda_.3} parent=5 // pred_check
      %p3912 = pneg %p3911
    $region66: #{_lambda_.3} parent=5 // pred_check_branch
      %3914 = sbr.rel (%p3912) target = $region68
    $region67: #{_lambda_.3} parent=5 // pred_region
      %s3915 = ssub.s32 %s18, 2
      // Predicated region
      $region69: #{_lambda_.3} parent=67 // pred_check
        %p3916 = pneg %p262
      $region70: #{_lambda_.3} parent=67 // pred_check_branch
        %3918 = sbr.rel (%p3916) target = $region72
      $region71: #{_lambda_.3} parent=67 // pred_region
        %p3919 = scmp.lt.s32.totalorder %s24, 1
        %s3920 = scalar_select %p3919, %s24, 1
        %s3921 = smul.addr %s3920, 32
        %s3922 = smul.addr %s3921, 8
        %s3923 = scalar_lea.vmem %s10, %s3922
      $region72: #{_lambda_.3} parent=67 // pred_fallthru
        _
    $region68: #{_lambda_.3} parent=5 // pred_fallthru
      _
  $region6: #{_lambda_.3} parent=0 // loop_footer
    %s22 = sadd.s32 1, %s18
  $region7: #{_lambda_.3} parent=0 // loop_footer_branch
    %17 = sbr.rel target = $region3
  $region8: #{_lambda_.3} parent=0 // loop_exit
    _

// kernel: _lambda_.2
$region0: #{_lambda_.2}
  #allocation0 [shape = 'u32[]', space=smem, size = 0x4, offset = 0x4, fixed_abs, tag = 'smem constant byte address 0x4 - core index']
  #allocation1 [shape = 'u32[72,128]{1,0:T(1,128)}', space=vmem, size = 0x9000, scoped, tag = 'internal scratch']
  #allocation2 [shape = 'f32[18,18,128]{2,1,0:T(8,128)}', space=vmem, size = 0x36000, scoped, tag = 'scratch operand']
  #allocation3 [shape = 'f32[18,18,128]{2,1,0:T(8,128)}', space=vmem, size = 0x36000, scoped, tag = 'scratch operand']
  #allocation4 [shape = 'f32[1,1]{1,0:T(1,128)S(1)}', space=vmem, size = 0x200, scoped, tag = 'scoped memory for _lambda_.2']
  %s0 = inlined_call_operand.vmem [shape: f32[2,256,128], index: 0, kind: input, shape index: {}, may-alias: {0,12}]
  %s1 = inlined_call_operand.vmem [shape: f32[1152,128], index: 1, kind: input, shape index: {}]
  %s2 = inlined_call_operand.vmem [shape: f32[1,128], index: 2, kind: input, shape index: {}, may-alias: {2,4,8,11}]
  %s3 = inlined_call_operand.vmem [shape: f32[1152,128], index: 3, kind: input, shape index: {}]
  %s4 = inlined_call_operand.vmem [shape: f32[1,128], index: 4, kind: input, shape index: {}, may-alias: {2,4,8,11}]
  %s5 = inlined_call_operand.vmem [shape: f32[128,128], index: 5, kind: input, shape index: {}]
  %s6 = inlined_call_operand.vmem [shape: f32[1,128], index: 6, kind: input, shape index: {}]
  %s7 = inlined_call_operand.vmem [shape: f32[128,128], index: 7, kind: input, shape index: {}]
  %s8 = inlined_call_operand.vmem [shape: f32[1,128], index: 8, kind: input, shape index: {}, may-alias: {2,4,8,11}]
  %s9 = inlined_call_operand.<no memory space> [shape: f32[1,1], index: 9, kind: input, shape index: {}]
  %s10 = inlined_call_operand.vmem [shape: f32[128,128], index: 10, kind: input, shape index: {}]
  %s11 = inlined_call_operand.vmem [shape: f32[1,128], index: 11, kind: input, shape index: {}, may-alias: {2,4,8,11}]
  %s12 = inlined_call_operand.vmem [shape: f32[2,256,128], index: 12, kind: output, shape index: {}, may-alias: {0,12}]
  %s13 = sld [smem:[#allocation0]]
  $region81: #{_lambda_.2} parent=0
    _
  %s15 = ssub.s32 1, %s13
  %s16 = scalar_select 0, %s15, %s13
  %v17 = vstv %s9
  %18 = vst [vmem:[#allocation4] sm:$0x1] %v17
  loop: start=0, step=1, limit=4
  $region2: #{_lambda_.2} parent=0 // loop_pre_header
    _
  $region3: #{_lambda_.2} parent=0 // loop_header
    %s20 = sphi 0, %s24
    %p21 = scmp.ge.s32.totalorder %s20, 4
    %s30 = sphi 0, %s32
    %s33 = sphi 0, %s30
    %s34 = sphi 0, %s33
    %s50 = sphi 0, %s34
    %s54 = sphi 0, %s54
    %s56 = sphi 0, %s54
    %s57 = sphi 0, %s56
    %s71 = sphi 0, %s57
    %s75 = sphi 0, %s75
    %s77 = sphi 0, %s75
    %s78 = sphi 0, %s77
    %s92 = sphi 0, %s78
    %s96 = sphi 0, %s96
    %s98 = sphi 0, %s96
    %s99 = sphi 0, %s98
    %s113 = sphi 0, %s99
    %s117 = sphi 0, %s117
    %s119 = sphi 0, %s117
    %s120 = sphi 0, %s119
    %s134 = sphi 0, %s120
    %s138 = sphi 0, %s138
    %s140 = sphi 0, %s138
    %s141 = sphi 0, %s140
    %s155 = sphi 0, %s141
    %s159 = sphi 0, %s159
    %s161 = sphi 0, %s159
    %s162 = sphi 0, %s161
    %s176 = sphi 0, %s162
    %s180 = sphi 0, %s180
    %s182 = sphi 0, %s180
    %s183 = sphi 0, %s182
    %s197 = sphi 0, %s183
    %s201 = sphi 0, %s201
    %s203 = sphi 0, %s201
    %s204 = sphi 0, %s203
    %s218 = sphi 0, %s204
    %s222 = sphi 0, %s222
    %s224 = sphi 0, %s222
    %s225 = sphi 0, %s224
    %s239 = sphi 0, %s225
    %s243 = sphi 0, %s243
    %s245 = sphi 0, %s243
    %s246 = sphi 0, %s245
    %s260 = sphi 0, %s246
    %s264 = sphi 0, %s264
    %s266 = sphi 0, %s264
    %s267 = sphi 0, %s266
    %s281 = sphi 0, %s267
    %s287 = sphi 0, %s289
    %s290 = sphi 0, %s287
    %s291 = sphi 0, %s290
    %s307 = sphi 0, %s291
  $region4: #{_lambda_.2} parent=0 // loop_header_branch
    %23 = sbr.rel (%p21) target = $region8
  $region5: #{_lambda_.2} parent=0 // loop_body
    %s25 = ssub.s32 %s20, 1
    %s26 = ssub.s32 %s20, 2
    %s27 = sadd.s32 %s20, 1
    %s28 = ssub.s32 %s20, %s27
    %p29 = scmp.eq.s32.totalorder %s28, 0
    %s31 = sadd.s32 %s30, 1
    %s32 = scalar_select %p29, %s30, %s31
    %p35 = pneg %p29
    %p36 = scmp.eq.s32.totalorder %s20, 1
    %p37 = por %p35, %p36
    %p38 = scmp.ne.s32.totalorder %s30, %s33
    %p39 = scmp.eq.s32.totalorder %s20, 0
    %p40 = por %p38, %p39
    %p41 = scmp.ne.s32.totalorder %s30, %s33
    %p42 = scmp.eq.s32.totalorder %s25, 1
    %p43 = por %p41, %p42
    %p44 = scmp.ne.s32.totalorder %s33, %s34
    %p45 = scmp.eq.s32.totalorder %s25, 0
    %p46 = por %p44, %p45
    %p47 = scmp.ne.s32.totalorder %s33, %s34
    %p48 = scmp.eq.s32.totalorder %s26, 1
    %p49 = por %p47, %p48
    %p51 = scmp.ne.s32.totalorder %s34, %s50
    %p52 = scmp.eq.s32.totalorder %s26, 0
    %p53 = por %p51, %p52
    %s55 = sadd.s32 %s54, 1
    %p58 = scmp.eq.s32.totalorder %s20, 1
    %p59 = scmp.ne.s32.totalorder %s54, %s56
    %p60 = scmp.eq.s32.totalorder %s20, 0
    %p61 = por %p59, %p60
    %p62 = scmp.ne.s32.totalorder %s54, %s56
    %p63 = scmp.eq.s32.totalorder %s25, 1
    %p64 = por %p62, %p63
    %p65 = scmp.ne.s32.totalorder %s56, %s57
    %p66 = scmp.eq.s32.totalorder %s25, 0
    %p67 = por %p65, %p66
    %p68 = scmp.ne.s32.totalorder %s56, %s57
    %p69 = scmp.eq.s32.totalorder %s26, 1
    %p70 = por %p68, %p69
    %p72 = scmp.ne.s32.totalorder %s57, %s71
    %p73 = scmp.eq.s32.totalorder %s26, 0
    %p74 = por %p72, %p73
    %s76 = sadd.s32 %s75, 1
    %p79 = scmp.eq.s32.totalorder %s20, 1
    %p80 = scmp.ne.s32.totalorder %s75, %s77
    %p81 = scmp.eq.s32.totalorder %s20, 0
    %p82 = por %p80, %p81
    %p83 = scmp.ne.s32.totalorder %s75, %s77
    %p84 = scmp.eq.s32.totalorder %s25, 1
    %p85 = por %p83, %p84
    %p86 = scmp.ne.s32.totalorder %s77, %s78
    %p87 = scmp.eq.s32.totalorder %s25, 0
    %p88 = por %p86, %p87
    %p89 = scmp.ne.s32.totalorder %s77, %s78
    %p90 = scmp.eq.s32.totalorder %s26, 1
    %p91 = por %p89, %p90
    %p93 = scmp.ne.s32.totalorder %s78, %s92
    %p94 = scmp.eq.s32.totalorder %s26, 0
    %p95 = por %p93, %p94
    %s97 = sadd.s32 %s96, 1
    %p100 = scmp.eq.s32.totalorder %s20, 1
    %p101 = scmp.ne.s32.totalorder %s96, %s98
    %p102 = scmp.eq.s32.totalorder %s20, 0
    %p103 = por %p101, %p102
    %p104 = scmp.ne.s32.totalorder %s96, %s98
    %p105 = scmp.eq.s32.totalorder %s25, 1
    %p106 = por %p104, %p105
    %p107 = scmp.ne.s32.totalorder %s98, %s99
    %p108 = scmp.eq.s32.totalorder %s25, 0
    %p109 = por %p107, %p108
    %p110 = scmp.ne.s32.totalorder %s98, %s99
    %p111 = scmp.eq.s32.totalorder %s26, 1
    %p112 = por %p110, %p111
    %p114 = scmp.ne.s32.totalorder %s99, %s113
    %p115 = scmp.eq.s32.totalorder %s26, 0
    %p116 = por %p114, %p115
    %s118 = sadd.s32 %s117, 1
    %p121 = scmp.eq.s32.totalorder %s20, 1
    %p122 = scmp.ne.s32.totalorder %s117, %s119
    %p123 = scmp.eq.s32.totalorder %s20, 0
    %p124 = por %p122, %p123
    %p125 = scmp.ne.s32.totalorder %s117, %s119
    %p126 = scmp.eq.s32.totalorder %s25, 1
    %p127 = por %p125, %p126
    %p128 = scmp.ne.s32.totalorder %s119, %s120
    %p129 = scmp.eq.s32.totalorder %s25, 0
    %p130 = por %p128, %p129
    %p131 = scmp.ne.s32.totalorder %s119, %s120
    %p132 = scmp.eq.s32.totalorder %s26, 1
    %p133 = por %p131, %p132
    %p135 = scmp.ne.s32.totalorder %s120, %s134
    %p136 = scmp.eq.s32.totalorder %s26, 0
    %p137 = por %p135, %p136
    %s139 = sadd.s32 %s138, 1
    %p142 = scmp.eq.s32.totalorder %s20, 1
    %p143 = scmp.ne.s32.totalorder %s138, %s140
    %p144 = scmp.eq.s32.totalorder %s20, 0
    %p145 = por %p143, %p144
    %p146 = scmp.ne.s32.totalorder %s138, %s140
    %p147 = scmp.eq.s32.totalorder %s25, 1
    %p148 = por %p146, %p147
    %p149 = scmp.ne.s32.totalorder %s140, %s141
    %p150 = scmp.eq.s32.totalorder %s25, 0
    %p151 = por %p149, %p150
    %p152 = scmp.ne.s32.totalorder %s140, %s141
    %p153 = scmp.eq.s32.totalorder %s26, 1
    %p154 = por %p152, %p153
    %p156 = scmp.ne.s32.totalorder %s141, %s155
    %p157 = scmp.eq.s32.totalorder %s26, 0
    %p158 = por %p156, %p157
    %s160 = sadd.s32 %s159, 1
    %p163 = scmp.eq.s32.totalorder %s20, 1
    %p164 = scmp.ne.s32.totalorder %s159, %s161
    %p165 = scmp.eq.s32.totalorder %s20, 0
    %p166 = por %p164, %p165
    %p167 = scmp.ne.s32.totalorder %s159, %s161
    %p168 = scmp.eq.s32.totalorder %s25, 1
    %p169 = por %p167, %p168
    %p170 = scmp.ne.s32.totalorder %s161, %s162
    %p171 = scmp.eq.s32.totalorder %s25, 0
    %p172 = por %p170, %p171
    %p173 = scmp.ne.s32.totalorder %s161, %s162
    %p174 = scmp.eq.s32.totalorder %s26, 1
    %p175 = por %p173, %p174
    %p177 = scmp.ne.s32.totalorder %s162, %s176
    %p178 = scmp.eq.s32.totalorder %s26, 0
    %p179 = por %p177, %p178
    %s181 = sadd.s32 %s180, 1
    %p184 = scmp.eq.s32.totalorder %s20, 1
    %p185 = scmp.ne.s32.totalorder %s180, %s182
    %p186 = scmp.eq.s32.totalorder %s20, 0
    %p187 = por %p185, %p186
    %p188 = scmp.ne.s32.totalorder %s180, %s182
    %p189 = scmp.eq.s32.totalorder %s25, 1
    %p190 = por %p188, %p189
    %p191 = scmp.ne.s32.totalorder %s182, %s183
    %p192 = scmp.eq.s32.totalorder %s25, 0
    %p193 = por %p191, %p192
    %p194 = scmp.ne.s32.totalorder %s182, %s183
    %p195 = scmp.eq.s32.totalorder %s26, 1
    %p196 = por %p194, %p195
    %p198 = scmp.ne.s32.totalorder %s183, %s197
    %p199 = scmp.eq.s32.totalorder %s26, 0
    %p200 = por %p198, %p199
    %s202 = sadd.s32 %s201, 1
    %p205 = scmp.eq.s32.totalorder %s20, 1
    %p206 = scmp.ne.s32.totalorder %s201, %s203
    %p207 = scmp.eq.s32.totalorder %s20, 0
    %p208 = por %p206, %p207
    %p209 = scmp.ne.s32.totalorder %s201, %s203
    %p210 = scmp.eq.s32.totalorder %s25, 1
    %p211 = por %p209, %p210
    %p212 = scmp.ne.s32.totalorder %s203, %s204
    %p213 = scmp.eq.s32.totalorder %s25, 0
    %p214 = por %p212, %p213
    %p215 = scmp.ne.s32.totalorder %s203, %s204
    %p216 = scmp.eq.s32.totalorder %s26, 1
    %p217 = por %p215, %p216
    %p219 = scmp.ne.s32.totalorder %s204, %s218
    %p220 = scmp.eq.s32.totalorder %s26, 0
    %p221 = por %p219, %p220
    %s223 = sadd.s32 %s222, 1
    %p226 = scmp.eq.s32.totalorder %s20, 1
    %p227 = scmp.ne.s32.totalorder %s222, %s224
    %p228 = scmp.eq.s32.totalorder %s20, 0
    %p229 = por %p227, %p228
    %p230 = scmp.ne.s32.totalorder %s222, %s224
    %p231 = scmp.eq.s32.totalorder %s25, 1
    %p232 = por %p230, %p231
    %p233 = scmp.ne.s32.totalorder %s224, %s225
    %p234 = scmp.eq.s32.totalorder %s25, 0
    %p235 = por %p233, %p234
    %p236 = scmp.ne.s32.totalorder %s224, %s225
    %p237 = scmp.eq.s32.totalorder %s26, 1
    %p238 = por %p236, %p237
    %p240 = scmp.ne.s32.totalorder %s225, %s239
    %p241 = scmp.eq.s32.totalorder %s26, 0
    %p242 = por %p240, %p241
    %s244 = sadd.s32 %s243, 1
    %p247 = scmp.eq.s32.totalorder %s20, 1
    %p248 = scmp.ne.s32.totalorder %s243, %s245
    %p249 = scmp.eq.s32.totalorder %s20, 0
    %p250 = por %p248, %p249
    %p251 = scmp.ne.s32.totalorder %s243, %s245
    %p252 = scmp.eq.s32.totalorder %s25, 1
    %p253 = por %p251, %p252
    %p254 = scmp.ne.s32.totalorder %s245, %s246
    %p255 = scmp.eq.s32.totalorder %s25, 0
    %p256 = por %p254, %p255
    %p257 = scmp.ne.s32.totalorder %s245, %s246
    %p258 = scmp.eq.s32.totalorder %s26, 1
    %p259 = por %p257, %p258
    %p261 = scmp.ne.s32.totalorder %s246, %s260
    %p262 = scmp.eq.s32.totalorder %s26, 0
    %p263 = por %p261, %p262
    %s265 = sadd.s32 %s264, 1
    %p268 = scmp.eq.s32.totalorder %s20, 1
    %p269 = scmp.ne.s32.totalorder %s264, %s266
    %p270 = scmp.eq.s32.totalorder %s20, 0
    %p271 = por %p269, %p270
    %p272 = scmp.ne.s32.totalorder %s264, %s266
    %p273 = scmp.eq.s32.totalorder %s25, 1
    %p274 = por %p272, %p273
    %p275 = scmp.ne.s32.totalorder %s266, %s267
    %p276 = scmp.eq.s32.totalorder %s25, 0
    %p277 = por %p275, %p276
    %p278 = scmp.ne.s32.totalorder %s266, %s267
    %p279 = scmp.eq.s32.totalorder %s26, 1
    %p280 = por %p278, %p279
    %p282 = scmp.ne.s32.totalorder %s267, %s281
    %p283 = scmp.eq.s32.totalorder %s26, 0
    %p284 = por %p282, %p283
    %s285 = ssub.s32 %s20, %s27
    %p286 = scmp.eq.s32.totalorder %s285, 0
    %s288 = sadd.s32 %s287, 1
    %s289 = scalar_select %p286, %s287, %s288
    %p292 = pneg %p286
    %p293 = scmp.eq.s32.totalorder %s20, 1
    %p294 = por %p292, %p293
    %p295 = scmp.ne.s32.totalorder %s287, %s290
    %p296 = scmp.eq.s32.totalorder %s20, 0
    %p297 = por %p295, %p296
    %p298 = scmp.ne.s32.totalorder %s287, %s290
    %p299 = scmp.eq.s32.totalorder %s25, 1
    %p300 = por %p298, %p299
    %p301 = scmp.ne.s32.totalorder %s290, %s291
    %p302 = scmp.eq.s32.totalorder %s25, 0
    %p303 = por %p301, %p302
    %p304 = scmp.ne.s32.totalorder %s290, %s291
    %p305 = scmp.eq.s32.totalorder %s26, 1
    %p306 = por %p304, %p305
    %p308 = scmp.ne.s32.totalorder %s291, %s307
    %p309 = scmp.eq.s32.totalorder %s26, 0
    %p310 = por %p308, %p309
    %p311 = scmp.le.s32.totalorder 1, %s20
    %p312 = scmp.lt.s32.totalorder %s20, 3
    %p313 = pnand %p311, %p312
    %p314 = pneg %p313
    // Predicated region
    $region9: #{_lambda_.2} parent=5 // pred_check
      _
    $region10: #{_lambda_.2} parent=5 // pred_check_branch
      %316 = sbr.rel (%p313) target = $region12
    $region11: #{_lambda_.2} parent=5 // pred_region
      %s317 = ssub.s32 %s20, 1
      // Predicated region
      $region13: #{_lambda_.2} parent=11 // pred_check
        %p318 = pneg %p67
      $region14: #{_lambda_.2} parent=11 // pred_check_branch
        %320 = sbr.rel (%p318) target = $region16
      $region15: #{_lambda_.2} parent=11 // pred_region
        _
      $region16: #{_lambda_.2} parent=11 // pred_fallthru
        _
      // Predicated region
      $region17: #{_lambda_.2} parent=11 // pred_check
        %p321 = pneg %p88
      $region18: #{_lambda_.2} parent=11 // pred_check_branch
        %323 = sbr.rel (%p321) target = $region20
      $region19: #{_lambda_.2} parent=11 // pred_region
        _
      $region20: #{_lambda_.2} parent=11 // pred_fallthru
        _
      // Predicated region
      $region21: #{_lambda_.2} parent=11 // pred_check
        %p324 = pneg %p109
      $region22: #{_lambda_.2} parent=11 // pred_check_branch
        %326 = sbr.rel (%p324) target = $region24
      $region23: #{_lambda_.2} parent=11 // pred_region
        _
      $region24: #{_lambda_.2} parent=11 // pred_fallthru
        _
      // Predicated region
      $region25: #{_lambda_.2} parent=11 // pred_check
        %p327 = pneg %p130
      $region26: #{_lambda_.2} parent=11 // pred_check_branch
        %329 = sbr.rel (%p327) target = $region28
      $region27: #{_lambda_.2} parent=11 // pred_region
        _
      $region28: #{_lambda_.2} parent=11 // pred_fallthru
        _
      // Predicated region
      $region29: #{_lambda_.2} parent=11 // pred_check
        %p330 = pneg %p151
      $region30: #{_lambda_.2} parent=11 // pred_check_branch
        %332 = sbr.rel (%p330) target = $region32
      $region31: #{_lambda_.2} parent=11 // pred_region
        _
      $region32: #{_lambda_.2} parent=11 // pred_fallthru
        _
      // Predicated region
      $region33: #{_lambda_.2} parent=11 // pred_check
        %p333 = pneg %p172
      $region34: #{_lambda_.2} parent=11 // pred_check_branch
        %335 = sbr.rel (%p333) target = $region36
      $region35: #{_lambda_.2} parent=11 // pred_region
        _
      $region36: #{_lambda_.2} parent=11 // pred_fallthru
        _
      // Predicated region
      $region37: #{_lambda_.2} parent=11 // pred_check
        %p336 = pneg %p193
      $region38: #{_lambda_.2} parent=11 // pred_check_branch
        %338 = sbr.rel (%p336) target = $region40
      $region39: #{_lambda_.2} parent=11 // pred_region
        _
      $region40: #{_lambda_.2} parent=11 // pred_fallthru
        _
      // Predicated region
      $region41: #{_lambda_.2} parent=11 // pred_check
        %p339 = pneg %p214
      $region42: #{_lambda_.2} parent=11 // pred_check_branch
        %341 = sbr.rel (%p339) target = $region44
      $region43: #{_lambda_.2} parent=11 // pred_region
        _
      $region44: #{_lambda_.2} parent=11 // pred_fallthru
        _
      // Predicated region
      $region45: #{_lambda_.2} parent=11 // pred_check
        %p342 = pneg %p235
      $region46: #{_lambda_.2} parent=11 // pred_check_branch
        %344 = sbr.rel (%p342) target = $region48
      $region47: #{_lambda_.2} parent=11 // pred_region
        _
      $region48: #{_lambda_.2} parent=11 // pred_fallthru
        _
      // Predicated region
      $region49: #{_lambda_.2} parent=11 // pred_check
        %p345 = pneg %p256
      $region50: #{_lambda_.2} parent=11 // pred_check_branch
        %347 = sbr.rel (%p345) target = $region52
      $region51: #{_lambda_.2} parent=11 // pred_region
        _
      $region52: #{_lambda_.2} parent=11 // pred_fallthru
        _
      // Predicated region
      $region53: #{_lambda_.2} parent=11 // pred_check
        %p348 = pneg %p277
      $region54: #{_lambda_.2} parent=11 // pred_check_branch
        %350 = sbr.rel (%p348) target = $region56
      $region55: #{_lambda_.2} parent=11 // pred_region
        _
      $region56: #{_lambda_.2} parent=11 // pred_fallthru
        _
    $region12: #{_lambda_.2} parent=5 // pred_fallthru
      _
    %p351 = scmp.lt.s32.totalorder %s20, 2
    // Predicated region
    $region57: #{_lambda_.2} parent=5 // pred_check
      %p352 = pneg %p351
    $region58: #{_lambda_.2} parent=5 // pred_check_branch
      %354 = sbr.rel (%p352) target = $region60
    $region59: #{_lambda_.2} parent=5 // pred_region
      // Predicated region
      $region61: #{_lambda_.2} parent=59 // pred_check
        %p355 = pneg %p40
      $region62: #{_lambda_.2} parent=59 // pred_check_branch
        %357 = sbr.rel (%p355) target = $region64
      $region63: #{_lambda_.2} parent=59 // pred_region
        %p358 = scmp.lt.s32.totalorder %s20, 1
        %s359 = scalar_select %p358, %s20, 1
        %s360 = smul.addr %s359, 32
        %s361 = smul.addr %s360, 8
        %s362 = scalar_lea.vmem %s0, %s361
      $region64: #{_lambda_.2} parent=59 // pred_fallthru
        _
    $region60: #{_lambda_.2} parent=5 // pred_fallthru
      _
    %p363 = scmp.le.s32.totalorder 1, %s20
    %p364 = scmp.lt.s32.totalorder %s20, 3
    %p365 = pnand %p363, %p364
    %p366 = pneg %p365
    // Predicated region
    $region65: #{_lambda_.2} parent=5 // pred_check
      _
    $region66: #{_lambda_.2} parent=5 // pred_check_branch
      %368 = sbr.rel (%p365) target = $region68
    $region67: #{_lambda_.2} parent=5 // pred_region
      %s369 = ssub.s32 %s20, 1
      %p370 = scmp.lt.s32.totalorder %s25, 1
      %s371 = scalar_select %p370, %s25, 1
      %s372 = smul.addr %s371, 32
      %s373 = smul.addr %s372, 8
      %s374 = scalar_lea.vmem %s0, %s373
      %p375 = pneg %p46
      %p376 = pneg %p43
      %p377 = pneg %p67
      %p378 = pneg %p64
      %p379 = pneg %p88
      %p380 = pneg %p85
      %p381 = pneg %p109
      %p382 = pneg %p106
      %p383 = pneg %p130
      %p384 = pneg %p127
      %p385 = pneg %p151
      %p386 = pneg %p148
      %p387 = pneg %p172
      %p388 = pneg %p169
      %p389 = pneg %p193
      %p390 = pneg %p190
      %p391 = pneg %p214
      %p392 = pneg %p211
      %p393 = pneg %p235
      %p394 = pneg %p232
      %p395 = pneg %p256
      %p396 = pneg %p253
      %p397 = pneg %p277
      %p398 = pneg %p274
      %p399 = pneg %p303
      %p400 = pneg %p300
      %p401 = scmp.lt.s32.totalorder %s25, 1
      %s402 = scalar_select %p401, %s25, 1
      %s403 = smul.addr %s402, 32
      %s404 = smul.addr %s403, 8
      %s405 = scalar_lea.vmem %s12, %s404
      %p406 = scmp.lt.s32.totalorder %s25, 1
      %s407 = scalar_select %p406, %s25, 1
      %s408 = smul.addr %s407, 32
      %s409 = smul.addr %s408, 8
      %s410 = scalar_lea.vmem %s0, %s409
      %p411 = scmp.lt.s32.totalorder %s25, 1
      %s412 = scalar_select %p411, %s25, 1
      %s413 = smul.addr %s412, 32
      %s414 = smul.addr %s413, 8
      %s415 = scalar_lea.vmem %s12, %s414
      %v416 = vld [vmem:[%s410] sm:$0xff]
      %v417 = vld [vmem:[%s410 + $0x8] sm:$0xff]
      %v418 = vld [vmem:[%s410 + $0x10] sm:$0xff]
      %v419 = vld [vmem:[%s410 + $0x18] sm:$0xff]
      %v420 = vld [vmem:[%s410 + $0x20] sm:$0xff]
      %v421 = vld [vmem:[%s410 + $0x28] sm:$0xff]
      %v422 = vld [vmem:[%s410 + $0x30] sm:$0xff]
      %v423 = vld [vmem:[%s410 + $0x38] sm:$0xff]
      %v424 = vld [vmem:[%s410 + $0x40] sm:$0xff]
      %v425 = vld [vmem:[%s410 + $0x48] sm:$0xff]
      %v426 = vld [vmem:[%s410 + $0x50] sm:$0xff]
      %v427 = vld [vmem:[%s410 + $0x58] sm:$0xff]
      %v428 = vld [vmem:[%s410 + $0x60] sm:$0xff]
      %v429 = vld [vmem:[%s410 + $0x68] sm:$0xff]
      %v430 = vld [vmem:[%s410 + $0x70] sm:$0xff]
      %v431 = vld [vmem:[%s410 + $0x78] sm:$0xff]
      %v432 = vld [vmem:[%s410 + $0x80] sm:$0xff]
      %v433 = vld [vmem:[%s410 + $0x88] sm:$0xff]
      %v434 = vld [vmem:[%s410 + $0x90] sm:$0xff]
      %v435 = vld [vmem:[%s410 + $0x98] sm:$0xff]
      %v436 = vld [vmem:[%s410 + $0xa0] sm:$0xff]
      %v437 = vld [vmem:[%s410 + $0xa8] sm:$0xff]
      %v438 = vld [vmem:[%s410 + $0xb0] sm:$0xff]
      %v439 = vld [vmem:[%s410 + $0xb8] sm:$0xff]
      %v440 = vld [vmem:[%s410 + $0xc0] sm:$0xff]
      %v441 = vld [vmem:[%s410 + $0xc8] sm:$0xff]
      %v442 = vld [vmem:[%s410 + $0xd0] sm:$0xff]
      %v443 = vld [vmem:[%s410 + $0xd8] sm:$0xff]
      %v444 = vld [vmem:[%s410 + $0xe0] sm:$0xff]
      %v445 = vld [vmem:[%s410 + $0xe8] sm:$0xff]
      %v446 = vld [vmem:[%s410 + $0xf0] sm:$0xff]
      %v447 = vld [vmem:[%s410 + $0xf8] sm:$0xff]
      %448 = vst [vmem:[#allocation2] sm:$0xff] 0.0
      %449 = vst [vmem:[#allocation2 + $0x8] sm:$0xff] 0.0
      %450 = vst [vmem:[#allocation2 + $0x10] sm:$0x3] 0.0
      %451 = vst [vmem:[#allocation2 + $0x18] sm:$0xff] 0.0
      %452 = vst [vmem:[#allocation2 + $0x20] sm:$0xff] 0.0
      %453 = vst [vmem:[#allocation2 + $0x28] sm:$0x3] 0.0
      %454 = vst [vmem:[#allocation2 + $0x30] sm:$0xff] 0.0
      %455 = vst [vmem:[#allocation2 + $0x38] sm:$0xff] 0.0
      %456 = vst [vmem:[#allocation2 + $0x40] sm:$0x3] 0.0
      %457 = vst [vmem:[#allocation2 + $0x48] sm:$0xff] 0.0
      %458 = vst [vmem:[#allocation2 + $0x50] sm:$0xff] 0.0
      %459 = vst [vmem:[#allocation2 + $0x58] sm:$0x3] 0.0
      %460 = vst [vmem:[#allocation2 + $0x60] sm:$0xff] 0.0
      %461 = vst [vmem:[#allocation2 + $0x68] sm:$0xff] 0.0
      %462 = vst [vmem:[#allocation2 + $0x70] sm:$0x3] 0.0
      %463 = vst [vmem:[#allocation2 + $0x78] sm:$0xff] 0.0
      %464 = vst [vmem:[#allocation2 + $0x80] sm:$0xff] 0.0
      %465 = vst [vmem:[#allocation2 + $0x88] sm:$0x3] 0.0
      %466 = vst [vmem:[#allocation2 + $0x90] sm:$0xff] 0.0
      %467 = vst [vmem:[#allocation2 + $0x98] sm:$0xff] 0.0
      %468 = vst [vmem:[#allocation2 + $0xa0] sm:$0x3] 0.0
      %469 = vst [vmem:[#allocation2 + $0xa8] sm:$0xff] 0.0
      %470 = vst [vmem:[#allocation2 + $0xb0] sm:$0xff] 0.0
      %471 = vst [vmem:[#allocation2 + $0xb8] sm:$0x3] 0.0
      %472 = vst [vmem:[#allocation2 + $0xc0] sm:$0xff] 0.0
      %473 = vst [vmem:[#allocation2 + $0xc8] sm:$0xff] 0.0
      %474 = vst [vmem:[#allocation2 + $0xd0] sm:$0x3] 0.0
      %475 = vst [vmem:[#allocation2 + $0xd8] sm:$0xff] 0.0
      %476 = vst [vmem:[#allocation2 + $0xe0] sm:$0xff] 0.0
      %477 = vst [vmem:[#allocation2 + $0xe8] sm:$0x3] 0.0
      %478 = vst [vmem:[#allocation2 + $0xf0] sm:$0xff] 0.0
      %479 = vst [vmem:[#allocation2 + $0xf8] sm:$0xff] 0.0
      %480 = vst [vmem:[#allocation2 + $0x100] sm:$0x3] 0.0
      %481 = vst [vmem:[#allocation2 + $0x108] sm:$0xff] 0.0
      %482 = vst [vmem:[#allocation2 + $0x110] sm:$0xff] 0.0
      %483 = vst [vmem:[#allocation2 + $0x118] sm:$0x3] 0.0
      %484 = vst [vmem:[#allocation2 + $0x120] sm:$0xff] 0.0
      %485 = vst [vmem:[#allocation2 + $0x128] sm:$0xff] 0.0
      %486 = vst [vmem:[#allocation2 + $0x130] sm:$0x3] 0.0
      %487 = vst [vmem:[#allocation2 + $0x138] sm:$0xff] 0.0
      %488 = vst [vmem:[#allocation2 + $0x140] sm:$0xff] 0.0
      %489 = vst [vmem:[#allocation2 + $0x148] sm:$0x3] 0.0
      %490 = vst [vmem:[#allocation2 + $0x150] sm:$0xff] 0.0
      %491 = vst [vmem:[#allocation2 + $0x158] sm:$0xff] 0.0
      %492 = vst [vmem:[#allocation2 + $0x160] sm:$0x3] 0.0
      %493 = vst [vmem:[#allocation2 + $0x168] sm:$0xff] 0.0
      %494 = vst [vmem:[#allocation2 + $0x170] sm:$0xff] 0.0
      %495 = vst [vmem:[#allocation2 + $0x178] sm:$0x3] 0.0
      %496 = vst [vmem:[#allocation2 + $0x180] sm:$0xff] 0.0
      %497 = vst [vmem:[#allocation2 + $0x188] sm:$0xff] 0.0
      %498 = vst [vmem:[#allocation2 + $0x190] sm:$0x3] 0.0
      %499 = vst [vmem:[#allocation2 + $0x198] sm:$0xff] 0.0
      %500 = vst [vmem:[#allocation2 + $0x1a0] sm:$0xff] 0.0
      %501 = vst [vmem:[#allocation2 + $0x1a8] sm:$0x3] 0.0
      %v502 = vmax.f32 %v416, 0.0
      %v503 = vmax.f32 %v417, 0.0
      %v504 = vmax.f32 %v418, 0.0
      %v505 = vmax.f32 %v419, 0.0
      %v506 = vmax.f32 %v420, 0.0
      %v507 = vmax.f32 %v421, 0.0
      %v508 = vmax.f32 %v422, 0.0
      %v509 = vmax.f32 %v423, 0.0
      %v510 = vmax.f32 %v424, 0.0
      %v511 = vmax.f32 %v425, 0.0
      %v512 = vmax.f32 %v426, 0.0
      %v513 = vmax.f32 %v427, 0.0
      %v514 = vmax.f32 %v428, 0.0
      %v515 = vmax.f32 %v429, 0.0
      %v516 = vmax.f32 %v430, 0.0
      %v517 = vmax.f32 %v431, 0.0
      %v518 = vmax.f32 %v432, 0.0
      %v519 = vmax.f32 %v433, 0.0
      %v520 = vmax.f32 %v434, 0.0
      %v521 = vmax.f32 %v435, 0.0
      %v522 = vmax.f32 %v436, 0.0
      %v523 = vmax.f32 %v437, 0.0
      %v524 = vmax.f32 %v438, 0.0
      %v525 = vmax.f32 %v439, 0.0
      %v526 = vmax.f32 %v440, 0.0
      %v527 = vmax.f32 %v441, 0.0
      %v528 = vmax.f32 %v442, 0.0
      %v529 = vmax.f32 %v443, 0.0
      %v530 = vmax.f32 %v444, 0.0
      %v531 = vmax.f32 %v445, 0.0
      %v532 = vmax.f32 %v446, 0.0
      %v533 = vmax.f32 %v447, 0.0
      %v534 = vmul.f32 %v502, 1.7128586
      %v535 = vmul.f32 %v503, 1.7128586
      %v536 = vmul.f32 %v504, 1.7128586
      %v537 = vmul.f32 %v505, 1.7128586
      %v538 = vmul.f32 %v506, 1.7128586
      %v539 = vmul.f32 %v507, 1.7128586
      %v540 = vmul.f32 %v508, 1.7128586
      %v541 = vmul.f32 %v509, 1.7128586
      %v542 = vmul.f32 %v510, 1.7128586
      %v543 = vmul.f32 %v511, 1.7128586
      %v544 = vmul.f32 %v512, 1.7128586
      %v545 = vmul.f32 %v513, 1.7128586
      %v546 = vmul.f32 %v514, 1.7128586
      %v547 = vmul.f32 %v515, 1.7128586
      %v548 = vmul.f32 %v516, 1.7128586
      %v549 = vmul.f32 %v517, 1.7128586
      %v550 = vmul.f32 %v518, 1.7128586
      %v551 = vmul.f32 %v519, 1.7128586
      %v552 = vmul.f32 %v520, 1.7128586
      %v553 = vmul.f32 %v521, 1.7128586
      %v554 = vmul.f32 %v522, 1.7128586
      %v555 = vmul.f32 %v523, 1.7128586
      %v556 = vmul.f32 %v524, 1.7128586
      %v557 = vmul.f32 %v525, 1.7128586
      %v558 = vmul.f32 %v526, 1.7128586
      %v559 = vmul.f32 %v527, 1.7128586
      %v560 = vmul.f32 %v528, 1.7128586
      %v561 = vmul.f32 %v529, 1.7128586
      %v562 = vmul.f32 %v530, 1.7128586
      %v563 = vmul.f32 %v531, 1.7128586
      %v564 = vmul.f32 %v532, 1.7128586
      %v565 = vmul.f32 %v533, 1.7128586
      %s566 = scalar_lea.vmem [#allocation2], 24
      %567 = vst [vmem:[%s566 + $0x1] sm:$0xff] %v534
      %568 = vst [vmem:[%s566 + $0x9] sm:$0xff] %v535
      %s569 = scalar_lea.vmem [#allocation2], 48
      %570 = vst [vmem:[%s569 + $0x1] sm:$0xff] %v536
      %571 = vst [vmem:[%s569 + $0x9] sm:$0xff] %v537
      %s572 = scalar_lea.vmem [#allocation2], 72
      %573 = vst [vmem:[%s572 + $0x1] sm:$0xff] %v538
      %574 = vst [vmem:[%s572 + $0x9] sm:$0xff] %v539
      %s575 = scalar_lea.vmem [#allocation2], 96
      %576 = vst [vmem:[%s575 + $0x1] sm:$0xff] %v540
      %577 = vst [vmem:[%s575 + $0x9] sm:$0xff] %v541
      %s578 = scalar_lea.vmem [#allocation2], 120
      %579 = vst [vmem:[%s578 + $0x1] sm:$0xff] %v542
      %580 = vst [vmem:[%s578 + $0x9] sm:$0xff] %v543
      %s581 = scalar_lea.vmem [#allocation2], 144
      %582 = vst [vmem:[%s581 + $0x1] sm:$0xff] %v544
      %583 = vst [vmem:[%s581 + $0x9] sm:$0xff] %v545
      %s584 = scalar_lea.vmem [#allocation2], 168
      %585 = vst [vmem:[%s584 + $0x1] sm:$0xff] %v546
      %586 = vst [vmem:[%s584 + $0x9] sm:$0xff] %v547
      %s587 = scalar_lea.vmem [#allocation2], 192
      %588 = vst [vmem:[%s587 + $0x1] sm:$0xff] %v548
      %589 = vst [vmem:[%s587 + $0x9] sm:$0xff] %v549
      %s590 = scalar_lea.vmem [#allocation2], 216
      %591 = vst [vmem:[%s590 + $0x1] sm:$0xff] %v550
      %592 = vst [vmem:[%s590 + $0x9] sm:$0xff] %v551
      %s593 = scalar_lea.vmem [#allocation2], 240
      %594 = vst [vmem:[%s593 + $0x1] sm:$0xff] %v552
      %595 = vst [vmem:[%s593 + $0x9] sm:$0xff] %v553
      %s596 = scalar_lea.vmem [#allocation2], 264
      %597 = vst [vmem:[%s596 + $0x1] sm:$0xff] %v554
      %598 = vst [vmem:[%s596 + $0x9] sm:$0xff] %v555
      %s599 = scalar_lea.vmem [#allocation2], 288
      %600 = vst [vmem:[%s599 + $0x1] sm:$0xff] %v556
      %601 = vst [vmem:[%s599 + $0x9] sm:$0xff] %v557
      %s602 = scalar_lea.vmem [#allocation2], 312
      %603 = vst [vmem:[%s602 + $0x1] sm:$0xff] %v558
      %604 = vst [vmem:[%s602 + $0x9] sm:$0xff] %v559
      %s605 = scalar_lea.vmem [#allocation2], 336
      %606 = vst [vmem:[%s605 + $0x1] sm:$0xff] %v560
      %607 = vst [vmem:[%s605 + $0x9] sm:$0xff] %v561
      %s608 = scalar_lea.vmem [#allocation2], 360
      %609 = vst [vmem:[%s608 + $0x1] sm:$0xff] %v562
      %610 = vst [vmem:[%s608 + $0x9] sm:$0xff] %v563
      %s611 = scalar_lea.vmem [#allocation2], 384
      %612 = vst [vmem:[%s611 + $0x1] sm:$0xff] %v564
      %613 = vst [vmem:[%s611 + $0x9] sm:$0xff] %v565
      %v614 = vld [vmem:[%s2] sm:$0x1]
      %v615 = vld [vmem:[#allocation2] sm:$0xff]
      %v616 = vld [vmem:[#allocation2 + $0x8] sm:$0xff]
      %v617 = vld [vmem:[#allocation2 + $0x18] sm:$0xff]
      %v618 = vld [vmem:[#allocation2 + $0x20] sm:$0xff]
      %v619 = vld [vmem:[#allocation2 + $0x30] sm:$0xff]
      %v620 = vld [vmem:[#allocation2 + $0x38] sm:$0xff]
      %v621 = vld [vmem:[#allocation2 + $0x48] sm:$0xff]
      %v622 = vld [vmem:[#allocation2 + $0x50] sm:$0xff]
      %v623 = vld [vmem:[#allocation2 + $0x60] sm:$0xff]
      %v624 = vld [vmem:[#allocation2 + $0x68] sm:$0xff]
      %v625 = vld [vmem:[#allocation2 + $0x78] sm:$0xff]
      %v626 = vld [vmem:[#allocation2 + $0x80] sm:$0xff]
      %v627 = vld [vmem:[#allocation2 + $0x90] sm:$0xff]
      %v628 = vld [vmem:[#allocation2 + $0x98] sm:$0xff]
      %v629 = vld [vmem:[#allocation2 + $0xa8] sm:$0xff]
      %v630 = vld [vmem:[#allocation2 + $0xb0] sm:$0xff]
      %v631 = vld [vmem:[#allocation2 + $0xc0] sm:$0xff]
      %v632 = vld [vmem:[#allocation2 + $0xc8] sm:$0xff]
      %v633 = vld [vmem:[#allocation2 + $0xd8] sm:$0xff]
      %v634 = vld [vmem:[#allocation2 + $0xe0] sm:$0xff]
      %v635 = vld [vmem:[#allocation2 + $0xf0] sm:$0xff]
      %v636 = vld [vmem:[#allocation2 + $0xf8] sm:$0xff]
      %v637 = vld [vmem:[#allocation2 + $0x108] sm:$0xff]
      %v638 = vld [vmem:[#allocation2 + $0x110] sm:$0xff]
      %v639 = vld [vmem:[#allocation2 + $0x120] sm:$0xff]
      %v640 = vld [vmem:[#allocation2 + $0x128] sm:$0xff]
      %v641 = vld [vmem:[#allocation2 + $0x138] sm:$0xff]
      %v642 = vld [vmem:[#allocation2 + $0x140] sm:$0xff]
      %v643 = vld [vmem:[#allocation2 + $0x150] sm:$0xff]
      %v644 = vld [vmem:[#allocation2 + $0x158] sm:$0xff]
      %v645 = vld [vmem:[#allocation2 + $0x168] sm:$0xff]
      %v646 = vld [vmem:[#allocation2 + $0x170] sm:$0xff]
      %v647 = vld [vmem:[#allocation2 + $0x1] sm:$0xff]
      %v648 = vld [vmem:[#allocation2 + $0x9] sm:$0xff]
      %v649 = vld [vmem:[#allocation2 + $0x19] sm:$0xff]
      %v650 = vld [vmem:[#allocation2 + $0x21] sm:$0xff]
      %v651 = vld [vmem:[#allocation2 + $0x31] sm:$0xff]
      %v652 = vld [vmem:[#allocation2 + $0x39] sm:$0xff]
      %v653 = vld [vmem:[#allocation2 + $0x49] sm:$0xff]
      %v654 = vld [vmem:[#allocation2 + $0x51] sm:$0xff]
      %v655 = vld [vmem:[#allocation2 + $0x61] sm:$0xff]
      %v656 = vld [vmem:[#allocation2 + $0x69] sm:$0xff]
      %v657 = vld [vmem:[#allocation2 + $0x79] sm:$0xff]
      %v658 = vld [vmem:[#allocation2 + $0x81] sm:$0xff]
      %v659 = vld [vmem:[#allocation2 + $0x91] sm:$0xff]
      %v660 = vld [vmem:[#allocation2 + $0x99] sm:$0xff]
      %v661 = vld [vmem:[#allocation2 + $0xa9] sm:$0xff]
      %v662 = vld [vmem:[#allocation2 + $0xb1] sm:$0xff]
      %v663 = vld [vmem:[#allocation2 + $0xc1] sm:$0xff]
      %v664 = vld [vmem:[#allocation2 + $0xc9] sm:$0xff]
      %v665 = vld [vmem:[#allocation2 + $0xd9] sm:$0xff]
      %v666 = vld [vmem:[#allocation2 + $0xe1] sm:$0xff]
      %v667 = vld [vmem:[#allocation2 + $0xf1] sm:$0xff]
      %v668 = vld [vmem:[#allocation2 + $0xf9] sm:$0xff]
      %v669 = vld [vmem:[#allocation2 + $0x109] sm:$0xff]
      %v670 = vld [vmem:[#allocation2 + $0x111] sm:$0xff]
      %v671 = vld [vmem:[#allocation2 + $0x121] sm:$0xff]
      %v672 = vld [vmem:[#allocation2 + $0x129] sm:$0xff]
      %v673 = vld [vmem:[#allocation2 + $0x139] sm:$0xff]
      %v674 = vld [vmem:[#allocation2 + $0x141] sm:$0xff]
      %v675 = vld [vmem:[#allocation2 + $0x151] sm:$0xff]
      %v676 = vld [vmem:[#allocation2 + $0x159] sm:$0xff]
      %v677 = vld [vmem:[#allocation2 + $0x169] sm:$0xff]
      %v678 = vld [vmem:[#allocation2 + $0x171] sm:$0xff]
      %v679 = vld [vmem:[#allocation2 + $0x2] sm:$0xff]
      %v680 = vld [vmem:[#allocation2 + $0xa] sm:$0xff]
      %v681 = vld [vmem:[#allocation2 + $0x1a] sm:$0xff]
      %v682 = vld [vmem:[#allocation2 + $0x22] sm:$0xff]
      %v683 = vld [vmem:[#allocation2 + $0x32] sm:$0xff]
      %v684 = vld [vmem:[#allocation2 + $0x3a] sm:$0xff]
      %v685 = vld [vmem:[#allocation2 + $0x4a] sm:$0xff]
      %v686 = vld [vmem:[#allocation2 + $0x52] sm:$0xff]
      %v687 = vld [vmem:[#allocation2 + $0x62] sm:$0xff]
      %v688 = vld [vmem:[#allocation2 + $0x6a] sm:$0xff]
      %v689 = vld [vmem:[#allocation2 + $0x7a] sm:$0xff]
      %v690 = vld [vmem:[#allocation2 + $0x82] sm:$0xff]
      %v691 = vld [vmem:[#allocation2 + $0x92] sm:$0xff]
      %v692 = vld [vmem:[#allocation2 + $0x9a] sm:$0xff]
      %v693 = vld [vmem:[#allocation2 + $0xaa] sm:$0xff]
      %v694 = vld [vmem:[#allocation2 + $0xb2] sm:$0xff]
      %v695 = vld [vmem:[#allocation2 + $0xc2] sm:$0xff]
      %v696 = vld [vmem:[#allocation2 + $0xca] sm:$0xff]
      %v697 = vld [vmem:[#allocation2 + $0xda] sm:$0xff]
      %v698 = vld [vmem:[#allocation2 + $0xe2] sm:$0xff]
      %v699 = vld [vmem:[#allocation2 + $0xf2] sm:$0xff]
      %v700 = vld [vmem:[#allocation2 + $0xfa] sm:$0xff]
      %v701 = vld [vmem:[#allocation2 + $0x10a] sm:$0xff]
      %v702 = vld [vmem:[#allocation2 + $0x112] sm:$0xff]
      %v703 = vld [vmem:[#allocation2 + $0x122] sm:$0xff]
      %v704 = vld [vmem:[#allocation2 + $0x12a] sm:$0xff]
      %v705 = vld [vmem:[#allocation2 + $0x13a] sm:$0xff]
      %v706 = vld [vmem:[#allocation2 + $0x142] sm:$0xff]
      %v707 = vld [vmem:[#allocation2 + $0x152] sm:$0xff]
      %v708 = vld [vmem:[#allocation2 + $0x15a] sm:$0xff]
      %v709 = vld [vmem:[#allocation2 + $0x16a] sm:$0xff]
      %v710 = vld [vmem:[#allocation2 + $0x172] sm:$0xff]
      %v711 = vld [vmem:[%s566] sm:$0xff]
      %v712 = vld [vmem:[%s566 + $0x8] sm:$0xff]
      %v713 = vld [vmem:[%s566 + $0x18] sm:$0xff]
      %v714 = vld [vmem:[%s566 + $0x20] sm:$0xff]
      %v715 = vld [vmem:[%s566 + $0x30] sm:$0xff]
      %v716 = vld [vmem:[%s566 + $0x38] sm:$0xff]
      %v717 = vld [vmem:[%s566 + $0x48] sm:$0xff]
      %v718 = vld [vmem:[%s566 + $0x50] sm:$0xff]
      %v719 = vld [vmem:[%s566 + $0x60] sm:$0xff]
      %v720 = vld [vmem:[%s566 + $0x68] sm:$0xff]
      %v721 = vld [vmem:[%s566 + $0x78] sm:$0xff]
      %v722 = vld [vmem:[%s566 + $0x80] sm:$0xff]
      %v723 = vld [vmem:[%s566 + $0x90] sm:$0xff]
      %v724 = vld [vmem:[%s566 + $0x98] sm:$0xff]
      %v725 = vld [vmem:[%s566 + $0xa8] sm:$0xff]
      %v726 = vld [vmem:[%s566 + $0xb0] sm:$0xff]
      %v727 = vld [vmem:[%s566 + $0xc0] sm:$0xff]
      %v728 = vld [vmem:[%s566 + $0xc8] sm:$0xff]
      %v729 = vld [vmem:[%s566 + $0xd8] sm:$0xff]
      %v730 = vld [vmem:[%s566 + $0xe0] sm:$0xff]
      %v731 = vld [vmem:[%s566 + $0xf0] sm:$0xff]
      %v732 = vld [vmem:[%s566 + $0xf8] sm:$0xff]
      %v733 = vld [vmem:[%s566 + $0x108] sm:$0xff]
      %v734 = vld [vmem:[%s566 + $0x110] sm:$0xff]
      %v735 = vld [vmem:[%s566 + $0x120] sm:$0xff]
      %v736 = vld [vmem:[%s566 + $0x128] sm:$0xff]
      %v737 = vld [vmem:[%s566 + $0x138] sm:$0xff]
      %v738 = vld [vmem:[%s566 + $0x140] sm:$0xff]
      %v739 = vld [vmem:[%s566 + $0x150] sm:$0xff]
      %v740 = vld [vmem:[%s566 + $0x158] sm:$0xff]
      %v741 = vld [vmem:[%s566 + $0x168] sm:$0xff]
      %v742 = vld [vmem:[%s566 + $0x170] sm:$0xff]
      %v743 = vld [vmem:[%s566 + $0x1] sm:$0xff]
      %v744 = vld [vmem:[%s566 + $0x9] sm:$0xff]
      %v745 = vld [vmem:[%s566 + $0x19] sm:$0xff]
      %v746 = vld [vmem:[%s566 + $0x21] sm:$0xff]
      %v747 = vld [vmem:[%s566 + $0x31] sm:$0xff]
      %v748 = vld [vmem:[%s566 + $0x39] sm:$0xff]
      %v749 = vld [vmem:[%s566 + $0x49] sm:$0xff]
      %v750 = vld [vmem:[%s566 + $0x51] sm:$0xff]
      %v751 = vld [vmem:[%s566 + $0x61] sm:$0xff]
      %v752 = vld [vmem:[%s566 + $0x69] sm:$0xff]
      %v753 = vld [vmem:[%s566 + $0x79] sm:$0xff]
      %v754 = vld [vmem:[%s566 + $0x81] sm:$0xff]
      %v755 = vld [vmem:[%s566 + $0x91] sm:$0xff]
      %v756 = vld [vmem:[%s566 + $0x99] sm:$0xff]
      %v757 = vld [vmem:[%s566 + $0xa9] sm:$0xff]
      %v758 = vld [vmem:[%s566 + $0xb1] sm:$0xff]
      %v759 = vld [vmem:[%s566 + $0xc1] sm:$0xff]
      %v760 = vld [vmem:[%s566 + $0xc9] sm:$0xff]
      %v761 = vld [vmem:[%s566 + $0xd9] sm:$0xff]
      %v762 = vld [vmem:[%s566 + $0xe1] sm:$0xff]
      %v763 = vld [vmem:[%s566 + $0xf1] sm:$0xff]
      %v764 = vld [vmem:[%s566 + $0xf9] sm:$0xff]
      %v765 = vld [vmem:[%s566 + $0x109] sm:$0xff]
      %v766 = vld [vmem:[%s566 + $0x111] sm:$0xff]
      %v767 = vld [vmem:[%s566 + $0x121] sm:$0xff]
      %v768 = vld [vmem:[%s566 + $0x129] sm:$0xff]
      %v769 = vld [vmem:[%s566 + $0x139] sm:$0xff]
      %v770 = vld [vmem:[%s566 + $0x141] sm:$0xff]
      %v771 = vld [vmem:[%s566 + $0x151] sm:$0xff]
      %v772 = vld [vmem:[%s566 + $0x159] sm:$0xff]
      %v773 = vld [vmem:[%s566 + $0x169] sm:$0xff]
      %v774 = vld [vmem:[%s566 + $0x171] sm:$0xff]
      %v775 = vld [vmem:[%s566 + $0x2] sm:$0xff]
      %v776 = vld [vmem:[%s566 + $0xa] sm:$0xff]
      %v777 = vld [vmem:[%s566 + $0x1a] sm:$0xff]
      %v778 = vld [vmem:[%s566 + $0x22] sm:$0xff]
      %v779 = vld [vmem:[%s566 + $0x32] sm:$0xff]
      %v780 = vld [vmem:[%s566 + $0x3a] sm:$0xff]
      %v781 = vld [vmem:[%s566 + $0x4a] sm:$0xff]
      %v782 = vld [vmem:[%s566 + $0x52] sm:$0xff]
      %v783 = vld [vmem:[%s566 + $0x62] sm:$0xff]
      %v784 = vld [vmem:[%s566 + $0x6a] sm:$0xff]
      %v785 = vld [vmem:[%s566 + $0x7a] sm:$0xff]
      %v786 = vld [vmem:[%s566 + $0x82] sm:$0xff]
      %v787 = vld [vmem:[%s566 + $0x92] sm:$0xff]
      %v788 = vld [vmem:[%s566 + $0x9a] sm:$0xff]
      %v789 = vld [vmem:[%s566 + $0xaa] sm:$0xff]
      %v790 = vld [vmem:[%s566 + $0xb2] sm:$0xff]
      %v791 = vld [vmem:[%s566 + $0xc2] sm:$0xff]
      %v792 = vld [vmem:[%s566 + $0xca] sm:$0xff]
      %v793 = vld [vmem:[%s566 + $0xda] sm:$0xff]
      %v794 = vld [vmem:[%s566 + $0xe2] sm:$0xff]
      %v795 = vld [vmem:[%s566 + $0xf2] sm:$0xff]
      %v796 = vld [vmem:[%s566 + $0xfa] sm:$0xff]
      %v797 = vld [vmem:[%s566 + $0x10a] sm:$0xff]
      %v798 = vld [vmem:[%s566 + $0x112] sm:$0xff]
      %v799 = vld [vmem:[%s566 + $0x122] sm:$0xff]
      %v800 = vld [vmem:[%s566 + $0x12a] sm:$0xff]
      %v801 = vld [vmem:[%s566 + $0x13a] sm:$0xff]
      %v802 = vld [vmem:[%s566 + $0x142] sm:$0xff]
      %v803 = vld [vmem:[%s566 + $0x152] sm:$0xff]
      %v804 = vld [vmem:[%s566 + $0x15a] sm:$0xff]
      %v805 = vld [vmem:[%s566 + $0x16a] sm:$0xff]
      %v806 = vld [vmem:[%s566 + $0x172] sm:$0xff]
      %v807 = vld [vmem:[%s569] sm:$0xff]
      %v808 = vld [vmem:[%s569 + $0x8] sm:$0xff]
      %v809 = vld [vmem:[%s569 + $0x18] sm:$0xff]
      %v810 = vld [vmem:[%s569 + $0x20] sm:$0xff]
      %v811 = vld [vmem:[%s569 + $0x30] sm:$0xff]
      %v812 = vld [vmem:[%s569 + $0x38] sm:$0xff]
      %v813 = vld [vmem:[%s569 + $0x48] sm:$0xff]
      %v814 = vld [vmem:[%s569 + $0x50] sm:$0xff]
      %v815 = vld [vmem:[%s569 + $0x60] sm:$0xff]
      %v816 = vld [vmem:[%s569 + $0x68] sm:$0xff]
      %v817 = vld [vmem:[%s569 + $0x78] sm:$0xff]
      %v818 = vld [vmem:[%s569 + $0x80] sm:$0xff]
      %v819 = vld [vmem:[%s569 + $0x90] sm:$0xff]
      %v820 = vld [vmem:[%s569 + $0x98] sm:$0xff]
      %v821 = vld [vmem:[%s569 + $0xa8] sm:$0xff]
      %v822 = vld [vmem:[%s569 + $0xb0] sm:$0xff]
      %v823 = vld [vmem:[%s569 + $0xc0] sm:$0xff]
      %v824 = vld [vmem:[%s569 + $0xc8] sm:$0xff]
      %v825 = vld [vmem:[%s569 + $0xd8] sm:$0xff]
      %v826 = vld [vmem:[%s569 + $0xe0] sm:$0xff]
      %v827 = vld [vmem:[%s569 + $0xf0] sm:$0xff]
      %v828 = vld [vmem:[%s569 + $0xf8] sm:$0xff]
      %v829 = vld [vmem:[%s569 + $0x108] sm:$0xff]
      %v830 = vld [vmem:[%s569 + $0x110] sm:$0xff]
      %v831 = vld [vmem:[%s569 + $0x120] sm:$0xff]
      %v832 = vld [vmem:[%s569 + $0x128] sm:$0xff]
      %v833 = vld [vmem:[%s569 + $0x138] sm:$0xff]
      %v834 = vld [vmem:[%s569 + $0x140] sm:$0xff]
      %v835 = vld [vmem:[%s569 + $0x150] sm:$0xff]
      %v836 = vld [vmem:[%s569 + $0x158] sm:$0xff]
      %v837 = vld [vmem:[%s569 + $0x168] sm:$0xff]
      %v838 = vld [vmem:[%s569 + $0x170] sm:$0xff]
      %v839 = vld [vmem:[%s569 + $0x1] sm:$0xff]
      %v840 = vld [vmem:[%s569 + $0x9] sm:$0xff]
      %v841 = vld [vmem:[%s569 + $0x19] sm:$0xff]
      %v842 = vld [vmem:[%s569 + $0x21] sm:$0xff]
      %v843 = vld [vmem:[%s569 + $0x31] sm:$0xff]
      %v844 = vld [vmem:[%s569 + $0x39] sm:$0xff]
      %v845 = vld [vmem:[%s569 + $0x49] sm:$0xff]
      %v846 = vld [vmem:[%s569 + $0x51] sm:$0xff]
      %v847 = vld [vmem:[%s569 + $0x61] sm:$0xff]
      %v848 = vld [vmem:[%s569 + $0x69] sm:$0xff]
      %v849 = vld [vmem:[%s569 + $0x79] sm:$0xff]
      %v850 = vld [vmem:[%s569 + $0x81] sm:$0xff]
      %v851 = vld [vmem:[%s569 + $0x91] sm:$0xff]
      %v852 = vld [vmem:[%s569 + $0x99] sm:$0xff]
      %v853 = vld [vmem:[%s569 + $0xa9] sm:$0xff]
      %v854 = vld [vmem:[%s569 + $0xb1] sm:$0xff]
      %v855 = vld [vmem:[%s569 + $0xc1] sm:$0xff]
      %v856 = vld [vmem:[%s569 + $0xc9] sm:$0xff]
      %v857 = vld [vmem:[%s569 + $0xd9] sm:$0xff]
      %v858 = vld [vmem:[%s569 + $0xe1] sm:$0xff]
      %v859 = vld [vmem:[%s569 + $0xf1] sm:$0xff]
      %v860 = vld [vmem:[%s569 + $0xf9] sm:$0xff]
      %v861 = vld [vmem:[%s569 + $0x109] sm:$0xff]
      %v862 = vld [vmem:[%s569 + $0x111] sm:$0xff]
      %v863 = vld [vmem:[%s569 + $0x121] sm:$0xff]
      %v864 = vld [vmem:[%s569 + $0x129] sm:$0xff]
      %v865 = vld [vmem:[%s569 + $0x139] sm:$0xff]
      %v866 = vld [vmem:[%s569 + $0x141] sm:$0xff]
      %v867 = vld [vmem:[%s569 + $0x151] sm:$0xff]
      %v868 = vld [vmem:[%s569 + $0x159] sm:$0xff]
      %v869 = vld [vmem:[%s569 + $0x169] sm:$0xff]
      %v870 = vld [vmem:[%s569 + $0x171] sm:$0xff]
      %v871 = vld [vmem:[%s569 + $0x2] sm:$0xff]
      %v872 = vld [vmem:[%s569 + $0xa] sm:$0xff]
      %v873 = vld [vmem:[%s569 + $0x1a] sm:$0xff]
      %v874 = vld [vmem:[%s569 + $0x22] sm:$0xff]
      %v875 = vld [vmem:[%s569 + $0x32] sm:$0xff]
      %v876 = vld [vmem:[%s569 + $0x3a] sm:$0xff]
      %v877 = vld [vmem:[%s569 + $0x4a] sm:$0xff]
      %v878 = vld [vmem:[%s569 + $0x52] sm:$0xff]
      %v879 = vld [vmem:[%s569 + $0x62] sm:$0xff]
      %v880 = vld [vmem:[%s569 + $0x6a] sm:$0xff]
      %v881 = vld [vmem:[%s569 + $0x7a] sm:$0xff]
      %v882 = vld [vmem:[%s569 + $0x82] sm:$0xff]
      %v883 = vld [vmem:[%s569 + $0x92] sm:$0xff]
      %v884 = vld [vmem:[%s569 + $0x9a] sm:$0xff]
      %v885 = vld [vmem:[%s569 + $0xaa] sm:$0xff]
      %v886 = vld [vmem:[%s569 + $0xb2] sm:$0xff]
      %v887 = vld [vmem:[%s569 + $0xc2] sm:$0xff]
      %v888 = vld [vmem:[%s569 + $0xca] sm:$0xff]
      %v889 = vld [vmem:[%s569 + $0xda] sm:$0xff]
      %v890 = vld [vmem:[%s569 + $0xe2] sm:$0xff]
      %v891 = vld [vmem:[%s569 + $0xf2] sm:$0xff]
      %v892 = vld [vmem:[%s569 + $0xfa] sm:$0xff]
      %v893 = vld [vmem:[%s569 + $0x10a] sm:$0xff]
      %v894 = vld [vmem:[%s569 + $0x112] sm:$0xff]
      %v895 = vld [vmem:[%s569 + $0x122] sm:$0xff]
      %v896 = vld [vmem:[%s569 + $0x12a] sm:$0xff]
      %v897 = vld [vmem:[%s569 + $0x13a] sm:$0xff]
      %v898 = vld [vmem:[%s569 + $0x142] sm:$0xff]
      %v899 = vld [vmem:[%s569 + $0x152] sm:$0xff]
      %v900 = vld [vmem:[%s569 + $0x15a] sm:$0xff]
      %v901 = vld [vmem:[%s569 + $0x16a] sm:$0xff]
      %v902 = vld [vmem:[%s569 + $0x172] sm:$0xff]
      %v903 = vld [vmem:[%s1] sm:$0xff]
      %v904 = vld [vmem:[%s1 + $0x8] sm:$0xff]
      %v905 = vld [vmem:[%s1 + $0x10] sm:$0xff]
      %v906 = vld [vmem:[%s1 + $0x18] sm:$0xff]
      %v907 = vld [vmem:[%s1 + $0x20] sm:$0xff]
      %v908 = vld [vmem:[%s1 + $0x28] sm:$0xff]
      %v909 = vld [vmem:[%s1 + $0x30] sm:$0xff]
      %v910 = vld [vmem:[%s1 + $0x38] sm:$0xff]
      %v911 = vld [vmem:[%s1 + $0x40] sm:$0xff]
      %v912 = vld [vmem:[%s1 + $0x48] sm:$0xff]
      %v913 = vld [vmem:[%s1 + $0x50] sm:$0xff]
      %v914 = vld [vmem:[%s1 + $0x58] sm:$0xff]
      %v915 = vld [vmem:[%s1 + $0x60] sm:$0xff]
      %v916 = vld [vmem:[%s1 + $0x68] sm:$0xff]
      %v917 = vld [vmem:[%s1 + $0x70] sm:$0xff]
      %v918 = vld [vmem:[%s1 + $0x78] sm:$0xff]
      %v919 = vld [vmem:[%s1 + $0x80] sm:$0xff]
      %v920 = vld [vmem:[%s1 + $0x88] sm:$0xff]
      %v921 = vld [vmem:[%s1 + $0x90] sm:$0xff]
      %v922 = vld [vmem:[%s1 + $0x98] sm:$0xff]
      %v923 = vld [vmem:[%s1 + $0xa0] sm:$0xff]
      %v924 = vld [vmem:[%s1 + $0xa8] sm:$0xff]
      %v925 = vld [vmem:[%s1 + $0xb0] sm:$0xff]
      %v926 = vld [vmem:[%s1 + $0xb8] sm:$0xff]
      %v927 = vld [vmem:[%s1 + $0xc0] sm:$0xff]
      %v928 = vld [vmem:[%s1 + $0xc8] sm:$0xff]
      %v929 = vld [vmem:[%s1 + $0xd0] sm:$0xff]
      %v930 = vld [vmem:[%s1 + $0xd8] sm:$0xff]
      %v931 = vld [vmem:[%s1 + $0xe0] sm:$0xff]
      %v932 = vld [vmem:[%s1 + $0xe8] sm:$0xff]
      %v933 = vld [vmem:[%s1 + $0xf0] sm:$0xff]
      %v934 = vld [vmem:[%s1 + $0xf8] sm:$0xff]
      %v935 = vld [vmem:[%s1 + $0x100] sm:$0xff]
      %v936 = vld [vmem:[%s1 + $0x108] sm:$0xff]
      %v937 = vld [vmem:[%s1 + $0x110] sm:$0xff]
      %v938 = vld [vmem:[%s1 + $0x118] sm:$0xff]
      %v939 = vld [vmem:[%s1 + $0x120] sm:$0xff]
      %v940 = vld [vmem:[%s1 + $0x128] sm:$0xff]
      %v941 = vld [vmem:[%s1 + $0x130] sm:$0xff]
      %v942 = vld [vmem:[%s1 + $0x138] sm:$0xff]
      %v943 = vld [vmem:[%s1 + $0x140] sm:$0xff]
      %v944 = vld [vmem:[%s1 + $0x148] sm:$0xff]
      %v945 = vld [vmem:[%s1 + $0x150] sm:$0xff]
      %v946 = vld [vmem:[%s1 + $0x158] sm:$0xff]
      %v947 = vld [vmem:[%s1 + $0x160] sm:$0xff]
      %v948 = vld [vmem:[%s1 + $0x168] sm:$0xff]
      %v949 = vld [vmem:[%s1 + $0x170] sm:$0xff]
      %v950 = vld [vmem:[%s1 + $0x178] sm:$0xff]
      %v951 = vld [vmem:[%s1 + $0x180] sm:$0xff]
      %v952 = vld [vmem:[%s1 + $0x188] sm:$0xff]
      %v953 = vld [vmem:[%s1 + $0x190] sm:$0xff]
      %v954 = vld [vmem:[%s1 + $0x198] sm:$0xff]
      %v955 = vld [vmem:[%s1 + $0x1a0] sm:$0xff]
      %v956 = vld [vmem:[%s1 + $0x1a8] sm:$0xff]
      %v957 = vld [vmem:[%s1 + $0x1b0] sm:$0xff]
      %v958 = vld [vmem:[%s1 + $0x1b8] sm:$0xff]
      %v959 = vld [vmem:[%s1 + $0x1c0] sm:$0xff]
      %v960 = vld [vmem:[%s1 + $0x1c8] sm:$0xff]
      %v961 = vld [vmem:[%s1 + $0x1d0] sm:$0xff]
      %v962 = vld [vmem:[%s1 + $0x1d8] sm:$0xff]
      %v963 = vld [vmem:[%s1 + $0x1e0] sm:$0xff]
      %v964 = vld [vmem:[%s1 + $0x1e8] sm:$0xff]
      %v965 = vld [vmem:[%s1 + $0x1f0] sm:$0xff]
      %v966 = vld [vmem:[%s1 + $0x1f8] sm:$0xff]
      %v967 = vld [vmem:[%s1 + $0x200] sm:$0xff]
      %v968 = vld [vmem:[%s1 + $0x208] sm:$0xff]
      %v969 = vld [vmem:[%s1 + $0x210] sm:$0xff]
      %v970 = vld [vmem:[%s1 + $0x218] sm:$0xff]
      %v971 = vld [vmem:[%s1 + $0x220] sm:$0xff]
      %v972 = vld [vmem:[%s1 + $0x228] sm:$0xff]
      %v973 = vld [vmem:[%s1 + $0x230] sm:$0xff]
      %v974 = vld [vmem:[%s1 + $0x238] sm:$0xff]
      %v975 = vld [vmem:[%s1 + $0x240] sm:$0xff]
      %v976 = vld [vmem:[%s1 + $0x248] sm:$0xff]
      %v977 = vld [vmem:[%s1 + $0x250] sm:$0xff]
      %v978 = vld [vmem:[%s1 + $0x258] sm:$0xff]
      %v979 = vld [vmem:[%s1 + $0x260] sm:$0xff]
      %v980 = vld [vmem:[%s1 + $0x268] sm:$0xff]
      %v981 = vld [vmem:[%s1 + $0x270] sm:$0xff]
      %v982 = vld [vmem:[%s1 + $0x278] sm:$0xff]
      %v983 = vld [vmem:[%s1 + $0x280] sm:$0xff]
      %v984 = vld [vmem:[%s1 + $0x288] sm:$0xff]
      %v985 = vld [vmem:[%s1 + $0x290] sm:$0xff]
      %v986 = vld [vmem:[%s1 + $0x298] sm:$0xff]
      %v987 = vld [vmem:[%s1 + $0x2a0] sm:$0xff]
      %v988 = vld [vmem:[%s1 + $0x2a8] sm:$0xff]
      %v989 = vld [vmem:[%s1 + $0x2b0] sm:$0xff]
      %v990 = vld [vmem:[%s1 + $0x2b8] sm:$0xff]
      %v991 = vld [vmem:[%s1 + $0x2c0] sm:$0xff]
      %v992 = vld [vmem:[%s1 + $0x2c8] sm:$0xff]
      %v993 = vld [vmem:[%s1 + $0x2d0] sm:$0xff]
      %v994 = vld [vmem:[%s1 + $0x2d8] sm:$0xff]
      %v995 = vld [vmem:[%s1 + $0x2e0] sm:$0xff]
      %v996 = vld [vmem:[%s1 + $0x2e8] sm:$0xff]
      %v997 = vld [vmem:[%s1 + $0x2f0] sm:$0xff]
      %v998 = vld [vmem:[%s1 + $0x2f8] sm:$0xff]
      %v999 = vld [vmem:[%s1 + $0x300] sm:$0xff]
      %v1000 = vld [vmem:[%s1 + $0x308] sm:$0xff]
      %v1001 = vld [vmem:[%s1 + $0x310] sm:$0xff]
      %v1002 = vld [vmem:[%s1 + $0x318] sm:$0xff]
      %v1003 = vld [vmem:[%s1 + $0x320] sm:$0xff]
      %v1004 = vld [vmem:[%s1 + $0x328] sm:$0xff]
      %v1005 = vld [vmem:[%s1 + $0x330] sm:$0xff]
      %v1006 = vld [vmem:[%s1 + $0x338] sm:$0xff]
      %v1007 = vld [vmem:[%s1 + $0x340] sm:$0xff]
      %v1008 = vld [vmem:[%s1 + $0x348] sm:$0xff]
      %v1009 = vld [vmem:[%s1 + $0x350] sm:$0xff]
      %v1010 = vld [vmem:[%s1 + $0x358] sm:$0xff]
      %v1011 = vld [vmem:[%s1 + $0x360] sm:$0xff]
      %v1012 = vld [vmem:[%s1 + $0x368] sm:$0xff]
      %v1013 = vld [vmem:[%s1 + $0x370] sm:$0xff]
      %v1014 = vld [vmem:[%s1 + $0x378] sm:$0xff]
      %v1015 = vld [vmem:[%s1 + $0x380] sm:$0xff]
      %v1016 = vld [vmem:[%s1 + $0x388] sm:$0xff]
      %v1017 = vld [vmem:[%s1 + $0x390] sm:$0xff]
      %v1018 = vld [vmem:[%s1 + $0x398] sm:$0xff]
      %v1019 = vld [vmem:[%s1 + $0x3a0] sm:$0xff]
      %v1020 = vld [vmem:[%s1 + $0x3a8] sm:$0xff]
      %v1021 = vld [vmem:[%s1 + $0x3b0] sm:$0xff]
      %v1022 = vld [vmem:[%s1 + $0x3b8] sm:$0xff]
      %v1023 = vld [vmem:[%s1 + $0x3c0] sm:$0xff]
      %v1024 = vld [vmem:[%s1 + $0x3c8] sm:$0xff]
      %v1025 = vld [vmem:[%s1 + $0x3d0] sm:$0xff]
      %v1026 = vld [vmem:[%s1 + $0x3d8] sm:$0xff]
      %v1027 = vld [vmem:[%s1 + $0x3e0] sm:$0xff]
      %v1028 = vld [vmem:[%s1 + $0x3e8] sm:$0xff]
      %v1029 = vld [vmem:[%s1 + $0x3f0] sm:$0xff]
      %v1030 = vld [vmem:[%s1 + $0x3f8] sm:$0xff]
      %v1031 = vld [vmem:[%s1 + $0x400] sm:$0xff]
      %v1032 = vld [vmem:[%s1 + $0x408] sm:$0xff]
      %v1033 = vld [vmem:[%s1 + $0x410] sm:$0xff]
      %v1034 = vld [vmem:[%s1 + $0x418] sm:$0xff]
      %v1035 = vld [vmem:[%s1 + $0x420] sm:$0xff]
      %v1036 = vld [vmem:[%s1 + $0x428] sm:$0xff]
      %v1037 = vld [vmem:[%s1 + $0x430] sm:$0xff]
      %v1038 = vld [vmem:[%s1 + $0x438] sm:$0xff]
      %v1039 = vld [vmem:[%s1 + $0x440] sm:$0xff]
      %v1040 = vld [vmem:[%s1 + $0x448] sm:$0xff]
      %v1041 = vld [vmem:[%s1 + $0x450] sm:$0xff]
      %v1042 = vld [vmem:[%s1 + $0x458] sm:$0xff]
      %v1043 = vld [vmem:[%s1 + $0x460] sm:$0xff]
      %v1044 = vld [vmem:[%s1 + $0x468] sm:$0xff]
      %v1045 = vld [vmem:[%s1 + $0x470] sm:$0xff]
      %v1046 = vld [vmem:[%s1 + $0x478] sm:$0xff]
      %v1048 = vperm.slane %v614, 0
      %1050 = vmatpush.msra.mxu0 %v918
      %1051 = vmatpush.msra.mxu0 %v917
      %1052 = vmatpush.msra.mxu0 %v916
      %1053 = vmatpush.msra.mxu0 %v915
      %1054 = vmatpush.msra.mxu0 %v914
      %1055 = vmatpush.msra.mxu0 %v913
      %1056 = vmatpush.msra.mxu0 %v912
      %1057 = vmatpush.msra.mxu0 %v911
      %1058 = vmatpush.msra.mxu0 %v910
      %1059 = vmatpush.msra.mxu0 %v909
      %1060 = vmatpush.msra.mxu0 %v908
      %1061 = vmatpush.msra.mxu0 %v907
      %1062 = vmatpush.msra.mxu0 %v906
      %1063 = vmatpush.msra.mxu0 %v905
      %1064 = vmatpush.msra.mxu0 %v904
      %1065 = vmatpush.msra.mxu0 %v903
      %1066 = vmatmul.f32.gmra.mxu0 %v615
      %v1067 = vpop.f32.mrf.mxu0
      %v1068 = vadd.f32 %v1048, %v1067
      %1069 = vmatmul.f32.gmra.mxu0 %v616
      %v1070 = vpop.f32.mrf.mxu0
      %v1071 = vadd.f32 %v1048, %v1070
      %1072 = vmatmul.f32.gmra.mxu0 %v617
      %v1073 = vpop.f32.mrf.mxu0
      %v1074 = vadd.f32 %v1048, %v1073
      %1075 = vmatmul.f32.gmra.mxu0 %v618
      %v1076 = vpop.f32.mrf.mxu0
      %v1077 = vadd.f32 %v1048, %v1076
      %1078 = vmatmul.f32.gmra.mxu0 %v619
      %v1079 = vpop.f32.mrf.mxu0
      %v1080 = vadd.f32 %v1048, %v1079
      %1081 = vmatmul.f32.gmra.mxu0 %v620
      %v1082 = vpop.f32.mrf.mxu0
      %v1083 = vadd.f32 %v1048, %v1082
      %1084 = vmatmul.f32.gmra.mxu0 %v621
      %v1085 = vpop.f32.mrf.mxu0
      %v1086 = vadd.f32 %v1048, %v1085
      %1087 = vmatmul.f32.gmra.mxu0 %v622
      %v1088 = vpop.f32.mrf.mxu0
      %v1089 = vadd.f32 %v1048, %v1088
      %1090 = vmatmul.f32.gmra.mxu0 %v623
      %v1091 = vpop.f32.mrf.mxu0
      %v1092 = vadd.f32 %v1048, %v1091
      %1093 = vmatmul.f32.gmra.mxu0 %v624
      %v1094 = vpop.f32.mrf.mxu0
      %v1095 = vadd.f32 %v1048, %v1094
      %1096 = vmatmul.f32.gmra.mxu0 %v625
      %v1097 = vpop.f32.mrf.mxu0
      %v1098 = vadd.f32 %v1048, %v1097
      %1099 = vmatmul.f32.gmra.mxu0 %v626
      %v1100 = vpop.f32.mrf.mxu0
      %v1101 = vadd.f32 %v1048, %v1100
      %1102 = vmatmul.f32.gmra.mxu0 %v627
      %v1103 = vpop.f32.mrf.mxu0
      %v1104 = vadd.f32 %v1048, %v1103
      %1105 = vmatmul.f32.gmra.mxu0 %v628
      %v1106 = vpop.f32.mrf.mxu0
      %v1107 = vadd.f32 %v1048, %v1106
      %1108 = vmatmul.f32.gmra.mxu0 %v629
      %v1109 = vpop.f32.mrf.mxu0
      %v1110 = vadd.f32 %v1048, %v1109
      %1111 = vmatmul.f32.gmra.mxu0 %v630
      %v1112 = vpop.f32.mrf.mxu0
      %v1113 = vadd.f32 %v1048, %v1112
      %1114 = vmatmul.f32.gmra.mxu0 %v631
      %v1115 = vpop.f32.mrf.mxu0
      %v1116 = vadd.f32 %v1048, %v1115
      %1117 = vmatmul.f32.gmra.mxu0 %v632
      %v1118 = vpop.f32.mrf.mxu0
      %v1119 = vadd.f32 %v1048, %v1118
      %1120 = vmatmul.f32.gmra.mxu0 %v633
      %v1121 = vpop.f32.mrf.mxu0
      %v1122 = vadd.f32 %v1048, %v1121
      %1123 = vmatmul.f32.gmra.mxu0 %v634
      %v1124 = vpop.f32.mrf.mxu0
      %v1125 = vadd.f32 %v1048, %v1124
      %1126 = vmatmul.f32.gmra.mxu0 %v635
      %v1127 = vpop.f32.mrf.mxu0
      %v1128 = vadd.f32 %v1048, %v1127
      %1129 = vmatmul.f32.gmra.mxu0 %v636
      %v1130 = vpop.f32.mrf.mxu0
      %v1131 = vadd.f32 %v1048, %v1130
      %1132 = vmatmul.f32.gmra.mxu0 %v637
      %v1133 = vpop.f32.mrf.mxu0
      %v1134 = vadd.f32 %v1048, %v1133
      %1135 = vmatmul.f32.gmra.mxu0 %v638
      %v1136 = vpop.f32.mrf.mxu0
      %v1137 = vadd.f32 %v1048, %v1136
      %1138 = vmatmul.f32.gmra.mxu0 %v639
      %v1139 = vpop.f32.mrf.mxu0
      %v1140 = vadd.f32 %v1048, %v1139
      %1141 = vmatmul.f32.gmra.mxu0 %v640
      %v1142 = vpop.f32.mrf.mxu0
      %v1143 = vadd.f32 %v1048, %v1142
      %1144 = vmatmul.f32.gmra.mxu0 %v641
      %v1145 = vpop.f32.mrf.mxu0
      %v1146 = vadd.f32 %v1048, %v1145
      %1147 = vmatmul.f32.gmra.mxu0 %v642
      %v1148 = vpop.f32.mrf.mxu0
      %v1149 = vadd.f32 %v1048, %v1148
      %1150 = vmatmul.f32.gmra.mxu0 %v643
      %v1151 = vpop.f32.mrf.mxu0
      %v1152 = vadd.f32 %v1048, %v1151
      %1153 = vmatmul.f32.gmra.mxu0 %v644
      %v1154 = vpop.f32.mrf.mxu0
      %v1155 = vadd.f32 %v1048, %v1154
      %1156 = vmatmul.f32.gmra.mxu0 %v645
      %v1157 = vpop.f32.mrf.mxu0
      %v1158 = vadd.f32 %v1048, %v1157
      %1159 = vmatmul.f32.gmra.mxu0 %v646
      %v1160 = vpop.f32.mrf.mxu0
      %v1161 = vadd.f32 %v1048, %v1160
      %1162 = vdwg.mxu0
      %1163 = vmatpush.msra.mxu0 %v934
      %1164 = vmatpush.msra.mxu0 %v933
      %1165 = vmatpush.msra.mxu0 %v932
      %1166 = vmatpush.msra.mxu0 %v931
      %1167 = vmatpush.msra.mxu0 %v930
      %1168 = vmatpush.msra.mxu0 %v929
      %1169 = vmatpush.msra.mxu0 %v928
      %1170 = vmatpush.msra.mxu0 %v927
      %1171 = vmatpush.msra.mxu0 %v926
      %1172 = vmatpush.msra.mxu0 %v925
      %1173 = vmatpush.msra.mxu0 %v924
      %1174 = vmatpush.msra.mxu0 %v923
      %1175 = vmatpush.msra.mxu0 %v922
      %1176 = vmatpush.msra.mxu0 %v921
      %1177 = vmatpush.msra.mxu0 %v920
      %1178 = vmatpush.msra.mxu0 %v919
      %1179 = vmatmul.f32.gmra.mxu0 %v647
      %v1180 = vpop.f32.mrf.mxu0
      %v1181 = vadd.f32 %v1068, %v1180
      %1182 = vmatmul.f32.gmra.mxu0 %v648
      %v1183 = vpop.f32.mrf.mxu0
      %v1184 = vadd.f32 %v1071, %v1183
      %1185 = vmatmul.f32.gmra.mxu0 %v649
      %v1186 = vpop.f32.mrf.mxu0
      %v1187 = vadd.f32 %v1074, %v1186
      %1188 = vmatmul.f32.gmra.mxu0 %v650
      %v1189 = vpop.f32.mrf.mxu0
      %v1190 = vadd.f32 %v1077, %v1189
      %1191 = vmatmul.f32.gmra.mxu0 %v651
      %v1192 = vpop.f32.mrf.mxu0
      %v1193 = vadd.f32 %v1080, %v1192
      %1194 = vmatmul.f32.gmra.mxu0 %v652
      %v1195 = vpop.f32.mrf.mxu0
      %v1196 = vadd.f32 %v1083, %v1195
      %1197 = vmatmul.f32.gmra.mxu0 %v653
      %v1198 = vpop.f32.mrf.mxu0
      %v1199 = vadd.f32 %v1086, %v1198
      %1200 = vmatmul.f32.gmra.mxu0 %v654
      %v1201 = vpop.f32.mrf.mxu0
      %v1202 = vadd.f32 %v1089, %v1201
      %1203 = vmatmul.f32.gmra.mxu0 %v655
      %v1204 = vpop.f32.mrf.mxu0
      %v1205 = vadd.f32 %v1092, %v1204
      %1206 = vmatmul.f32.gmra.mxu0 %v656
      %v1207 = vpop.f32.mrf.mxu0
      %v1208 = vadd.f32 %v1095, %v1207
      %1209 = vmatmul.f32.gmra.mxu0 %v657
      %v1210 = vpop.f32.mrf.mxu0
      %v1211 = vadd.f32 %v1098, %v1210
      %1212 = vmatmul.f32.gmra.mxu0 %v658
      %v1213 = vpop.f32.mrf.mxu0
      %v1214 = vadd.f32 %v1101, %v1213
      %1215 = vmatmul.f32.gmra.mxu0 %v659
      %v1216 = vpop.f32.mrf.mxu0
      %v1217 = vadd.f32 %v1104, %v1216
      %1218 = vmatmul.f32.gmra.mxu0 %v660
      %v1219 = vpop.f32.mrf.mxu0
      %v1220 = vadd.f32 %v1107, %v1219
      %1221 = vmatmul.f32.gmra.mxu0 %v661
      %v1222 = vpop.f32.mrf.mxu0
      %v1223 = vadd.f32 %v1110, %v1222
      %1224 = vmatmul.f32.gmra.mxu0 %v662
      %v1225 = vpop.f32.mrf.mxu0
      %v1226 = vadd.f32 %v1113, %v1225
      %1227 = vmatmul.f32.gmra.mxu0 %v663
      %v1228 = vpop.f32.mrf.mxu0
      %v1229 = vadd.f32 %v1116, %v1228
      %1230 = vmatmul.f32.gmra.mxu0 %v664
      %v1231 = vpop.f32.mrf.mxu0
      %v1232 = vadd.f32 %v1119, %v1231
      %1233 = vmatmul.f32.gmra.mxu0 %v665
      %v1234 = vpop.f32.mrf.mxu0
      %v1235 = vadd.f32 %v1122, %v1234
      %1236 = vmatmul.f32.gmra.mxu0 %v666
      %v1237 = vpop.f32.mrf.mxu0
      %v1238 = vadd.f32 %v1125, %v1237
      %1239 = vmatmul.f32.gmra.mxu0 %v667
      %v1240 = vpop.f32.mrf.mxu0
      %v1241 = vadd.f32 %v1128, %v1240
      %1242 = vmatmul.f32.gmra.mxu0 %v668
      %v1243 = vpop.f32.mrf.mxu0
      %v1244 = vadd.f32 %v1131, %v1243
      %1245 = vmatmul.f32.gmra.mxu0 %v669
      %v1246 = vpop.f32.mrf.mxu0
      %v1247 = vadd.f32 %v1134, %v1246
      %1248 = vmatmul.f32.gmra.mxu0 %v670
      %v1249 = vpop.f32.mrf.mxu0
      %v1250 = vadd.f32 %v1137, %v1249
      %1251 = vmatmul.f32.gmra.mxu0 %v671
      %v1252 = vpop.f32.mrf.mxu0
      %v1253 = vadd.f32 %v1140, %v1252
      %1254 = vmatmul.f32.gmra.mxu0 %v672
      %v1255 = vpop.f32.mrf.mxu0
      %v1256 = vadd.f32 %v1143, %v1255
      %1257 = vmatmul.f32.gmra.mxu0 %v673
      %v1258 = vpop.f32.mrf.mxu0
      %v1259 = vadd.f32 %v1146, %v1258
      %1260 = vmatmul.f32.gmra.mxu0 %v674
      %v1261 = vpop.f32.mrf.mxu0
      %v1262 = vadd.f32 %v1149, %v1261
      %1263 = vmatmul.f32.gmra.mxu0 %v675
      %v1264 = vpop.f32.mrf.mxu0
      %v1265 = vadd.f32 %v1152, %v1264
      %1266 = vmatmul.f32.gmra.mxu0 %v676
      %v1267 = vpop.f32.mrf.mxu0
      %v1268 = vadd.f32 %v1155, %v1267
      %1269 = vmatmul.f32.gmra.mxu0 %v677
      %v1270 = vpop.f32.mrf.mxu0
      %v1271 = vadd.f32 %v1158, %v1270
      %1272 = vmatmul.f32.gmra.mxu0 %v678
      %v1273 = vpop.f32.mrf.mxu0
      %v1274 = vadd.f32 %v1161, %v1273
      %1275 = vdwg.mxu0
      %1276 = vmatpush.msra.mxu0 %v950
      %1277 = vmatpush.msra.mxu0 %v949
      %1278 = vmatpush.msra.mxu0 %v948
      %1279 = vmatpush.msra.mxu0 %v947
      %1280 = vmatpush.msra.mxu0 %v946
      %1281 = vmatpush.msra.mxu0 %v945
      %1282 = vmatpush.msra.mxu0 %v944
      %1283 = vmatpush.msra.mxu0 %v943
      %1284 = vmatpush.msra.mxu0 %v942
      %1285 = vmatpush.msra.mxu0 %v941
      %1286 = vmatpush.msra.mxu0 %v940
      %1287 = vmatpush.msra.mxu0 %v939
      %1288 = vmatpush.msra.mxu0 %v938
      %1289 = vmatpush.msra.mxu0 %v937
      %1290 = vmatpush.msra.mxu0 %v936
      %1291 = vmatpush.msra.mxu0 %v935
      %1292 = vmatmul.f32.gmra.mxu0 %v679
      %v1293 = vpop.f32.mrf.mxu0
      %v1294 = vadd.f32 %v1181, %v1293
      %1295 = vmatmul.f32.gmra.mxu0 %v680
      %v1296 = vpop.f32.mrf.mxu0
      %v1297 = vadd.f32 %v1184, %v1296
      %1298 = vmatmul.f32.gmra.mxu0 %v681
      %v1299 = vpop.f32.mrf.mxu0
      %v1300 = vadd.f32 %v1187, %v1299
      %1301 = vmatmul.f32.gmra.mxu0 %v682
      %v1302 = vpop.f32.mrf.mxu0
      %v1303 = vadd.f32 %v1190, %v1302
      %1304 = vmatmul.f32.gmra.mxu0 %v683
      %v1305 = vpop.f32.mrf.mxu0
      %v1306 = vadd.f32 %v1193, %v1305
      %1307 = vmatmul.f32.gmra.mxu0 %v684
      %v1308 = vpop.f32.mrf.mxu0
      %v1309 = vadd.f32 %v1196, %v1308
      %1310 = vmatmul.f32.gmra.mxu0 %v685
      %v1311 = vpop.f32.mrf.mxu0
      %v1312 = vadd.f32 %v1199, %v1311
      %1313 = vmatmul.f32.gmra.mxu0 %v686
      %v1314 = vpop.f32.mrf.mxu0
      %v1315 = vadd.f32 %v1202, %v1314
      %1316 = vmatmul.f32.gmra.mxu0 %v687
      %v1317 = vpop.f32.mrf.mxu0
      %v1318 = vadd.f32 %v1205, %v1317
      %1319 = vmatmul.f32.gmra.mxu0 %v688
      %v1320 = vpop.f32.mrf.mxu0
      %v1321 = vadd.f32 %v1208, %v1320
      %1322 = vmatmul.f32.gmra.mxu0 %v689
      %v1323 = vpop.f32.mrf.mxu0
      %v1324 = vadd.f32 %v1211, %v1323
      %1325 = vmatmul.f32.gmra.mxu0 %v690
      %v1326 = vpop.f32.mrf.mxu0
      %v1327 = vadd.f32 %v1214, %v1326
      %1328 = vmatmul.f32.gmra.mxu0 %v691
      %v1329 = vpop.f32.mrf.mxu0
      %v1330 = vadd.f32 %v1217, %v1329
      %1331 = vmatmul.f32.gmra.mxu0 %v692
      %v1332 = vpop.f32.mrf.mxu0
      %v1333 = vadd.f32 %v1220, %v1332
      %1334 = vmatmul.f32.gmra.mxu0 %v693
      %v1335 = vpop.f32.mrf.mxu0
      %v1336 = vadd.f32 %v1223, %v1335
      %1337 = vmatmul.f32.gmra.mxu0 %v694
      %v1338 = vpop.f32.mrf.mxu0
      %v1339 = vadd.f32 %v1226, %v1338
      %1340 = vmatmul.f32.gmra.mxu0 %v695
      %v1341 = vpop.f32.mrf.mxu0
      %v1342 = vadd.f32 %v1229, %v1341
      %1343 = vmatmul.f32.gmra.mxu0 %v696
      %v1344 = vpop.f32.mrf.mxu0
      %v1345 = vadd.f32 %v1232, %v1344
      %1346 = vmatmul.f32.gmra.mxu0 %v697
      %v1347 = vpop.f32.mrf.mxu0
      %v1348 = vadd.f32 %v1235, %v1347
      %1349 = vmatmul.f32.gmra.mxu0 %v698
      %v1350 = vpop.f32.mrf.mxu0
      %v1351 = vadd.f32 %v1238, %v1350
      %1352 = vmatmul.f32.gmra.mxu0 %v699
      %v1353 = vpop.f32.mrf.mxu0
      %v1354 = vadd.f32 %v1241, %v1353
      %1355 = vmatmul.f32.gmra.mxu0 %v700
      %v1356 = vpop.f32.mrf.mxu0
      %v1357 = vadd.f32 %v1244, %v1356
      %1358 = vmatmul.f32.gmra.mxu0 %v701
      %v1359 = vpop.f32.mrf.mxu0
      %v1360 = vadd.f32 %v1247, %v1359
      %1361 = vmatmul.f32.gmra.mxu0 %v702
      %v1362 = vpop.f32.mrf.mxu0
      %v1363 = vadd.f32 %v1250, %v1362
      %1364 = vmatmul.f32.gmra.mxu0 %v703
      %v1365 = vpop.f32.mrf.mxu0
      %v1366 = vadd.f32 %v1253, %v1365
      %1367 = vmatmul.f32.gmra.mxu0 %v704
      %v1368 = vpop.f32.mrf.mxu0
      %v1369 = vadd.f32 %v1256, %v1368
      %1370 = vmatmul.f32.gmra.mxu0 %v705
      %v1371 = vpop.f32.mrf.mxu0
      %v1372 = vadd.f32 %v1259, %v1371
      %1373 = vmatmul.f32.gmra.mxu0 %v706
      %v1374 = vpop.f32.mrf.mxu0
      %v1375 = vadd.f32 %v1262, %v1374
      %1376 = vmatmul.f32.gmra.mxu0 %v707
      %v1377 = vpop.f32.mrf.mxu0
      %v1378 = vadd.f32 %v1265, %v1377
      %1379 = vmatmul.f32.gmra.mxu0 %v708
      %v1380 = vpop.f32.mrf.mxu0
      %v1381 = vadd.f32 %v1268, %v1380
      %1382 = vmatmul.f32.gmra.mxu0 %v709
      %v1383 = vpop.f32.mrf.mxu0
      %v1384 = vadd.f32 %v1271, %v1383
      %1385 = vmatmul.f32.gmra.mxu0 %v710
      %v1386 = vpop.f32.mrf.mxu0
      %v1387 = vadd.f32 %v1274, %v1386
      %1388 = vdwg.mxu0
      %1389 = vmatpush.msra.mxu0 %v966
      %1390 = vmatpush.msra.mxu0 %v965
      %1391 = vmatpush.msra.mxu0 %v964
      %1392 = vmatpush.msra.mxu0 %v963
      %1393 = vmatpush.msra.mxu0 %v962
      %1394 = vmatpush.msra.mxu0 %v961
      %1395 = vmatpush.msra.mxu0 %v960
      %1396 = vmatpush.msra.mxu0 %v959
      %1397 = vmatpush.msra.mxu0 %v958
      %1398 = vmatpush.msra.mxu0 %v957
      %1399 = vmatpush.msra.mxu0 %v956
      %1400 = vmatpush.msra.mxu0 %v955
      %1401 = vmatpush.msra.mxu0 %v954
      %1402 = vmatpush.msra.mxu0 %v953
      %1403 = vmatpush.msra.mxu0 %v952
      %1404 = vmatpush.msra.mxu0 %v951
      %1405 = vmatmul.f32.gmra.mxu0 %v711
      %v1406 = vpop.f32.mrf.mxu0
      %v1407 = vadd.f32 %v1294, %v1406
      %1408 = vmatmul.f32.gmra.mxu0 %v712
      %v1409 = vpop.f32.mrf.mxu0
      %v1410 = vadd.f32 %v1297, %v1409
      %1411 = vmatmul.f32.gmra.mxu0 %v713
      %v1412 = vpop.f32.mrf.mxu0
      %v1413 = vadd.f32 %v1300, %v1412
      %1414 = vmatmul.f32.gmra.mxu0 %v714
      %v1415 = vpop.f32.mrf.mxu0
      %v1416 = vadd.f32 %v1303, %v1415
      %1417 = vmatmul.f32.gmra.mxu0 %v715
      %v1418 = vpop.f32.mrf.mxu0
      %v1419 = vadd.f32 %v1306, %v1418
      %1420 = vmatmul.f32.gmra.mxu0 %v716
      %v1421 = vpop.f32.mrf.mxu0
      %v1422 = vadd.f32 %v1309, %v1421
      %1423 = vmatmul.f32.gmra.mxu0 %v717
      %v1424 = vpop.f32.mrf.mxu0
      %v1425 = vadd.f32 %v1312, %v1424
      %1426 = vmatmul.f32.gmra.mxu0 %v718
      %v1427 = vpop.f32.mrf.mxu0
      %v1428 = vadd.f32 %v1315, %v1427
      %1429 = vmatmul.f32.gmra.mxu0 %v719
      %v1430 = vpop.f32.mrf.mxu0
      %v1431 = vadd.f32 %v1318, %v1430
      %1432 = vmatmul.f32.gmra.mxu0 %v720
      %v1433 = vpop.f32.mrf.mxu0
      %v1434 = vadd.f32 %v1321, %v1433
      %1435 = vmatmul.f32.gmra.mxu0 %v721
      %v1436 = vpop.f32.mrf.mxu0
      %v1437 = vadd.f32 %v1324, %v1436
      %1438 = vmatmul.f32.gmra.mxu0 %v722
      %v1439 = vpop.f32.mrf.mxu0
      %v1440 = vadd.f32 %v1327, %v1439
      %1441 = vmatmul.f32.gmra.mxu0 %v723
      %v1442 = vpop.f32.mrf.mxu0
      %v1443 = vadd.f32 %v1330, %v1442
      %1444 = vmatmul.f32.gmra.mxu0 %v724
      %v1445 = vpop.f32.mrf.mxu0
      %v1446 = vadd.f32 %v1333, %v1445
      %1447 = vmatmul.f32.gmra.mxu0 %v725
      %v1448 = vpop.f32.mrf.mxu0
      %v1449 = vadd.f32 %v1336, %v1448
      %1450 = vmatmul.f32.gmra.mxu0 %v726
      %v1451 = vpop.f32.mrf.mxu0
      %v1452 = vadd.f32 %v1339, %v1451
      %1453 = vmatmul.f32.gmra.mxu0 %v727
      %v1454 = vpop.f32.mrf.mxu0
      %v1455 = vadd.f32 %v1342, %v1454
      %1456 = vmatmul.f32.gmra.mxu0 %v728
      %v1457 = vpop.f32.mrf.mxu0
      %v1458 = vadd.f32 %v1345, %v1457
      %1459 = vmatmul.f32.gmra.mxu0 %v729
      %v1460 = vpop.f32.mrf.mxu0
      %v1461 = vadd.f32 %v1348, %v1460
      %1462 = vmatmul.f32.gmra.mxu0 %v730
      %v1463 = vpop.f32.mrf.mxu0
      %v1464 = vadd.f32 %v1351, %v1463
      %1465 = vmatmul.f32.gmra.mxu0 %v731
      %v1466 = vpop.f32.mrf.mxu0
      %v1467 = vadd.f32 %v1354, %v1466
      %1468 = vmatmul.f32.gmra.mxu0 %v732
      %v1469 = vpop.f32.mrf.mxu0
      %v1470 = vadd.f32 %v1357, %v1469
      %1471 = vmatmul.f32.gmra.mxu0 %v733
      %v1472 = vpop.f32.mrf.mxu0
      %v1473 = vadd.f32 %v1360, %v1472
      %1474 = vmatmul.f32.gmra.mxu0 %v734
      %v1475 = vpop.f32.mrf.mxu0
      %v1476 = vadd.f32 %v1363, %v1475
      %1477 = vmatmul.f32.gmra.mxu0 %v735
      %v1478 = vpop.f32.mrf.mxu0
      %v1479 = vadd.f32 %v1366, %v1478
      %1480 = vmatmul.f32.gmra.mxu0 %v736
      %v1481 = vpop.f32.mrf.mxu0
      %v1482 = vadd.f32 %v1369, %v1481
      %1483 = vmatmul.f32.gmra.mxu0 %v737
      %v1484 = vpop.f32.mrf.mxu0
      %v1485 = vadd.f32 %v1372, %v1484
      %1486 = vmatmul.f32.gmra.mxu0 %v738
      %v1487 = vpop.f32.mrf.mxu0
      %v1488 = vadd.f32 %v1375, %v1487
      %1489 = vmatmul.f32.gmra.mxu0 %v739
      %v1490 = vpop.f32.mrf.mxu0
      %v1491 = vadd.f32 %v1378, %v1490
      %1492 = vmatmul.f32.gmra.mxu0 %v740
      %v1493 = vpop.f32.mrf.mxu0
      %v1494 = vadd.f32 %v1381, %v1493
      %1495 = vmatmul.f32.gmra.mxu0 %v741
      %v1496 = vpop.f32.mrf.mxu0
      %v1497 = vadd.f32 %v1384, %v1496
      %1498 = vmatmul.f32.gmra.mxu0 %v742
      %v1499 = vpop.f32.mrf.mxu0
      %v1500 = vadd.f32 %v1387, %v1499
      %1501 = vdwg.mxu0
      %1502 = vmatpush.msra.mxu0 %v982
      %1503 = vmatpush.msra.mxu0 %v981
      %1504 = vmatpush.msra.mxu0 %v980
      %1505 = vmatpush.msra.mxu0 %v979
      %1506 = vmatpush.msra.mxu0 %v978
      %1507 = vmatpush.msra.mxu0 %v977
      %1508 = vmatpush.msra.mxu0 %v976
      %1509 = vmatpush.msra.mxu0 %v975
      %1510 = vmatpush.msra.mxu0 %v974
      %1511 = vmatpush.msra.mxu0 %v973
      %1512 = vmatpush.msra.mxu0 %v972
      %1513 = vmatpush.msra.mxu0 %v971
      %1514 = vmatpush.msra.mxu0 %v970
      %1515 = vmatpush.msra.mxu0 %v969
      %1516 = vmatpush.msra.mxu0 %v968
      %1517 = vmatpush.msra.mxu0 %v967
      %1518 = vmatmul.f32.gmra.mxu0 %v743
      %v1519 = vpop.f32.mrf.mxu0
      %v1520 = vadd.f32 %v1407, %v1519
      %1521 = vmatmul.f32.gmra.mxu0 %v744
      %v1522 = vpop.f32.mrf.mxu0
      %v1523 = vadd.f32 %v1410, %v1522
      %1524 = vmatmul.f32.gmra.mxu0 %v745
      %v1525 = vpop.f32.mrf.mxu0
      %v1526 = vadd.f32 %v1413, %v1525
      %1527 = vmatmul.f32.gmra.mxu0 %v746
      %v1528 = vpop.f32.mrf.mxu0
      %v1529 = vadd.f32 %v1416, %v1528
      %1530 = vmatmul.f32.gmra.mxu0 %v747
      %v1531 = vpop.f32.mrf.mxu0
      %v1532 = vadd.f32 %v1419, %v1531
      %1533 = vmatmul.f32.gmra.mxu0 %v748
      %v1534 = vpop.f32.mrf.mxu0
      %v1535 = vadd.f32 %v1422, %v1534
      %1536 = vmatmul.f32.gmra.mxu0 %v749
      %v1537 = vpop.f32.mrf.mxu0
      %v1538 = vadd.f32 %v1425, %v1537
      %1539 = vmatmul.f32.gmra.mxu0 %v750
      %v1540 = vpop.f32.mrf.mxu0
      %v1541 = vadd.f32 %v1428, %v1540
      %1542 = vmatmul.f32.gmra.mxu0 %v751
      %v1543 = vpop.f32.mrf.mxu0
      %v1544 = vadd.f32 %v1431, %v1543
      %1545 = vmatmul.f32.gmra.mxu0 %v752
      %v1546 = vpop.f32.mrf.mxu0
      %v1547 = vadd.f32 %v1434, %v1546
      %1548 = vmatmul.f32.gmra.mxu0 %v753
      %v1549 = vpop.f32.mrf.mxu0
      %v1550 = vadd.f32 %v1437, %v1549
      %1551 = vmatmul.f32.gmra.mxu0 %v754
      %v1552 = vpop.f32.mrf.mxu0
      %v1553 = vadd.f32 %v1440, %v1552
      %1554 = vmatmul.f32.gmra.mxu0 %v755
      %v1555 = vpop.f32.mrf.mxu0
      %v1556 = vadd.f32 %v1443, %v1555
      %1557 = vmatmul.f32.gmra.mxu0 %v756
      %v1558 = vpop.f32.mrf.mxu0
      %v1559 = vadd.f32 %v1446, %v1558
      %1560 = vmatmul.f32.gmra.mxu0 %v757
      %v1561 = vpop.f32.mrf.mxu0
      %v1562 = vadd.f32 %v1449, %v1561
      %1563 = vmatmul.f32.gmra.mxu0 %v758
      %v1564 = vpop.f32.mrf.mxu0
      %v1565 = vadd.f32 %v1452, %v1564
      %1566 = vmatmul.f32.gmra.mxu0 %v759
      %v1567 = vpop.f32.mrf.mxu0
      %v1568 = vadd.f32 %v1455, %v1567
      %1569 = vmatmul.f32.gmra.mxu0 %v760
      %v1570 = vpop.f32.mrf.mxu0
      %v1571 = vadd.f32 %v1458, %v1570
      %1572 = vmatmul.f32.gmra.mxu0 %v761
      %v1573 = vpop.f32.mrf.mxu0
      %v1574 = vadd.f32 %v1461, %v1573
      %1575 = vmatmul.f32.gmra.mxu0 %v762
      %v1576 = vpop.f32.mrf.mxu0
      %v1577 = vadd.f32 %v1464, %v1576
      %1578 = vmatmul.f32.gmra.mxu0 %v763
      %v1579 = vpop.f32.mrf.mxu0
      %v1580 = vadd.f32 %v1467, %v1579
      %1581 = vmatmul.f32.gmra.mxu0 %v764
      %v1582 = vpop.f32.mrf.mxu0
      %v1583 = vadd.f32 %v1470, %v1582
      %1584 = vmatmul.f32.gmra.mxu0 %v765
      %v1585 = vpop.f32.mrf.mxu0
      %v1586 = vadd.f32 %v1473, %v1585
      %1587 = vmatmul.f32.gmra.mxu0 %v766
      %v1588 = vpop.f32.mrf.mxu0
      %v1589 = vadd.f32 %v1476, %v1588
      %1590 = vmatmul.f32.gmra.mxu0 %v767
      %v1591 = vpop.f32.mrf.mxu0
      %v1592 = vadd.f32 %v1479, %v1591
      %1593 = vmatmul.f32.gmra.mxu0 %v768
      %v1594 = vpop.f32.mrf.mxu0
      %v1595 = vadd.f32 %v1482, %v1594
      %1596 = vmatmul.f32.gmra.mxu0 %v769
      %v1597 = vpop.f32.mrf.mxu0
      %v1598 = vadd.f32 %v1485, %v1597
      %1599 = vmatmul.f32.gmra.mxu0 %v770
      %v1600 = vpop.f32.mrf.mxu0
      %v1601 = vadd.f32 %v1488, %v1600
      %1602 = vmatmul.f32.gmra.mxu0 %v771
      %v1603 = vpop.f32.mrf.mxu0
      %v1604 = vadd.f32 %v1491, %v1603
      %1605 = vmatmul.f32.gmra.mxu0 %v772
      %v1606 = vpop.f32.mrf.mxu0
      %v1607 = vadd.f32 %v1494, %v1606
      %1608 = vmatmul.f32.gmra.mxu0 %v773
      %v1609 = vpop.f32.mrf.mxu0
      %v1610 = vadd.f32 %v1497, %v1609
      %1611 = vmatmul.f32.gmra.mxu0 %v774
      %v1612 = vpop.f32.mrf.mxu0
      %v1613 = vadd.f32 %v1500, %v1612
      %1614 = vdwg.mxu0
      %1615 = vmatpush.msra.mxu0 %v998
      %1616 = vmatpush.msra.mxu0 %v997
      %1617 = vmatpush.msra.mxu0 %v996
      %1618 = vmatpush.msra.mxu0 %v995
      %1619 = vmatpush.msra.mxu0 %v994
      %1620 = vmatpush.msra.mxu0 %v993
      %1621 = vmatpush.msra.mxu0 %v992
      %1622 = vmatpush.msra.mxu0 %v991
      %1623 = vmatpush.msra.mxu0 %v990
      %1624 = vmatpush.msra.mxu0 %v989
      %1625 = vmatpush.msra.mxu0 %v988
      %1626 = vmatpush.msra.mxu0 %v987
      %1627 = vmatpush.msra.mxu0 %v986
      %1628 = vmatpush.msra.mxu0 %v985
      %1629 = vmatpush.msra.mxu0 %v984
      %1630 = vmatpush.msra.mxu0 %v983
      %1631 = vmatmul.f32.gmra.mxu0 %v775
      %v1632 = vpop.f32.mrf.mxu0
      %v1633 = vadd.f32 %v1520, %v1632
      %1634 = vmatmul.f32.gmra.mxu0 %v776
      %v1635 = vpop.f32.mrf.mxu0
      %v1636 = vadd.f32 %v1523, %v1635
      %1637 = vmatmul.f32.gmra.mxu0 %v777
      %v1638 = vpop.f32.mrf.mxu0
      %v1639 = vadd.f32 %v1526, %v1638
      %1640 = vmatmul.f32.gmra.mxu0 %v778
      %v1641 = vpop.f32.mrf.mxu0
      %v1642 = vadd.f32 %v1529, %v1641
      %1643 = vmatmul.f32.gmra.mxu0 %v779
      %v1644 = vpop.f32.mrf.mxu0
      %v1645 = vadd.f32 %v1532, %v1644
      %1646 = vmatmul.f32.gmra.mxu0 %v780
      %v1647 = vpop.f32.mrf.mxu0
      %v1648 = vadd.f32 %v1535, %v1647
      %1649 = vmatmul.f32.gmra.mxu0 %v781
      %v1650 = vpop.f32.mrf.mxu0
      %v1651 = vadd.f32 %v1538, %v1650
      %1652 = vmatmul.f32.gmra.mxu0 %v782
      %v1653 = vpop.f32.mrf.mxu0
      %v1654 = vadd.f32 %v1541, %v1653
      %1655 = vmatmul.f32.gmra.mxu0 %v783
      %v1656 = vpop.f32.mrf.mxu0
      %v1657 = vadd.f32 %v1544, %v1656
      %1658 = vmatmul.f32.gmra.mxu0 %v784
      %v1659 = vpop.f32.mrf.mxu0
      %v1660 = vadd.f32 %v1547, %v1659
      %1661 = vmatmul.f32.gmra.mxu0 %v785
      %v1662 = vpop.f32.mrf.mxu0
      %v1663 = vadd.f32 %v1550, %v1662
      %1664 = vmatmul.f32.gmra.mxu0 %v786
      %v1665 = vpop.f32.mrf.mxu0
      %v1666 = vadd.f32 %v1553, %v1665
      %1667 = vmatmul.f32.gmra.mxu0 %v787
      %v1668 = vpop.f32.mrf.mxu0
      %v1669 = vadd.f32 %v1556, %v1668
      %1670 = vmatmul.f32.gmra.mxu0 %v788
      %v1671 = vpop.f32.mrf.mxu0
      %v1672 = vadd.f32 %v1559, %v1671
      %1673 = vmatmul.f32.gmra.mxu0 %v789
      %v1674 = vpop.f32.mrf.mxu0
      %v1675 = vadd.f32 %v1562, %v1674
      %1676 = vmatmul.f32.gmra.mxu0 %v790
      %v1677 = vpop.f32.mrf.mxu0
      %v1678 = vadd.f32 %v1565, %v1677
      %1679 = vmatmul.f32.gmra.mxu0 %v791
      %v1680 = vpop.f32.mrf.mxu0
      %v1681 = vadd.f32 %v1568, %v1680
      %1682 = vmatmul.f32.gmra.mxu0 %v792
      %v1683 = vpop.f32.mrf.mxu0
      %v1684 = vadd.f32 %v1571, %v1683
      %1685 = vmatmul.f32.gmra.mxu0 %v793
      %v1686 = vpop.f32.mrf.mxu0
      %v1687 = vadd.f32 %v1574, %v1686
      %1688 = vmatmul.f32.gmra.mxu0 %v794
      %v1689 = vpop.f32.mrf.mxu0
      %v1690 = vadd.f32 %v1577, %v1689
      %1691 = vmatmul.f32.gmra.mxu0 %v795
      %v1692 = vpop.f32.mrf.mxu0
      %v1693 = vadd.f32 %v1580, %v1692
      %1694 = vmatmul.f32.gmra.mxu0 %v796
      %v1695 = vpop.f32.mrf.mxu0
      %v1696 = vadd.f32 %v1583, %v1695
      %1697 = vmatmul.f32.gmra.mxu0 %v797
      %v1698 = vpop.f32.mrf.mxu0
      %v1699 = vadd.f32 %v1586, %v1698
      %1700 = vmatmul.f32.gmra.mxu0 %v798
      %v1701 = vpop.f32.mrf.mxu0
      %v1702 = vadd.f32 %v1589, %v1701
      %1703 = vmatmul.f32.gmra.mxu0 %v799
      %v1704 = vpop.f32.mrf.mxu0
      %v1705 = vadd.f32 %v1592, %v1704
      %1706 = vmatmul.f32.gmra.mxu0 %v800
      %v1707 = vpop.f32.mrf.mxu0
      %v1708 = vadd.f32 %v1595, %v1707
      %1709 = vmatmul.f32.gmra.mxu0 %v801
      %v1710 = vpop.f32.mrf.mxu0
      %v1711 = vadd.f32 %v1598, %v1710
      %1712 = vmatmul.f32.gmra.mxu0 %v802
      %v1713 = vpop.f32.mrf.mxu0
      %v1714 = vadd.f32 %v1601, %v1713
      %1715 = vmatmul.f32.gmra.mxu0 %v803
      %v1716 = vpop.f32.mrf.mxu0
      %v1717 = vadd.f32 %v1604, %v1716
      %1718 = vmatmul.f32.gmra.mxu0 %v804
      %v1719 = vpop.f32.mrf.mxu0
      %v1720 = vadd.f32 %v1607, %v1719
      %1721 = vmatmul.f32.gmra.mxu0 %v805
      %v1722 = vpop.f32.mrf.mxu0
      %v1723 = vadd.f32 %v1610, %v1722
      %1724 = vmatmul.f32.gmra.mxu0 %v806
      %v1725 = vpop.f32.mrf.mxu0
      %v1726 = vadd.f32 %v1613, %v1725
      %1727 = vdwg.mxu0
      %1728 = vmatpush.msra.mxu0 %v1014
      %1729 = vmatpush.msra.mxu0 %v1013
      %1730 = vmatpush.msra.mxu0 %v1012
      %1731 = vmatpush.msra.mxu0 %v1011
      %1732 = vmatpush.msra.mxu0 %v1010
      %1733 = vmatpush.msra.mxu0 %v1009
      %1734 = vmatpush.msra.mxu0 %v1008
      %1735 = vmatpush.msra.mxu0 %v1007
      %1736 = vmatpush.msra.mxu0 %v1006
      %1737 = vmatpush.msra.mxu0 %v1005
      %1738 = vmatpush.msra.mxu0 %v1004
      %1739 = vmatpush.msra.mxu0 %v1003
      %1740 = vmatpush.msra.mxu0 %v1002
      %1741 = vmatpush.msra.mxu0 %v1001
      %1742 = vmatpush.msra.mxu0 %v1000
      %1743 = vmatpush.msra.mxu0 %v999
      %1744 = vmatmul.f32.gmra.mxu0 %v807
      %v1745 = vpop.f32.mrf.mxu0
      %v1746 = vadd.f32 %v1633, %v1745
      %1747 = vmatmul.f32.gmra.mxu0 %v808
      %v1748 = vpop.f32.mrf.mxu0
      %v1749 = vadd.f32 %v1636, %v1748
      %1750 = vmatmul.f32.gmra.mxu0 %v809
      %v1751 = vpop.f32.mrf.mxu0
      %v1752 = vadd.f32 %v1639, %v1751
      %1753 = vmatmul.f32.gmra.mxu0 %v810
      %v1754 = vpop.f32.mrf.mxu0
      %v1755 = vadd.f32 %v1642, %v1754
      %1756 = vmatmul.f32.gmra.mxu0 %v811
      %v1757 = vpop.f32.mrf.mxu0
      %v1758 = vadd.f32 %v1645, %v1757
      %1759 = vmatmul.f32.gmra.mxu0 %v812
      %v1760 = vpop.f32.mrf.mxu0
      %v1761 = vadd.f32 %v1648, %v1760
      %1762 = vmatmul.f32.gmra.mxu0 %v813
      %v1763 = vpop.f32.mrf.mxu0
      %v1764 = vadd.f32 %v1651, %v1763
      %1765 = vmatmul.f32.gmra.mxu0 %v814
      %v1766 = vpop.f32.mrf.mxu0
      %v1767 = vadd.f32 %v1654, %v1766
      %1768 = vmatmul.f32.gmra.mxu0 %v815
      %v1769 = vpop.f32.mrf.mxu0
      %v1770 = vadd.f32 %v1657, %v1769
      %1771 = vmatmul.f32.gmra.mxu0 %v816
      %v1772 = vpop.f32.mrf.mxu0
      %v1773 = vadd.f32 %v1660, %v1772
      %1774 = vmatmul.f32.gmra.mxu0 %v817
      %v1775 = vpop.f32.mrf.mxu0
      %v1776 = vadd.f32 %v1663, %v1775
      %1777 = vmatmul.f32.gmra.mxu0 %v818
      %v1778 = vpop.f32.mrf.mxu0
      %v1779 = vadd.f32 %v1666, %v1778
      %1780 = vmatmul.f32.gmra.mxu0 %v819
      %v1781 = vpop.f32.mrf.mxu0
      %v1782 = vadd.f32 %v1669, %v1781
      %1783 = vmatmul.f32.gmra.mxu0 %v820
      %v1784 = vpop.f32.mrf.mxu0
      %v1785 = vadd.f32 %v1672, %v1784
      %1786 = vmatmul.f32.gmra.mxu0 %v821
      %v1787 = vpop.f32.mrf.mxu0
      %v1788 = vadd.f32 %v1675, %v1787
      %1789 = vmatmul.f32.gmra.mxu0 %v822
      %v1790 = vpop.f32.mrf.mxu0
      %v1791 = vadd.f32 %v1678, %v1790
      %1792 = vmatmul.f32.gmra.mxu0 %v823
      %v1793 = vpop.f32.mrf.mxu0
      %v1794 = vadd.f32 %v1681, %v1793
      %1795 = vmatmul.f32.gmra.mxu0 %v824
      %v1796 = vpop.f32.mrf.mxu0
      %v1797 = vadd.f32 %v1684, %v1796
      %1798 = vmatmul.f32.gmra.mxu0 %v825
      %v1799 = vpop.f32.mrf.mxu0
      %v1800 = vadd.f32 %v1687, %v1799
      %1801 = vmatmul.f32.gmra.mxu0 %v826
      %v1802 = vpop.f32.mrf.mxu0
      %v1803 = vadd.f32 %v1690, %v1802
      %1804 = vmatmul.f32.gmra.mxu0 %v827
      %v1805 = vpop.f32.mrf.mxu0
      %v1806 = vadd.f32 %v1693, %v1805
      %1807 = vmatmul.f32.gmra.mxu0 %v828
      %v1808 = vpop.f32.mrf.mxu0
      %v1809 = vadd.f32 %v1696, %v1808
      %1810 = vmatmul.f32.gmra.mxu0 %v829
      %v1811 = vpop.f32.mrf.mxu0
      %v1812 = vadd.f32 %v1699, %v1811
      %1813 = vmatmul.f32.gmra.mxu0 %v830
      %v1814 = vpop.f32.mrf.mxu0
      %v1815 = vadd.f32 %v1702, %v1814
      %1816 = vmatmul.f32.gmra.mxu0 %v831
      %v1817 = vpop.f32.mrf.mxu0
      %v1818 = vadd.f32 %v1705, %v1817
      %1819 = vmatmul.f32.gmra.mxu0 %v832
      %v1820 = vpop.f32.mrf.mxu0
      %v1821 = vadd.f32 %v1708, %v1820
      %1822 = vmatmul.f32.gmra.mxu0 %v833
      %v1823 = vpop.f32.mrf.mxu0
      %v1824 = vadd.f32 %v1711, %v1823
      %1825 = vmatmul.f32.gmra.mxu0 %v834
      %v1826 = vpop.f32.mrf.mxu0
      %v1827 = vadd.f32 %v1714, %v1826
      %1828 = vmatmul.f32.gmra.mxu0 %v835
      %v1829 = vpop.f32.mrf.mxu0
      %v1830 = vadd.f32 %v1717, %v1829
      %1831 = vmatmul.f32.gmra.mxu0 %v836
      %v1832 = vpop.f32.mrf.mxu0
      %v1833 = vadd.f32 %v1720, %v1832
      %1834 = vmatmul.f32.gmra.mxu0 %v837
      %v1835 = vpop.f32.mrf.mxu0
      %v1836 = vadd.f32 %v1723, %v1835
      %1837 = vmatmul.f32.gmra.mxu0 %v838
      %v1838 = vpop.f32.mrf.mxu0
      %v1839 = vadd.f32 %v1726, %v1838
      %1840 = vdwg.mxu0
      %1841 = vmatpush.msra.mxu0 %v1030
      %1842 = vmatpush.msra.mxu0 %v1029
      %1843 = vmatpush.msra.mxu0 %v1028
      %1844 = vmatpush.msra.mxu0 %v1027
      %1845 = vmatpush.msra.mxu0 %v1026
      %1846 = vmatpush.msra.mxu0 %v1025
      %1847 = vmatpush.msra.mxu0 %v1024
      %1848 = vmatpush.msra.mxu0 %v1023
      %1849 = vmatpush.msra.mxu0 %v1022
      %1850 = vmatpush.msra.mxu0 %v1021
      %1851 = vmatpush.msra.mxu0 %v1020
      %1852 = vmatpush.msra.mxu0 %v1019
      %1853 = vmatpush.msra.mxu0 %v1018
      %1854 = vmatpush.msra.mxu0 %v1017
      %1855 = vmatpush.msra.mxu0 %v1016
      %1856 = vmatpush.msra.mxu0 %v1015
      %1857 = vmatmul.f32.gmra.mxu0 %v839
      %v1858 = vpop.f32.mrf.mxu0
      %v1859 = vadd.f32 %v1746, %v1858
      %1860 = vmatmul.f32.gmra.mxu0 %v840
      %v1861 = vpop.f32.mrf.mxu0
      %v1862 = vadd.f32 %v1749, %v1861
      %1863 = vmatmul.f32.gmra.mxu0 %v841
      %v1864 = vpop.f32.mrf.mxu0
      %v1865 = vadd.f32 %v1752, %v1864
      %1866 = vmatmul.f32.gmra.mxu0 %v842
      %v1867 = vpop.f32.mrf.mxu0
      %v1868 = vadd.f32 %v1755, %v1867
      %1869 = vmatmul.f32.gmra.mxu0 %v843
      %v1870 = vpop.f32.mrf.mxu0
      %v1871 = vadd.f32 %v1758, %v1870
      %1872 = vmatmul.f32.gmra.mxu0 %v844
      %v1873 = vpop.f32.mrf.mxu0
      %v1874 = vadd.f32 %v1761, %v1873
      %1875 = vmatmul.f32.gmra.mxu0 %v845
      %v1876 = vpop.f32.mrf.mxu0
      %v1877 = vadd.f32 %v1764, %v1876
      %1878 = vmatmul.f32.gmra.mxu0 %v846
      %v1879 = vpop.f32.mrf.mxu0
      %v1880 = vadd.f32 %v1767, %v1879
      %1881 = vmatmul.f32.gmra.mxu0 %v847
      %v1882 = vpop.f32.mrf.mxu0
      %v1883 = vadd.f32 %v1770, %v1882
      %1884 = vmatmul.f32.gmra.mxu0 %v848
      %v1885 = vpop.f32.mrf.mxu0
      %v1886 = vadd.f32 %v1773, %v1885
      %1887 = vmatmul.f32.gmra.mxu0 %v849
      %v1888 = vpop.f32.mrf.mxu0
      %v1889 = vadd.f32 %v1776, %v1888
      %1890 = vmatmul.f32.gmra.mxu0 %v850
      %v1891 = vpop.f32.mrf.mxu0
      %v1892 = vadd.f32 %v1779, %v1891
      %1893 = vmatmul.f32.gmra.mxu0 %v851
      %v1894 = vpop.f32.mrf.mxu0
      %v1895 = vadd.f32 %v1782, %v1894
      %1896 = vmatmul.f32.gmra.mxu0 %v852
      %v1897 = vpop.f32.mrf.mxu0
      %v1898 = vadd.f32 %v1785, %v1897
      %1899 = vmatmul.f32.gmra.mxu0 %v853
      %v1900 = vpop.f32.mrf.mxu0
      %v1901 = vadd.f32 %v1788, %v1900
      %1902 = vmatmul.f32.gmra.mxu0 %v854
      %v1903 = vpop.f32.mrf.mxu0
      %v1904 = vadd.f32 %v1791, %v1903
      %1905 = vmatmul.f32.gmra.mxu0 %v855
      %v1906 = vpop.f32.mrf.mxu0
      %v1907 = vadd.f32 %v1794, %v1906
      %1908 = vmatmul.f32.gmra.mxu0 %v856
      %v1909 = vpop.f32.mrf.mxu0
      %v1910 = vadd.f32 %v1797, %v1909
      %1911 = vmatmul.f32.gmra.mxu0 %v857
      %v1912 = vpop.f32.mrf.mxu0
      %v1913 = vadd.f32 %v1800, %v1912
      %1914 = vmatmul.f32.gmra.mxu0 %v858
      %v1915 = vpop.f32.mrf.mxu0
      %v1916 = vadd.f32 %v1803, %v1915
      %1917 = vmatmul.f32.gmra.mxu0 %v859
      %v1918 = vpop.f32.mrf.mxu0
      %v1919 = vadd.f32 %v1806, %v1918
      %1920 = vmatmul.f32.gmra.mxu0 %v860
      %v1921 = vpop.f32.mrf.mxu0
      %v1922 = vadd.f32 %v1809, %v1921
      %1923 = vmatmul.f32.gmra.mxu0 %v861
      %v1924 = vpop.f32.mrf.mxu0
      %v1925 = vadd.f32 %v1812, %v1924
      %1926 = vmatmul.f32.gmra.mxu0 %v862
      %v1927 = vpop.f32.mrf.mxu0
      %v1928 = vadd.f32 %v1815, %v1927
      %1929 = vmatmul.f32.gmra.mxu0 %v863
      %v1930 = vpop.f32.mrf.mxu0
      %v1931 = vadd.f32 %v1818, %v1930
      %1932 = vmatmul.f32.gmra.mxu0 %v864
      %v1933 = vpop.f32.mrf.mxu0
      %v1934 = vadd.f32 %v1821, %v1933
      %1935 = vmatmul.f32.gmra.mxu0 %v865
      %v1936 = vpop.f32.mrf.mxu0
      %v1937 = vadd.f32 %v1824, %v1936
      %1938 = vmatmul.f32.gmra.mxu0 %v866
      %v1939 = vpop.f32.mrf.mxu0
      %v1940 = vadd.f32 %v1827, %v1939
      %1941 = vmatmul.f32.gmra.mxu0 %v867
      %v1942 = vpop.f32.mrf.mxu0
      %v1943 = vadd.f32 %v1830, %v1942
      %1944 = vmatmul.f32.gmra.mxu0 %v868
      %v1945 = vpop.f32.mrf.mxu0
      %v1946 = vadd.f32 %v1833, %v1945
      %1947 = vmatmul.f32.gmra.mxu0 %v869
      %v1948 = vpop.f32.mrf.mxu0
      %v1949 = vadd.f32 %v1836, %v1948
      %1950 = vmatmul.f32.gmra.mxu0 %v870
      %v1951 = vpop.f32.mrf.mxu0
      %v1952 = vadd.f32 %v1839, %v1951
      %1953 = vdwg.mxu0
      %1954 = vmatpush.msra.mxu0 %v1046
      %1955 = vmatpush.msra.mxu0 %v1045
      %1956 = vmatpush.msra.mxu0 %v1044
      %1957 = vmatpush.msra.mxu0 %v1043
      %1958 = vmatpush.msra.mxu0 %v1042
      %1959 = vmatpush.msra.mxu0 %v1041
      %1960 = vmatpush.msra.mxu0 %v1040
      %1961 = vmatpush.msra.mxu0 %v1039
      %1962 = vmatpush.msra.mxu0 %v1038
      %1963 = vmatpush.msra.mxu0 %v1037
      %1964 = vmatpush.msra.mxu0 %v1036
      %1965 = vmatpush.msra.mxu0 %v1035
      %1966 = vmatpush.msra.mxu0 %v1034
      %1967 = vmatpush.msra.mxu0 %v1033
      %1968 = vmatpush.msra.mxu0 %v1032
      %1969 = vmatpush.msra.mxu0 %v1031
      %1970 = vmatmul.f32.gmra.mxu0 %v871
      %v1971 = vpop.f32.mrf.mxu0
      %v1972 = vadd.f32 %v1859, %v1971
      %1973 = vmatmul.f32.gmra.mxu0 %v872
      %v1974 = vpop.f32.mrf.mxu0
      %v1975 = vadd.f32 %v1862, %v1974
      %1976 = vmatmul.f32.gmra.mxu0 %v873
      %v1977 = vpop.f32.mrf.mxu0
      %v1978 = vadd.f32 %v1865, %v1977
      %1979 = vmatmul.f32.gmra.mxu0 %v874
      %v1980 = vpop.f32.mrf.mxu0
      %v1981 = vadd.f32 %v1868, %v1980
      %1982 = vmatmul.f32.gmra.mxu0 %v875
      %v1983 = vpop.f32.mrf.mxu0
      %v1984 = vadd.f32 %v1871, %v1983
      %1985 = vmatmul.f32.gmra.mxu0 %v876
      %v1986 = vpop.f32.mrf.mxu0
      %v1987 = vadd.f32 %v1874, %v1986
      %1988 = vmatmul.f32.gmra.mxu0 %v877
      %v1989 = vpop.f32.mrf.mxu0
      %v1990 = vadd.f32 %v1877, %v1989
      %1991 = vmatmul.f32.gmra.mxu0 %v878
      %v1992 = vpop.f32.mrf.mxu0
      %v1993 = vadd.f32 %v1880, %v1992
      %1994 = vmatmul.f32.gmra.mxu0 %v879
      %v1995 = vpop.f32.mrf.mxu0
      %v1996 = vadd.f32 %v1883, %v1995
      %1997 = vmatmul.f32.gmra.mxu0 %v880
      %v1998 = vpop.f32.mrf.mxu0
      %v1999 = vadd.f32 %v1886, %v1998
      %2000 = vmatmul.f32.gmra.mxu0 %v881
      %v2001 = vpop.f32.mrf.mxu0
      %v2002 = vadd.f32 %v1889, %v2001
      %2003 = vmatmul.f32.gmra.mxu0 %v882
      %v2004 = vpop.f32.mrf.mxu0
      %v2005 = vadd.f32 %v1892, %v2004
      %2006 = vmatmul.f32.gmra.mxu0 %v883
      %v2007 = vpop.f32.mrf.mxu0
      %v2008 = vadd.f32 %v1895, %v2007
      %2009 = vmatmul.f32.gmra.mxu0 %v884
      %v2010 = vpop.f32.mrf.mxu0
      %v2011 = vadd.f32 %v1898, %v2010
      %2012 = vmatmul.f32.gmra.mxu0 %v885
      %v2013 = vpop.f32.mrf.mxu0
      %v2014 = vadd.f32 %v1901, %v2013
      %2015 = vmatmul.f32.gmra.mxu0 %v886
      %v2016 = vpop.f32.mrf.mxu0
      %v2017 = vadd.f32 %v1904, %v2016
      %2018 = vmatmul.f32.gmra.mxu0 %v887
      %v2019 = vpop.f32.mrf.mxu0
      %v2020 = vadd.f32 %v1907, %v2019
      %2021 = vmatmul.f32.gmra.mxu0 %v888
      %v2022 = vpop.f32.mrf.mxu0
      %v2023 = vadd.f32 %v1910, %v2022
      %2024 = vmatmul.f32.gmra.mxu0 %v889
      %v2025 = vpop.f32.mrf.mxu0
      %v2026 = vadd.f32 %v1913, %v2025
      %2027 = vmatmul.f32.gmra.mxu0 %v890
      %v2028 = vpop.f32.mrf.mxu0
      %v2029 = vadd.f32 %v1916, %v2028
      %2030 = vmatmul.f32.gmra.mxu0 %v891
      %v2031 = vpop.f32.mrf.mxu0
      %v2032 = vadd.f32 %v1919, %v2031
      %2033 = vmatmul.f32.gmra.mxu0 %v892
      %v2034 = vpop.f32.mrf.mxu0
      %v2035 = vadd.f32 %v1922, %v2034
      %2036 = vmatmul.f32.gmra.mxu0 %v893
      %v2037 = vpop.f32.mrf.mxu0
      %v2038 = vadd.f32 %v1925, %v2037
      %2039 = vmatmul.f32.gmra.mxu0 %v894
      %v2040 = vpop.f32.mrf.mxu0
      %v2041 = vadd.f32 %v1928, %v2040
      %2042 = vmatmul.f32.gmra.mxu0 %v895
      %v2043 = vpop.f32.mrf.mxu0
      %v2044 = vadd.f32 %v1931, %v2043
      %2045 = vmatmul.f32.gmra.mxu0 %v896
      %v2046 = vpop.f32.mrf.mxu0
      %v2047 = vadd.f32 %v1934, %v2046
      %2048 = vmatmul.f32.gmra.mxu0 %v897
      %v2049 = vpop.f32.mrf.mxu0
      %v2050 = vadd.f32 %v1937, %v2049
      %2051 = vmatmul.f32.gmra.mxu0 %v898
      %v2052 = vpop.f32.mrf.mxu0
      %v2053 = vadd.f32 %v1940, %v2052
      %2054 = vmatmul.f32.gmra.mxu0 %v899
      %v2055 = vpop.f32.mrf.mxu0
      %v2056 = vadd.f32 %v1943, %v2055
      %2057 = vmatmul.f32.gmra.mxu0 %v900
      %v2058 = vpop.f32.mrf.mxu0
      %v2059 = vadd.f32 %v1946, %v2058
      %2060 = vmatmul.f32.gmra.mxu0 %v901
      %v2061 = vpop.f32.mrf.mxu0
      %v2062 = vadd.f32 %v1949, %v2061
      %2063 = vmatmul.f32.gmra.mxu0 %v902
      %v2064 = vpop.f32.mrf.mxu0
      %v2065 = vadd.f32 %v1952, %v2064
      %2066 = vdwg.mxu0
      %2067 = vst [vmem:[#allocation3] sm:$0xff] 0.0
      %2068 = vst [vmem:[#allocation3 + $0x8] sm:$0xff] 0.0
      %2069 = vst [vmem:[#allocation3 + $0x10] sm:$0x3] 0.0
      %2070 = vst [vmem:[#allocation3 + $0x18] sm:$0xff] 0.0
      %2071 = vst [vmem:[#allocation3 + $0x20] sm:$0xff] 0.0
      %2072 = vst [vmem:[#allocation3 + $0x28] sm:$0x3] 0.0
      %2073 = vst [vmem:[#allocation3 + $0x30] sm:$0xff] 0.0
      %2074 = vst [vmem:[#allocation3 + $0x38] sm:$0xff] 0.0
      %2075 = vst [vmem:[#allocation3 + $0x40] sm:$0x3] 0.0
      %2076 = vst [vmem:[#allocation3 + $0x48] sm:$0xff] 0.0
      %2077 = vst [vmem:[#allocation3 + $0x50] sm:$0xff] 0.0
      %2078 = vst [vmem:[#allocation3 + $0x58] sm:$0x3] 0.0
      %2079 = vst [vmem:[#allocation3 + $0x60] sm:$0xff] 0.0
      %2080 = vst [vmem:[#allocation3 + $0x68] sm:$0xff] 0.0
      %2081 = vst [vmem:[#allocation3 + $0x70] sm:$0x3] 0.0
      %2082 = vst [vmem:[#allocation3 + $0x78] sm:$0xff] 0.0
      %2083 = vst [vmem:[#allocation3 + $0x80] sm:$0xff] 0.0
      %2084 = vst [vmem:[#allocation3 + $0x88] sm:$0x3] 0.0
      %2085 = vst [vmem:[#allocation3 + $0x90] sm:$0xff] 0.0
      %2086 = vst [vmem:[#allocation3 + $0x98] sm:$0xff] 0.0
      %2087 = vst [vmem:[#allocation3 + $0xa0] sm:$0x3] 0.0
      %2088 = vst [vmem:[#allocation3 + $0xa8] sm:$0xff] 0.0
      %2089 = vst [vmem:[#allocation3 + $0xb0] sm:$0xff] 0.0
      %2090 = vst [vmem:[#allocation3 + $0xb8] sm:$0x3] 0.0
      %2091 = vst [vmem:[#allocation3 + $0xc0] sm:$0xff] 0.0
      %2092 = vst [vmem:[#allocation3 + $0xc8] sm:$0xff] 0.0
      %2093 = vst [vmem:[#allocation3 + $0xd0] sm:$0x3] 0.0
      %2094 = vst [vmem:[#allocation3 + $0xd8] sm:$0xff] 0.0
      %2095 = vst [vmem:[#allocation3 + $0xe0] sm:$0xff] 0.0
      %2096 = vst [vmem:[#allocation3 + $0xe8] sm:$0x3] 0.0
      %2097 = vst [vmem:[#allocation3 + $0xf0] sm:$0xff] 0.0
      %2098 = vst [vmem:[#allocation3 + $0xf8] sm:$0xff] 0.0
      %2099 = vst [vmem:[#allocation3 + $0x100] sm:$0x3] 0.0
      %2100 = vst [vmem:[#allocation3 + $0x108] sm:$0xff] 0.0
      %2101 = vst [vmem:[#allocation3 + $0x110] sm:$0xff] 0.0
      %2102 = vst [vmem:[#allocation3 + $0x118] sm:$0x3] 0.0
      %2103 = vst [vmem:[#allocation3 + $0x120] sm:$0xff] 0.0
      %2104 = vst [vmem:[#allocation3 + $0x128] sm:$0xff] 0.0
      %2105 = vst [vmem:[#allocation3 + $0x130] sm:$0x3] 0.0
      %2106 = vst [vmem:[#allocation3 + $0x138] sm:$0xff] 0.0
      %2107 = vst [vmem:[#allocation3 + $0x140] sm:$0xff] 0.0
      %2108 = vst [vmem:[#allocation3 + $0x148] sm:$0x3] 0.0
      %2109 = vst [vmem:[#allocation3 + $0x150] sm:$0xff] 0.0
      %2110 = vst [vmem:[#allocation3 + $0x158] sm:$0xff] 0.0
      %2111 = vst [vmem:[#allocation3 + $0x160] sm:$0x3] 0.0
      %2112 = vst [vmem:[#allocation3 + $0x168] sm:$0xff] 0.0
      %2113 = vst [vmem:[#allocation3 + $0x170] sm:$0xff] 0.0
      %2114 = vst [vmem:[#allocation3 + $0x178] sm:$0x3] 0.0
      %2115 = vst [vmem:[#allocation3 + $0x180] sm:$0xff] 0.0
      %2116 = vst [vmem:[#allocation3 + $0x188] sm:$0xff] 0.0
      %2117 = vst [vmem:[#allocation3 + $0x190] sm:$0x3] 0.0
      %2118 = vst [vmem:[#allocation3 + $0x198] sm:$0xff] 0.0
      %2119 = vst [vmem:[#allocation3 + $0x1a0] sm:$0xff] 0.0
      %2120 = vst [vmem:[#allocation3 + $0x1a8] sm:$0x3] 0.0
      %v2121 = vmax.f32 %v1972, 0.0
      %v2122 = vmax.f32 %v1975, 0.0
      %v2123 = vmax.f32 %v1978, 0.0
      %v2124 = vmax.f32 %v1981, 0.0
      %v2125 = vmax.f32 %v1984, 0.0
      %v2126 = vmax.f32 %v1987, 0.0
      %v2127 = vmax.f32 %v1990, 0.0
      %v2128 = vmax.f32 %v1993, 0.0
      %v2129 = vmax.f32 %v1996, 0.0
      %v2130 = vmax.f32 %v1999, 0.0
      %v2131 = vmax.f32 %v2002, 0.0
      %v2132 = vmax.f32 %v2005, 0.0
      %v2133 = vmax.f32 %v2008, 0.0
      %v2134 = vmax.f32 %v2011, 0.0
      %v2135 = vmax.f32 %v2014, 0.0
      %v2136 = vmax.f32 %v2017, 0.0
      %v2137 = vmax.f32 %v2020, 0.0
      %v2138 = vmax.f32 %v2023, 0.0
      %v2139 = vmax.f32 %v2026, 0.0
      %v2140 = vmax.f32 %v2029, 0.0
      %v2141 = vmax.f32 %v2032, 0.0
      %v2142 = vmax.f32 %v2035, 0.0
      %v2143 = vmax.f32 %v2038, 0.0
      %v2144 = vmax.f32 %v2041, 0.0
      %v2145 = vmax.f32 %v2044, 0.0
      %v2146 = vmax.f32 %v2047, 0.0
      %v2147 = vmax.f32 %v2050, 0.0
      %v2148 = vmax.f32 %v2053, 0.0
      %v2149 = vmax.f32 %v2056, 0.0
      %v2150 = vmax.f32 %v2059, 0.0
      %v2151 = vmax.f32 %v2062, 0.0
      %v2152 = vmax.f32 %v2065, 0.0
      %v2153 = vmul.f32 %v2121, 1.7128586
      %v2154 = vmul.f32 %v2122, 1.7128586
      %v2155 = vmul.f32 %v2123, 1.7128586
      %v2156 = vmul.f32 %v2124, 1.7128586
      %v2157 = vmul.f32 %v2125, 1.7128586
      %v2158 = vmul.f32 %v2126, 1.7128586
      %v2159 = vmul.f32 %v2127, 1.7128586
      %v2160 = vmul.f32 %v2128, 1.7128586
      %v2161 = vmul.f32 %v2129, 1.7128586
      %v2162 = vmul.f32 %v2130, 1.7128586
      %v2163 = vmul.f32 %v2131, 1.7128586
      %v2164 = vmul.f32 %v2132, 1.7128586
      %v2165 = vmul.f32 %v2133, 1.7128586
      %v2166 = vmul.f32 %v2134, 1.7128586
      %v2167 = vmul.f32 %v2135, 1.7128586
      %v2168 = vmul.f32 %v2136, 1.7128586
      %v2169 = vmul.f32 %v2137, 1.7128586
      %v2170 = vmul.f32 %v2138, 1.7128586
      %v2171 = vmul.f32 %v2139, 1.7128586
      %v2172 = vmul.f32 %v2140, 1.7128586
      %v2173 = vmul.f32 %v2141, 1.7128586
      %v2174 = vmul.f32 %v2142, 1.7128586
      %v2175 = vmul.f32 %v2143, 1.7128586
      %v2176 = vmul.f32 %v2144, 1.7128586
      %v2177 = vmul.f32 %v2145, 1.7128586
      %v2178 = vmul.f32 %v2146, 1.7128586
      %v2179 = vmul.f32 %v2147, 1.7128586
      %v2180 = vmul.f32 %v2148, 1.7128586
      %v2181 = vmul.f32 %v2149, 1.7128586
      %v2182 = vmul.f32 %v2150, 1.7128586
      %v2183 = vmul.f32 %v2151, 1.7128586
      %v2184 = vmul.f32 %v2152, 1.7128586
      %s2185 = scalar_lea.vmem [#allocation3], 24
      %2186 = vst [vmem:[%s2185 + $0x1] sm:$0xff] %v2153
      %2187 = vst [vmem:[%s2185 + $0x9] sm:$0xff] %v2154
      %s2188 = scalar_lea.vmem [#allocation3], 48
      %2189 = vst [vmem:[%s2188 + $0x1] sm:$0xff] %v2155
      %2190 = vst [vmem:[%s2188 + $0x9] sm:$0xff] %v2156
      %s2191 = scalar_lea.vmem [#allocation3], 72
      %2192 = vst [vmem:[%s2191 + $0x1] sm:$0xff] %v2157
      %2193 = vst [vmem:[%s2191 + $0x9] sm:$0xff] %v2158
      %s2194 = scalar_lea.vmem [#allocation3], 96
      %2195 = vst [vmem:[%s2194 + $0x1] sm:$0xff] %v2159
      %2196 = vst [vmem:[%s2194 + $0x9] sm:$0xff] %v2160
      %s2197 = scalar_lea.vmem [#allocation3], 120
      %2198 = vst [vmem:[%s2197 + $0x1] sm:$0xff] %v2161
      %2199 = vst [vmem:[%s2197 + $0x9] sm:$0xff] %v2162
      %s2200 = scalar_lea.vmem [#allocation3], 144
      %2201 = vst [vmem:[%s2200 + $0x1] sm:$0xff] %v2163
      %2202 = vst [vmem:[%s2200 + $0x9] sm:$0xff] %v2164
      %s2203 = scalar_lea.vmem [#allocation3], 168
      %2204 = vst [vmem:[%s2203 + $0x1] sm:$0xff] %v2165
      %2205 = vst [vmem:[%s2203 + $0x9] sm:$0xff] %v2166
      %s2206 = scalar_lea.vmem [#allocation3], 192
      %2207 = vst [vmem:[%s2206 + $0x1] sm:$0xff] %v2167
      %2208 = vst [vmem:[%s2206 + $0x9] sm:$0xff] %v2168
      %s2209 = scalar_lea.vmem [#allocation3], 216
      %2210 = vst [vmem:[%s2209 + $0x1] sm:$0xff] %v2169
      %2211 = vst [vmem:[%s2209 + $0x9] sm:$0xff] %v2170
      %s2212 = scalar_lea.vmem [#allocation3], 240
      %2213 = vst [vmem:[%s2212 + $0x1] sm:$0xff] %v2171
      %2214 = vst [vmem:[%s2212 + $0x9] sm:$0xff] %v2172
      %s2215 = scalar_lea.vmem [#allocation3], 264
      %2216 = vst [vmem:[%s2215 + $0x1] sm:$0xff] %v2173
      %2217 = vst [vmem:[%s2215 + $0x9] sm:$0xff] %v2174
      %s2218 = scalar_lea.vmem [#allocation3], 288
      %2219 = vst [vmem:[%s2218 + $0x1] sm:$0xff] %v2175
      %2220 = vst [vmem:[%s2218 + $0x9] sm:$0xff] %v2176
      %s2221 = scalar_lea.vmem [#allocation3], 312
      %2222 = vst [vmem:[%s2221 + $0x1] sm:$0xff] %v2177
      %2223 = vst [vmem:[%s2221 + $0x9] sm:$0xff] %v2178
      %s2224 = scalar_lea.vmem [#allocation3], 336
      %2225 = vst [vmem:[%s2224 + $0x1] sm:$0xff] %v2179
      %2226 = vst [vmem:[%s2224 + $0x9] sm:$0xff] %v2180
      %s2227 = scalar_lea.vmem [#allocation3], 360
      %2228 = vst [vmem:[%s2227 + $0x1] sm:$0xff] %v2181
      %2229 = vst [vmem:[%s2227 + $0x9] sm:$0xff] %v2182
      %s2230 = scalar_lea.vmem [#allocation3], 384
      %2231 = vst [vmem:[%s2230 + $0x1] sm:$0xff] %v2183
      %2232 = vst [vmem:[%s2230 + $0x9] sm:$0xff] %v2184
      %v2233 = vld [vmem:[%s4] sm:$0x1]
      %v2234 = vld [vmem:[#allocation3] sm:$0xff]
      %v2235 = vld [vmem:[#allocation3 + $0x8] sm:$0xff]
      %v2236 = vld [vmem:[#allocation3 + $0x18] sm:$0xff]
      %v2237 = vld [vmem:[#allocation3 + $0x20] sm:$0xff]
      %v2238 = vld [vmem:[#allocation3 + $0x30] sm:$0xff]
      %v2239 = vld [vmem:[#allocation3 + $0x38] sm:$0xff]
      %v2240 = vld [vmem:[#allocation3 + $0x48] sm:$0xff]
      %v2241 = vld [vmem:[#allocation3 + $0x50] sm:$0xff]
      %v2242 = vld [vmem:[#allocation3 + $0x60] sm:$0xff]
      %v2243 = vld [vmem:[#allocation3 + $0x68] sm:$0xff]
      %v2244 = vld [vmem:[#allocation3 + $0x78] sm:$0xff]
      %v2245 = vld [vmem:[#allocation3 + $0x80] sm:$0xff]
      %v2246 = vld [vmem:[#allocation3 + $0x90] sm:$0xff]
      %v2247 = vld [vmem:[#allocation3 + $0x98] sm:$0xff]
      %v2248 = vld [vmem:[#allocation3 + $0xa8] sm:$0xff]
      %v2249 = vld [vmem:[#allocation3 + $0xb0] sm:$0xff]
      %v2250 = vld [vmem:[#allocation3 + $0xc0] sm:$0xff]
      %v2251 = vld [vmem:[#allocation3 + $0xc8] sm:$0xff]
      %v2252 = vld [vmem:[#allocation3 + $0xd8] sm:$0xff]
      %v2253 = vld [vmem:[#allocation3 + $0xe0] sm:$0xff]
      %v2254 = vld [vmem:[#allocation3 + $0xf0] sm:$0xff]
      %v2255 = vld [vmem:[#allocation3 + $0xf8] sm:$0xff]
      %v2256 = vld [vmem:[#allocation3 + $0x108] sm:$0xff]
      %v2257 = vld [vmem:[#allocation3 + $0x110] sm:$0xff]
      %v2258 = vld [vmem:[#allocation3 + $0x120] sm:$0xff]
      %v2259 = vld [vmem:[#allocation3 + $0x128] sm:$0xff]
      %v2260 = vld [vmem:[#allocation3 + $0x138] sm:$0xff]
      %v2261 = vld [vmem:[#allocation3 + $0x140] sm:$0xff]
      %v2262 = vld [vmem:[#allocation3 + $0x150] sm:$0xff]
      %v2263 = vld [vmem:[#allocation3 + $0x158] sm:$0xff]
      %v2264 = vld [vmem:[#allocation3 + $0x168] sm:$0xff]
      %v2265 = vld [vmem:[#allocation3 + $0x170] sm:$0xff]
      %v2266 = vld [vmem:[#allocation3 + $0x1] sm:$0xff]
      %v2267 = vld [vmem:[#allocation3 + $0x9] sm:$0xff]
      %v2268 = vld [vmem:[#allocation3 + $0x19] sm:$0xff]
      %v2269 = vld [vmem:[#allocation3 + $0x21] sm:$0xff]
      %v2270 = vld [vmem:[#allocation3 + $0x31] sm:$0xff]
      %v2271 = vld [vmem:[#allocation3 + $0x39] sm:$0xff]
      %v2272 = vld [vmem:[#allocation3 + $0x49] sm:$0xff]
      %v2273 = vld [vmem:[#allocation3 + $0x51] sm:$0xff]
      %v2274 = vld [vmem:[#allocation3 + $0x61] sm:$0xff]
      %v2275 = vld [vmem:[#allocation3 + $0x69] sm:$0xff]
      %v2276 = vld [vmem:[#allocation3 + $0x79] sm:$0xff]
      %v2277 = vld [vmem:[#allocation3 + $0x81] sm:$0xff]
      %v2278 = vld [vmem:[#allocation3 + $0x91] sm:$0xff]
      %v2279 = vld [vmem:[#allocation3 + $0x99] sm:$0xff]
      %v2280 = vld [vmem:[#allocation3 + $0xa9] sm:$0xff]
      %v2281 = vld [vmem:[#allocation3 + $0xb1] sm:$0xff]
      %v2282 = vld [vmem:[#allocation3 + $0xc1] sm:$0xff]
      %v2283 = vld [vmem:[#allocation3 + $0xc9] sm:$0xff]
      %v2284 = vld [vmem:[#allocation3 + $0xd9] sm:$0xff]
      %v2285 = vld [vmem:[#allocation3 + $0xe1] sm:$0xff]
      %v2286 = vld [vmem:[#allocation3 + $0xf1] sm:$0xff]
      %v2287 = vld [vmem:[#allocation3 + $0xf9] sm:$0xff]
      %v2288 = vld [vmem:[#allocation3 + $0x109] sm:$0xff]
      %v2289 = vld [vmem:[#allocation3 + $0x111] sm:$0xff]
      %v2290 = vld [vmem:[#allocation3 + $0x121] sm:$0xff]
      %v2291 = vld [vmem:[#allocation3 + $0x129] sm:$0xff]
      %v2292 = vld [vmem:[#allocation3 + $0x139] sm:$0xff]
      %v2293 = vld [vmem:[#allocation3 + $0x141] sm:$0xff]
      %v2294 = vld [vmem:[#allocation3 + $0x151] sm:$0xff]
      %v2295 = vld [vmem:[#allocation3 + $0x159] sm:$0xff]
      %v2296 = vld [vmem:[#allocation3 + $0x169] sm:$0xff]
      %v2297 = vld [vmem:[#allocation3 + $0x171] sm:$0xff]
      %v2298 = vld [vmem:[#allocation3 + $0x2] sm:$0xff]
      %v2299 = vld [vmem:[#allocation3 + $0xa] sm:$0xff]
      %v2300 = vld [vmem:[#allocation3 + $0x1a] sm:$0xff]
      %v2301 = vld [vmem:[#allocation3 + $0x22] sm:$0xff]
      %v2302 = vld [vmem:[#allocation3 + $0x32] sm:$0xff]
      %v2303 = vld [vmem:[#allocation3 + $0x3a] sm:$0xff]
      %v2304 = vld [vmem:[#allocation3 + $0x4a] sm:$0xff]
      %v2305 = vld [vmem:[#allocation3 + $0x52] sm:$0xff]
      %v2306 = vld [vmem:[#allocation3 + $0x62] sm:$0xff]
      %v2307 = vld [vmem:[#allocation3 + $0x6a] sm:$0xff]
      %v2308 = vld [vmem:[#allocation3 + $0x7a] sm:$0xff]
      %v2309 = vld [vmem:[#allocation3 + $0x82] sm:$0xff]
      %v2310 = vld [vmem:[#allocation3 + $0x92] sm:$0xff]
      %v2311 = vld [vmem:[#allocation3 + $0x9a] sm:$0xff]
      %v2312 = vld [vmem:[#allocation3 + $0xaa] sm:$0xff]
      %v2313 = vld [vmem:[#allocation3 + $0xb2] sm:$0xff]
      %v2314 = vld [vmem:[#allocation3 + $0xc2] sm:$0xff]
      %v2315 = vld [vmem:[#allocation3 + $0xca] sm:$0xff]
      %v2316 = vld [vmem:[#allocation3 + $0xda] sm:$0xff]
      %v2317 = vld [vmem:[#allocation3 + $0xe2] sm:$0xff]
      %v2318 = vld [vmem:[#allocation3 + $0xf2] sm:$0xff]
      %v2319 = vld [vmem:[#allocation3 + $0xfa] sm:$0xff]
      %v2320 = vld [vmem:[#allocation3 + $0x10a] sm:$0xff]
      %v2321 = vld [vmem:[#allocation3 + $0x112] sm:$0xff]
      %v2322 = vld [vmem:[#allocation3 + $0x122] sm:$0xff]
      %v2323 = vld [vmem:[#allocation3 + $0x12a] sm:$0xff]
      %v2324 = vld [vmem:[#allocation3 + $0x13a] sm:$0xff]
      %v2325 = vld [vmem:[#allocation3 + $0x142] sm:$0xff]
      %v2326 = vld [vmem:[#allocation3 + $0x152] sm:$0xff]
      %v2327 = vld [vmem:[#allocation3 + $0x15a] sm:$0xff]
      %v2328 = vld [vmem:[#allocation3 + $0x16a] sm:$0xff]
      %v2329 = vld [vmem:[#allocation3 + $0x172] sm:$0xff]
      %v2330 = vld [vmem:[%s2185] sm:$0xff]
      %v2331 = vld [vmem:[%s2185 + $0x8] sm:$0xff]
      %v2332 = vld [vmem:[%s2185 + $0x18] sm:$0xff]
      %v2333 = vld [vmem:[%s2185 + $0x20] sm:$0xff]
      %v2334 = vld [vmem:[%s2185 + $0x30] sm:$0xff]
      %v2335 = vld [vmem:[%s2185 + $0x38] sm:$0xff]
      %v2336 = vld [vmem:[%s2185 + $0x48] sm:$0xff]
      %v2337 = vld [vmem:[%s2185 + $0x50] sm:$0xff]
      %v2338 = vld [vmem:[%s2185 + $0x60] sm:$0xff]
      %v2339 = vld [vmem:[%s2185 + $0x68] sm:$0xff]
      %v2340 = vld [vmem:[%s2185 + $0x78] sm:$0xff]
      %v2341 = vld [vmem:[%s2185 + $0x80] sm:$0xff]
      %v2342 = vld [vmem:[%s2185 + $0x90] sm:$0xff]
      %v2343 = vld [vmem:[%s2185 + $0x98] sm:$0xff]
      %v2344 = vld [vmem:[%s2185 + $0xa8] sm:$0xff]
      %v2345 = vld [vmem:[%s2185 + $0xb0] sm:$0xff]
      %v2346 = vld [vmem:[%s2185 + $0xc0] sm:$0xff]
      %v2347 = vld [vmem:[%s2185 + $0xc8] sm:$0xff]
      %v2348 = vld [vmem:[%s2185 + $0xd8] sm:$0xff]
      %v2349 = vld [vmem:[%s2185 + $0xe0] sm:$0xff]
      %v2350 = vld [vmem:[%s2185 + $0xf0] sm:$0xff]
      %v2351 = vld [vmem:[%s2185 + $0xf8] sm:$0xff]
      %v2352 = vld [vmem:[%s2185 + $0x108] sm:$0xff]
      %v2353 = vld [vmem:[%s2185 + $0x110] sm:$0xff]
      %v2354 = vld [vmem:[%s2185 + $0x120] sm:$0xff]
      %v2355 = vld [vmem:[%s2185 + $0x128] sm:$0xff]
      %v2356 = vld [vmem:[%s2185 + $0x138] sm:$0xff]
      %v2357 = vld [vmem:[%s2185 + $0x140] sm:$0xff]
      %v2358 = vld [vmem:[%s2185 + $0x150] sm:$0xff]
      %v2359 = vld [vmem:[%s2185 + $0x158] sm:$0xff]
      %v2360 = vld [vmem:[%s2185 + $0x168] sm:$0xff]
      %v2361 = vld [vmem:[%s2185 + $0x170] sm:$0xff]
      %v2362 = vld [vmem:[%s2185 + $0x1] sm:$0xff]
      %v2363 = vld [vmem:[%s2185 + $0x9] sm:$0xff]
      %v2364 = vld [vmem:[%s2185 + $0x19] sm:$0xff]
      %v2365 = vld [vmem:[%s2185 + $0x21] sm:$0xff]
      %v2366 = vld [vmem:[%s2185 + $0x31] sm:$0xff]
      %v2367 = vld [vmem:[%s2185 + $0x39] sm:$0xff]
      %v2368 = vld [vmem:[%s2185 + $0x49] sm:$0xff]
      %v2369 = vld [vmem:[%s2185 + $0x51] sm:$0xff]
      %v2370 = vld [vmem:[%s2185 + $0x61] sm:$0xff]
      %v2371 = vld [vmem:[%s2185 + $0x69] sm:$0xff]
      %v2372 = vld [vmem:[%s2185 + $0x79] sm:$0xff]
      %v2373 = vld [vmem:[%s2185 + $0x81] sm:$0xff]
      %v2374 = vld [vmem:[%s2185 + $0x91] sm:$0xff]
      %v2375 = vld [vmem:[%s2185 + $0x99] sm:$0xff]
      %v2376 = vld [vmem:[%s2185 + $0xa9] sm:$0xff]
      %v2377 = vld [vmem:[%s2185 + $0xb1] sm:$0xff]
      %v2378 = vld [vmem:[%s2185 + $0xc1] sm:$0xff]
      %v2379 = vld [vmem:[%s2185 + $0xc9] sm:$0xff]
      %v2380 = vld [vmem:[%s2185 + $0xd9] sm:$0xff]
      %v2381 = vld [vmem:[%s2185 + $0xe1] sm:$0xff]
      %v2382 = vld [vmem:[%s2185 + $0xf1] sm:$0xff]
      %v2383 = vld [vmem:[%s2185 + $0xf9] sm:$0xff]
      %v2384 = vld [vmem:[%s2185 + $0x109] sm:$0xff]
      %v2385 = vld [vmem:[%s2185 + $0x111] sm:$0xff]
      %v2386 = vld [vmem:[%s2185 + $0x121] sm:$0xff]
      %v2387 = vld [vmem:[%s2185 + $0x129] sm:$0xff]
      %v2388 = vld [vmem:[%s2185 + $0x139] sm:$0xff]
      %v2389 = vld [vmem:[%s2185 + $0x141] sm:$0xff]
      %v2390 = vld [vmem:[%s2185 + $0x151] sm:$0xff]
      %v2391 = vld [vmem:[%s2185 + $0x159] sm:$0xff]
      %v2392 = vld [vmem:[%s2185 + $0x169] sm:$0xff]
      %v2393 = vld [vmem:[%s2185 + $0x171] sm:$0xff]
      %v2394 = vld [vmem:[%s2185 + $0x2] sm:$0xff]
      %v2395 = vld [vmem:[%s2185 + $0xa] sm:$0xff]
      %v2396 = vld [vmem:[%s2185 + $0x1a] sm:$0xff]
      %v2397 = vld [vmem:[%s2185 + $0x22] sm:$0xff]
      %v2398 = vld [vmem:[%s2185 + $0x32] sm:$0xff]
      %v2399 = vld [vmem:[%s2185 + $0x3a] sm:$0xff]
      %v2400 = vld [vmem:[%s2185 + $0x4a] sm:$0xff]
      %v2401 = vld [vmem:[%s2185 + $0x52] sm:$0xff]
      %v2402 = vld [vmem:[%s2185 + $0x62] sm:$0xff]
      %v2403 = vld [vmem:[%s2185 + $0x6a] sm:$0xff]
      %v2404 = vld [vmem:[%s2185 + $0x7a] sm:$0xff]
      %v2405 = vld [vmem:[%s2185 + $0x82] sm:$0xff]
      %v2406 = vld [vmem:[%s2185 + $0x92] sm:$0xff]
      %v2407 = vld [vmem:[%s2185 + $0x9a] sm:$0xff]
      %v2408 = vld [vmem:[%s2185 + $0xaa] sm:$0xff]
      %v2409 = vld [vmem:[%s2185 + $0xb2] sm:$0xff]
      %v2410 = vld [vmem:[%s2185 + $0xc2] sm:$0xff]
      %v2411 = vld [vmem:[%s2185 + $0xca] sm:$0xff]
      %v2412 = vld [vmem:[%s2185 + $0xda] sm:$0xff]
      %v2413 = vld [vmem:[%s2185 + $0xe2] sm:$0xff]
      %v2414 = vld [vmem:[%s2185 + $0xf2] sm:$0xff]
      %v2415 = vld [vmem:[%s2185 + $0xfa] sm:$0xff]
      %v2416 = vld [vmem:[%s2185 + $0x10a] sm:$0xff]
      %v2417 = vld [vmem:[%s2185 + $0x112] sm:$0xff]
      %v2418 = vld [vmem:[%s2185 + $0x122] sm:$0xff]
      %v2419 = vld [vmem:[%s2185 + $0x12a] sm:$0xff]
      %v2420 = vld [vmem:[%s2185 + $0x13a] sm:$0xff]
      %v2421 = vld [vmem:[%s2185 + $0x142] sm:$0xff]
      %v2422 = vld [vmem:[%s2185 + $0x152] sm:$0xff]
      %v2423 = vld [vmem:[%s2185 + $0x15a] sm:$0xff]
      %v2424 = vld [vmem:[%s2185 + $0x16a] sm:$0xff]
      %v2425 = vld [vmem:[%s2185 + $0x172] sm:$0xff]
      %v2426 = vld [vmem:[%s2188] sm:$0xff]
      %v2427 = vld [vmem:[%s2188 + $0x8] sm:$0xff]
      %v2428 = vld [vmem:[%s2188 + $0x18] sm:$0xff]
      %v2429 = vld [vmem:[%s2188 + $0x20] sm:$0xff]
      %v2430 = vld [vmem:[%s2188 + $0x30] sm:$0xff]
      %v2431 = vld [vmem:[%s2188 + $0x38] sm:$0xff]
      %v2432 = vld [vmem:[%s2188 + $0x48] sm:$0xff]
      %v2433 = vld [vmem:[%s2188 + $0x50] sm:$0xff]
      %v2434 = vld [vmem:[%s2188 + $0x60] sm:$0xff]
      %v2435 = vld [vmem:[%s2188 + $0x68] sm:$0xff]
      %v2436 = vld [vmem:[%s2188 + $0x78] sm:$0xff]
      %v2437 = vld [vmem:[%s2188 + $0x80] sm:$0xff]
      %v2438 = vld [vmem:[%s2188 + $0x90] sm:$0xff]
      %v2439 = vld [vmem:[%s2188 + $0x98] sm:$0xff]
      %v2440 = vld [vmem:[%s2188 + $0xa8] sm:$0xff]
      %v2441 = vld [vmem:[%s2188 + $0xb0] sm:$0xff]
      %v2442 = vld [vmem:[%s2188 + $0xc0] sm:$0xff]
      %v2443 = vld [vmem:[%s2188 + $0xc8] sm:$0xff]
      %v2444 = vld [vmem:[%s2188 + $0xd8] sm:$0xff]
      %v2445 = vld [vmem:[%s2188 + $0xe0] sm:$0xff]
      %v2446 = vld [vmem:[%s2188 + $0xf0] sm:$0xff]
      %v2447 = vld [vmem:[%s2188 + $0xf8] sm:$0xff]
      %v2448 = vld [vmem:[%s2188 + $0x108] sm:$0xff]
      %v2449 = vld [vmem:[%s2188 + $0x110] sm:$0xff]
      %v2450 = vld [vmem:[%s2188 + $0x120] sm:$0xff]
      %v2451 = vld [vmem:[%s2188 + $0x128] sm:$0xff]
      %v2452 = vld [vmem:[%s2188 + $0x138] sm:$0xff]
      %v2453 = vld [vmem:[%s2188 + $0x140] sm:$0xff]
      %v2454 = vld [vmem:[%s2188 + $0x150] sm:$0xff]
      %v2455 = vld [vmem:[%s2188 + $0x158] sm:$0xff]
      %v2456 = vld [vmem:[%s2188 + $0x168] sm:$0xff]
      %v2457 = vld [vmem:[%s2188 + $0x170] sm:$0xff]
      %v2458 = vld [vmem:[%s2188 + $0x1] sm:$0xff]
      %v2459 = vld [vmem:[%s2188 + $0x9] sm:$0xff]
      %v2460 = vld [vmem:[%s2188 + $0x19] sm:$0xff]
      %v2461 = vld [vmem:[%s2188 + $0x21] sm:$0xff]
      %v2462 = vld [vmem:[%s2188 + $0x31] sm:$0xff]
      %v2463 = vld [vmem:[%s2188 + $0x39] sm:$0xff]
      %v2464 = vld [vmem:[%s2188 + $0x49] sm:$0xff]
      %v2465 = vld [vmem:[%s2188 + $0x51] sm:$0xff]
      %v2466 = vld [vmem:[%s2188 + $0x61] sm:$0xff]
      %v2467 = vld [vmem:[%s2188 + $0x69] sm:$0xff]
      %v2468 = vld [vmem:[%s2188 + $0x79] sm:$0xff]
      %v2469 = vld [vmem:[%s2188 + $0x81] sm:$0xff]
      %v2470 = vld [vmem:[%s2188 + $0x91] sm:$0xff]
      %v2471 = vld [vmem:[%s2188 + $0x99] sm:$0xff]
      %v2472 = vld [vmem:[%s2188 + $0xa9] sm:$0xff]
      %v2473 = vld [vmem:[%s2188 + $0xb1] sm:$0xff]
      %v2474 = vld [vmem:[%s2188 + $0xc1] sm:$0xff]
      %v2475 = vld [vmem:[%s2188 + $0xc9] sm:$0xff]
      %v2476 = vld [vmem:[%s2188 + $0xd9] sm:$0xff]
      %v2477 = vld [vmem:[%s2188 + $0xe1] sm:$0xff]
      %v2478 = vld [vmem:[%s2188 + $0xf1] sm:$0xff]
      %v2479 = vld [vmem:[%s2188 + $0xf9] sm:$0xff]
      %v2480 = vld [vmem:[%s2188 + $0x109] sm:$0xff]
      %v2481 = vld [vmem:[%s2188 + $0x111] sm:$0xff]
      %v2482 = vld [vmem:[%s2188 + $0x121] sm:$0xff]
      %v2483 = vld [vmem:[%s2188 + $0x129] sm:$0xff]
      %v2484 = vld [vmem:[%s2188 + $0x139] sm:$0xff]
      %v2485 = vld [vmem:[%s2188 + $0x141] sm:$0xff]
      %v2486 = vld [vmem:[%s2188 + $0x151] sm:$0xff]
      %v2487 = vld [vmem:[%s2188 + $0x159] sm:$0xff]
      %v2488 = vld [vmem:[%s2188 + $0x169] sm:$0xff]
      %v2489 = vld [vmem:[%s2188 + $0x171] sm:$0xff]
      %v2490 = vld [vmem:[%s2188 + $0x2] sm:$0xff]
      %v2491 = vld [vmem:[%s2188 + $0xa] sm:$0xff]
      %v2492 = vld [vmem:[%s2188 + $0x1a] sm:$0xff]
      %v2493 = vld [vmem:[%s2188 + $0x22] sm:$0xff]
      %v2494 = vld [vmem:[%s2188 + $0x32] sm:$0xff]
      %v2495 = vld [vmem:[%s2188 + $0x3a] sm:$0xff]
      %v2496 = vld [vmem:[%s2188 + $0x4a] sm:$0xff]
      %v2497 = vld [vmem:[%s2188 + $0x52] sm:$0xff]
      %v2498 = vld [vmem:[%s2188 + $0x62] sm:$0xff]
      %v2499 = vld [vmem:[%s2188 + $0x6a] sm:$0xff]
      %v2500 = vld [vmem:[%s2188 + $0x7a] sm:$0xff]
      %v2501 = vld [vmem:[%s2188 + $0x82] sm:$0xff]
      %v2502 = vld [vmem:[%s2188 + $0x92] sm:$0xff]
      %v2503 = vld [vmem:[%s2188 + $0x9a] sm:$0xff]
      %v2504 = vld [vmem:[%s2188 + $0xaa] sm:$0xff]
      %v2505 = vld [vmem:[%s2188 + $0xb2] sm:$0xff]
      %v2506 = vld [vmem:[%s2188 + $0xc2] sm:$0xff]
      %v2507 = vld [vmem:[%s2188 + $0xca] sm:$0xff]
      %v2508 = vld [vmem:[%s2188 + $0xda] sm:$0xff]
      %v2509 = vld [vmem:[%s2188 + $0xe2] sm:$0xff]
      %v2510 = vld [vmem:[%s2188 + $0xf2] sm:$0xff]
      %v2511 = vld [vmem:[%s2188 + $0xfa] sm:$0xff]
      %v2512 = vld [vmem:[%s2188 + $0x10a] sm:$0xff]
      %v2513 = vld [vmem:[%s2188 + $0x112] sm:$0xff]
      %v2514 = vld [vmem:[%s2188 + $0x122] sm:$0xff]
      %v2515 = vld [vmem:[%s2188 + $0x12a] sm:$0xff]
      %v2516 = vld [vmem:[%s2188 + $0x13a] sm:$0xff]
      %v2517 = vld [vmem:[%s2188 + $0x142] sm:$0xff]
      %v2518 = vld [vmem:[%s2188 + $0x152] sm:$0xff]
      %v2519 = vld [vmem:[%s2188 + $0x15a] sm:$0xff]
      %v2520 = vld [vmem:[%s2188 + $0x16a] sm:$0xff]
      %v2521 = vld [vmem:[%s2188 + $0x172] sm:$0xff]
      %v2522 = vld [vmem:[%s3] sm:$0xff]
      %v2523 = vld [vmem:[%s3 + $0x8] sm:$0xff]
      %v2524 = vld [vmem:[%s3 + $0x10] sm:$0xff]
      %v2525 = vld [vmem:[%s3 + $0x18] sm:$0xff]
      %v2526 = vld [vmem:[%s3 + $0x20] sm:$0xff]
      %v2527 = vld [vmem:[%s3 + $0x28] sm:$0xff]
      %v2528 = vld [vmem:[%s3 + $0x30] sm:$0xff]
      %v2529 = vld [vmem:[%s3 + $0x38] sm:$0xff]
      %v2530 = vld [vmem:[%s3 + $0x40] sm:$0xff]
      %v2531 = vld [vmem:[%s3 + $0x48] sm:$0xff]
      %v2532 = vld [vmem:[%s3 + $0x50] sm:$0xff]
      %v2533 = vld [vmem:[%s3 + $0x58] sm:$0xff]
      %v2534 = vld [vmem:[%s3 + $0x60] sm:$0xff]
      %v2535 = vld [vmem:[%s3 + $0x68] sm:$0xff]
      %v2536 = vld [vmem:[%s3 + $0x70] sm:$0xff]
      %v2537 = vld [vmem:[%s3 + $0x78] sm:$0xff]
      %v2538 = vld [vmem:[%s3 + $0x80] sm:$0xff]
      %v2539 = vld [vmem:[%s3 + $0x88] sm:$0xff]
      %v2540 = vld [vmem:[%s3 + $0x90] sm:$0xff]
      %v2541 = vld [vmem:[%s3 + $0x98] sm:$0xff]
      %v2542 = vld [vmem:[%s3 + $0xa0] sm:$0xff]
      %v2543 = vld [vmem:[%s3 + $0xa8] sm:$0xff]
      %v2544 = vld [vmem:[%s3 + $0xb0] sm:$0xff]
      %v2545 = vld [vmem:[%s3 + $0xb8] sm:$0xff]
      %v2546 = vld [vmem:[%s3 + $0xc0] sm:$0xff]
      %v2547 = vld [vmem:[%s3 + $0xc8] sm:$0xff]
      %v2548 = vld [vmem:[%s3 + $0xd0] sm:$0xff]
      %v2549 = vld [vmem:[%s3 + $0xd8] sm:$0xff]
      %v2550 = vld [vmem:[%s3 + $0xe0] sm:$0xff]
      %v2551 = vld [vmem:[%s3 + $0xe8] sm:$0xff]
      %v2552 = vld [vmem:[%s3 + $0xf0] sm:$0xff]
      %v2553 = vld [vmem:[%s3 + $0xf8] sm:$0xff]
      %v2554 = vld [vmem:[%s3 + $0x100] sm:$0xff]
      %v2555 = vld [vmem:[%s3 + $0x108] sm:$0xff]
      %v2556 = vld [vmem:[%s3 + $0x110] sm:$0xff]
      %v2557 = vld [vmem:[%s3 + $0x118] sm:$0xff]
      %v2558 = vld [vmem:[%s3 + $0x120] sm:$0xff]
      %v2559 = vld [vmem:[%s3 + $0x128] sm:$0xff]
      %v2560 = vld [vmem:[%s3 + $0x130] sm:$0xff]
      %v2561 = vld [vmem:[%s3 + $0x138] sm:$0xff]
      %v2562 = vld [vmem:[%s3 + $0x140] sm:$0xff]
      %v2563 = vld [vmem:[%s3 + $0x148] sm:$0xff]
      %v2564 = vld [vmem:[%s3 + $0x150] sm:$0xff]
      %v2565 = vld [vmem:[%s3 + $0x158] sm:$0xff]
      %v2566 = vld [vmem:[%s3 + $0x160] sm:$0xff]
      %v2567 = vld [vmem:[%s3 + $0x168] sm:$0xff]
      %v2568 = vld [vmem:[%s3 + $0x170] sm:$0xff]
      %v2569 = vld [vmem:[%s3 + $0x178] sm:$0xff]
      %v2570 = vld [vmem:[%s3 + $0x180] sm:$0xff]
      %v2571 = vld [vmem:[%s3 + $0x188] sm:$0xff]
      %v2572 = vld [vmem:[%s3 + $0x190] sm:$0xff]
      %v2573 = vld [vmem:[%s3 + $0x198] sm:$0xff]
      %v2574 = vld [vmem:[%s3 + $0x1a0] sm:$0xff]
      %v2575 = vld [vmem:[%s3 + $0x1a8] sm:$0xff]
      %v2576 = vld [vmem:[%s3 + $0x1b0] sm:$0xff]
      %v2577 = vld [vmem:[%s3 + $0x1b8] sm:$0xff]
      %v2578 = vld [vmem:[%s3 + $0x1c0] sm:$0xff]
      %v2579 = vld [vmem:[%s3 + $0x1c8] sm:$0xff]
      %v2580 = vld [vmem:[%s3 + $0x1d0] sm:$0xff]
      %v2581 = vld [vmem:[%s3 + $0x1d8] sm:$0xff]
      %v2582 = vld [vmem:[%s3 + $0x1e0] sm:$0xff]
      %v2583 = vld [vmem:[%s3 + $0x1e8] sm:$0xff]
      %v2584 = vld [vmem:[%s3 + $0x1f0] sm:$0xff]
      %v2585 = vld [vmem:[%s3 + $0x1f8] sm:$0xff]
      %v2586 = vld [vmem:[%s3 + $0x200] sm:$0xff]
      %v2587 = vld [vmem:[%s3 + $0x208] sm:$0xff]
      %v2588 = vld [vmem:[%s3 + $0x210] sm:$0xff]
      %v2589 = vld [vmem:[%s3 + $0x218] sm:$0xff]
      %v2590 = vld [vmem:[%s3 + $0x220] sm:$0xff]
      %v2591 = vld [vmem:[%s3 + $0x228] sm:$0xff]
      %v2592 = vld [vmem:[%s3 + $0x230] sm:$0xff]
      %v2593 = vld [vmem:[%s3 + $0x238] sm:$0xff]
      %v2594 = vld [vmem:[%s3 + $0x240] sm:$0xff]
      %v2595 = vld [vmem:[%s3 + $0x248] sm:$0xff]
      %v2596 = vld [vmem:[%s3 + $0x250] sm:$0xff]
      %v2597 = vld [vmem:[%s3 + $0x258] sm:$0xff]
      %v2598 = vld [vmem:[%s3 + $0x260] sm:$0xff]
      %v2599 = vld [vmem:[%s3 + $0x268] sm:$0xff]
      %v2600 = vld [vmem:[%s3 + $0x270] sm:$0xff]
      %v2601 = vld [vmem:[%s3 + $0x278] sm:$0xff]
      %v2602 = vld [vmem:[%s3 + $0x280] sm:$0xff]
      %v2603 = vld [vmem:[%s3 + $0x288] sm:$0xff]
      %v2604 = vld [vmem:[%s3 + $0x290] sm:$0xff]
      %v2605 = vld [vmem:[%s3 + $0x298] sm:$0xff]
      %v2606 = vld [vmem:[%s3 + $0x2a0] sm:$0xff]
      %v2607 = vld [vmem:[%s3 + $0x2a8] sm:$0xff]
      %v2608 = vld [vmem:[%s3 + $0x2b0] sm:$0xff]
      %v2609 = vld [vmem:[%s3 + $0x2b8] sm:$0xff]
      %v2610 = vld [vmem:[%s3 + $0x2c0] sm:$0xff]
      %v2611 = vld [vmem:[%s3 + $0x2c8] sm:$0xff]
      %v2612 = vld [vmem:[%s3 + $0x2d0] sm:$0xff]
      %v2613 = vld [vmem:[%s3 + $0x2d8] sm:$0xff]
      %v2614 = vld [vmem:[%s3 + $0x2e0] sm:$0xff]
      %v2615 = vld [vmem:[%s3 + $0x2e8] sm:$0xff]
      %v2616 = vld [vmem:[%s3 + $0x2f0] sm:$0xff]
      %v2617 = vld [vmem:[%s3 + $0x2f8] sm:$0xff]
      %v2618 = vld [vmem:[%s3 + $0x300] sm:$0xff]
      %v2619 = vld [vmem:[%s3 + $0x308] sm:$0xff]
      %v2620 = vld [vmem:[%s3 + $0x310] sm:$0xff]
      %v2621 = vld [vmem:[%s3 + $0x318] sm:$0xff]
      %v2622 = vld [vmem:[%s3 + $0x320] sm:$0xff]
      %v2623 = vld [vmem:[%s3 + $0x328] sm:$0xff]
      %v2624 = vld [vmem:[%s3 + $0x330] sm:$0xff]
      %v2625 = vld [vmem:[%s3 + $0x338] sm:$0xff]
      %v2626 = vld [vmem:[%s3 + $0x340] sm:$0xff]
      %v2627 = vld [vmem:[%s3 + $0x348] sm:$0xff]
      %v2628 = vld [vmem:[%s3 + $0x350] sm:$0xff]
      %v2629 = vld [vmem:[%s3 + $0x358] sm:$0xff]
      %v2630 = vld [vmem:[%s3 + $0x360] sm:$0xff]
      %v2631 = vld [vmem:[%s3 + $0x368] sm:$0xff]
      %v2632 = vld [vmem:[%s3 + $0x370] sm:$0xff]
      %v2633 = vld [vmem:[%s3 + $0x378] sm:$0xff]
      %v2634 = vld [vmem:[%s3 + $0x380] sm:$0xff]
      %v2635 = vld [vmem:[%s3 + $0x388] sm:$0xff]
      %v2636 = vld [vmem:[%s3 + $0x390] sm:$0xff]
      %v2637 = vld [vmem:[%s3 + $0x398] sm:$0xff]
      %v2638 = vld [vmem:[%s3 + $0x3a0] sm:$0xff]
      %v2639 = vld [vmem:[%s3 + $0x3a8] sm:$0xff]
      %v2640 = vld [vmem:[%s3 + $0x3b0] sm:$0xff]
      %v2641 = vld [vmem:[%s3 + $0x3b8] sm:$0xff]
      %v2642 = vld [vmem:[%s3 + $0x3c0] sm:$0xff]
      %v2643 = vld [vmem:[%s3 + $0x3c8] sm:$0xff]
      %v2644 = vld [vmem:[%s3 + $0x3d0] sm:$0xff]
      %v2645 = vld [vmem:[%s3 + $0x3d8] sm:$0xff]
      %v2646 = vld [vmem:[%s3 + $0x3e0] sm:$0xff]
      %v2647 = vld [vmem:[%s3 + $0x3e8] sm:$0xff]
      %v2648 = vld [vmem:[%s3 + $0x3f0] sm:$0xff]
      %v2649 = vld [vmem:[%s3 + $0x3f8] sm:$0xff]
      %v2650 = vld [vmem:[%s3 + $0x400] sm:$0xff]
      %v2651 = vld [vmem:[%s3 + $0x408] sm:$0xff]
      %v2652 = vld [vmem:[%s3 + $0x410] sm:$0xff]
      %v2653 = vld [vmem:[%s3 + $0x418] sm:$0xff]
      %v2654 = vld [vmem:[%s3 + $0x420] sm:$0xff]
      %v2655 = vld [vmem:[%s3 + $0x428] sm:$0xff]
      %v2656 = vld [vmem:[%s3 + $0x430] sm:$0xff]
      %v2657 = vld [vmem:[%s3 + $0x438] sm:$0xff]
      %v2658 = vld [vmem:[%s3 + $0x440] sm:$0xff]
      %v2659 = vld [vmem:[%s3 + $0x448] sm:$0xff]
      %v2660 = vld [vmem:[%s3 + $0x450] sm:$0xff]
      %v2661 = vld [vmem:[%s3 + $0x458] sm:$0xff]
      %v2662 = vld [vmem:[%s3 + $0x460] sm:$0xff]
      %v2663 = vld [vmem:[%s3 + $0x468] sm:$0xff]
      %v2664 = vld [vmem:[%s3 + $0x470] sm:$0xff]
      %v2665 = vld [vmem:[%s3 + $0x478] sm:$0xff]
      %v2667 = vperm.slane %v2233, 0
      %2669 = vmatpush.msra.mxu0 %v2537
      %2670 = vmatpush.msra.mxu0 %v2536
      %2671 = vmatpush.msra.mxu0 %v2535
      %2672 = vmatpush.msra.mxu0 %v2534
      %2673 = vmatpush.msra.mxu0 %v2533
      %2674 = vmatpush.msra.mxu0 %v2532
      %2675 = vmatpush.msra.mxu0 %v2531
      %2676 = vmatpush.msra.mxu0 %v2530
      %2677 = vmatpush.msra.mxu0 %v2529
      %2678 = vmatpush.msra.mxu0 %v2528
      %2679 = vmatpush.msra.mxu0 %v2527
      %2680 = vmatpush.msra.mxu0 %v2526
      %2681 = vmatpush.msra.mxu0 %v2525
      %2682 = vmatpush.msra.mxu0 %v2524
      %2683 = vmatpush.msra.mxu0 %v2523
      %2684 = vmatpush.msra.mxu0 %v2522
      %2685 = vmatmul.f32.gmra.mxu0 %v2234
      %v2686 = vpop.f32.mrf.mxu0
      %v2687 = vadd.f32 %v2667, %v2686
      %2688 = vmatmul.f32.gmra.mxu0 %v2235
      %v2689 = vpop.f32.mrf.mxu0
      %v2690 = vadd.f32 %v2667, %v2689
      %2691 = vmatmul.f32.gmra.mxu0 %v2236
      %v2692 = vpop.f32.mrf.mxu0
      %v2693 = vadd.f32 %v2667, %v2692
      %2694 = vmatmul.f32.gmra.mxu0 %v2237
      %v2695 = vpop.f32.mrf.mxu0
      %v2696 = vadd.f32 %v2667, %v2695
      %2697 = vmatmul.f32.gmra.mxu0 %v2238
      %v2698 = vpop.f32.mrf.mxu0
      %v2699 = vadd.f32 %v2667, %v2698
      %2700 = vmatmul.f32.gmra.mxu0 %v2239
      %v2701 = vpop.f32.mrf.mxu0
      %v2702 = vadd.f32 %v2667, %v2701
      %2703 = vmatmul.f32.gmra.mxu0 %v2240
      %v2704 = vpop.f32.mrf.mxu0
      %v2705 = vadd.f32 %v2667, %v2704
      %2706 = vmatmul.f32.gmra.mxu0 %v2241
      %v2707 = vpop.f32.mrf.mxu0
      %v2708 = vadd.f32 %v2667, %v2707
      %2709 = vmatmul.f32.gmra.mxu0 %v2242
      %v2710 = vpop.f32.mrf.mxu0
      %v2711 = vadd.f32 %v2667, %v2710
      %2712 = vmatmul.f32.gmra.mxu0 %v2243
      %v2713 = vpop.f32.mrf.mxu0
      %v2714 = vadd.f32 %v2667, %v2713
      %2715 = vmatmul.f32.gmra.mxu0 %v2244
      %v2716 = vpop.f32.mrf.mxu0
      %v2717 = vadd.f32 %v2667, %v2716
      %2718 = vmatmul.f32.gmra.mxu0 %v2245
      %v2719 = vpop.f32.mrf.mxu0
      %v2720 = vadd.f32 %v2667, %v2719
      %2721 = vmatmul.f32.gmra.mxu0 %v2246
      %v2722 = vpop.f32.mrf.mxu0
      %v2723 = vadd.f32 %v2667, %v2722
      %2724 = vmatmul.f32.gmra.mxu0 %v2247
      %v2725 = vpop.f32.mrf.mxu0
      %v2726 = vadd.f32 %v2667, %v2725
      %2727 = vmatmul.f32.gmra.mxu0 %v2248
      %v2728 = vpop.f32.mrf.mxu0
      %v2729 = vadd.f32 %v2667, %v2728
      %2730 = vmatmul.f32.gmra.mxu0 %v2249
      %v2731 = vpop.f32.mrf.mxu0
      %v2732 = vadd.f32 %v2667, %v2731
      %2733 = vmatmul.f32.gmra.mxu0 %v2250
      %v2734 = vpop.f32.mrf.mxu0
      %v2735 = vadd.f32 %v2667, %v2734
      %2736 = vmatmul.f32.gmra.mxu0 %v2251
      %v2737 = vpop.f32.mrf.mxu0
      %v2738 = vadd.f32 %v2667, %v2737
      %2739 = vmatmul.f32.gmra.mxu0 %v2252
      %v2740 = vpop.f32.mrf.mxu0
      %v2741 = vadd.f32 %v2667, %v2740
      %2742 = vmatmul.f32.gmra.mxu0 %v2253
      %v2743 = vpop.f32.mrf.mxu0
      %v2744 = vadd.f32 %v2667, %v2743
      %2745 = vmatmul.f32.gmra.mxu0 %v2254
      %v2746 = vpop.f32.mrf.mxu0
      %v2747 = vadd.f32 %v2667, %v2746
      %2748 = vmatmul.f32.gmra.mxu0 %v2255
      %v2749 = vpop.f32.mrf.mxu0
      %v2750 = vadd.f32 %v2667, %v2749
      %2751 = vmatmul.f32.gmra.mxu0 %v2256
      %v2752 = vpop.f32.mrf.mxu0
      %v2753 = vadd.f32 %v2667, %v2752
      %2754 = vmatmul.f32.gmra.mxu0 %v2257
      %v2755 = vpop.f32.mrf.mxu0
      %v2756 = vadd.f32 %v2667, %v2755
      %2757 = vmatmul.f32.gmra.mxu0 %v2258
      %v2758 = vpop.f32.mrf.mxu0
      %v2759 = vadd.f32 %v2667, %v2758
      %2760 = vmatmul.f32.gmra.mxu0 %v2259
      %v2761 = vpop.f32.mrf.mxu0
      %v2762 = vadd.f32 %v2667, %v2761
      %2763 = vmatmul.f32.gmra.mxu0 %v2260
      %v2764 = vpop.f32.mrf.mxu0
      %v2765 = vadd.f32 %v2667, %v2764
      %2766 = vmatmul.f32.gmra.mxu0 %v2261
      %v2767 = vpop.f32.mrf.mxu0
      %v2768 = vadd.f32 %v2667, %v2767
      %2769 = vmatmul.f32.gmra.mxu0 %v2262
      %v2770 = vpop.f32.mrf.mxu0
      %v2771 = vadd.f32 %v2667, %v2770
      %2772 = vmatmul.f32.gmra.mxu0 %v2263
      %v2773 = vpop.f32.mrf.mxu0
      %v2774 = vadd.f32 %v2667, %v2773
      %2775 = vmatmul.f32.gmra.mxu0 %v2264
      %v2776 = vpop.f32.mrf.mxu0
      %v2777 = vadd.f32 %v2667, %v2776
      %2778 = vmatmul.f32.gmra.mxu0 %v2265
      %v2779 = vpop.f32.mrf.mxu0
      %v2780 = vadd.f32 %v2667, %v2779
      %2781 = vdwg.mxu0
      %2782 = vmatpush.msra.mxu0 %v2553
      %2783 = vmatpush.msra.mxu0 %v2552
      %2784 = vmatpush.msra.mxu0 %v2551
      %2785 = vmatpush.msra.mxu0 %v2550
      %2786 = vmatpush.msra.mxu0 %v2549
      %2787 = vmatpush.msra.mxu0 %v2548
      %2788 = vmatpush.msra.mxu0 %v2547
      %2789 = vmatpush.msra.mxu0 %v2546
      %2790 = vmatpush.msra.mxu0 %v2545
      %2791 = vmatpush.msra.mxu0 %v2544
      %2792 = vmatpush.msra.mxu0 %v2543
      %2793 = vmatpush.msra.mxu0 %v2542
      %2794 = vmatpush.msra.mxu0 %v2541
      %2795 = vmatpush.msra.mxu0 %v2540
      %2796 = vmatpush.msra.mxu0 %v2539
      %2797 = vmatpush.msra.mxu0 %v2538
      %2798 = vmatmul.f32.gmra.mxu0 %v2266
      %v2799 = vpop.f32.mrf.mxu0
      %v2800 = vadd.f32 %v2687, %v2799
      %2801 = vmatmul.f32.gmra.mxu0 %v2267
      %v2802 = vpop.f32.mrf.mxu0
      %v2803 = vadd.f32 %v2690, %v2802
      %2804 = vmatmul.f32.gmra.mxu0 %v2268
      %v2805 = vpop.f32.mrf.mxu0
      %v2806 = vadd.f32 %v2693, %v2805
      %2807 = vmatmul.f32.gmra.mxu0 %v2269
      %v2808 = vpop.f32.mrf.mxu0
      %v2809 = vadd.f32 %v2696, %v2808
      %2810 = vmatmul.f32.gmra.mxu0 %v2270
      %v2811 = vpop.f32.mrf.mxu0
      %v2812 = vadd.f32 %v2699, %v2811
      %2813 = vmatmul.f32.gmra.mxu0 %v2271
      %v2814 = vpop.f32.mrf.mxu0
      %v2815 = vadd.f32 %v2702, %v2814
      %2816 = vmatmul.f32.gmra.mxu0 %v2272
      %v2817 = vpop.f32.mrf.mxu0
      %v2818 = vadd.f32 %v2705, %v2817
      %2819 = vmatmul.f32.gmra.mxu0 %v2273
      %v2820 = vpop.f32.mrf.mxu0
      %v2821 = vadd.f32 %v2708, %v2820
      %2822 = vmatmul.f32.gmra.mxu0 %v2274
      %v2823 = vpop.f32.mrf.mxu0
      %v2824 = vadd.f32 %v2711, %v2823
      %2825 = vmatmul.f32.gmra.mxu0 %v2275
      %v2826 = vpop.f32.mrf.mxu0
      %v2827 = vadd.f32 %v2714, %v2826
      %2828 = vmatmul.f32.gmra.mxu0 %v2276
      %v2829 = vpop.f32.mrf.mxu0
      %v2830 = vadd.f32 %v2717, %v2829
      %2831 = vmatmul.f32.gmra.mxu0 %v2277
      %v2832 = vpop.f32.mrf.mxu0
      %v2833 = vadd.f32 %v2720, %v2832
      %2834 = vmatmul.f32.gmra.mxu0 %v2278
      %v2835 = vpop.f32.mrf.mxu0
      %v2836 = vadd.f32 %v2723, %v2835
      %2837 = vmatmul.f32.gmra.mxu0 %v2279
      %v2838 = vpop.f32.mrf.mxu0
      %v2839 = vadd.f32 %v2726, %v2838
      %2840 = vmatmul.f32.gmra.mxu0 %v2280
      %v2841 = vpop.f32.mrf.mxu0
      %v2842 = vadd.f32 %v2729, %v2841
      %2843 = vmatmul.f32.gmra.mxu0 %v2281
      %v2844 = vpop.f32.mrf.mxu0
      %v2845 = vadd.f32 %v2732, %v2844
      %2846 = vmatmul.f32.gmra.mxu0 %v2282
      %v2847 = vpop.f32.mrf.mxu0
      %v2848 = vadd.f32 %v2735, %v2847
      %2849 = vmatmul.f32.gmra.mxu0 %v2283
      %v2850 = vpop.f32.mrf.mxu0
      %v2851 = vadd.f32 %v2738, %v2850
      %2852 = vmatmul.f32.gmra.mxu0 %v2284
      %v2853 = vpop.f32.mrf.mxu0
      %v2854 = vadd.f32 %v2741, %v2853
      %2855 = vmatmul.f32.gmra.mxu0 %v2285
      %v2856 = vpop.f32.mrf.mxu0
      %v2857 = vadd.f32 %v2744, %v2856
      %2858 = vmatmul.f32.gmra.mxu0 %v2286
      %v2859 = vpop.f32.mrf.mxu0
      %v2860 = vadd.f32 %v2747, %v2859
      %2861 = vmatmul.f32.gmra.mxu0 %v2287
      %v2862 = vpop.f32.mrf.mxu0
      %v2863 = vadd.f32 %v2750, %v2862
      %2864 = vmatmul.f32.gmra.mxu0 %v2288
      %v2865 = vpop.f32.mrf.mxu0
      %v2866 = vadd.f32 %v2753, %v2865
      %2867 = vmatmul.f32.gmra.mxu0 %v2289
      %v2868 = vpop.f32.mrf.mxu0
      %v2869 = vadd.f32 %v2756, %v2868
      %2870 = vmatmul.f32.gmra.mxu0 %v2290
      %v2871 = vpop.f32.mrf.mxu0
      %v2872 = vadd.f32 %v2759, %v2871
      %2873 = vmatmul.f32.gmra.mxu0 %v2291
      %v2874 = vpop.f32.mrf.mxu0
      %v2875 = vadd.f32 %v2762, %v2874
      %2876 = vmatmul.f32.gmra.mxu0 %v2292
      %v2877 = vpop.f32.mrf.mxu0
      %v2878 = vadd.f32 %v2765, %v2877
      %2879 = vmatmul.f32.gmra.mxu0 %v2293
      %v2880 = vpop.f32.mrf.mxu0
      %v2881 = vadd.f32 %v2768, %v2880
      %2882 = vmatmul.f32.gmra.mxu0 %v2294
      %v2883 = vpop.f32.mrf.mxu0
      %v2884 = vadd.f32 %v2771, %v2883
      %2885 = vmatmul.f32.gmra.mxu0 %v2295
      %v2886 = vpop.f32.mrf.mxu0
      %v2887 = vadd.f32 %v2774, %v2886
      %2888 = vmatmul.f32.gmra.mxu0 %v2296
      %v2889 = vpop.f32.mrf.mxu0
      %v2890 = vadd.f32 %v2777, %v2889
      %2891 = vmatmul.f32.gmra.mxu0 %v2297
      %v2892 = vpop.f32.mrf.mxu0
      %v2893 = vadd.f32 %v2780, %v2892
      %2894 = vdwg.mxu0
      %2895 = vmatpush.msra.mxu0 %v2569
      %2896 = vmatpush.msra.mxu0 %v2568
      %2897 = vmatpush.msra.mxu0 %v2567
      %2898 = vmatpush.msra.mxu0 %v2566
      %2899 = vmatpush.msra.mxu0 %v2565
      %2900 = vmatpush.msra.mxu0 %v2564
      %2901 = vmatpush.msra.mxu0 %v2563
      %2902 = vmatpush.msra.mxu0 %v2562
      %2903 = vmatpush.msra.mxu0 %v2561
      %2904 = vmatpush.msra.mxu0 %v2560
      %2905 = vmatpush.msra.mxu0 %v2559
      %2906 = vmatpush.msra.mxu0 %v2558
      %2907 = vmatpush.msra.mxu0 %v2557
      %2908 = vmatpush.msra.mxu0 %v2556
      %2909 = vmatpush.msra.mxu0 %v2555
      %2910 = vmatpush.msra.mxu0 %v2554
      %2911 = vmatmul.f32.gmra.mxu0 %v2298
      %v2912 = vpop.f32.mrf.mxu0
      %v2913 = vadd.f32 %v2800, %v2912
      %2914 = vmatmul.f32.gmra.mxu0 %v2299
      %v2915 = vpop.f32.mrf.mxu0
      %v2916 = vadd.f32 %v2803, %v2915
      %2917 = vmatmul.f32.gmra.mxu0 %v2300
      %v2918 = vpop.f32.mrf.mxu0
      %v2919 = vadd.f32 %v2806, %v2918
      %2920 = vmatmul.f32.gmra.mxu0 %v2301
      %v2921 = vpop.f32.mrf.mxu0
      %v2922 = vadd.f32 %v2809, %v2921
      %2923 = vmatmul.f32.gmra.mxu0 %v2302
      %v2924 = vpop.f32.mrf.mxu0
      %v2925 = vadd.f32 %v2812, %v2924
      %2926 = vmatmul.f32.gmra.mxu0 %v2303
      %v2927 = vpop.f32.mrf.mxu0
      %v2928 = vadd.f32 %v2815, %v2927
      %2929 = vmatmul.f32.gmra.mxu0 %v2304
      %v2930 = vpop.f32.mrf.mxu0
      %v2931 = vadd.f32 %v2818, %v2930
      %2932 = vmatmul.f32.gmra.mxu0 %v2305
      %v2933 = vpop.f32.mrf.mxu0
      %v2934 = vadd.f32 %v2821, %v2933
      %2935 = vmatmul.f32.gmra.mxu0 %v2306
      %v2936 = vpop.f32.mrf.mxu0
      %v2937 = vadd.f32 %v2824, %v2936
      %2938 = vmatmul.f32.gmra.mxu0 %v2307
      %v2939 = vpop.f32.mrf.mxu0
      %v2940 = vadd.f32 %v2827, %v2939
      %2941 = vmatmul.f32.gmra.mxu0 %v2308
      %v2942 = vpop.f32.mrf.mxu0
      %v2943 = vadd.f32 %v2830, %v2942
      %2944 = vmatmul.f32.gmra.mxu0 %v2309
      %v2945 = vpop.f32.mrf.mxu0
      %v2946 = vadd.f32 %v2833, %v2945
      %2947 = vmatmul.f32.gmra.mxu0 %v2310
      %v2948 = vpop.f32.mrf.mxu0
      %v2949 = vadd.f32 %v2836, %v2948
      %2950 = vmatmul.f32.gmra.mxu0 %v2311
      %v2951 = vpop.f32.mrf.mxu0
      %v2952 = vadd.f32 %v2839, %v2951
      %2953 = vmatmul.f32.gmra.mxu0 %v2312
      %v2954 = vpop.f32.mrf.mxu0
      %v2955 = vadd.f32 %v2842, %v2954
      %2956 = vmatmul.f32.gmra.mxu0 %v2313
      %v2957 = vpop.f32.mrf.mxu0
      %v2958 = vadd.f32 %v2845, %v2957
      %2959 = vmatmul.f32.gmra.mxu0 %v2314
      %v2960 = vpop.f32.mrf.mxu0
      %v2961 = vadd.f32 %v2848, %v2960
      %2962 = vmatmul.f32.gmra.mxu0 %v2315
      %v2963 = vpop.f32.mrf.mxu0
      %v2964 = vadd.f32 %v2851, %v2963
      %2965 = vmatmul.f32.gmra.mxu0 %v2316
      %v2966 = vpop.f32.mrf.mxu0
      %v2967 = vadd.f32 %v2854, %v2966
      %2968 = vmatmul.f32.gmra.mxu0 %v2317
      %v2969 = vpop.f32.mrf.mxu0
      %v2970 = vadd.f32 %v2857, %v2969
      %2971 = vmatmul.f32.gmra.mxu0 %v2318
      %v2972 = vpop.f32.mrf.mxu0
      %v2973 = vadd.f32 %v2860, %v2972
      %2974 = vmatmul.f32.gmra.mxu0 %v2319
      %v2975 = vpop.f32.mrf.mxu0
      %v2976 = vadd.f32 %v2863, %v2975
      %2977 = vmatmul.f32.gmra.mxu0 %v2320
      %v2978 = vpop.f32.mrf.mxu0
      %v2979 = vadd.f32 %v2866, %v2978
      %2980 = vmatmul.f32.gmra.mxu0 %v2321
      %v2981 = vpop.f32.mrf.mxu0
      %v2982 = vadd.f32 %v2869, %v2981
      %2983 = vmatmul.f32.gmra.mxu0 %v2322
      %v2984 = vpop.f32.mrf.mxu0
      %v2985 = vadd.f32 %v2872, %v2984
      %2986 = vmatmul.f32.gmra.mxu0 %v2323
      %v2987 = vpop.f32.mrf.mxu0
      %v2988 = vadd.f32 %v2875, %v2987
      %2989 = vmatmul.f32.gmra.mxu0 %v2324
      %v2990 = vpop.f32.mrf.mxu0
      %v2991 = vadd.f32 %v2878, %v2990
      %2992 = vmatmul.f32.gmra.mxu0 %v2325
      %v2993 = vpop.f32.mrf.mxu0
      %v2994 = vadd.f32 %v2881, %v2993
      %2995 = vmatmul.f32.gmra.mxu0 %v2326
      %v2996 = vpop.f32.mrf.mxu0
      %v2997 = vadd.f32 %v2884, %v2996
      %2998 = vmatmul.f32.gmra.mxu0 %v2327
      %v2999 = vpop.f32.mrf.mxu0
      %v3000 = vadd.f32 %v2887, %v2999
      %3001 = vmatmul.f32.gmra.mxu0 %v2328
      %v3002 = vpop.f32.mrf.mxu0
      %v3003 = vadd.f32 %v2890, %v3002
      %3004 = vmatmul.f32.gmra.mxu0 %v2329
      %v3005 = vpop.f32.mrf.mxu0
      %v3006 = vadd.f32 %v2893, %v3005
      %3007 = vdwg.mxu0
      %3008 = vmatpush.msra.mxu0 %v2585
      %3009 = vmatpush.msra.mxu0 %v2584
      %3010 = vmatpush.msra.mxu0 %v2583
      %3011 = vmatpush.msra.mxu0 %v2582
      %3012 = vmatpush.msra.mxu0 %v2581
      %3013 = vmatpush.msra.mxu0 %v2580
      %3014 = vmatpush.msra.mxu0 %v2579
      %3015 = vmatpush.msra.mxu0 %v2578
      %3016 = vmatpush.msra.mxu0 %v2577
      %3017 = vmatpush.msra.mxu0 %v2576
      %3018 = vmatpush.msra.mxu0 %v2575
      %3019 = vmatpush.msra.mxu0 %v2574
      %3020 = vmatpush.msra.mxu0 %v2573
      %3021 = vmatpush.msra.mxu0 %v2572
      %3022 = vmatpush.msra.mxu0 %v2571
      %3023 = vmatpush.msra.mxu0 %v2570
      %3024 = vmatmul.f32.gmra.mxu0 %v2330
      %v3025 = vpop.f32.mrf.mxu0
      %v3026 = vadd.f32 %v2913, %v3025
      %3027 = vmatmul.f32.gmra.mxu0 %v2331
      %v3028 = vpop.f32.mrf.mxu0
      %v3029 = vadd.f32 %v2916, %v3028
      %3030 = vmatmul.f32.gmra.mxu0 %v2332
      %v3031 = vpop.f32.mrf.mxu0
      %v3032 = vadd.f32 %v2919, %v3031
      %3033 = vmatmul.f32.gmra.mxu0 %v2333
      %v3034 = vpop.f32.mrf.mxu0
      %v3035 = vadd.f32 %v2922, %v3034
      %3036 = vmatmul.f32.gmra.mxu0 %v2334
      %v3037 = vpop.f32.mrf.mxu0
      %v3038 = vadd.f32 %v2925, %v3037
      %3039 = vmatmul.f32.gmra.mxu0 %v2335
      %v3040 = vpop.f32.mrf.mxu0
      %v3041 = vadd.f32 %v2928, %v3040
      %3042 = vmatmul.f32.gmra.mxu0 %v2336
      %v3043 = vpop.f32.mrf.mxu0
      %v3044 = vadd.f32 %v2931, %v3043
      %3045 = vmatmul.f32.gmra.mxu0 %v2337
      %v3046 = vpop.f32.mrf.mxu0
      %v3047 = vadd.f32 %v2934, %v3046
      %3048 = vmatmul.f32.gmra.mxu0 %v2338
      %v3049 = vpop.f32.mrf.mxu0
      %v3050 = vadd.f32 %v2937, %v3049
      %3051 = vmatmul.f32.gmra.mxu0 %v2339
      %v3052 = vpop.f32.mrf.mxu0
      %v3053 = vadd.f32 %v2940, %v3052
      %3054 = vmatmul.f32.gmra.mxu0 %v2340
      %v3055 = vpop.f32.mrf.mxu0
      %v3056 = vadd.f32 %v2943, %v3055
      %3057 = vmatmul.f32.gmra.mxu0 %v2341
      %v3058 = vpop.f32.mrf.mxu0
      %v3059 = vadd.f32 %v2946, %v3058
      %3060 = vmatmul.f32.gmra.mxu0 %v2342
      %v3061 = vpop.f32.mrf.mxu0
      %v3062 = vadd.f32 %v2949, %v3061
      %3063 = vmatmul.f32.gmra.mxu0 %v2343
      %v3064 = vpop.f32.mrf.mxu0
      %v3065 = vadd.f32 %v2952, %v3064
      %3066 = vmatmul.f32.gmra.mxu0 %v2344
      %v3067 = vpop.f32.mrf.mxu0
      %v3068 = vadd.f32 %v2955, %v3067
      %3069 = vmatmul.f32.gmra.mxu0 %v2345
      %v3070 = vpop.f32.mrf.mxu0
      %v3071 = vadd.f32 %v2958, %v3070
      %3072 = vmatmul.f32.gmra.mxu0 %v2346
      %v3073 = vpop.f32.mrf.mxu0
      %v3074 = vadd.f32 %v2961, %v3073
      %3075 = vmatmul.f32.gmra.mxu0 %v2347
      %v3076 = vpop.f32.mrf.mxu0
      %v3077 = vadd.f32 %v2964, %v3076
      %3078 = vmatmul.f32.gmra.mxu0 %v2348
      %v3079 = vpop.f32.mrf.mxu0
      %v3080 = vadd.f32 %v2967, %v3079
      %3081 = vmatmul.f32.gmra.mxu0 %v2349
      %v3082 = vpop.f32.mrf.mxu0
      %v3083 = vadd.f32 %v2970, %v3082
      %3084 = vmatmul.f32.gmra.mxu0 %v2350
      %v3085 = vpop.f32.mrf.mxu0
      %v3086 = vadd.f32 %v2973, %v3085
      %3087 = vmatmul.f32.gmra.mxu0 %v2351
      %v3088 = vpop.f32.mrf.mxu0
      %v3089 = vadd.f32 %v2976, %v3088
      %3090 = vmatmul.f32.gmra.mxu0 %v2352
      %v3091 = vpop.f32.mrf.mxu0
      %v3092 = vadd.f32 %v2979, %v3091
      %3093 = vmatmul.f32.gmra.mxu0 %v2353
      %v3094 = vpop.f32.mrf.mxu0
      %v3095 = vadd.f32 %v2982, %v3094
      %3096 = vmatmul.f32.gmra.mxu0 %v2354
      %v3097 = vpop.f32.mrf.mxu0
      %v3098 = vadd.f32 %v2985, %v3097
      %3099 = vmatmul.f32.gmra.mxu0 %v2355
      %v3100 = vpop.f32.mrf.mxu0
      %v3101 = vadd.f32 %v2988, %v3100
      %3102 = vmatmul.f32.gmra.mxu0 %v2356
      %v3103 = vpop.f32.mrf.mxu0
      %v3104 = vadd.f32 %v2991, %v3103
      %3105 = vmatmul.f32.gmra.mxu0 %v2357
      %v3106 = vpop.f32.mrf.mxu0
      %v3107 = vadd.f32 %v2994, %v3106
      %3108 = vmatmul.f32.gmra.mxu0 %v2358
      %v3109 = vpop.f32.mrf.mxu0
      %v3110 = vadd.f32 %v2997, %v3109
      %3111 = vmatmul.f32.gmra.mxu0 %v2359
      %v3112 = vpop.f32.mrf.mxu0
      %v3113 = vadd.f32 %v3000, %v3112
      %3114 = vmatmul.f32.gmra.mxu0 %v2360
      %v3115 = vpop.f32.mrf.mxu0
      %v3116 = vadd.f32 %v3003, %v3115
      %3117 = vmatmul.f32.gmra.mxu0 %v2361
      %v3118 = vpop.f32.mrf.mxu0
      %v3119 = vadd.f32 %v3006, %v3118
      %3120 = vdwg.mxu0
      %3121 = vmatpush.msra.mxu0 %v2601
      %3122 = vmatpush.msra.mxu0 %v2600
      %3123 = vmatpush.msra.mxu0 %v2599
      %3124 = vmatpush.msra.mxu0 %v2598
      %3125 = vmatpush.msra.mxu0 %v2597
      %3126 = vmatpush.msra.mxu0 %v2596
      %3127 = vmatpush.msra.mxu0 %v2595
      %3128 = vmatpush.msra.mxu0 %v2594
      %3129 = vmatpush.msra.mxu0 %v2593
      %3130 = vmatpush.msra.mxu0 %v2592
      %3131 = vmatpush.msra.mxu0 %v2591
      %3132 = vmatpush.msra.mxu0 %v2590
      %3133 = vmatpush.msra.mxu0 %v2589
      %3134 = vmatpush.msra.mxu0 %v2588
      %3135 = vmatpush.msra.mxu0 %v2587
      %3136 = vmatpush.msra.mxu0 %v2586
      %3137 = vmatmul.f32.gmra.mxu0 %v2362
      %v3138 = vpop.f32.mrf.mxu0
      %v3139 = vadd.f32 %v3026, %v3138
      %3140 = vmatmul.f32.gmra.mxu0 %v2363
      %v3141 = vpop.f32.mrf.mxu0
      %v3142 = vadd.f32 %v3029, %v3141
      %3143 = vmatmul.f32.gmra.mxu0 %v2364
      %v3144 = vpop.f32.mrf.mxu0
      %v3145 = vadd.f32 %v3032, %v3144
      %3146 = vmatmul.f32.gmra.mxu0 %v2365
      %v3147 = vpop.f32.mrf.mxu0
      %v3148 = vadd.f32 %v3035, %v3147
      %3149 = vmatmul.f32.gmra.mxu0 %v2366
      %v3150 = vpop.f32.mrf.mxu0
      %v3151 = vadd.f32 %v3038, %v3150
      %3152 = vmatmul.f32.gmra.mxu0 %v2367
      %v3153 = vpop.f32.mrf.mxu0
      %v3154 = vadd.f32 %v3041, %v3153
      %3155 = vmatmul.f32.gmra.mxu0 %v2368
      %v3156 = vpop.f32.mrf.mxu0
      %v3157 = vadd.f32 %v3044, %v3156
      %3158 = vmatmul.f32.gmra.mxu0 %v2369
      %v3159 = vpop.f32.mrf.mxu0
      %v3160 = vadd.f32 %v3047, %v3159
      %3161 = vmatmul.f32.gmra.mxu0 %v2370
      %v3162 = vpop.f32.mrf.mxu0
      %v3163 = vadd.f32 %v3050, %v3162
      %3164 = vmatmul.f32.gmra.mxu0 %v2371
      %v3165 = vpop.f32.mrf.mxu0
      %v3166 = vadd.f32 %v3053, %v3165
      %3167 = vmatmul.f32.gmra.mxu0 %v2372
      %v3168 = vpop.f32.mrf.mxu0
      %v3169 = vadd.f32 %v3056, %v3168
      %3170 = vmatmul.f32.gmra.mxu0 %v2373
      %v3171 = vpop.f32.mrf.mxu0
      %v3172 = vadd.f32 %v3059, %v3171
      %3173 = vmatmul.f32.gmra.mxu0 %v2374
      %v3174 = vpop.f32.mrf.mxu0
      %v3175 = vadd.f32 %v3062, %v3174
      %3176 = vmatmul.f32.gmra.mxu0 %v2375
      %v3177 = vpop.f32.mrf.mxu0
      %v3178 = vadd.f32 %v3065, %v3177
      %3179 = vmatmul.f32.gmra.mxu0 %v2376
      %v3180 = vpop.f32.mrf.mxu0
      %v3181 = vadd.f32 %v3068, %v3180
      %3182 = vmatmul.f32.gmra.mxu0 %v2377
      %v3183 = vpop.f32.mrf.mxu0
      %v3184 = vadd.f32 %v3071, %v3183
      %3185 = vmatmul.f32.gmra.mxu0 %v2378
      %v3186 = vpop.f32.mrf.mxu0
      %v3187 = vadd.f32 %v3074, %v3186
      %3188 = vmatmul.f32.gmra.mxu0 %v2379
      %v3189 = vpop.f32.mrf.mxu0
      %v3190 = vadd.f32 %v3077, %v3189
      %3191 = vmatmul.f32.gmra.mxu0 %v2380
      %v3192 = vpop.f32.mrf.mxu0
      %v3193 = vadd.f32 %v3080, %v3192
      %3194 = vmatmul.f32.gmra.mxu0 %v2381
      %v3195 = vpop.f32.mrf.mxu0
      %v3196 = vadd.f32 %v3083, %v3195
      %3197 = vmatmul.f32.gmra.mxu0 %v2382
      %v3198 = vpop.f32.mrf.mxu0
      %v3199 = vadd.f32 %v3086, %v3198
      %3200 = vmatmul.f32.gmra.mxu0 %v2383
      %v3201 = vpop.f32.mrf.mxu0
      %v3202 = vadd.f32 %v3089, %v3201
      %3203 = vmatmul.f32.gmra.mxu0 %v2384
      %v3204 = vpop.f32.mrf.mxu0
      %v3205 = vadd.f32 %v3092, %v3204
      %3206 = vmatmul.f32.gmra.mxu0 %v2385
      %v3207 = vpop.f32.mrf.mxu0
      %v3208 = vadd.f32 %v3095, %v3207
      %3209 = vmatmul.f32.gmra.mxu0 %v2386
      %v3210 = vpop.f32.mrf.mxu0
      %v3211 = vadd.f32 %v3098, %v3210
      %3212 = vmatmul.f32.gmra.mxu0 %v2387
      %v3213 = vpop.f32.mrf.mxu0
      %v3214 = vadd.f32 %v3101, %v3213
      %3215 = vmatmul.f32.gmra.mxu0 %v2388
      %v3216 = vpop.f32.mrf.mxu0
      %v3217 = vadd.f32 %v3104, %v3216
      %3218 = vmatmul.f32.gmra.mxu0 %v2389
      %v3219 = vpop.f32.mrf.mxu0
      %v3220 = vadd.f32 %v3107, %v3219
      %3221 = vmatmul.f32.gmra.mxu0 %v2390
      %v3222 = vpop.f32.mrf.mxu0
      %v3223 = vadd.f32 %v3110, %v3222
      %3224 = vmatmul.f32.gmra.mxu0 %v2391
      %v3225 = vpop.f32.mrf.mxu0
      %v3226 = vadd.f32 %v3113, %v3225
      %3227 = vmatmul.f32.gmra.mxu0 %v2392
      %v3228 = vpop.f32.mrf.mxu0
      %v3229 = vadd.f32 %v3116, %v3228
      %3230 = vmatmul.f32.gmra.mxu0 %v2393
      %v3231 = vpop.f32.mrf.mxu0
      %v3232 = vadd.f32 %v3119, %v3231
      %3233 = vdwg.mxu0
      %3234 = vmatpush.msra.mxu0 %v2617
      %3235 = vmatpush.msra.mxu0 %v2616
      %3236 = vmatpush.msra.mxu0 %v2615
      %3237 = vmatpush.msra.mxu0 %v2614
      %3238 = vmatpush.msra.mxu0 %v2613
      %3239 = vmatpush.msra.mxu0 %v2612
      %3240 = vmatpush.msra.mxu0 %v2611
      %3241 = vmatpush.msra.mxu0 %v2610
      %3242 = vmatpush.msra.mxu0 %v2609
      %3243 = vmatpush.msra.mxu0 %v2608
      %3244 = vmatpush.msra.mxu0 %v2607
      %3245 = vmatpush.msra.mxu0 %v2606
      %3246 = vmatpush.msra.mxu0 %v2605
      %3247 = vmatpush.msra.mxu0 %v2604
      %3248 = vmatpush.msra.mxu0 %v2603
      %3249 = vmatpush.msra.mxu0 %v2602
      %3250 = vmatmul.f32.gmra.mxu0 %v2394
      %v3251 = vpop.f32.mrf.mxu0
      %v3252 = vadd.f32 %v3139, %v3251
      %3253 = vmatmul.f32.gmra.mxu0 %v2395
      %v3254 = vpop.f32.mrf.mxu0
      %v3255 = vadd.f32 %v3142, %v3254
      %3256 = vmatmul.f32.gmra.mxu0 %v2396
      %v3257 = vpop.f32.mrf.mxu0
      %v3258 = vadd.f32 %v3145, %v3257
      %3259 = vmatmul.f32.gmra.mxu0 %v2397
      %v3260 = vpop.f32.mrf.mxu0
      %v3261 = vadd.f32 %v3148, %v3260
      %3262 = vmatmul.f32.gmra.mxu0 %v2398
      %v3263 = vpop.f32.mrf.mxu0
      %v3264 = vadd.f32 %v3151, %v3263
      %3265 = vmatmul.f32.gmra.mxu0 %v2399
      %v3266 = vpop.f32.mrf.mxu0
      %v3267 = vadd.f32 %v3154, %v3266
      %3268 = vmatmul.f32.gmra.mxu0 %v2400
      %v3269 = vpop.f32.mrf.mxu0
      %v3270 = vadd.f32 %v3157, %v3269
      %3271 = vmatmul.f32.gmra.mxu0 %v2401
      %v3272 = vpop.f32.mrf.mxu0
      %v3273 = vadd.f32 %v3160, %v3272
      %3274 = vmatmul.f32.gmra.mxu0 %v2402
      %v3275 = vpop.f32.mrf.mxu0
      %v3276 = vadd.f32 %v3163, %v3275
      %3277 = vmatmul.f32.gmra.mxu0 %v2403
      %v3278 = vpop.f32.mrf.mxu0
      %v3279 = vadd.f32 %v3166, %v3278
      %3280 = vmatmul.f32.gmra.mxu0 %v2404
      %v3281 = vpop.f32.mrf.mxu0
      %v3282 = vadd.f32 %v3169, %v3281
      %3283 = vmatmul.f32.gmra.mxu0 %v2405
      %v3284 = vpop.f32.mrf.mxu0
      %v3285 = vadd.f32 %v3172, %v3284
      %3286 = vmatmul.f32.gmra.mxu0 %v2406
      %v3287 = vpop.f32.mrf.mxu0
      %v3288 = vadd.f32 %v3175, %v3287
      %3289 = vmatmul.f32.gmra.mxu0 %v2407
      %v3290 = vpop.f32.mrf.mxu0
      %v3291 = vadd.f32 %v3178, %v3290
      %3292 = vmatmul.f32.gmra.mxu0 %v2408
      %v3293 = vpop.f32.mrf.mxu0
      %v3294 = vadd.f32 %v3181, %v3293
      %3295 = vmatmul.f32.gmra.mxu0 %v2409
      %v3296 = vpop.f32.mrf.mxu0
      %v3297 = vadd.f32 %v3184, %v3296
      %3298 = vmatmul.f32.gmra.mxu0 %v2410
      %v3299 = vpop.f32.mrf.mxu0
      %v3300 = vadd.f32 %v3187, %v3299
      %3301 = vmatmul.f32.gmra.mxu0 %v2411
      %v3302 = vpop.f32.mrf.mxu0
      %v3303 = vadd.f32 %v3190, %v3302
      %3304 = vmatmul.f32.gmra.mxu0 %v2412
      %v3305 = vpop.f32.mrf.mxu0
      %v3306 = vadd.f32 %v3193, %v3305
      %3307 = vmatmul.f32.gmra.mxu0 %v2413
      %v3308 = vpop.f32.mrf.mxu0
      %v3309 = vadd.f32 %v3196, %v3308
      %3310 = vmatmul.f32.gmra.mxu0 %v2414
      %v3311 = vpop.f32.mrf.mxu0
      %v3312 = vadd.f32 %v3199, %v3311
      %3313 = vmatmul.f32.gmra.mxu0 %v2415
      %v3314 = vpop.f32.mrf.mxu0
      %v3315 = vadd.f32 %v3202, %v3314
      %3316 = vmatmul.f32.gmra.mxu0 %v2416
      %v3317 = vpop.f32.mrf.mxu0
      %v3318 = vadd.f32 %v3205, %v3317
      %3319 = vmatmul.f32.gmra.mxu0 %v2417
      %v3320 = vpop.f32.mrf.mxu0
      %v3321 = vadd.f32 %v3208, %v3320
      %3322 = vmatmul.f32.gmra.mxu0 %v2418
      %v3323 = vpop.f32.mrf.mxu0
      %v3324 = vadd.f32 %v3211, %v3323
      %3325 = vmatmul.f32.gmra.mxu0 %v2419
      %v3326 = vpop.f32.mrf.mxu0
      %v3327 = vadd.f32 %v3214, %v3326
      %3328 = vmatmul.f32.gmra.mxu0 %v2420
      %v3329 = vpop.f32.mrf.mxu0
      %v3330 = vadd.f32 %v3217, %v3329
      %3331 = vmatmul.f32.gmra.mxu0 %v2421
      %v3332 = vpop.f32.mrf.mxu0
      %v3333 = vadd.f32 %v3220, %v3332
      %3334 = vmatmul.f32.gmra.mxu0 %v2422
      %v3335 = vpop.f32.mrf.mxu0
      %v3336 = vadd.f32 %v3223, %v3335
      %3337 = vmatmul.f32.gmra.mxu0 %v2423
      %v3338 = vpop.f32.mrf.mxu0
      %v3339 = vadd.f32 %v3226, %v3338
      %3340 = vmatmul.f32.gmra.mxu0 %v2424
      %v3341 = vpop.f32.mrf.mxu0
      %v3342 = vadd.f32 %v3229, %v3341
      %3343 = vmatmul.f32.gmra.mxu0 %v2425
      %v3344 = vpop.f32.mrf.mxu0
      %v3345 = vadd.f32 %v3232, %v3344
      %3346 = vdwg.mxu0
      %3347 = vmatpush.msra.mxu0 %v2633
      %3348 = vmatpush.msra.mxu0 %v2632
      %3349 = vmatpush.msra.mxu0 %v2631
      %3350 = vmatpush.msra.mxu0 %v2630
      %3351 = vmatpush.msra.mxu0 %v2629
      %3352 = vmatpush.msra.mxu0 %v2628
      %3353 = vmatpush.msra.mxu0 %v2627
      %3354 = vmatpush.msra.mxu0 %v2626
      %3355 = vmatpush.msra.mxu0 %v2625
      %3356 = vmatpush.msra.mxu0 %v2624
      %3357 = vmatpush.msra.mxu0 %v2623
      %3358 = vmatpush.msra.mxu0 %v2622
      %3359 = vmatpush.msra.mxu0 %v2621
      %3360 = vmatpush.msra.mxu0 %v2620
      %3361 = vmatpush.msra.mxu0 %v2619
      %3362 = vmatpush.msra.mxu0 %v2618
      %3363 = vmatmul.f32.gmra.mxu0 %v2426
      %v3364 = vpop.f32.mrf.mxu0
      %v3365 = vadd.f32 %v3252, %v3364
      %3366 = vmatmul.f32.gmra.mxu0 %v2427
      %v3367 = vpop.f32.mrf.mxu0
      %v3368 = vadd.f32 %v3255, %v3367
      %3369 = vmatmul.f32.gmra.mxu0 %v2428
      %v3370 = vpop.f32.mrf.mxu0
      %v3371 = vadd.f32 %v3258, %v3370
      %3372 = vmatmul.f32.gmra.mxu0 %v2429
      %v3373 = vpop.f32.mrf.mxu0
      %v3374 = vadd.f32 %v3261, %v3373
      %3375 = vmatmul.f32.gmra.mxu0 %v2430
      %v3376 = vpop.f32.mrf.mxu0
      %v3377 = vadd.f32 %v3264, %v3376
      %3378 = vmatmul.f32.gmra.mxu0 %v2431
      %v3379 = vpop.f32.mrf.mxu0
      %v3380 = vadd.f32 %v3267, %v3379
      %3381 = vmatmul.f32.gmra.mxu0 %v2432
      %v3382 = vpop.f32.mrf.mxu0
      %v3383 = vadd.f32 %v3270, %v3382
      %3384 = vmatmul.f32.gmra.mxu0 %v2433
      %v3385 = vpop.f32.mrf.mxu0
      %v3386 = vadd.f32 %v3273, %v3385
      %3387 = vmatmul.f32.gmra.mxu0 %v2434
      %v3388 = vpop.f32.mrf.mxu0
      %v3389 = vadd.f32 %v3276, %v3388
      %3390 = vmatmul.f32.gmra.mxu0 %v2435
      %v3391 = vpop.f32.mrf.mxu0
      %v3392 = vadd.f32 %v3279, %v3391
      %3393 = vmatmul.f32.gmra.mxu0 %v2436
      %v3394 = vpop.f32.mrf.mxu0
      %v3395 = vadd.f32 %v3282, %v3394
      %3396 = vmatmul.f32.gmra.mxu0 %v2437
      %v3397 = vpop.f32.mrf.mxu0
      %v3398 = vadd.f32 %v3285, %v3397
      %3399 = vmatmul.f32.gmra.mxu0 %v2438
      %v3400 = vpop.f32.mrf.mxu0
      %v3401 = vadd.f32 %v3288, %v3400
      %3402 = vmatmul.f32.gmra.mxu0 %v2439
      %v3403 = vpop.f32.mrf.mxu0
      %v3404 = vadd.f32 %v3291, %v3403
      %3405 = vmatmul.f32.gmra.mxu0 %v2440
      %v3406 = vpop.f32.mrf.mxu0
      %v3407 = vadd.f32 %v3294, %v3406
      %3408 = vmatmul.f32.gmra.mxu0 %v2441
      %v3409 = vpop.f32.mrf.mxu0
      %v3410 = vadd.f32 %v3297, %v3409
      %3411 = vmatmul.f32.gmra.mxu0 %v2442
      %v3412 = vpop.f32.mrf.mxu0
      %v3413 = vadd.f32 %v3300, %v3412
      %3414 = vmatmul.f32.gmra.mxu0 %v2443
      %v3415 = vpop.f32.mrf.mxu0
      %v3416 = vadd.f32 %v3303, %v3415
      %3417 = vmatmul.f32.gmra.mxu0 %v2444
      %v3418 = vpop.f32.mrf.mxu0
      %v3419 = vadd.f32 %v3306, %v3418
      %3420 = vmatmul.f32.gmra.mxu0 %v2445
      %v3421 = vpop.f32.mrf.mxu0
      %v3422 = vadd.f32 %v3309, %v3421
      %3423 = vmatmul.f32.gmra.mxu0 %v2446
      %v3424 = vpop.f32.mrf.mxu0
      %v3425 = vadd.f32 %v3312, %v3424
      %3426 = vmatmul.f32.gmra.mxu0 %v2447
      %v3427 = vpop.f32.mrf.mxu0
      %v3428 = vadd.f32 %v3315, %v3427
      %3429 = vmatmul.f32.gmra.mxu0 %v2448
      %v3430 = vpop.f32.mrf.mxu0
      %v3431 = vadd.f32 %v3318, %v3430
      %3432 = vmatmul.f32.gmra.mxu0 %v2449
      %v3433 = vpop.f32.mrf.mxu0
      %v3434 = vadd.f32 %v3321, %v3433
      %3435 = vmatmul.f32.gmra.mxu0 %v2450
      %v3436 = vpop.f32.mrf.mxu0
      %v3437 = vadd.f32 %v3324, %v3436
      %3438 = vmatmul.f32.gmra.mxu0 %v2451
      %v3439 = vpop.f32.mrf.mxu0
      %v3440 = vadd.f32 %v3327, %v3439
      %3441 = vmatmul.f32.gmra.mxu0 %v2452
      %v3442 = vpop.f32.mrf.mxu0
      %v3443 = vadd.f32 %v3330, %v3442
      %3444 = vmatmul.f32.gmra.mxu0 %v2453
      %v3445 = vpop.f32.mrf.mxu0
      %v3446 = vadd.f32 %v3333, %v3445
      %3447 = vmatmul.f32.gmra.mxu0 %v2454
      %v3448 = vpop.f32.mrf.mxu0
      %v3449 = vadd.f32 %v3336, %v3448
      %3450 = vmatmul.f32.gmra.mxu0 %v2455
      %v3451 = vpop.f32.mrf.mxu0
      %v3452 = vadd.f32 %v3339, %v3451
      %3453 = vmatmul.f32.gmra.mxu0 %v2456
      %v3454 = vpop.f32.mrf.mxu0
      %v3455 = vadd.f32 %v3342, %v3454
      %3456 = vmatmul.f32.gmra.mxu0 %v2457
      %v3457 = vpop.f32.mrf.mxu0
      %v3458 = vadd.f32 %v3345, %v3457
      %3459 = vdwg.mxu0
      %3460 = vmatpush.msra.mxu0 %v2649
      %3461 = vmatpush.msra.mxu0 %v2648
      %3462 = vmatpush.msra.mxu0 %v2647
      %3463 = vmatpush.msra.mxu0 %v2646
      %3464 = vmatpush.msra.mxu0 %v2645
      %3465 = vmatpush.msra.mxu0 %v2644
      %3466 = vmatpush.msra.mxu0 %v2643
      %3467 = vmatpush.msra.mxu0 %v2642
      %3468 = vmatpush.msra.mxu0 %v2641
      %3469 = vmatpush.msra.mxu0 %v2640
      %3470 = vmatpush.msra.mxu0 %v2639
      %3471 = vmatpush.msra.mxu0 %v2638
      %3472 = vmatpush.msra.mxu0 %v2637
      %3473 = vmatpush.msra.mxu0 %v2636
      %3474 = vmatpush.msra.mxu0 %v2635
      %3475 = vmatpush.msra.mxu0 %v2634
      %3476 = vmatmul.f32.gmra.mxu0 %v2458
      %v3477 = vpop.f32.mrf.mxu0
      %v3478 = vadd.f32 %v3365, %v3477
      %3479 = vmatmul.f32.gmra.mxu0 %v2459
      %v3480 = vpop.f32.mrf.mxu0
      %v3481 = vadd.f32 %v3368, %v3480
      %3482 = vmatmul.f32.gmra.mxu0 %v2460
      %v3483 = vpop.f32.mrf.mxu0
      %v3484 = vadd.f32 %v3371, %v3483
      %3485 = vmatmul.f32.gmra.mxu0 %v2461
      %v3486 = vpop.f32.mrf.mxu0
      %v3487 = vadd.f32 %v3374, %v3486
      %3488 = vmatmul.f32.gmra.mxu0 %v2462
      %v3489 = vpop.f32.mrf.mxu0
      %v3490 = vadd.f32 %v3377, %v3489
      %3491 = vmatmul.f32.gmra.mxu0 %v2463
      %v3492 = vpop.f32.mrf.mxu0
      %v3493 = vadd.f32 %v3380, %v3492
      %3494 = vmatmul.f32.gmra.mxu0 %v2464
      %v3495 = vpop.f32.mrf.mxu0
      %v3496 = vadd.f32 %v3383, %v3495
      %3497 = vmatmul.f32.gmra.mxu0 %v2465
      %v3498 = vpop.f32.mrf.mxu0
      %v3499 = vadd.f32 %v3386, %v3498
      %3500 = vmatmul.f32.gmra.mxu0 %v2466
      %v3501 = vpop.f32.mrf.mxu0
      %v3502 = vadd.f32 %v3389, %v3501
      %3503 = vmatmul.f32.gmra.mxu0 %v2467
      %v3504 = vpop.f32.mrf.mxu0
      %v3505 = vadd.f32 %v3392, %v3504
      %3506 = vmatmul.f32.gmra.mxu0 %v2468
      %v3507 = vpop.f32.mrf.mxu0
      %v3508 = vadd.f32 %v3395, %v3507
      %3509 = vmatmul.f32.gmra.mxu0 %v2469
      %v3510 = vpop.f32.mrf.mxu0
      %v3511 = vadd.f32 %v3398, %v3510
      %3512 = vmatmul.f32.gmra.mxu0 %v2470
      %v3513 = vpop.f32.mrf.mxu0
      %v3514 = vadd.f32 %v3401, %v3513
      %3515 = vmatmul.f32.gmra.mxu0 %v2471
      %v3516 = vpop.f32.mrf.mxu0
      %v3517 = vadd.f32 %v3404, %v3516
      %3518 = vmatmul.f32.gmra.mxu0 %v2472
      %v3519 = vpop.f32.mrf.mxu0
      %v3520 = vadd.f32 %v3407, %v3519
      %3521 = vmatmul.f32.gmra.mxu0 %v2473
      %v3522 = vpop.f32.mrf.mxu0
      %v3523 = vadd.f32 %v3410, %v3522
      %3524 = vmatmul.f32.gmra.mxu0 %v2474
      %v3525 = vpop.f32.mrf.mxu0
      %v3526 = vadd.f32 %v3413, %v3525
      %3527 = vmatmul.f32.gmra.mxu0 %v2475
      %v3528 = vpop.f32.mrf.mxu0
      %v3529 = vadd.f32 %v3416, %v3528
      %3530 = vmatmul.f32.gmra.mxu0 %v2476
      %v3531 = vpop.f32.mrf.mxu0
      %v3532 = vadd.f32 %v3419, %v3531
      %3533 = vmatmul.f32.gmra.mxu0 %v2477
      %v3534 = vpop.f32.mrf.mxu0
      %v3535 = vadd.f32 %v3422, %v3534
      %3536 = vmatmul.f32.gmra.mxu0 %v2478
      %v3537 = vpop.f32.mrf.mxu0
      %v3538 = vadd.f32 %v3425, %v3537
      %3539 = vmatmul.f32.gmra.mxu0 %v2479
      %v3540 = vpop.f32.mrf.mxu0
      %v3541 = vadd.f32 %v3428, %v3540
      %3542 = vmatmul.f32.gmra.mxu0 %v2480
      %v3543 = vpop.f32.mrf.mxu0
      %v3544 = vadd.f32 %v3431, %v3543
      %3545 = vmatmul.f32.gmra.mxu0 %v2481
      %v3546 = vpop.f32.mrf.mxu0
      %v3547 = vadd.f32 %v3434, %v3546
      %3548 = vmatmul.f32.gmra.mxu0 %v2482
      %v3549 = vpop.f32.mrf.mxu0
      %v3550 = vadd.f32 %v3437, %v3549
      %3551 = vmatmul.f32.gmra.mxu0 %v2483
      %v3552 = vpop.f32.mrf.mxu0
      %v3553 = vadd.f32 %v3440, %v3552
      %3554 = vmatmul.f32.gmra.mxu0 %v2484
      %v3555 = vpop.f32.mrf.mxu0
      %v3556 = vadd.f32 %v3443, %v3555
      %3557 = vmatmul.f32.gmra.mxu0 %v2485
      %v3558 = vpop.f32.mrf.mxu0
      %v3559 = vadd.f32 %v3446, %v3558
      %3560 = vmatmul.f32.gmra.mxu0 %v2486
      %v3561 = vpop.f32.mrf.mxu0
      %v3562 = vadd.f32 %v3449, %v3561
      %3563 = vmatmul.f32.gmra.mxu0 %v2487
      %v3564 = vpop.f32.mrf.mxu0
      %v3565 = vadd.f32 %v3452, %v3564
      %3566 = vmatmul.f32.gmra.mxu0 %v2488
      %v3567 = vpop.f32.mrf.mxu0
      %v3568 = vadd.f32 %v3455, %v3567
      %3569 = vmatmul.f32.gmra.mxu0 %v2489
      %v3570 = vpop.f32.mrf.mxu0
      %v3571 = vadd.f32 %v3458, %v3570
      %3572 = vdwg.mxu0
      %3573 = vmatpush.msra.mxu0 %v2665
      %3574 = vmatpush.msra.mxu0 %v2664
      %3575 = vmatpush.msra.mxu0 %v2663
      %3576 = vmatpush.msra.mxu0 %v2662
      %3577 = vmatpush.msra.mxu0 %v2661
      %3578 = vmatpush.msra.mxu0 %v2660
      %3579 = vmatpush.msra.mxu0 %v2659
      %3580 = vmatpush.msra.mxu0 %v2658
      %3581 = vmatpush.msra.mxu0 %v2657
      %3582 = vmatpush.msra.mxu0 %v2656
      %3583 = vmatpush.msra.mxu0 %v2655
      %3584 = vmatpush.msra.mxu0 %v2654
      %3585 = vmatpush.msra.mxu0 %v2653
      %3586 = vmatpush.msra.mxu0 %v2652
      %3587 = vmatpush.msra.mxu0 %v2651
      %3588 = vmatpush.msra.mxu0 %v2650
      %3589 = vmatmul.f32.gmra.mxu0 %v2490
      %v3590 = vpop.f32.mrf.mxu0
      %v3591 = vadd.f32 %v3478, %v3590
      %3592 = vmatmul.f32.gmra.mxu0 %v2491
      %v3593 = vpop.f32.mrf.mxu0
      %v3594 = vadd.f32 %v3481, %v3593
      %3595 = vmatmul.f32.gmra.mxu0 %v2492
      %v3596 = vpop.f32.mrf.mxu0
      %v3597 = vadd.f32 %v3484, %v3596
      %3598 = vmatmul.f32.gmra.mxu0 %v2493
      %v3599 = vpop.f32.mrf.mxu0
      %v3600 = vadd.f32 %v3487, %v3599
      %3601 = vmatmul.f32.gmra.mxu0 %v2494
      %v3602 = vpop.f32.mrf.mxu0
      %v3603 = vadd.f32 %v3490, %v3602
      %3604 = vmatmul.f32.gmra.mxu0 %v2495
      %v3605 = vpop.f32.mrf.mxu0
      %v3606 = vadd.f32 %v3493, %v3605
      %3607 = vmatmul.f32.gmra.mxu0 %v2496
      %v3608 = vpop.f32.mrf.mxu0
      %v3609 = vadd.f32 %v3496, %v3608
      %3610 = vmatmul.f32.gmra.mxu0 %v2497
      %v3611 = vpop.f32.mrf.mxu0
      %v3612 = vadd.f32 %v3499, %v3611
      %3613 = vmatmul.f32.gmra.mxu0 %v2498
      %v3614 = vpop.f32.mrf.mxu0
      %v3615 = vadd.f32 %v3502, %v3614
      %3616 = vmatmul.f32.gmra.mxu0 %v2499
      %v3617 = vpop.f32.mrf.mxu0
      %v3618 = vadd.f32 %v3505, %v3617
      %3619 = vmatmul.f32.gmra.mxu0 %v2500
      %v3620 = vpop.f32.mrf.mxu0
      %v3621 = vadd.f32 %v3508, %v3620
      %3622 = vmatmul.f32.gmra.mxu0 %v2501
      %v3623 = vpop.f32.mrf.mxu0
      %v3624 = vadd.f32 %v3511, %v3623
      %3625 = vmatmul.f32.gmra.mxu0 %v2502
      %v3626 = vpop.f32.mrf.mxu0
      %v3627 = vadd.f32 %v3514, %v3626
      %3628 = vmatmul.f32.gmra.mxu0 %v2503
      %v3629 = vpop.f32.mrf.mxu0
      %v3630 = vadd.f32 %v3517, %v3629
      %3631 = vmatmul.f32.gmra.mxu0 %v2504
      %v3632 = vpop.f32.mrf.mxu0
      %v3633 = vadd.f32 %v3520, %v3632
      %3634 = vmatmul.f32.gmra.mxu0 %v2505
      %v3635 = vpop.f32.mrf.mxu0
      %v3636 = vadd.f32 %v3523, %v3635
      %3637 = vmatmul.f32.gmra.mxu0 %v2506
      %v3638 = vpop.f32.mrf.mxu0
      %v3639 = vadd.f32 %v3526, %v3638
      %3640 = vmatmul.f32.gmra.mxu0 %v2507
      %v3641 = vpop.f32.mrf.mxu0
      %v3642 = vadd.f32 %v3529, %v3641
      %3643 = vmatmul.f32.gmra.mxu0 %v2508
      %v3644 = vpop.f32.mrf.mxu0
      %v3645 = vadd.f32 %v3532, %v3644
      %3646 = vmatmul.f32.gmra.mxu0 %v2509
      %v3647 = vpop.f32.mrf.mxu0
      %v3648 = vadd.f32 %v3535, %v3647
      %3649 = vmatmul.f32.gmra.mxu0 %v2510
      %v3650 = vpop.f32.mrf.mxu0
      %v3651 = vadd.f32 %v3538, %v3650
      %3652 = vmatmul.f32.gmra.mxu0 %v2511
      %v3653 = vpop.f32.mrf.mxu0
      %v3654 = vadd.f32 %v3541, %v3653
      %3655 = vmatmul.f32.gmra.mxu0 %v2512
      %v3656 = vpop.f32.mrf.mxu0
      %v3657 = vadd.f32 %v3544, %v3656
      %3658 = vmatmul.f32.gmra.mxu0 %v2513
      %v3659 = vpop.f32.mrf.mxu0
      %v3660 = vadd.f32 %v3547, %v3659
      %3661 = vmatmul.f32.gmra.mxu0 %v2514
      %v3662 = vpop.f32.mrf.mxu0
      %v3663 = vadd.f32 %v3550, %v3662
      %3664 = vmatmul.f32.gmra.mxu0 %v2515
      %v3665 = vpop.f32.mrf.mxu0
      %v3666 = vadd.f32 %v3553, %v3665
      %3667 = vmatmul.f32.gmra.mxu0 %v2516
      %v3668 = vpop.f32.mrf.mxu0
      %v3669 = vadd.f32 %v3556, %v3668
      %3670 = vmatmul.f32.gmra.mxu0 %v2517
      %v3671 = vpop.f32.mrf.mxu0
      %v3672 = vadd.f32 %v3559, %v3671
      %3673 = vmatmul.f32.gmra.mxu0 %v2518
      %v3674 = vpop.f32.mrf.mxu0
      %v3675 = vadd.f32 %v3562, %v3674
      %3676 = vmatmul.f32.gmra.mxu0 %v2519
      %v3677 = vpop.f32.mrf.mxu0
      %v3678 = vadd.f32 %v3565, %v3677
      %3679 = vmatmul.f32.gmra.mxu0 %v2520
      %v3680 = vpop.f32.mrf.mxu0
      %v3681 = vadd.f32 %v3568, %v3680
      %3682 = vmatmul.f32.gmra.mxu0 %v2521
      %v3683 = vpop.f32.mrf.mxu0
      %v3684 = vadd.f32 %v3571, %v3683
      %3685 = vdwg.mxu0
      %v3686 = vadd.f32 %v3591, %v3594
      %v3687 = vadd.f32 %v3686, %v3597
      %v3688 = vadd.f32 %v3687, %v3600
      %v3689 = vadd.f32 %v3688, %v3603
      %v3690 = vadd.f32 %v3689, %v3606
      %v3691 = vadd.f32 %v3690, %v3609
      %v3692 = vadd.f32 %v3691, %v3612
      %v3693 = vadd.f32 %v3692, %v3615
      %v3694 = vadd.f32 %v3693, %v3618
      %v3695 = vadd.f32 %v3694, %v3621
      %v3696 = vadd.f32 %v3695, %v3624
      %v3697 = vadd.f32 %v3696, %v3627
      %v3698 = vadd.f32 %v3697, %v3630
      %v3699 = vadd.f32 %v3698, %v3633
      %v3700 = vadd.f32 %v3699, %v3636
      %v3701 = vadd.f32 %v3700, %v3639
      %v3702 = vadd.f32 %v3701, %v3642
      %v3703 = vadd.f32 %v3702, %v3645
      %v3704 = vadd.f32 %v3703, %v3648
      %v3705 = vadd.f32 %v3704, %v3651
      %v3706 = vadd.f32 %v3705, %v3654
      %v3707 = vadd.f32 %v3706, %v3657
      %v3708 = vadd.f32 %v3707, %v3660
      %v3709 = vadd.f32 %v3708, %v3663
      %v3710 = vadd.f32 %v3709, %v3666
      %v3711 = vadd.f32 %v3710, %v3669
      %v3712 = vadd.f32 %v3711, %v3672
      %v3713 = vadd.f32 %v3712, %v3675
      %v3714 = vadd.f32 %v3713, %v3678
      %v3715 = vadd.f32 %v3714, %v3681
      %v3716 = vadd.f32 %v3715, %v3684
      %v3717 = vrot.slane %v3716, 4
      %v3718 = vadd.f32 %v3716, %v3717
      %v3719 = vrot.slane %v3718, 2
      %v3720 = vadd.f32 %v3718, %v3719
      %v3721 = vrot.slane %v3720, 1
      %v3722 = vadd.f32 %v3720, %v3721
      %v3723 = vmul.f32 %v3722, 0.00390625
      %v3724 = vld [vmem:[%s5] sm:$0xff]
      %v3725 = vld [vmem:[%s5 + $0x8] sm:$0xff]
      %v3726 = vld [vmem:[%s5 + $0x10] sm:$0xff]
      %v3727 = vld [vmem:[%s5 + $0x18] sm:$0xff]
      %v3728 = vld [vmem:[%s5 + $0x20] sm:$0xff]
      %v3729 = vld [vmem:[%s5 + $0x28] sm:$0xff]
      %v3730 = vld [vmem:[%s5 + $0x30] sm:$0xff]
      %v3731 = vld [vmem:[%s5 + $0x38] sm:$0xff]
      %v3732 = vld [vmem:[%s5 + $0x40] sm:$0xff]
      %v3733 = vld [vmem:[%s5 + $0x48] sm:$0xff]
      %v3734 = vld [vmem:[%s5 + $0x50] sm:$0xff]
      %v3735 = vld [vmem:[%s5 + $0x58] sm:$0xff]
      %v3736 = vld [vmem:[%s5 + $0x60] sm:$0xff]
      %v3737 = vld [vmem:[%s5 + $0x68] sm:$0xff]
      %v3738 = vld [vmem:[%s5 + $0x70] sm:$0xff]
      %v3739 = vld [vmem:[%s5 + $0x78] sm:$0xff]
      %v3740 = vld [vmem:[%s6] sm:$0x1]
      %3741 = vmatpush.msra.mxu0 %v3739
      %3742 = vmatpush.msra.mxu0 %v3738
      %3743 = vmatpush.msra.mxu0 %v3737
      %3744 = vmatpush.msra.mxu0 %v3736
      %3745 = vmatpush.msra.mxu0 %v3735
      %3746 = vmatpush.msra.mxu0 %v3734
      %3747 = vmatpush.msra.mxu0 %v3733
      %3748 = vmatpush.msra.mxu0 %v3732
      %3749 = vmatpush.msra.mxu0 %v3731
      %3750 = vmatpush.msra.mxu0 %v3730
      %3751 = vmatpush.msra.mxu0 %v3729
      %3752 = vmatpush.msra.mxu0 %v3728
      %3753 = vmatpush.msra.mxu0 %v3727
      %3754 = vmatpush.msra.mxu0 %v3726
      %3755 = vmatpush.msra.mxu0 %v3725
      %3756 = vmatpush.msra.mxu0 %v3724
      %3757 = vmatmul.f32.gmra.mxu0 %v3723
      %v3758 = vpop.f32.mrf.mxu0
      %v3759 = vadd.f32 %v3740, %v3758
      %3760 = vdwg.mxu0
      %v3761 = vmax.f32 %v3759, 0.0
      %v3762 = vmul.f32 %v3761, 1.7128586
      %v3763 = vld [vmem:[%s7] sm:$0xff]
      %v3764 = vld [vmem:[%s7 + $0x8] sm:$0xff]
      %v3765 = vld [vmem:[%s7 + $0x10] sm:$0xff]
      %v3766 = vld [vmem:[%s7 + $0x18] sm:$0xff]
      %v3767 = vld [vmem:[%s7 + $0x20] sm:$0xff]
      %v3768 = vld [vmem:[%s7 + $0x28] sm:$0xff]
      %v3769 = vld [vmem:[%s7 + $0x30] sm:$0xff]
      %v3770 = vld [vmem:[%s7 + $0x38] sm:$0xff]
      %v3771 = vld [vmem:[%s7 + $0x40] sm:$0xff]
      %v3772 = vld [vmem:[%s7 + $0x48] sm:$0xff]
      %v3773 = vld [vmem:[%s7 + $0x50] sm:$0xff]
      %v3774 = vld [vmem:[%s7 + $0x58] sm:$0xff]
      %v3775 = vld [vmem:[%s7 + $0x60] sm:$0xff]
      %v3776 = vld [vmem:[%s7 + $0x68] sm:$0xff]
      %v3777 = vld [vmem:[%s7 + $0x70] sm:$0xff]
      %v3778 = vld [vmem:[%s7 + $0x78] sm:$0xff]
      %v3779 = vld [vmem:[%s8] sm:$0x1]
      %3780 = vmatpush.msra.mxu0 %v3778
      %3781 = vmatpush.msra.mxu0 %v3777
      %3782 = vmatpush.msra.mxu0 %v3776
      %3783 = vmatpush.msra.mxu0 %v3775
      %3784 = vmatpush.msra.mxu0 %v3774
      %3785 = vmatpush.msra.mxu0 %v3773
      %3786 = vmatpush.msra.mxu0 %v3772
      %3787 = vmatpush.msra.mxu0 %v3771
      %3788 = vmatpush.msra.mxu0 %v3770
      %3789 = vmatpush.msra.mxu0 %v3769
      %3790 = vmatpush.msra.mxu0 %v3768
      %3791 = vmatpush.msra.mxu0 %v3767
      %3792 = vmatpush.msra.mxu0 %v3766
      %3793 = vmatpush.msra.mxu0 %v3765
      %3794 = vmatpush.msra.mxu0 %v3764
      %3795 = vmatpush.msra.mxu0 %v3763
      %3796 = vmatmul.f32.gmra.mxu0 %v3762
      %v3797 = vpop.f32.mrf.mxu0
      %v3798 = vadd.f32 %v3779, %v3797
      %3799 = vdwg.mxu0
      %v3800 = vxor.u32 %v3798, 2147483648
      %v3801 = vmul.f32 %v3800, 1.442695
      %v3802 = vpow.pop %v3801
      %v3803 = vadd.f32 %v3802, 1.0
      %v3804 = vrcp.pop %v3803
      %v3805 = vmul.f32 %v3803, %v3804
      %v3806 = vsub.f32 1.0, %v3805
      %v3807 = vmul.f32 %v3804, %v3806
      %v3808 = vadd.f32 %v3804, %v3807
      %vm3809 = vweird.f32 %v3803
      %vm3810 = vweird.f32 %v3804
      %vm3811 = vmor %vm3809, %vm3810
      %v3812 = vsel %vm3811, %v3804, %v3808
      %v3813 = vand.u32 2147483647, %v3803
      %vm3814 = vcmp.eq.f32.partialorder %v3813, 8.507059e+37
      %v3815 = vand.u32 %v3803, 2147483648
      %v3816 = vor.u32 1.1754944e-38, %v3815
      %v3817 = vsel %vm3814, %v3816, %v3812
      %v3818 = vmul.f32 1.0, %v3817
      %v3819 = vmul.f32 %v3818, 2.0
      %v3820 = vld [vmem:[#allocation4] sm:$0x1]
      %3822 = vset.pattern.permute.xlu0 0
      %3823 = vperm.xlu0 %3822, %v3820
      %v3824 = vpop.permute.xlu0 %3823
      %v3826 = vperm.slane %v3824, 0
      %v3827 = vmul.f32 %v3819, %v3826
      %v3828 = vperm.slane %v3827, 0
      %v3829 = vmul.f32 %v3591, %v3828
      %v3830 = vmul.f32 %v3594, %v3828
      %v3831 = vmul.f32 %v3597, %v3828
      %v3832 = vmul.f32 %v3600, %v3828
      %v3833 = vmul.f32 %v3603, %v3828
      %v3834 = vmul.f32 %v3606, %v3828
      %v3835 = vmul.f32 %v3609, %v3828
      %v3836 = vmul.f32 %v3612, %v3828
      %v3837 = vmul.f32 %v3615, %v3828
      %v3838 = vmul.f32 %v3618, %v3828
      %v3839 = vmul.f32 %v3621, %v3828
      %v3840 = vmul.f32 %v3624, %v3828
      %v3841 = vmul.f32 %v3627, %v3828
      %v3842 = vmul.f32 %v3630, %v3828
      %v3843 = vmul.f32 %v3633, %v3828
      %v3844 = vmul.f32 %v3636, %v3828
      %v3845 = vmul.f32 %v3639, %v3828
      %v3846 = vmul.f32 %v3642, %v3828
      %v3847 = vmul.f32 %v3645, %v3828
      %v3848 = vmul.f32 %v3648, %v3828
      %v3849 = vmul.f32 %v3651, %v3828
      %v3850 = vmul.f32 %v3654, %v3828
      %v3851 = vmul.f32 %v3657, %v3828
      %v3852 = vmul.f32 %v3660, %v3828
      %v3853 = vmul.f32 %v3663, %v3828
      %v3854 = vmul.f32 %v3666, %v3828
      %v3855 = vmul.f32 %v3669, %v3828
      %v3856 = vmul.f32 %v3672, %v3828
      %v3857 = vmul.f32 %v3675, %v3828
      %v3858 = vmul.f32 %v3678, %v3828
      %v3859 = vmul.f32 %v3681, %v3828
      %v3860 = vmul.f32 %v3684, %v3828
      %v3861 = vld [vmem:[%s10] sm:$0xff]
      %v3862 = vld [vmem:[%s10 + $0x8] sm:$0xff]
      %v3863 = vld [vmem:[%s10 + $0x10] sm:$0xff]
      %v3864 = vld [vmem:[%s10 + $0x18] sm:$0xff]
      %v3865 = vld [vmem:[%s10 + $0x20] sm:$0xff]
      %v3866 = vld [vmem:[%s10 + $0x28] sm:$0xff]
      %v3867 = vld [vmem:[%s10 + $0x30] sm:$0xff]
      %v3868 = vld [vmem:[%s10 + $0x38] sm:$0xff]
      %v3869 = vld [vmem:[%s10 + $0x40] sm:$0xff]
      %v3870 = vld [vmem:[%s10 + $0x48] sm:$0xff]
      %v3871 = vld [vmem:[%s10 + $0x50] sm:$0xff]
      %v3872 = vld [vmem:[%s10 + $0x58] sm:$0xff]
      %v3873 = vld [vmem:[%s10 + $0x60] sm:$0xff]
      %v3874 = vld [vmem:[%s10 + $0x68] sm:$0xff]
      %v3875 = vld [vmem:[%s10 + $0x70] sm:$0xff]
      %v3876 = vld [vmem:[%s10 + $0x78] sm:$0xff]
      %v3877 = vld [vmem:[%s11] sm:$0x1]
      %v3879 = vperm.slane %v3877, 0
      %3881 = vmatpush.msra.mxu0 %v3876
      %3882 = vmatpush.msra.mxu0 %v3875
      %3883 = vmatpush.msra.mxu0 %v3874
      %3884 = vmatpush.msra.mxu0 %v3873
      %3885 = vmatpush.msra.mxu0 %v3872
      %3886 = vmatpush.msra.mxu0 %v3871
      %3887 = vmatpush.msra.mxu0 %v3870
      %3888 = vmatpush.msra.mxu0 %v3869
      %3889 = vmatpush.msra.mxu0 %v3868
      %3890 = vmatpush.msra.mxu0 %v3867
      %3891 = vmatpush.msra.mxu0 %v3866
      %3892 = vmatpush.msra.mxu0 %v3865
      %3893 = vmatpush.msra.mxu0 %v3864
      %3894 = vmatpush.msra.mxu0 %v3863
      %3895 = vmatpush.msra.mxu0 %v3862
      %3896 = vmatpush.msra.mxu0 %v3861
      %3897 = vmatmul.f32.gmra.mxu0 %v416
      %v3898 = vpop.f32.mrf.mxu0
      %v3899 = vadd.f32 %v3879, %v3898
      %3900 = vmatmul.f32.gmra.mxu0 %v417
      %v3901 = vpop.f32.mrf.mxu0
      %v3902 = vadd.f32 %v3879, %v3901
      %3903 = vmatmul.f32.gmra.mxu0 %v418
      %v3904 = vpop.f32.mrf.mxu0
      %v3905 = vadd.f32 %v3879, %v3904
      %3906 = vmatmul.f32.gmra.mxu0 %v419
      %v3907 = vpop.f32.mrf.mxu0
      %v3908 = vadd.f32 %v3879, %v3907
      %3909 = vmatmul.f32.gmra.mxu0 %v420
      %v3910 = vpop.f32.mrf.mxu0
      %v3911 = vadd.f32 %v3879, %v3910
      %3912 = vmatmul.f32.gmra.mxu0 %v421
      %v3913 = vpop.f32.mrf.mxu0
      %v3914 = vadd.f32 %v3879, %v3913
      %3915 = vmatmul.f32.gmra.mxu0 %v422
      %v3916 = vpop.f32.mrf.mxu0
      %v3917 = vadd.f32 %v3879, %v3916
      %3918 = vmatmul.f32.gmra.mxu0 %v423
      %v3919 = vpop.f32.mrf.mxu0
      %v3920 = vadd.f32 %v3879, %v3919
      %3921 = vmatmul.f32.gmra.mxu0 %v424
      %v3922 = vpop.f32.mrf.mxu0
      %v3923 = vadd.f32 %v3879, %v3922
      %3924 = vmatmul.f32.gmra.mxu0 %v425
      %v3925 = vpop.f32.mrf.mxu0
      %v3926 = vadd.f32 %v3879, %v3925
      %3927 = vmatmul.f32.gmra.mxu0 %v426
      %v3928 = vpop.f32.mrf.mxu0
      %v3929 = vadd.f32 %v3879, %v3928
      %3930 = vmatmul.f32.gmra.mxu0 %v427
      %v3931 = vpop.f32.mrf.mxu0
      %v3932 = vadd.f32 %v3879, %v3931
      %3933 = vmatmul.f32.gmra.mxu0 %v428
      %v3934 = vpop.f32.mrf.mxu0
      %v3935 = vadd.f32 %v3879, %v3934
      %3936 = vmatmul.f32.gmra.mxu0 %v429
      %v3937 = vpop.f32.mrf.mxu0
      %v3938 = vadd.f32 %v3879, %v3937
      %3939 = vmatmul.f32.gmra.mxu0 %v430
      %v3940 = vpop.f32.mrf.mxu0
      %v3941 = vadd.f32 %v3879, %v3940
      %3942 = vmatmul.f32.gmra.mxu0 %v431
      %v3943 = vpop.f32.mrf.mxu0
      %v3944 = vadd.f32 %v3879, %v3943
      %3945 = vmatmul.f32.gmra.mxu0 %v432
      %v3946 = vpop.f32.mrf.mxu0
      %v3947 = vadd.f32 %v3879, %v3946
      %3948 = vmatmul.f32.gmra.mxu0 %v433
      %v3949 = vpop.f32.mrf.mxu0
      %v3950 = vadd.f32 %v3879, %v3949
      %3951 = vmatmul.f32.gmra.mxu0 %v434
      %v3952 = vpop.f32.mrf.mxu0
      %v3953 = vadd.f32 %v3879, %v3952
      %3954 = vmatmul.f32.gmra.mxu0 %v435
      %v3955 = vpop.f32.mrf.mxu0
      %v3956 = vadd.f32 %v3879, %v3955
      %3957 = vmatmul.f32.gmra.mxu0 %v436
      %v3958 = vpop.f32.mrf.mxu0
      %v3959 = vadd.f32 %v3879, %v3958
      %3960 = vmatmul.f32.gmra.mxu0 %v437
      %v3961 = vpop.f32.mrf.mxu0
      %v3962 = vadd.f32 %v3879, %v3961
      %3963 = vmatmul.f32.gmra.mxu0 %v438
      %v3964 = vpop.f32.mrf.mxu0
      %v3965 = vadd.f32 %v3879, %v3964
      %3966 = vmatmul.f32.gmra.mxu0 %v439
      %v3967 = vpop.f32.mrf.mxu0
      %v3968 = vadd.f32 %v3879, %v3967
      %3969 = vmatmul.f32.gmra.mxu0 %v440
      %v3970 = vpop.f32.mrf.mxu0
      %v3971 = vadd.f32 %v3879, %v3970
      %3972 = vmatmul.f32.gmra.mxu0 %v441
      %v3973 = vpop.f32.mrf.mxu0
      %v3974 = vadd.f32 %v3879, %v3973
      %3975 = vmatmul.f32.gmra.mxu0 %v442
      %v3976 = vpop.f32.mrf.mxu0
      %v3977 = vadd.f32 %v3879, %v3976
      %3978 = vmatmul.f32.gmra.mxu0 %v443
      %v3979 = vpop.f32.mrf.mxu0
      %v3980 = vadd.f32 %v3879, %v3979
      %3981 = vmatmul.f32.gmra.mxu0 %v444
      %v3982 = vpop.f32.mrf.mxu0
      %v3983 = vadd.f32 %v3879, %v3982
      %3984 = vmatmul.f32.gmra.mxu0 %v445
      %v3985 = vpop.f32.mrf.mxu0
      %v3986 = vadd.f32 %v3879, %v3985
      %3987 = vmatmul.f32.gmra.mxu0 %v446
      %v3988 = vpop.f32.mrf.mxu0
      %v3989 = vadd.f32 %v3879, %v3988
      %3990 = vmatmul.f32.gmra.mxu0 %v447
      %v3991 = vpop.f32.mrf.mxu0
      %v3992 = vadd.f32 %v3879, %v3991
      %3993 = vdwg.mxu0
      %v3994 = vadd.f32 %v3829, %v3899
      %v3995 = vadd.f32 %v3830, %v3902
      %v3996 = vadd.f32 %v3831, %v3905
      %v3997 = vadd.f32 %v3832, %v3908
      %v3998 = vadd.f32 %v3833, %v3911
      %v3999 = vadd.f32 %v3834, %v3914
      %v4000 = vadd.f32 %v3835, %v3917
      %v4001 = vadd.f32 %v3836, %v3920
      %v4002 = vadd.f32 %v3837, %v3923
      %v4003 = vadd.f32 %v3838, %v3926
      %v4004 = vadd.f32 %v3839, %v3929
      %v4005 = vadd.f32 %v3840, %v3932
      %v4006 = vadd.f32 %v3841, %v3935
      %v4007 = vadd.f32 %v3842, %v3938
      %v4008 = vadd.f32 %v3843, %v3941
      %v4009 = vadd.f32 %v3844, %v3944
      %v4010 = vadd.f32 %v3845, %v3947
      %v4011 = vadd.f32 %v3846, %v3950
      %v4012 = vadd.f32 %v3847, %v3953
      %v4013 = vadd.f32 %v3848, %v3956
      %v4014 = vadd.f32 %v3849, %v3959
      %v4015 = vadd.f32 %v3850, %v3962
      %v4016 = vadd.f32 %v3851, %v3965
      %v4017 = vadd.f32 %v3852, %v3968
      %v4018 = vadd.f32 %v3853, %v3971
      %v4019 = vadd.f32 %v3854, %v3974
      %v4020 = vadd.f32 %v3855, %v3977
      %v4021 = vadd.f32 %v3856, %v3980
      %v4022 = vadd.f32 %v3857, %v3983
      %v4023 = vadd.f32 %v3858, %v3986
      %v4024 = vadd.f32 %v3859, %v3989
      %v4025 = vadd.f32 %v3860, %v3992
      %4026 = vst [vmem:[%s415] sm:$0xff] %v3994
      %4027 = vst [vmem:[%s415 + $0x8] sm:$0xff] %v3995
      %4028 = vst [vmem:[%s415 + $0x10] sm:$0xff] %v3996
      %4029 = vst [vmem:[%s415 + $0x18] sm:$0xff] %v3997
      %4030 = vst [vmem:[%s415 + $0x20] sm:$0xff] %v3998
      %4031 = vst [vmem:[%s415 + $0x28] sm:$0xff] %v3999
      %4032 = vst [vmem:[%s415 + $0x30] sm:$0xff] %v4000
      %4033 = vst [vmem:[%s415 + $0x38] sm:$0xff] %v4001
      %4034 = vst [vmem:[%s415 + $0x40] sm:$0xff] %v4002
      %4035 = vst [vmem:[%s415 + $0x48] sm:$0xff] %v4003
      %4036 = vst [vmem:[%s415 + $0x50] sm:$0xff] %v4004
      %4037 = vst [vmem:[%s415 + $0x58] sm:$0xff] %v4005
      %4038 = vst [vmem:[%s415 + $0x60] sm:$0xff] %v4006
      %4039 = vst [vmem:[%s415 + $0x68] sm:$0xff] %v4007
      %4040 = vst [vmem:[%s415 + $0x70] sm:$0xff] %v4008
      %4041 = vst [vmem:[%s415 + $0x78] sm:$0xff] %v4009
      %4042 = vst [vmem:[%s415 + $0x80] sm:$0xff] %v4010
      %4043 = vst [vmem:[%s415 + $0x88] sm:$0xff] %v4011
      %4044 = vst [vmem:[%s415 + $0x90] sm:$0xff] %v4012
      %4045 = vst [vmem:[%s415 + $0x98] sm:$0xff] %v4013
      %4046 = vst [vmem:[%s415 + $0xa0] sm:$0xff] %v4014
      %4047 = vst [vmem:[%s415 + $0xa8] sm:$0xff] %v4015
      %4048 = vst [vmem:[%s415 + $0xb0] sm:$0xff] %v4016
      %4049 = vst [vmem:[%s415 + $0xb8] sm:$0xff] %v4017
      %4050 = vst [vmem:[%s415 + $0xc0] sm:$0xff] %v4018
      %4051 = vst [vmem:[%s415 + $0xc8] sm:$0xff] %v4019
      %4052 = vst [vmem:[%s415 + $0xd0] sm:$0xff] %v4020
      %4053 = vst [vmem:[%s415 + $0xd8] sm:$0xff] %v4021
      %4054 = vst [vmem:[%s415 + $0xe0] sm:$0xff] %v4022
      %4055 = vst [vmem:[%s415 + $0xe8] sm:$0xff] %v4023
      %4056 = vst [vmem:[%s415 + $0xf0] sm:$0xff] %v4024
      %4057 = vst [vmem:[%s415 + $0xf8] sm:$0xff] %v4025
      %p4058 = scmp.lt.s32.totalorder %s25, 1
      %s4059 = scalar_select %p4058, %s25, 1
      %s4060 = smul.addr %s4059, 32
      %s4061 = smul.addr %s4060, 8
      %s4062 = scalar_lea.vmem %s12, %s4061
      // Predicated region
      $region69: #{_lambda_.2} parent=67 // pred_check
        %p4063 = pneg %p300
      $region70: #{_lambda_.2} parent=67 // pred_check_branch
        %4065 = sbr.rel (%p4063) target = $region72
      $region71: #{_lambda_.2} parent=67 // pred_region
        _
      $region72: #{_lambda_.2} parent=67 // pred_fallthru
        _
    $region68: #{_lambda_.2} parent=5 // pred_fallthru
      _
    %p4066 = scmp.le.s32.totalorder 2, %s20
    // Predicated region
    $region73: #{_lambda_.2} parent=5 // pred_check
      %p4067 = pneg %p4066
    $region74: #{_lambda_.2} parent=5 // pred_check_branch
      %4069 = sbr.rel (%p4067) target = $region76
    $region75: #{_lambda_.2} parent=5 // pred_region
      %s4070 = ssub.s32 %s20, 2
      // Predicated region
      $region77: #{_lambda_.2} parent=75 // pred_check
        %p4071 = pneg %p306
      $region78: #{_lambda_.2} parent=75 // pred_check_branch
        %4073 = sbr.rel (%p4071) target = $region80
      $region79: #{_lambda_.2} parent=75 // pred_region
        %p4074 = scmp.lt.s32.totalorder %s26, 1
        %s4075 = scalar_select %p4074, %s26, 1
        %s4076 = smul.addr %s4075, 32
        %s4077 = smul.addr %s4076, 8
        %s4078 = scalar_lea.vmem %s12, %s4077
      $region80: #{_lambda_.2} parent=75 // pred_fallthru
        _
    $region76: #{_lambda_.2} parent=5 // pred_fallthru
      _
  $region6: #{_lambda_.2} parent=0 // loop_footer
    %s24 = sadd.s32 1, %s20
  $region7: #{_lambda_.2} parent=0 // loop_footer_branch
    %19 = sbr.rel target = $region3
  $region8: #{_lambda_.2} parent=0 // loop_exit
    _

</llo_original>
